<compile_context>
chip_gen: v6e
topology: v6e:2x2x1
jax: 0.10.0
libtpu: 0.0.40
codegen_flags: <defaults>
</compile_context>

<pallas_src>
import functools
import numpy as np
import jax
import jax.numpy as jnp
from jax.experimental import pallas as pl
from jax.experimental.pallas import tpu as pltpu

_SQRT_HALF = 0.7071067811865476        # 1/sqrt(2)
_GELU_K = 0.7978845608028654           # sqrt(2/pi)


# ----------------------------- in-kernel helpers -----------------------------

def _gelu(v):
    # tanh-approx GELU (EUP tanh); ~1e-3 deviation from exact erf GELU.
    return 0.5 * v * (1.0 + jnp.tanh(_GELU_K * (v + 0.044715 * v * v * v)))


def _groupnorm(v, gamma, beta, eps=1e-5):
    # GroupNorm(1, C) in NCHW == normalize over (C, H, W) per sample
    # == normalize over all of (H, W, C) here, with per-channel affine.
    # Single-pass stats: var = E[x^2] - mu^2 (f32, eps-guarded).
    H, W, C = v.shape
    n = float(H * W * C)
    s = jnp.sum(v)
    ss = jnp.sum(v * v)
    mu = s / n
    var = jnp.maximum(ss / n - mu * mu, 0.0)
    inv = jax.lax.rsqrt(var + eps)
    scale = gamma.reshape(1, 1, C) * inv           # (1,1,C)
    shift = beta.reshape(1, 1, C) - mu * scale
    return v * scale + shift


def _conv3x3_circular(xhwc, w9, b, d):
    # xhwc: (H, W, C) f32; w9: (9*C, Cout) bf16 with row order (ky, kx, ci);
    # b: (1, Cout) f32.  Circular padding, dilation d, stride 1, "same" size.
    # Single im2col matmul: (H*W, 9C) @ (9C, Cout), f32 accumulation.
    H, W, C = xhwc.shape
    # circular halo pad: xp[a, b] = x[(a - d) % H, (b - d) % W]
    xp = jnp.concatenate([xhwc[H - d:], xhwc, xhwc[:d]], axis=0)        # (H+2d, W, C)
    xp = jnp.concatenate([xp[:, W - d:], xp, xp[:, :d]], axis=1)        # (H+2d, W+2d, C)
    taps = [xp[ky * d:ky * d + H, kx * d:kx * d + W, :]
            for ky in range(3) for kx in range(3)]
    patches = jnp.concatenate(taps, axis=-1).reshape(H * W, 9 * C)      # (HW, 9C) f32
    out = jnp.dot(patches.astype(jnp.bfloat16), w9,
                  preferred_element_type=jnp.float32)
    return out + b                                                       # (HW, Cout) f32


# --------------------------------- kernel ------------------------------------

def _block_kernel(x_ref, gn1w_ref, gn1b_ref, w1_ref, b1_ref, w2_ref, b2_ref,
                  w3_ref, b3_ref, gn2w_ref, gn2b_ref, wf1_ref, wf2_ref,
                  o_ref, *, dilation):
    x = x_ref[0]                                   # (H, W, C) f32
    H, W, C = x.shape
    HW = H * W

    # ---- conv branch: GN -> conv3x3 -> GELU -> conv3x3(dil) -> GELU -> conv3x3
    h = _groupnorm(x, gn1w_ref[...], gn1b_ref[...])
    h = _conv3x3_circular(h, w1_ref[...], b1_ref[...], 1)              # (HW, C)
    h = _gelu(h)
    h = _conv3x3_circular(h.reshape(H, W, C), w2_ref[...], b2_ref[...], dilation)
    h = _gelu(h)
    h = _conv3x3_circular(h.reshape(H, W, C), w3_ref[...], b3_ref[...], 1)
    x = x + h.reshape(H, W, C)

    # ---- ffn branch: GN -> 1x1 conv (no bias) -> GELU -> 1x1 conv (no bias)
    h = _groupnorm(x, gn2w_ref[...], gn2b_ref[...])
    h2 = jnp.dot(h.reshape(HW, C).astype(jnp.bfloat16), wf1_ref[...],
                 preferred_element_type=jnp.float32)
    h2 = _gelu(h2)
    h2 = jnp.dot(h2.astype(jnp.bfloat16), wf2_ref[...],
                 preferred_element_type=jnp.float32)
    o_ref[0] = x + h2.reshape(H, W, C)


# -------------------------------- wrappers ------------------------------------

def dilated_residual_block_nhwc(x_nhwc, params, dilation):
    """NHWC entry point (no layout transposes); x_nhwc: (N, H, W, C) f32."""
    N, H, W, C = x_nhwc.shape

    def cvt_w3(w):   # torch (Co, Ci, 3, 3) -> (9*Ci, Co), row order (ky, kx, ci)
        return jnp.transpose(w, (2, 3, 1, 0)).reshape(9 * C, C).astype(jnp.bfloat16)

    args = (
        x_nhwc.astype(jnp.float32),
        params["gn1_w"].reshape(1, C).astype(jnp.float32),
        params["gn1_b"].reshape(1, C).astype(jnp.float32),
        cvt_w3(params["w1"]), params["b1"].reshape(1, C).astype(jnp.float32),
        cvt_w3(params["w2"]), params["b2"].reshape(1, C).astype(jnp.float32),
        cvt_w3(params["w3"]), params["b3"].reshape(1, C).astype(jnp.float32),
        params["gn2_w"].reshape(1, C).astype(jnp.float32),
        params["gn2_b"].reshape(1, C).astype(jnp.float32),
        params["wf1"].T.astype(jnp.bfloat16),      # torch (Co, Ci) -> (Ci, Co)
        params["wf2"].T.astype(jnp.bfloat16),
    )

    vec_spec  = pl.BlockSpec((1, C), lambda n: (0, 0))
    w9_spec   = pl.BlockSpec((9 * C, C), lambda n: (0, 0))
    w1x1_spec = pl.BlockSpec((C, C), lambda n: (0, 0))
    act_spec  = pl.BlockSpec((1, H, W, C), lambda n: (n, 0, 0, 0))

    return pl.pallas_call(
        functools.partial(_block_kernel, dilation=dilation),
        out_shape=jax.ShapeDtypeStruct((N, H, W, C), jnp.float32),
        grid=(N,),
        in_specs=[act_spec,
                  vec_spec, vec_spec,          # gn1 w/b
                  w9_spec, vec_spec,           # conv1 w/b
                  w9_spec, vec_spec,           # conv2 w/b (dilated)
                  w9_spec, vec_spec,           # conv3 w/b
                  vec_spec, vec_spec,          # gn2 w/b
                  w1x1_spec, w1x1_spec],       # ffn weights
        out_specs=act_spec,
        compiler_params=pltpu.CompilerParams(
            dimension_semantics=("parallel",),          # 2 TCs on v7x for N>=2
            vmem_limit_bytes=32 * 1024 * 1024),
    )(*args)


def dilated_residual_block(x_nchw, params, dilation):
    """NCHW-compat wrapper (matches the PyTorch module's layout).
    Prefer dilated_residual_block_nhwc in a real model — the two transposes
    here are full extra HBM round-trips."""
    out = dilated_residual_block_nhwc(
        jnp.transpose(x_nchw, (0, 2, 3, 1)), params, dilation)
    return jnp.transpose(out, (0, 3, 1, 2))


# --------------------------- params & pure-JAX ref ----------------------------

def init_params(key, dim):
    ks = jax.random.split(key, 12)

    def conv_w(k):
        return jax.random.normal(k, (dim, dim, 3, 3), jnp.float32) / np.sqrt(9.0 * dim)

    return {
        "gn1_w": 1.0 + 0.1 * jax.random.normal(ks[0], (dim,), jnp.float32),
        "gn1_b": 0.1 * jax.random.normal(ks[1], (dim,), jnp.float32),
        "w1": conv_w(ks[2]), "b1": 0.1 * jax.random.normal(ks[3], (dim,), jnp.float32),
        "w2": conv_w(ks[4]), "b2": 0.1 * jax.random.normal(ks[5], (dim,), jnp.float32),
        "w3": conv_w(ks[6]), "b3": 0.1 * jax.random.normal(ks[7], (dim,), jnp.float32),
        "gn2_w": 1.0 + 0.1 * jax.random.normal(ks[8], (dim,), jnp.float32),
        "gn2_b": 0.1 * jax.random.normal(ks[9], (dim,), jnp.float32),
        "wf1": jax.random.normal(ks[10], (dim, dim), jnp.float32) / np.sqrt(dim),
        "wf2": jax.random.normal(ks[11], (dim, dim), jnp.float32) / np.sqrt(dim),
    }


def reference_forward_nhwc(x, params, dilation):
    # pure-JAX NHWC reference mirroring the PyTorch module exactly
    # (exact erf GELU, f32 everywhere).
    def gelu(v):
        return 0.5 * v * (1.0 + jax.scipy.special.erf(v * _SQRT_HALF))

    def gn(v, gamma, beta, eps=1e-5):
        mu = v.mean(axis=(1, 2, 3), keepdims=True)
        var = ((v - mu) ** 2).mean(axis=(1, 2, 3), keepdims=True)
        return ((v - mu) / jnp.sqrt(var + eps)) * gamma.reshape(1, 1, 1, -1) \
               + beta.reshape(1, 1, 1, -1)

    def conv(v, w, b, d):
        whwio = jnp.transpose(w, (2, 3, 1, 0))                      # OIHW -> HWIO
        vp = jnp.pad(v, ((0, 0), (d, d), (d, d), (0, 0)), mode="wrap")
        y = jax.lax.conv_general_dilated(
            vp, whwio, window_strides=(1, 1), padding="VALID",
            rhs_dilation=(d, d), dimension_numbers=("NHWC", "HWIO", "NHWC"))
        return y + b.reshape(1, 1, 1, -1)

    h = gn(x, params["gn1_w"], params["gn1_b"])
    h = conv(h, params["w1"], params["b1"], 1)
    h = gelu(h)
    h = conv(h, params["w2"], params["b2"], dilation)
    h = gelu(h)
    h = conv(h, params["w3"], params["b3"], 1)
    x = x + h

    h = gn(x, params["gn2_w"], params["gn2_b"])
    h1 = jnp.einsum("nhwc,oc->nhwo", h, params["wf1"])
    h1 = gelu(h1)
    h1 = jnp.einsum("nhwc,oc->nhwo", h1, params["wf2"])
    return x + h1


# ----------------------------------- main -------------------------------------

if __name__ == "__main__":
    N, dim, H, W = 2, 32, 16, 16
    dilation = 2

    key = jax.random.PRNGKey(0)
    kx, kp = jax.random.split(key)
    params = init_params(kp, dim)
    x = jax.random.normal(kx, (N, H, W, dim), jnp.float32)     # NHWC

    fn = jax.jit(functools.partial(dilated_residual_block_nhwc, dilation=dilation))
    out = jax.block_until_ready(fn(x, params))

    ref = reference_forward_nhwc(x, params, dilation)
    err = float(jnp.max(jnp.abs(out - ref)))
    # bf16 MXU inputs + tanh-GELU vs exact-erf/f32 reference: ~1e-2 level.
    if not np.isfinite(err) or err > 5e-2:
        raise RuntimeError(f"Pallas output mismatch vs reference: max abs err = {err}")

    print("KERNEL_OK")
</pallas_src>

<mosaic_0001>
module attributes {stable_mosaic.version = 11 : i64} {
  func.func @_block_kernel(%arg0: i32, %arg1: memref<1x16x16x32xf32, #tpu.memory_space<vmem>>, %arg2: memref<1x32xf32, #tpu.memory_space<vmem>>, %arg3: memref<1x32xf32, #tpu.memory_space<vmem>>, %arg4: memref<288x32xbf16, #tpu.memory_space<vmem>>, %arg5: memref<1x32xf32, #tpu.memory_space<vmem>>, %arg6: memref<288x32xbf16, #tpu.memory_space<vmem>>, %arg7: memref<1x32xf32, #tpu.memory_space<vmem>>, %arg8: memref<288x32xbf16, #tpu.memory_space<vmem>>, %arg9: memref<1x32xf32, #tpu.memory_space<vmem>>, %arg10: memref<1x32xf32, #tpu.memory_space<vmem>>, %arg11: memref<1x32xf32, #tpu.memory_space<vmem>>, %arg12: memref<32x32xbf16, #tpu.memory_space<vmem>>, %arg13: memref<32x32xbf16, #tpu.memory_space<vmem>>, %arg14: memref<1x16x16x32xf32, #tpu.memory_space<vmem>>) attributes {dimension_semantics = [#tpu.dimension_semantics<parallel>], iteration_bounds = array<i64: 2>, scalar_prefetch = 0 : i64, scratch_operands = 0 : i64, tpu.core_type = #tpu.core_type<tc>, window_params = [{transform_indices = @transform_0, window_bounds = array<i64: 1, 16, 16, 32>}, {pipeline_mode = #tpu.pipeline_mode<synchronous>, transform_indices = @transform_1, window_bounds = array<i64: 1, 32>}, {pipeline_mode = #tpu.pipeline_mode<synchronous>, transform_indices = @transform_2, window_bounds = array<i64: 1, 32>}, {pipeline_mode = #tpu.pipeline_mode<synchronous>, transform_indices = @transform_3, window_bounds = array<i64: 288, 32>}, {pipeline_mode = #tpu.pipeline_mode<synchronous>, transform_indices = @transform_4, window_bounds = array<i64: 1, 32>}, {pipeline_mode = #tpu.pipeline_mode<synchronous>, transform_indices = @transform_5, window_bounds = array<i64: 288, 32>}, {pipeline_mode = #tpu.pipeline_mode<synchronous>, transform_indices = @transform_6, window_bounds = array<i64: 1, 32>}, {pipeline_mode = #tpu.pipeline_mode<synchronous>, transform_indices = @transform_7, window_bounds = array<i64: 288, 32>}, {pipeline_mode = #tpu.pipeline_mode<synchronous>, transform_indices = @transform_8, window_bounds = array<i64: 1, 32>}, {pipeline_mode = #tpu.pipeline_mode<synchronous>, transform_indices = @transform_9, window_bounds = array<i64: 1, 32>}, {pipeline_mode = #tpu.pipeline_mode<synchronous>, transform_indices = @transform_10, window_bounds = array<i64: 1, 32>}, {pipeline_mode = #tpu.pipeline_mode<synchronous>, transform_indices = @transform_11, window_bounds = array<i64: 32, 32>}, {pipeline_mode = #tpu.pipeline_mode<synchronous>, transform_indices = @transform_12, window_bounds = array<i64: 32, 32>}, {transform_indices = @transform_13, window_bounds = array<i64: 1, 16, 16, 32>}]} {
    %c0 = arith.constant 0 : index
    %c0_0 = arith.constant 0 : index
    %c0_1 = arith.constant 0 : index
    %c0_2 = arith.constant 0 : index
    %0 = vector.load %arg1[%c0, %c0_0, %c0_1, %c0_2] : memref<1x16x16x32xf32, #tpu.memory_space<vmem>>, vector<1x16x16x32xf32>
    %1 = vector.shape_cast %0 : vector<1x16x16x32xf32> to vector<16x16x32xf32>
    %c0_3 = arith.constant 0 : index
    %c0_4 = arith.constant 0 : index
    %2 = vector.load %arg2[%c0_3, %c0_4] : memref<1x32xf32, #tpu.memory_space<vmem>>, vector<1x32xf32>
    %c0_5 = arith.constant 0 : index
    %c0_6 = arith.constant 0 : index
    %3 = vector.load %arg3[%c0_5, %c0_6] : memref<1x32xf32, #tpu.memory_space<vmem>>, vector<1x32xf32>
    %4 = vector.shape_cast %1 : vector<16x16x32xf32> to vector<1x16x16x32xf32>
    %cst = arith.constant dense<0.000000e+00> : vector<1xf32>
    %5 = vector.multi_reduction <add>, %4, %cst [1, 2, 3] : vector<1x16x16x32xf32> to vector<1xf32>
    %6 = vector.shape_cast %5 : vector<1xf32> to vector<1x1x1x1xf32>
    %7 = vector.extract %6[0, 0, 0, 0] : f32 from vector<1x1x1x1xf32>
    %8 = arith.mulf %1, %1 : vector<16x16x32xf32>
    %9 = vector.shape_cast %8 : vector<16x16x32xf32> to vector<1x16x16x32xf32>
    %cst_7 = arith.constant dense<0.000000e+00> : vector<1xf32>
    %10 = vector.multi_reduction <add>, %9, %cst_7 [1, 2, 3] : vector<1x16x16x32xf32> to vector<1xf32>
    %11 = vector.shape_cast %10 : vector<1xf32> to vector<1x1x1x1xf32>
    %12 = vector.extract %11[0, 0, 0, 0] : f32 from vector<1x1x1x1xf32>
    %cst_8 = arith.constant 8.192000e+03 : f32
    %13 = arith.divf %7, %cst_8 : f32
    %cst_9 = arith.constant 8.192000e+03 : f32
    %14 = arith.divf %12, %cst_9 : f32
    %15 = arith.mulf %13, %13 : f32
    %16 = arith.subf %14, %15 : f32
    %cst_10 = arith.constant 0.000000e+00 : f32
    %17 = arith.maximumf %16, %cst_10 : f32
    %cst_11 = arith.constant 9.99999974E-6 : f32
    %18 = arith.addf %17, %cst_11 : f32
    %19 = math.rsqrt %18 : f32
    %20 = vector.shape_cast %2 : vector<1x32xf32> to vector<1x1x32xf32>
    %21 = vector.broadcast %19 : f32 to vector<1x1x32xf32>
    %22 = arith.mulf %20, %21 : vector<1x1x32xf32>
    %23 = vector.shape_cast %3 : vector<1x32xf32> to vector<1x1x32xf32>
    %24 = vector.broadcast %13 : f32 to vector<1x1x32xf32>
    %25 = arith.mulf %24, %22 : vector<1x1x32xf32>
    %26 = arith.subf %23, %25 : vector<1x1x32xf32>
    %27 = vector.broadcast %22 : vector<1x1x32xf32> to vector<16x16x32xf32>
    %28 = arith.mulf %1, %27 : vector<16x16x32xf32>
    %29 = vector.broadcast %26 : vector<1x1x32xf32> to vector<16x16x32xf32>
    %30 = arith.addf %28, %29 : vector<16x16x32xf32>
    %c0_12 = arith.constant 0 : index
    %c0_13 = arith.constant 0 : index
    %31 = vector.load %arg4[%c0_12, %c0_13] : memref<288x32xbf16, #tpu.memory_space<vmem>>, vector<288x32xbf16>
    %c0_14 = arith.constant 0 : index
    %c0_15 = arith.constant 0 : index
    %32 = vector.load %arg5[%c0_14, %c0_15] : memref<1x32xf32, #tpu.memory_space<vmem>>, vector<1x32xf32>
    %33 = vector.extract_strided_slice %30 {offsets = [15, 0, 0], sizes = [1, 16, 32], strides = [1, 1, 1]} : vector<16x16x32xf32> to vector<1x16x32xf32>
    %34 = vector.extract_strided_slice %30 {offsets = [0, 0, 0], sizes = [1, 16, 32], strides = [1, 1, 1]} : vector<16x16x32xf32> to vector<1x16x32xf32>
    %35 = tpu.concatenate %33, %30, %34 in 0 : vector<1x16x32xf32>, vector<16x16x32xf32>, vector<1x16x32xf32> -> vector<18x16x32xf32>
    %36 = vector.extract_strided_slice %35 {offsets = [0, 15, 0], sizes = [18, 1, 32], strides = [1, 1, 1]} : vector<18x16x32xf32> to vector<18x1x32xf32>
    %37 = vector.extract_strided_slice %35 {offsets = [0, 0, 0], sizes = [18, 1, 32], strides = [1, 1, 1]} : vector<18x16x32xf32> to vector<18x1x32xf32>
    %38 = tpu.concatenate %36, %35, %37 in 1 : vector<18x1x32xf32>, vector<18x16x32xf32>, vector<18x1x32xf32> -> vector<18x18x32xf32>
    %39 = vector.extract_strided_slice %38 {offsets = [0, 0, 0], sizes = [16, 16, 32], strides = [1, 1, 1]} : vector<18x18x32xf32> to vector<16x16x32xf32>
    %40 = vector.extract_strided_slice %38 {offsets = [0, 1, 0], sizes = [16, 16, 32], strides = [1, 1, 1]} : vector<18x18x32xf32> to vector<16x16x32xf32>
    %41 = vector.extract_strided_slice %38 {offsets = [0, 2, 0], sizes = [16, 16, 32], strides = [1, 1, 1]} : vector<18x18x32xf32> to vector<16x16x32xf32>
    %42 = vector.extract_strided_slice %38 {offsets = [1, 0, 0], sizes = [16, 16, 32], strides = [1, 1, 1]} : vector<18x18x32xf32> to vector<16x16x32xf32>
    %43 = vector.extract_strided_slice %38 {offsets = [1, 1, 0], sizes = [16, 16, 32], strides = [1, 1, 1]} : vector<18x18x32xf32> to vector<16x16x32xf32>
    %44 = vector.extract_strided_slice %38 {offsets = [1, 2, 0], sizes = [16, 16, 32], strides = [1, 1, 1]} : vector<18x18x32xf32> to vector<16x16x32xf32>
    %45 = vector.extract_strided_slice %38 {offsets = [2, 0, 0], sizes = [16, 16, 32], strides = [1, 1, 1]} : vector<18x18x32xf32> to vector<16x16x32xf32>
    %46 = vector.extract_strided_slice %38 {offsets = [2, 1, 0], sizes = [16, 16, 32], strides = [1, 1, 1]} : vector<18x18x32xf32> to vector<16x16x32xf32>
    %47 = vector.extract_strided_slice %38 {offsets = [2, 2, 0], sizes = [16, 16, 32], strides = [1, 1, 1]} : vector<18x18x32xf32> to vector<16x16x32xf32>
    %48 = tpu.concatenate %39, %40, %41, %42, %43, %44, %45, %46, %47 in 2 : vector<16x16x32xf32>, vector<16x16x32xf32>, vector<16x16x32xf32>, vector<16x16x32xf32>, vector<16x16x32xf32>, vector<16x16x32xf32>, vector<16x16x32xf32>, vector<16x16x32xf32>, vector<16x16x32xf32> -> vector<16x16x288xf32>
    %49 = vector.shape_cast %48 : vector<16x16x288xf32> to vector<256x288xf32>
    %50 = arith.truncf %49 : vector<256x288xf32> to vector<256x288xbf16>
    %cst_16 = arith.constant dense<0.000000e+00> : vector<256x32xf32>
    %51 = tpu.matmul %50, %31, %cst_16 {dimension_numbers = #tpu.dot_dimension_numbers<[1], [0], [0], [1], [0, 0, 1, 1], [], []>} : vector<256x288xbf16>, vector<288x32xbf16>, vector<256x32xf32> -> vector<256x32xf32>
    %52 = vector.broadcast %32 : vector<1x32xf32> to vector<256x32xf32>
    %53 = arith.addf %51, %52 : vector<256x32xf32>
    %cst_17 = arith.constant 5.000000e-01 : f32
    %54 = vector.broadcast %cst_17 : f32 to vector<256x32xf32>
    %55 = arith.mulf %54, %53 : vector<256x32xf32>
    %cst_18 = arith.constant 4.471500e-02 : f32
    %56 = vector.broadcast %cst_18 : f32 to vector<256x32xf32>
    %57 = arith.mulf %56, %53 : vector<256x32xf32>
    %58 = arith.mulf %57, %53 : vector<256x32xf32>
    %59 = arith.mulf %58, %53 : vector<256x32xf32>
    %60 = arith.addf %53, %59 : vector<256x32xf32>
    %cst_19 = arith.constant 0.797884583 : f32
    %61 = vector.broadcast %cst_19 : f32 to vector<256x32xf32>
    %62 = arith.mulf %61, %60 : vector<256x32xf32>
    %63 = math.tanh %62 : vector<256x32xf32>
    %cst_20 = arith.constant 1.000000e+00 : f32
    %64 = vector.broadcast %cst_20 : f32 to vector<256x32xf32>
    %65 = arith.addf %64, %63 : vector<256x32xf32>
    %66 = arith.mulf %55, %65 : vector<256x32xf32>
    %67 = vector.shape_cast %66 : vector<256x32xf32> to vector<16x16x32xf32>
    %c0_21 = arith.constant 0 : index
    %c0_22 = arith.constant 0 : index
    %68 = vector.load %arg6[%c0_21, %c0_22] : memref<288x32xbf16, #tpu.memory_space<vmem>>, vector<288x32xbf16>
    %c0_23 = arith.constant 0 : index
    %c0_24 = arith.constant 0 : index
    %69 = vector.load %arg7[%c0_23, %c0_24] : memref<1x32xf32, #tpu.memory_space<vmem>>, vector<1x32xf32>
    %70 = vector.extract_strided_slice %67 {offsets = [14, 0, 0], sizes = [2, 16, 32], strides = [1, 1, 1]} : vector<16x16x32xf32> to vector<2x16x32xf32>
    %71 = vector.extract_strided_slice %67 {offsets = [0, 0, 0], sizes = [2, 16, 32], strides = [1, 1, 1]} : vector<16x16x32xf32> to vector<2x16x32xf32>
    %72 = tpu.concatenate %70, %67, %71 in 0 : vector<2x16x32xf32>, vector<16x16x32xf32>, vector<2x16x32xf32> -> vector<20x16x32xf32>
    %73 = vector.extract_strided_slice %72 {offsets = [0, 14, 0], sizes = [20, 2, 32], strides = [1, 1, 1]} : vector<20x16x32xf32> to vector<20x2x32xf32>
    %74 = vector.extract_strided_slice %72 {offsets = [0, 0, 0], sizes = [20, 2, 32], strides = [1, 1, 1]} : vector<20x16x32xf32> to vector<20x2x32xf32>
    %75 = tpu.concatenate %73, %72, %74 in 1 : vector<20x2x32xf32>, vector<20x16x32xf32>, vector<20x2x32xf32> -> vector<20x20x32xf32>
    %76 = vector.extract_strided_slice %75 {offsets = [0, 0, 0], sizes = [16, 16, 32], strides = [1, 1, 1]} : vector<20x20x32xf32> to vector<16x16x32xf32>
    %77 = vector.extract_strided_slice %75 {offsets = [0, 2, 0], sizes = [16, 16, 32], strides = [1, 1, 1]} : vector<20x20x32xf32> to vector<16x16x32xf32>
    %78 = vector.extract_strided_slice %75 {offsets = [0, 4, 0], sizes = [16, 16, 32], strides = [1, 1, 1]} : vector<20x20x32xf32> to vector<16x16x32xf32>
    %79 = vector.extract_strided_slice %75 {offsets = [2, 0, 0], sizes = [16, 16, 32], strides = [1, 1, 1]} : vector<20x20x32xf32> to vector<16x16x32xf32>
    %80 = vector.extract_strided_slice %75 {offsets = [2, 2, 0], sizes = [16, 16, 32], strides = [1, 1, 1]} : vector<20x20x32xf32> to vector<16x16x32xf32>
    %81 = vector.extract_strided_slice %75 {offsets = [2, 4, 0], sizes = [16, 16, 32], strides = [1, 1, 1]} : vector<20x20x32xf32> to vector<16x16x32xf32>
    %82 = vector.extract_strided_slice %75 {offsets = [4, 0, 0], sizes = [16, 16, 32], strides = [1, 1, 1]} : vector<20x20x32xf32> to vector<16x16x32xf32>
    %83 = vector.extract_strided_slice %75 {offsets = [4, 2, 0], sizes = [16, 16, 32], strides = [1, 1, 1]} : vector<20x20x32xf32> to vector<16x16x32xf32>
    %84 = vector.extract_strided_slice %75 {offsets = [4, 4, 0], sizes = [16, 16, 32], strides = [1, 1, 1]} : vector<20x20x32xf32> to vector<16x16x32xf32>
    %85 = tpu.concatenate %76, %77, %78, %79, %80, %81, %82, %83, %84 in 2 : vector<16x16x32xf32>, vector<16x16x32xf32>, vector<16x16x32xf32>, vector<16x16x32xf32>, vector<16x16x32xf32>, vector<16x16x32xf32>, vector<16x16x32xf32>, vector<16x16x32xf32>, vector<16x16x32xf32> -> vector<16x16x288xf32>
    %86 = vector.shape_cast %85 : vector<16x16x288xf32> to vector<256x288xf32>
    %87 = arith.truncf %86 : vector<256x288xf32> to vector<256x288xbf16>
    %cst_25 = arith.constant dense<0.000000e+00> : vector<256x32xf32>
    %88 = tpu.matmul %87, %68, %cst_25 {dimension_numbers = #tpu.dot_dimension_numbers<[1], [0], [0], [1], [0, 0, 1, 1], [], []>} : vector<256x288xbf16>, vector<288x32xbf16>, vector<256x32xf32> -> vector<256x32xf32>
    %89 = vector.broadcast %69 : vector<1x32xf32> to vector<256x32xf32>
    %90 = arith.addf %88, %89 : vector<256x32xf32>
    %cst_26 = arith.constant 5.000000e-01 : f32
    %91 = vector.broadcast %cst_26 : f32 to vector<256x32xf32>
    %92 = arith.mulf %91, %90 : vector<256x32xf32>
    %cst_27 = arith.constant 4.471500e-02 : f32
    %93 = vector.broadcast %cst_27 : f32 to vector<256x32xf32>
    %94 = arith.mulf %93, %90 : vector<256x32xf32>
    %95 = arith.mulf %94, %90 : vector<256x32xf32>
    %96 = arith.mulf %95, %90 : vector<256x32xf32>
    %97 = arith.addf %90, %96 : vector<256x32xf32>
    %cst_28 = arith.constant 0.797884583 : f32
    %98 = vector.broadcast %cst_28 : f32 to vector<256x32xf32>
    %99 = arith.mulf %98, %97 : vector<256x32xf32>
    %100 = math.tanh %99 : vector<256x32xf32>
    %cst_29 = arith.constant 1.000000e+00 : f32
    %101 = vector.broadcast %cst_29 : f32 to vector<256x32xf32>
    %102 = arith.addf %101, %100 : vector<256x32xf32>
    %103 = arith.mulf %92, %102 : vector<256x32xf32>
    %104 = vector.shape_cast %103 : vector<256x32xf32> to vector<16x16x32xf32>
    %c0_30 = arith.constant 0 : index
    %c0_31 = arith.constant 0 : index
    %105 = vector.load %arg8[%c0_30, %c0_31] : memref<288x32xbf16, #tpu.memory_space<vmem>>, vector<288x32xbf16>
    %c0_32 = arith.constant 0 : index
    %c0_33 = arith.constant 0 : index
    %106 = vector.load %arg9[%c0_32, %c0_33] : memref<1x32xf32, #tpu.memory_space<vmem>>, vector<1x32xf32>
    %107 = vector.extract_strided_slice %104 {offsets = [15, 0, 0], sizes = [1, 16, 32], strides = [1, 1, 1]} : vector<16x16x32xf32> to vector<1x16x32xf32>
    %108 = vector.extract_strided_slice %104 {offsets = [0, 0, 0], sizes = [1, 16, 32], strides = [1, 1, 1]} : vector<16x16x32xf32> to vector<1x16x32xf32>
    %109 = tpu.concatenate %107, %104, %108 in 0 : vector<1x16x32xf32>, vector<16x16x32xf32>, vector<1x16x32xf32> -> vector<18x16x32xf32>
    %110 = vector.extract_strided_slice %109 {offsets = [0, 15, 0], sizes = [18, 1, 32], strides = [1, 1, 1]} : vector<18x16x32xf32> to vector<18x1x32xf32>
    %111 = vector.extract_strided_slice %109 {offsets = [0, 0, 0], sizes = [18, 1, 32], strides = [1, 1, 1]} : vector<18x16x32xf32> to vector<18x1x32xf32>
    %112 = tpu.concatenate %110, %109, %111 in 1 : vector<18x1x32xf32>, vector<18x16x32xf32>, vector<18x1x32xf32> -> vector<18x18x32xf32>
    %113 = vector.extract_strided_slice %112 {offsets = [0, 0, 0], sizes = [16, 16, 32], strides = [1, 1, 1]} : vector<18x18x32xf32> to vector<16x16x32xf32>
    %114 = vector.extract_strided_slice %112 {offsets = [0, 1, 0], sizes = [16, 16, 32], strides = [1, 1, 1]} : vector<18x18x32xf32> to vector<16x16x32xf32>
    %115 = vector.extract_strided_slice %112 {offsets = [0, 2, 0], sizes = [16, 16, 32], strides = [1, 1, 1]} : vector<18x18x32xf32> to vector<16x16x32xf32>
    %116 = vector.extract_strided_slice %112 {offsets = [1, 0, 0], sizes = [16, 16, 32], strides = [1, 1, 1]} : vector<18x18x32xf32> to vector<16x16x32xf32>
    %117 = vector.extract_strided_slice %112 {offsets = [1, 1, 0], sizes = [16, 16, 32], strides = [1, 1, 1]} : vector<18x18x32xf32> to vector<16x16x32xf32>
    %118 = vector.extract_strided_slice %112 {offsets = [1, 2, 0], sizes = [16, 16, 32], strides = [1, 1, 1]} : vector<18x18x32xf32> to vector<16x16x32xf32>
    %119 = vector.extract_strided_slice %112 {offsets = [2, 0, 0], sizes = [16, 16, 32], strides = [1, 1, 1]} : vector<18x18x32xf32> to vector<16x16x32xf32>
    %120 = vector.extract_strided_slice %112 {offsets = [2, 1, 0], sizes = [16, 16, 32], strides = [1, 1, 1]} : vector<18x18x32xf32> to vector<16x16x32xf32>
    %121 = vector.extract_strided_slice %112 {offsets = [2, 2, 0], sizes = [16, 16, 32], strides = [1, 1, 1]} : vector<18x18x32xf32> to vector<16x16x32xf32>
    %122 = tpu.concatenate %113, %114, %115, %116, %117, %118, %119, %120, %121 in 2 : vector<16x16x32xf32>, vector<16x16x32xf32>, vector<16x16x32xf32>, vector<16x16x32xf32>, vector<16x16x32xf32>, vector<16x16x32xf32>, vector<16x16x32xf32>, vector<16x16x32xf32>, vector<16x16x32xf32> -> vector<16x16x288xf32>
    %123 = vector.shape_cast %122 : vector<16x16x288xf32> to vector<256x288xf32>
    %124 = arith.truncf %123 : vector<256x288xf32> to vector<256x288xbf16>
    %cst_34 = arith.constant dense<0.000000e+00> : vector<256x32xf32>
    %125 = tpu.matmul %124, %105, %cst_34 {dimension_numbers = #tpu.dot_dimension_numbers<[1], [0], [0], [1], [0, 0, 1, 1], [], []>} : vector<256x288xbf16>, vector<288x32xbf16>, vector<256x32xf32> -> vector<256x32xf32>
    %126 = vector.broadcast %106 : vector<1x32xf32> to vector<256x32xf32>
    %127 = arith.addf %125, %126 : vector<256x32xf32>
    %128 = vector.shape_cast %127 : vector<256x32xf32> to vector<16x16x32xf32>
    %129 = arith.addf %1, %128 : vector<16x16x32xf32>
    %c0_35 = arith.constant 0 : index
    %c0_36 = arith.constant 0 : index
    %130 = vector.load %arg10[%c0_35, %c0_36] : memref<1x32xf32, #tpu.memory_space<vmem>>, vector<1x32xf32>
    %c0_37 = arith.constant 0 : index
    %c0_38 = arith.constant 0 : index
    %131 = vector.load %arg11[%c0_37, %c0_38] : memref<1x32xf32, #tpu.memory_space<vmem>>, vector<1x32xf32>
    %132 = vector.shape_cast %129 : vector<16x16x32xf32> to vector<1x16x16x32xf32>
    %cst_39 = arith.constant dense<0.000000e+00> : vector<1xf32>
    %133 = vector.multi_reduction <add>, %132, %cst_39 [1, 2, 3] : vector<1x16x16x32xf32> to vector<1xf32>
    %134 = vector.shape_cast %133 : vector<1xf32> to vector<1x1x1x1xf32>
    %135 = vector.extract %134[0, 0, 0, 0] : f32 from vector<1x1x1x1xf32>
    %136 = arith.mulf %129, %129 : vector<16x16x32xf32>
    %137 = vector.shape_cast %136 : vector<16x16x32xf32> to vector<1x16x16x32xf32>
    %cst_40 = arith.constant dense<0.000000e+00> : vector<1xf32>
    %138 = vector.multi_reduction <add>, %137, %cst_40 [1, 2, 3] : vector<1x16x16x32xf32> to vector<1xf32>
    %139 = vector.shape_cast %138 : vector<1xf32> to vector<1x1x1x1xf32>
    %140 = vector.extract %139[0, 0, 0, 0] : f32 from vector<1x1x1x1xf32>
    %cst_41 = arith.constant 8.192000e+03 : f32
    %141 = arith.divf %135, %cst_41 : f32
    %cst_42 = arith.constant 8.192000e+03 : f32
    %142 = arith.divf %140, %cst_42 : f32
    %143 = arith.mulf %141, %141 : f32
    %144 = arith.subf %142, %143 : f32
    %cst_43 = arith.constant 0.000000e+00 : f32
    %145 = arith.maximumf %144, %cst_43 : f32
    %cst_44 = arith.constant 9.99999974E-6 : f32
    %146 = arith.addf %145, %cst_44 : f32
    %147 = math.rsqrt %146 : f32
    %148 = vector.shape_cast %130 : vector<1x32xf32> to vector<1x1x32xf32>
    %149 = vector.broadcast %147 : f32 to vector<1x1x32xf32>
    %150 = arith.mulf %148, %149 : vector<1x1x32xf32>
    %151 = vector.shape_cast %131 : vector<1x32xf32> to vector<1x1x32xf32>
    %152 = vector.broadcast %141 : f32 to vector<1x1x32xf32>
    %153 = arith.mulf %152, %150 : vector<1x1x32xf32>
    %154 = arith.subf %151, %153 : vector<1x1x32xf32>
    %155 = vector.broadcast %150 : vector<1x1x32xf32> to vector<16x16x32xf32>
    %156 = arith.mulf %129, %155 : vector<16x16x32xf32>
    %157 = vector.broadcast %154 : vector<1x1x32xf32> to vector<16x16x32xf32>
    %158 = arith.addf %156, %157 : vector<16x16x32xf32>
    %159 = vector.shape_cast %158 : vector<16x16x32xf32> to vector<256x32xf32>
    %160 = arith.truncf %159 : vector<256x32xf32> to vector<256x32xbf16>
    %c0_45 = arith.constant 0 : index
    %c0_46 = arith.constant 0 : index
    %161 = vector.load %arg12[%c0_45, %c0_46] : memref<32x32xbf16, #tpu.memory_space<vmem>>, vector<32x32xbf16>
    %cst_47 = arith.constant dense<0.000000e+00> : vector<256x32xf32>
    %162 = tpu.matmul %160, %161, %cst_47 {dimension_numbers = #tpu.dot_dimension_numbers<[1], [0], [0], [1], [0, 0, 1, 1], [], []>} : vector<256x32xbf16>, vector<32x32xbf16>, vector<256x32xf32> -> vector<256x32xf32>
    %cst_48 = arith.constant 5.000000e-01 : f32
    %163 = vector.broadcast %cst_48 : f32 to vector<256x32xf32>
    %164 = arith.mulf %163, %162 : vector<256x32xf32>
    %cst_49 = arith.constant 4.471500e-02 : f32
    %165 = vector.broadcast %cst_49 : f32 to vector<256x32xf32>
    %166 = arith.mulf %165, %162 : vector<256x32xf32>
    %167 = arith.mulf %166, %162 : vector<256x32xf32>
    %168 = arith.mulf %167, %162 : vector<256x32xf32>
    %169 = arith.addf %162, %168 : vector<256x32xf32>
    %cst_50 = arith.constant 0.797884583 : f32
    %170 = vector.broadcast %cst_50 : f32 to vector<256x32xf32>
    %171 = arith.mulf %170, %169 : vector<256x32xf32>
    %172 = math.tanh %171 : vector<256x32xf32>
    %cst_51 = arith.constant 1.000000e+00 : f32
    %173 = vector.broadcast %cst_51 : f32 to vector<256x32xf32>
    %174 = arith.addf %173, %172 : vector<256x32xf32>
    %175 = arith.mulf %164, %174 : vector<256x32xf32>
    %176 = arith.truncf %175 : vector<256x32xf32> to vector<256x32xbf16>
    %c0_52 = arith.constant 0 : index
    %c0_53 = arith.constant 0 : index
    %177 = vector.load %arg13[%c0_52, %c0_53] : memref<32x32xbf16, #tpu.memory_space<vmem>>, vector<32x32xbf16>
    %cst_54 = arith.constant dense<0.000000e+00> : vector<256x32xf32>
    %178 = tpu.matmul %176, %177, %cst_54 {dimension_numbers = #tpu.dot_dimension_numbers<[1], [0], [0], [1], [0, 0, 1, 1], [], []>} : vector<256x32xbf16>, vector<32x32xbf16>, vector<256x32xf32> -> vector<256x32xf32>
    %179 = vector.shape_cast %178 : vector<256x32xf32> to vector<16x16x32xf32>
    %180 = arith.addf %129, %179 : vector<16x16x32xf32>
    %c0_55 = arith.constant 0 : index
    %c0_56 = arith.constant 0 : index
    %c0_57 = arith.constant 0 : index
    %c0_58 = arith.constant 0 : index
    %181 = vector.load %arg14[%c0_55, %c0_56, %c0_57, %c0_58] : memref<1x16x16x32xf32, #tpu.memory_space<vmem>>, vector<1x16x16x32xf32>
    %182 = vector.shape_cast %181 : vector<1x16x16x32xf32> to vector<16x16x32xf32>
    %183 = vector.shape_cast %180 : vector<16x16x32xf32> to vector<1x16x16x32xf32>
    tpu.vector_store %arg14[%c0_55, %c0_56, %c0_57, %c0_58], %183 {strides = array<i32>} : memref<1x16x16x32xf32, #tpu.memory_space<vmem>>, vector<1x16x16x32xf32>,
    return
  }
  func.func @transform_0(%arg0: i32) -> (i32, i32, i32, i32) {
    %c0_i32 = arith.constant 0 : i32
    %c0_i32_0 = arith.constant 0 : i32
    %c0_i32_1 = arith.constant 0 : i32
    %c0_i32_2 = arith.constant 0 : i32
    return %arg0, %c0_i32, %c0_i32_0, %c0_i32_1 : i32, i32, i32, i32
  }
  func.func @transform_1(%arg0: i32) -> (i32, i32) {
    %c0_i32 = arith.constant 0 : i32
    %c0_i32_0 = arith.constant 0 : i32
    %c0_i32_1 = arith.constant 0 : i32
    return %c0_i32, %c0_i32_0 : i32, i32
  }
  func.func @transform_2(%arg0: i32) -> (i32, i32) {
    %c0_i32 = arith.constant 0 : i32
    %c0_i32_0 = arith.constant 0 : i32
    %c0_i32_1 = arith.constant 0 : i32
    return %c0_i32, %c0_i32_0 : i32, i32
  }
  func.func @transform_3(%arg0: i32) -> (i32, i32) {
    %c0_i32 = arith.constant 0 : i32
    %c0_i32_0 = arith.constant 0 : i32
    %c0_i32_1 = arith.constant 0 : i32
    return %c0_i32, %c0_i32_0 : i32, i32
  }
  func.func @transform_4(%arg0: i32) -> (i32, i32) {
    %c0_i32 = arith.constant 0 : i32
    %c0_i32_0 = arith.constant 0 : i32
    %c0_i32_1 = arith.constant 0 : i32
    return %c0_i32, %c0_i32_0 : i32, i32
  }
  func.func @transform_5(%arg0: i32) -> (i32, i32) {
    %c0_i32 = arith.constant 0 : i32
    %c0_i32_0 = arith.constant 0 : i32
    %c0_i32_1 = arith.constant 0 : i32
    return %c0_i32, %c0_i32_0 : i32, i32
  }
  func.func @transform_6(%arg0: i32) -> (i32, i32) {
    %c0_i32 = arith.constant 0 : i32
    %c0_i32_0 = arith.constant 0 : i32
    %c0_i32_1 = arith.constant 0 : i32
    return %c0_i32, %c0_i32_0 : i32, i32
  }
  func.func @transform_7(%arg0: i32) -> (i32, i32) {
    %c0_i32 = arith.constant 0 : i32
    %c0_i32_0 = arith.constant 0 : i32
    %c0_i32_1 = arith.constant 0 : i32
    return %c0_i32, %c0_i32_0 : i32, i32
  }
  func.func @transform_8(%arg0: i32) -> (i32, i32) {
    %c0_i32 = arith.constant 0 : i32
    %c0_i32_0 = arith.constant 0 : i32
    %c0_i32_1 = arith.constant 0 : i32
    return %c0_i32, %c0_i32_0 : i32, i32
  }
  func.func @transform_9(%arg0: i32) -> (i32, i32) {
    %c0_i32 = arith.constant 0 : i32
    %c0_i32_0 = arith.constant 0 : i32
    %c0_i32_1 = arith.constant 0 : i32
    return %c0_i32, %c0_i32_0 : i32, i32
  }
  func.func @transform_10(%arg0: i32) -> (i32, i32) {
    %c0_i32 = arith.constant 0 : i32
    %c0_i32_0 = arith.constant 0 : i32
    %c0_i32_1 = arith.constant 0 : i32
    return %c0_i32, %c0_i32_0 : i32, i32
  }
  func.func @transform_11(%arg0: i32) -> (i32, i32) {
    %c0_i32 = arith.constant 0 : i32
    %c0_i32_0 = arith.constant 0 : i32
    %c0_i32_1 = arith.constant 0 : i32
    return %c0_i32, %c0_i32_0 : i32, i32
  }
  func.func @transform_12(%arg0: i32) -> (i32, i32) {
    %c0_i32 = arith.constant 0 : i32
    %c0_i32_0 = arith.constant 0 : i32
    %c0_i32_1 = arith.constant 0 : i32
    return %c0_i32, %c0_i32_0 : i32, i32
  }
  func.func @transform_13(%arg0: i32) -> (i32, i32, i32, i32) {
    %c0_i32 = arith.constant 0 : i32
    %c0_i32_0 = arith.constant 0 : i32
    %c0_i32_1 = arith.constant 0 : i32
    %c0_i32_2 = arith.constant 0 : i32
    return %arg0, %c0_i32, %c0_i32_0, %c0_i32_1 : i32, i32, i32, i32
  }
}

</mosaic_0001>

<llo_original>
// kernel: dilated_residual_block_nhwc.1
$region0: #{dilated_residual_block_nhwc.1}
  #allocation0 [shape = 'u32[]', space=smem, size = 0x4, offset = 0x4, fixed_abs, tag = 'smem constant byte address 0x4 - core index']
  #allocation1 [shape = 'u32[144,128]{1,0:T(1,128)}', space=vmem, size = 0x12000, scoped, tag = 'internal scratch']
  %s0 = inlined_call_operand.vmem [shape: f32[2,16,16,32], index: 0, kind: input, shape index: {}]
  %s1 = inlined_call_operand.vmem [shape: f32[1,32], index: 1, kind: input, shape index: {}]
  %s2 = inlined_call_operand.vmem [shape: f32[1,32], index: 2, kind: input, shape index: {}]
  %s3 = inlined_call_operand.vmem [shape: bf16[288,32], index: 3, kind: input, shape index: {}]
  %s4 = inlined_call_operand.vmem [shape: f32[1,32], index: 4, kind: input, shape index: {}]
  %s5 = inlined_call_operand.vmem [shape: bf16[288,32], index: 5, kind: input, shape index: {}]
  %s6 = inlined_call_operand.vmem [shape: f32[1,32], index: 6, kind: input, shape index: {}]
  %s7 = inlined_call_operand.vmem [shape: bf16[288,32], index: 7, kind: input, shape index: {}]
  %s8 = inlined_call_operand.vmem [shape: f32[1,32], index: 8, kind: input, shape index: {}]
  %s9 = inlined_call_operand.vmem [shape: f32[1,32], index: 9, kind: input, shape index: {}]
  %s10 = inlined_call_operand.vmem [shape: f32[1,32], index: 10, kind: input, shape index: {}]
  %s11 = inlined_call_operand.vmem [shape: bf16[32,32], index: 11, kind: input, shape index: {}]
  %s12 = inlined_call_operand.vmem [shape: bf16[32,32], index: 12, kind: input, shape index: {}]
  %s13 = inlined_call_operand.hbm [shape: f32[2,16,16,32], index: 13, kind: output, shape index: {}]
  %s14 = sld [smem:[#allocation0]]
  $region85: #{dilated_residual_block_nhwc.1} parent=0
    _
  %s16 = ssub.s32 1, %s14
  %s17 = scalar_select 0, %s16, %s14
  $region1: #{dilated_residual_block_nhwc.1} parent=0
    #allocation2 [shape = 'u8[262144]{0}', space=vmem, size = 0x40000, scoped, tag = 'output window, operand 0']
    #allocation3 [shape = 's32[2]{0}', space=sflag, size = 0x8, scoped, tag = 'scoped memory for dilated_residual_block_nhwc.1']
    %18 = vsyncpa [#allocation3], 0
    %s19 = scalar_lea.sflag [#allocation3], 1
    %20 = vsyncpa %s19, 0
    loop: start=0, step=1, limit=4
    $region2: #{dilated_residual_block_nhwc.1} parent=1 // loop_pre_header
      _
    $region3: #{dilated_residual_block_nhwc.1} parent=1 // loop_header
      %s22 = sphi 0, %s26
      %p23 = scmp.ge.s32.totalorder %s22, 4
      %s32 = sphi 0, %s34
      %s35 = sphi 0, %s32
      %s36 = sphi 0, %s35
      %s52 = sphi 0, %s36
      %s56 = sphi 0, %s56
      %s58 = sphi 0, %s56
      %s59 = sphi 0, %s58
      %s73 = sphi 0, %s59
      %s77 = sphi 0, %s77
      %s79 = sphi 0, %s77
      %s80 = sphi 0, %s79
      %s94 = sphi 0, %s80
      %s98 = sphi 0, %s98
      %s100 = sphi 0, %s98
      %s101 = sphi 0, %s100
      %s115 = sphi 0, %s101
      %s119 = sphi 0, %s119
      %s121 = sphi 0, %s119
      %s122 = sphi 0, %s121
      %s136 = sphi 0, %s122
      %s140 = sphi 0, %s140
      %s142 = sphi 0, %s140
      %s143 = sphi 0, %s142
      %s157 = sphi 0, %s143
      %s161 = sphi 0, %s161
      %s163 = sphi 0, %s161
      %s164 = sphi 0, %s163
      %s178 = sphi 0, %s164
      %s182 = sphi 0, %s182
      %s184 = sphi 0, %s182
      %s185 = sphi 0, %s184
      %s199 = sphi 0, %s185
      %s203 = sphi 0, %s203
      %s205 = sphi 0, %s203
      %s206 = sphi 0, %s205
      %s220 = sphi 0, %s206
      %s224 = sphi 0, %s224
      %s226 = sphi 0, %s224
      %s227 = sphi 0, %s226
      %s241 = sphi 0, %s227
      %s245 = sphi 0, %s245
      %s247 = sphi 0, %s245
      %s248 = sphi 0, %s247
      %s262 = sphi 0, %s248
      %s266 = sphi 0, %s266
      %s268 = sphi 0, %s266
      %s269 = sphi 0, %s268
      %s283 = sphi 0, %s269
      %s287 = sphi 0, %s287
      %s289 = sphi 0, %s287
      %s290 = sphi 0, %s289
      %s304 = sphi 0, %s290
      %s310 = sphi 0, %s312
      %s313 = sphi 0, %s310
      %s314 = sphi 0, %s313
      %s330 = sphi 0, %s314
    $region4: #{dilated_residual_block_nhwc.1} parent=1 // loop_header_branch
      %25 = sbr.rel (%p23) target = $region8
    $region5: #{dilated_residual_block_nhwc.1} parent=1 // loop_body
      %s27 = ssub.s32 %s22, 1
      %s28 = ssub.s32 %s22, 2
      %s29 = sadd.s32 %s22, 1
      %s30 = ssub.s32 %s22, %s29
      %p31 = scmp.eq.s32.totalorder %s30, 0
      %s33 = sadd.s32 %s32, 1
      %s34 = scalar_select %p31, %s32, %s33
      %p37 = pneg %p31
      %p38 = scmp.eq.s32.totalorder %s22, 1
      %p39 = por %p37, %p38
      %p40 = scmp.ne.s32.totalorder %s32, %s35
      %p41 = scmp.eq.s32.totalorder %s22, 0
      %p42 = por %p40, %p41
      %p43 = scmp.ne.s32.totalorder %s32, %s35
      %p44 = scmp.eq.s32.totalorder %s27, 1
      %p45 = por %p43, %p44
      %p46 = scmp.ne.s32.totalorder %s35, %s36
      %p47 = scmp.eq.s32.totalorder %s27, 0
      %p48 = por %p46, %p47
      %p49 = scmp.ne.s32.totalorder %s35, %s36
      %p50 = scmp.eq.s32.totalorder %s28, 1
      %p51 = por %p49, %p50
      %p53 = scmp.ne.s32.totalorder %s36, %s52
      %p54 = scmp.eq.s32.totalorder %s28, 0
      %p55 = por %p53, %p54
      %s57 = sadd.s32 %s56, 1
      %p60 = scmp.eq.s32.totalorder %s22, 1
      %p61 = scmp.ne.s32.totalorder %s56, %s58
      %p62 = scmp.eq.s32.totalorder %s22, 0
      %p63 = por %p61, %p62
      %p64 = scmp.ne.s32.totalorder %s56, %s58
      %p65 = scmp.eq.s32.totalorder %s27, 1
      %p66 = por %p64, %p65
      %p67 = scmp.ne.s32.totalorder %s58, %s59
      %p68 = scmp.eq.s32.totalorder %s27, 0
      %p69 = por %p67, %p68
      %p70 = scmp.ne.s32.totalorder %s58, %s59
      %p71 = scmp.eq.s32.totalorder %s28, 1
      %p72 = por %p70, %p71
      %p74 = scmp.ne.s32.totalorder %s59, %s73
      %p75 = scmp.eq.s32.totalorder %s28, 0
      %p76 = por %p74, %p75
      %s78 = sadd.s32 %s77, 1
      %p81 = scmp.eq.s32.totalorder %s22, 1
      %p82 = scmp.ne.s32.totalorder %s77, %s79
      %p83 = scmp.eq.s32.totalorder %s22, 0
      %p84 = por %p82, %p83
      %p85 = scmp.ne.s32.totalorder %s77, %s79
      %p86 = scmp.eq.s32.totalorder %s27, 1
      %p87 = por %p85, %p86
      %p88 = scmp.ne.s32.totalorder %s79, %s80
      %p89 = scmp.eq.s32.totalorder %s27, 0
      %p90 = por %p88, %p89
      %p91 = scmp.ne.s32.totalorder %s79, %s80
      %p92 = scmp.eq.s32.totalorder %s28, 1
      %p93 = por %p91, %p92
      %p95 = scmp.ne.s32.totalorder %s80, %s94
      %p96 = scmp.eq.s32.totalorder %s28, 0
      %p97 = por %p95, %p96
      %s99 = sadd.s32 %s98, 1
      %p102 = scmp.eq.s32.totalorder %s22, 1
      %p103 = scmp.ne.s32.totalorder %s98, %s100
      %p104 = scmp.eq.s32.totalorder %s22, 0
      %p105 = por %p103, %p104
      %p106 = scmp.ne.s32.totalorder %s98, %s100
      %p107 = scmp.eq.s32.totalorder %s27, 1
      %p108 = por %p106, %p107
      %p109 = scmp.ne.s32.totalorder %s100, %s101
      %p110 = scmp.eq.s32.totalorder %s27, 0
      %p111 = por %p109, %p110
      %p112 = scmp.ne.s32.totalorder %s100, %s101
      %p113 = scmp.eq.s32.totalorder %s28, 1
      %p114 = por %p112, %p113
      %p116 = scmp.ne.s32.totalorder %s101, %s115
      %p117 = scmp.eq.s32.totalorder %s28, 0
      %p118 = por %p116, %p117
      %s120 = sadd.s32 %s119, 1
      %p123 = scmp.eq.s32.totalorder %s22, 1
      %p124 = scmp.ne.s32.totalorder %s119, %s121
      %p125 = scmp.eq.s32.totalorder %s22, 0
      %p126 = por %p124, %p125
      %p127 = scmp.ne.s32.totalorder %s119, %s121
      %p128 = scmp.eq.s32.totalorder %s27, 1
      %p129 = por %p127, %p128
      %p130 = scmp.ne.s32.totalorder %s121, %s122
      %p131 = scmp.eq.s32.totalorder %s27, 0
      %p132 = por %p130, %p131
      %p133 = scmp.ne.s32.totalorder %s121, %s122
      %p134 = scmp.eq.s32.totalorder %s28, 1
      %p135 = por %p133, %p134
      %p137 = scmp.ne.s32.totalorder %s122, %s136
      %p138 = scmp.eq.s32.totalorder %s28, 0
      %p139 = por %p137, %p138
      %s141 = sadd.s32 %s140, 1
      %p144 = scmp.eq.s32.totalorder %s22, 1
      %p145 = scmp.ne.s32.totalorder %s140, %s142
      %p146 = scmp.eq.s32.totalorder %s22, 0
      %p147 = por %p145, %p146
      %p148 = scmp.ne.s32.totalorder %s140, %s142
      %p149 = scmp.eq.s32.totalorder %s27, 1
      %p150 = por %p148, %p149
      %p151 = scmp.ne.s32.totalorder %s142, %s143
      %p152 = scmp.eq.s32.totalorder %s27, 0
      %p153 = por %p151, %p152
      %p154 = scmp.ne.s32.totalorder %s142, %s143
      %p155 = scmp.eq.s32.totalorder %s28, 1
      %p156 = por %p154, %p155
      %p158 = scmp.ne.s32.totalorder %s143, %s157
      %p159 = scmp.eq.s32.totalorder %s28, 0
      %p160 = por %p158, %p159
      %s162 = sadd.s32 %s161, 1
      %p165 = scmp.eq.s32.totalorder %s22, 1
      %p166 = scmp.ne.s32.totalorder %s161, %s163
      %p167 = scmp.eq.s32.totalorder %s22, 0
      %p168 = por %p166, %p167
      %p169 = scmp.ne.s32.totalorder %s161, %s163
      %p170 = scmp.eq.s32.totalorder %s27, 1
      %p171 = por %p169, %p170
      %p172 = scmp.ne.s32.totalorder %s163, %s164
      %p173 = scmp.eq.s32.totalorder %s27, 0
      %p174 = por %p172, %p173
      %p175 = scmp.ne.s32.totalorder %s163, %s164
      %p176 = scmp.eq.s32.totalorder %s28, 1
      %p177 = por %p175, %p176
      %p179 = scmp.ne.s32.totalorder %s164, %s178
      %p180 = scmp.eq.s32.totalorder %s28, 0
      %p181 = por %p179, %p180
      %s183 = sadd.s32 %s182, 1
      %p186 = scmp.eq.s32.totalorder %s22, 1
      %p187 = scmp.ne.s32.totalorder %s182, %s184
      %p188 = scmp.eq.s32.totalorder %s22, 0
      %p189 = por %p187, %p188
      %p190 = scmp.ne.s32.totalorder %s182, %s184
      %p191 = scmp.eq.s32.totalorder %s27, 1
      %p192 = por %p190, %p191
      %p193 = scmp.ne.s32.totalorder %s184, %s185
      %p194 = scmp.eq.s32.totalorder %s27, 0
      %p195 = por %p193, %p194
      %p196 = scmp.ne.s32.totalorder %s184, %s185
      %p197 = scmp.eq.s32.totalorder %s28, 1
      %p198 = por %p196, %p197
      %p200 = scmp.ne.s32.totalorder %s185, %s199
      %p201 = scmp.eq.s32.totalorder %s28, 0
      %p202 = por %p200, %p201
      %s204 = sadd.s32 %s203, 1
      %p207 = scmp.eq.s32.totalorder %s22, 1
      %p208 = scmp.ne.s32.totalorder %s203, %s205
      %p209 = scmp.eq.s32.totalorder %s22, 0
      %p210 = por %p208, %p209
      %p211 = scmp.ne.s32.totalorder %s203, %s205
      %p212 = scmp.eq.s32.totalorder %s27, 1
      %p213 = por %p211, %p212
      %p214 = scmp.ne.s32.totalorder %s205, %s206
      %p215 = scmp.eq.s32.totalorder %s27, 0
      %p216 = por %p214, %p215
      %p217 = scmp.ne.s32.totalorder %s205, %s206
      %p218 = scmp.eq.s32.totalorder %s28, 1
      %p219 = por %p217, %p218
      %p221 = scmp.ne.s32.totalorder %s206, %s220
      %p222 = scmp.eq.s32.totalorder %s28, 0
      %p223 = por %p221, %p222
      %s225 = sadd.s32 %s224, 1
      %p228 = scmp.eq.s32.totalorder %s22, 1
      %p229 = scmp.ne.s32.totalorder %s224, %s226
      %p230 = scmp.eq.s32.totalorder %s22, 0
      %p231 = por %p229, %p230
      %p232 = scmp.ne.s32.totalorder %s224, %s226
      %p233 = scmp.eq.s32.totalorder %s27, 1
      %p234 = por %p232, %p233
      %p235 = scmp.ne.s32.totalorder %s226, %s227
      %p236 = scmp.eq.s32.totalorder %s27, 0
      %p237 = por %p235, %p236
      %p238 = scmp.ne.s32.totalorder %s226, %s227
      %p239 = scmp.eq.s32.totalorder %s28, 1
      %p240 = por %p238, %p239
      %p242 = scmp.ne.s32.totalorder %s227, %s241
      %p243 = scmp.eq.s32.totalorder %s28, 0
      %p244 = por %p242, %p243
      %s246 = sadd.s32 %s245, 1
      %p249 = scmp.eq.s32.totalorder %s22, 1
      %p250 = scmp.ne.s32.totalorder %s245, %s247
      %p251 = scmp.eq.s32.totalorder %s22, 0
      %p252 = por %p250, %p251
      %p253 = scmp.ne.s32.totalorder %s245, %s247
      %p254 = scmp.eq.s32.totalorder %s27, 1
      %p255 = por %p253, %p254
      %p256 = scmp.ne.s32.totalorder %s247, %s248
      %p257 = scmp.eq.s32.totalorder %s27, 0
      %p258 = por %p256, %p257
      %p259 = scmp.ne.s32.totalorder %s247, %s248
      %p260 = scmp.eq.s32.totalorder %s28, 1
      %p261 = por %p259, %p260
      %p263 = scmp.ne.s32.totalorder %s248, %s262
      %p264 = scmp.eq.s32.totalorder %s28, 0
      %p265 = por %p263, %p264
      %s267 = sadd.s32 %s266, 1
      %p270 = scmp.eq.s32.totalorder %s22, 1
      %p271 = scmp.ne.s32.totalorder %s266, %s268
      %p272 = scmp.eq.s32.totalorder %s22, 0
      %p273 = por %p271, %p272
      %p274 = scmp.ne.s32.totalorder %s266, %s268
      %p275 = scmp.eq.s32.totalorder %s27, 1
      %p276 = por %p274, %p275
      %p277 = scmp.ne.s32.totalorder %s268, %s269
      %p278 = scmp.eq.s32.totalorder %s27, 0
      %p279 = por %p277, %p278
      %p280 = scmp.ne.s32.totalorder %s268, %s269
      %p281 = scmp.eq.s32.totalorder %s28, 1
      %p282 = por %p280, %p281
      %p284 = scmp.ne.s32.totalorder %s269, %s283
      %p285 = scmp.eq.s32.totalorder %s28, 0
      %p286 = por %p284, %p285
      %s288 = sadd.s32 %s287, 1
      %p291 = scmp.eq.s32.totalorder %s22, 1
      %p292 = scmp.ne.s32.totalorder %s287, %s289
      %p293 = scmp.eq.s32.totalorder %s22, 0
      %p294 = por %p292, %p293
      %p295 = scmp.ne.s32.totalorder %s287, %s289
      %p296 = scmp.eq.s32.totalorder %s27, 1
      %p297 = por %p295, %p296
      %p298 = scmp.ne.s32.totalorder %s289, %s290
      %p299 = scmp.eq.s32.totalorder %s27, 0
      %p300 = por %p298, %p299
      %p301 = scmp.ne.s32.totalorder %s289, %s290
      %p302 = scmp.eq.s32.totalorder %s28, 1
      %p303 = por %p301, %p302
      %p305 = scmp.ne.s32.totalorder %s290, %s304
      %p306 = scmp.eq.s32.totalorder %s28, 0
      %p307 = por %p305, %p306
      %s308 = ssub.s32 %s22, %s29
      %p309 = scmp.eq.s32.totalorder %s308, 0
      %s311 = sadd.s32 %s310, 1
      %s312 = scalar_select %p309, %s310, %s311
      %p315 = pneg %p309
      %p316 = scmp.eq.s32.totalorder %s22, 1
      %p317 = por %p315, %p316
      %p318 = scmp.ne.s32.totalorder %s310, %s313
      %p319 = scmp.eq.s32.totalorder %s22, 0
      %p320 = por %p318, %p319
      %p321 = scmp.ne.s32.totalorder %s310, %s313
      %p322 = scmp.eq.s32.totalorder %s27, 1
      %p323 = por %p321, %p322
      %p324 = scmp.ne.s32.totalorder %s313, %s314
      %p325 = scmp.eq.s32.totalorder %s27, 0
      %p326 = por %p324, %p325
      %p327 = scmp.ne.s32.totalorder %s313, %s314
      %p328 = scmp.eq.s32.totalorder %s28, 1
      %p329 = por %p327, %p328
      %p331 = scmp.ne.s32.totalorder %s314, %s330
      %p332 = scmp.eq.s32.totalorder %s28, 0
      %p333 = por %p331, %p332
      %p334 = scmp.le.s32.totalorder 1, %s22
      %p335 = scmp.lt.s32.totalorder %s22, 3
      %p336 = pnand %p334, %p335
      %p337 = pneg %p336
      // Predicated region
      $region9: #{dilated_residual_block_nhwc.1} parent=5 // pred_check
        _
      $region10: #{dilated_residual_block_nhwc.1} parent=5 // pred_check_branch
        %339 = sbr.rel (%p336) target = $region12
      $region11: #{dilated_residual_block_nhwc.1} parent=5 // pred_region
        %s340 = ssub.s32 %s22, 1
        // Predicated region
        $region13: #{dilated_residual_block_nhwc.1} parent=11 // pred_check
          %p341 = pneg %p69
        $region14: #{dilated_residual_block_nhwc.1} parent=11 // pred_check_branch
          %343 = sbr.rel (%p341) target = $region16
        $region15: #{dilated_residual_block_nhwc.1} parent=11 // pred_region
          _
        $region16: #{dilated_residual_block_nhwc.1} parent=11 // pred_fallthru
          _
        // Predicated region
        $region17: #{dilated_residual_block_nhwc.1} parent=11 // pred_check
          %p344 = pneg %p90
        $region18: #{dilated_residual_block_nhwc.1} parent=11 // pred_check_branch
          %346 = sbr.rel (%p344) target = $region20
        $region19: #{dilated_residual_block_nhwc.1} parent=11 // pred_region
          _
        $region20: #{dilated_residual_block_nhwc.1} parent=11 // pred_fallthru
          _
        // Predicated region
        $region21: #{dilated_residual_block_nhwc.1} parent=11 // pred_check
          %p347 = pneg %p111
        $region22: #{dilated_residual_block_nhwc.1} parent=11 // pred_check_branch
          %349 = sbr.rel (%p347) target = $region24
        $region23: #{dilated_residual_block_nhwc.1} parent=11 // pred_region
          _
        $region24: #{dilated_residual_block_nhwc.1} parent=11 // pred_fallthru
          _
        // Predicated region
        $region25: #{dilated_residual_block_nhwc.1} parent=11 // pred_check
          %p350 = pneg %p132
        $region26: #{dilated_residual_block_nhwc.1} parent=11 // pred_check_branch
          %352 = sbr.rel (%p350) target = $region28
        $region27: #{dilated_residual_block_nhwc.1} parent=11 // pred_region
          _
        $region28: #{dilated_residual_block_nhwc.1} parent=11 // pred_fallthru
          _
        // Predicated region
        $region29: #{dilated_residual_block_nhwc.1} parent=11 // pred_check
          %p353 = pneg %p153
        $region30: #{dilated_residual_block_nhwc.1} parent=11 // pred_check_branch
          %355 = sbr.rel (%p353) target = $region32
        $region31: #{dilated_residual_block_nhwc.1} parent=11 // pred_region
          _
        $region32: #{dilated_residual_block_nhwc.1} parent=11 // pred_fallthru
          _
        // Predicated region
        $region33: #{dilated_residual_block_nhwc.1} parent=11 // pred_check
          %p356 = pneg %p174
        $region34: #{dilated_residual_block_nhwc.1} parent=11 // pred_check_branch
          %358 = sbr.rel (%p356) target = $region36
        $region35: #{dilated_residual_block_nhwc.1} parent=11 // pred_region
          _
        $region36: #{dilated_residual_block_nhwc.1} parent=11 // pred_fallthru
          _
        // Predicated region
        $region37: #{dilated_residual_block_nhwc.1} parent=11 // pred_check
          %p359 = pneg %p195
        $region38: #{dilated_residual_block_nhwc.1} parent=11 // pred_check_branch
          %361 = sbr.rel (%p359) target = $region40
        $region39: #{dilated_residual_block_nhwc.1} parent=11 // pred_region
          _
        $region40: #{dilated_residual_block_nhwc.1} parent=11 // pred_fallthru
          _
        // Predicated region
        $region41: #{dilated_residual_block_nhwc.1} parent=11 // pred_check
          %p362 = pneg %p216
        $region42: #{dilated_residual_block_nhwc.1} parent=11 // pred_check_branch
          %364 = sbr.rel (%p362) target = $region44
        $region43: #{dilated_residual_block_nhwc.1} parent=11 // pred_region
          _
        $region44: #{dilated_residual_block_nhwc.1} parent=11 // pred_fallthru
          _
        // Predicated region
        $region45: #{dilated_residual_block_nhwc.1} parent=11 // pred_check
          %p365 = pneg %p237
        $region46: #{dilated_residual_block_nhwc.1} parent=11 // pred_check_branch
          %367 = sbr.rel (%p365) target = $region48
        $region47: #{dilated_residual_block_nhwc.1} parent=11 // pred_region
          _
        $region48: #{dilated_residual_block_nhwc.1} parent=11 // pred_fallthru
          _
        // Predicated region
        $region49: #{dilated_residual_block_nhwc.1} parent=11 // pred_check
          %p368 = pneg %p258
        $region50: #{dilated_residual_block_nhwc.1} parent=11 // pred_check_branch
          %370 = sbr.rel (%p368) target = $region52
        $region51: #{dilated_residual_block_nhwc.1} parent=11 // pred_region
          _
        $region52: #{dilated_residual_block_nhwc.1} parent=11 // pred_fallthru
          _
        // Predicated region
        $region53: #{dilated_residual_block_nhwc.1} parent=11 // pred_check
          %p371 = pneg %p279
        $region54: #{dilated_residual_block_nhwc.1} parent=11 // pred_check_branch
          %373 = sbr.rel (%p371) target = $region56
        $region55: #{dilated_residual_block_nhwc.1} parent=11 // pred_region
          _
        $region56: #{dilated_residual_block_nhwc.1} parent=11 // pred_fallthru
          _
        // Predicated region
        $region57: #{dilated_residual_block_nhwc.1} parent=11 // pred_check
          %p374 = pneg %p300
        $region58: #{dilated_residual_block_nhwc.1} parent=11 // pred_check_branch
          %376 = sbr.rel (%p374) target = $region60
        $region59: #{dilated_residual_block_nhwc.1} parent=11 // pred_region
          _
        $region60: #{dilated_residual_block_nhwc.1} parent=11 // pred_fallthru
          _
      $region12: #{dilated_residual_block_nhwc.1} parent=5 // pred_fallthru
        _
      %p377 = scmp.lt.s32.totalorder %s22, 2
      // Predicated region
      $region61: #{dilated_residual_block_nhwc.1} parent=5 // pred_check
        %p378 = pneg %p377
      $region62: #{dilated_residual_block_nhwc.1} parent=5 // pred_check_branch
        %380 = sbr.rel (%p378) target = $region64
      $region63: #{dilated_residual_block_nhwc.1} parent=5 // pred_region
        // Predicated region
        $region65: #{dilated_residual_block_nhwc.1} parent=63 // pred_check
          %p381 = pneg %p42
        $region66: #{dilated_residual_block_nhwc.1} parent=63 // pred_check_branch
          %383 = sbr.rel (%p381) target = $region68
        $region67: #{dilated_residual_block_nhwc.1} parent=63 // pred_region
          %p384 = scmp.lt.s32.totalorder %s22, 1
          %s385 = scalar_select %p384, %s22, 1
          %s386 = smul.addr %s385, 32
          %s387 = smul.addr %s386, 8
          %s388 = scalar_lea.vmem %s0, %s387
        $region68: #{dilated_residual_block_nhwc.1} parent=63 // pred_fallthru
          _
      $region64: #{dilated_residual_block_nhwc.1} parent=5 // pred_fallthru
        _
      %p389 = scmp.le.s32.totalorder 1, %s22
      %p390 = scmp.lt.s32.totalorder %s22, 3
      %p391 = pnand %p389, %p390
      %p392 = pneg %p391
      // Predicated region
      $region69: #{dilated_residual_block_nhwc.1} parent=5 // pred_check
        _
      $region70: #{dilated_residual_block_nhwc.1} parent=5 // pred_check_branch
        %394 = sbr.rel (%p391) target = $region72
      $region71: #{dilated_residual_block_nhwc.1} parent=5 // pred_region
        %s395 = ssub.s32 %s22, 1
        %p396 = scmp.lt.s32.totalorder %s27, 1
        %s397 = scalar_select %p396, %s27, 1
        %s398 = smul.addr %s397, 32
        %s399 = smul.addr %s398, 8
        %s400 = scalar_lea.vmem %s0, %s399
        %p401 = pneg %p48
        %p402 = pneg %p45
        %p403 = pneg %p69
        %p404 = pneg %p66
        %p405 = pneg %p90
        %p406 = pneg %p87
        %p407 = pneg %p111
        %p408 = pneg %p108
        %p409 = pneg %p132
        %p410 = pneg %p129
        %p411 = pneg %p153
        %p412 = pneg %p150
        %p413 = pneg %p174
        %p414 = pneg %p171
        %p415 = pneg %p195
        %p416 = pneg %p192
        %p417 = pneg %p216
        %p418 = pneg %p213
        %p419 = pneg %p237
        %p420 = pneg %p234
        %p421 = pneg %p258
        %p422 = pneg %p255
        %p423 = pneg %p279
        %p424 = pneg %p276
        %p425 = pneg %p300
        %p426 = pneg %p297
        %p427 = pneg %p326
        %p428 = pneg %p323
        %s429 = sand.u32 %s313, 1
        %s430 = scalar_lea.sflag [#allocation3], %s429
        %s431 = sand.u32 %s313, 1
        %s432 = smul.addr %s431, 256
        %s433 = scalar_lea.vmem [#allocation2], %s432
        %p434 = scmp.lt.s32.totalorder %s27, 1
        %s435 = scalar_select %p434, %s27, 1
        %s436 = smul.addr %s435, 32
        %s437 = smul.addr %s436, 8
        %s438 = scalar_lea.vmem %s0, %s437
        %v440 = vld [vmem:[%s438] sm:$0xff]
        %v441 = vld [vmem:[%s438 + $0x8] sm:$0xff]
        %v442 = vld [vmem:[%s438 + $0x10] sm:$0xff]
        %v443 = vld [vmem:[%s438 + $0x18] sm:$0xff]
        %v444 = vld [vmem:[%s438 + $0x20] sm:$0xff]
        %v445 = vld [vmem:[%s438 + $0x28] sm:$0xff]
        %v446 = vld [vmem:[%s438 + $0x30] sm:$0xff]
        %v447 = vld [vmem:[%s438 + $0x38] sm:$0xff]
        %v448 = vld [vmem:[%s438 + $0x40] sm:$0xff]
        %v449 = vld [vmem:[%s438 + $0x48] sm:$0xff]
        %v450 = vld [vmem:[%s438 + $0x50] sm:$0xff]
        %v451 = vld [vmem:[%s438 + $0x58] sm:$0xff]
        %v452 = vld [vmem:[%s438 + $0x60] sm:$0xff]
        %v453 = vld [vmem:[%s438 + $0x68] sm:$0xff]
        %v454 = vld [vmem:[%s438 + $0x70] sm:$0xff]
        %v455 = vld [vmem:[%s438 + $0x78] sm:$0xff]
        %v456 = vld [vmem:[%s438 + $0x80] sm:$0xff]
        %v457 = vld [vmem:[%s438 + $0x88] sm:$0xff]
        %v458 = vld [vmem:[%s438 + $0x90] sm:$0xff]
        %v459 = vld [vmem:[%s438 + $0x98] sm:$0xff]
        %v460 = vld [vmem:[%s438 + $0xa0] sm:$0xff]
        %v461 = vld [vmem:[%s438 + $0xa8] sm:$0xff]
        %v462 = vld [vmem:[%s438 + $0xb0] sm:$0xff]
        %v463 = vld [vmem:[%s438 + $0xb8] sm:$0xff]
        %v464 = vld [vmem:[%s438 + $0xc0] sm:$0xff]
        %v465 = vld [vmem:[%s438 + $0xc8] sm:$0xff]
        %v466 = vld [vmem:[%s438 + $0xd0] sm:$0xff]
        %v467 = vld [vmem:[%s438 + $0xd8] sm:$0xff]
        %v468 = vld [vmem:[%s438 + $0xe0] sm:$0xff]
        %v469 = vld [vmem:[%s438 + $0xe8] sm:$0xff]
        %v470 = vld [vmem:[%s438 + $0xf0] sm:$0xff]
        %v471 = vld [vmem:[%s438 + $0xf8] sm:$0xff]
        %v472 = vld [vmem:[%s1] sm:$0x1]
        %v473 = vld [vmem:[%s2] sm:$0x1]
        %vm474 = vcmask 261120
        %v475 = vsel %vm474, %v440, 0.0
        %v476 = vsel %vm474, %v441, 0.0
        %v477 = vadd.f32 %v475, %v476
        %v478 = vsel %vm474, %v442, 0.0
        %v479 = vadd.f32 %v477, %v478
        %v480 = vsel %vm474, %v443, 0.0
        %v481 = vadd.f32 %v479, %v480
        %v482 = vsel %vm474, %v444, 0.0
        %v483 = vadd.f32 %v481, %v482
        %v484 = vsel %vm474, %v445, 0.0
        %v485 = vadd.f32 %v483, %v484
        %v486 = vsel %vm474, %v446, 0.0
        %v487 = vadd.f32 %v485, %v486
        %v488 = vsel %vm474, %v447, 0.0
        %v489 = vadd.f32 %v487, %v488
        %v490 = vsel %vm474, %v448, 0.0
        %v491 = vadd.f32 %v489, %v490
        %v492 = vsel %vm474, %v449, 0.0
        %v493 = vadd.f32 %v491, %v492
        %v494 = vsel %vm474, %v450, 0.0
        %v495 = vadd.f32 %v493, %v494
        %v496 = vsel %vm474, %v451, 0.0
        %v497 = vadd.f32 %v495, %v496
        %v498 = vsel %vm474, %v452, 0.0
        %v499 = vadd.f32 %v497, %v498
        %v500 = vsel %vm474, %v453, 0.0
        %v501 = vadd.f32 %v499, %v500
        %v502 = vsel %vm474, %v454, 0.0
        %v503 = vadd.f32 %v501, %v502
        %v504 = vsel %vm474, %v455, 0.0
        %v505 = vadd.f32 %v503, %v504
        %v506 = vsel %vm474, %v456, 0.0
        %v507 = vadd.f32 %v505, %v506
        %v508 = vsel %vm474, %v457, 0.0
        %v509 = vadd.f32 %v507, %v508
        %v510 = vsel %vm474, %v458, 0.0
        %v511 = vadd.f32 %v509, %v510
        %v512 = vsel %vm474, %v459, 0.0
        %v513 = vadd.f32 %v511, %v512
        %v514 = vsel %vm474, %v460, 0.0
        %v515 = vadd.f32 %v513, %v514
        %v516 = vsel %vm474, %v461, 0.0
        %v517 = vadd.f32 %v515, %v516
        %v518 = vsel %vm474, %v462, 0.0
        %v519 = vadd.f32 %v517, %v518
        %v520 = vsel %vm474, %v463, 0.0
        %v521 = vadd.f32 %v519, %v520
        %v522 = vsel %vm474, %v464, 0.0
        %v523 = vadd.f32 %v521, %v522
        %v524 = vsel %vm474, %v465, 0.0
        %v525 = vadd.f32 %v523, %v524
        %v526 = vsel %vm474, %v466, 0.0
        %v527 = vadd.f32 %v525, %v526
        %v528 = vsel %vm474, %v467, 0.0
        %v529 = vadd.f32 %v527, %v528
        %v530 = vsel %vm474, %v468, 0.0
        %v531 = vadd.f32 %v529, %v530
        %v532 = vsel %vm474, %v469, 0.0
        %v533 = vadd.f32 %v531, %v532
        %v534 = vsel %vm474, %v470, 0.0
        %v535 = vadd.f32 %v533, %v534
        %v536 = vsel %vm474, %v471, 0.0
        %v537 = vadd.f32 %v535, %v536
        %538 = vadd.xlane.f32.xlu0 %v537
        %v539 = vpop.xlane.xlu0 %538
        %v540 = vrot.slane %v539, 4
        %v541 = vadd.f32 %v539, %v540
        %v542 = vrot.slane %v541, 2
        %v543 = vadd.f32 %v541, %v542
        %v544 = vrot.slane %v543, 1
        %v545 = vadd.f32 %v543, %v544
        %s546 = vtos %v545
        %v547 = vmul.f32 %v440, %v440
        %v548 = vmul.f32 %v441, %v441
        %v549 = vmul.f32 %v442, %v442
        %v550 = vmul.f32 %v443, %v443
        %v551 = vmul.f32 %v444, %v444
        %v552 = vmul.f32 %v445, %v445
        %v553 = vmul.f32 %v446, %v446
        %v554 = vmul.f32 %v447, %v447
        %v555 = vmul.f32 %v448, %v448
        %v556 = vmul.f32 %v449, %v449
        %v557 = vmul.f32 %v450, %v450
        %v558 = vmul.f32 %v451, %v451
        %v559 = vmul.f32 %v452, %v452
        %v560 = vmul.f32 %v453, %v453
        %v561 = vmul.f32 %v454, %v454
        %v562 = vmul.f32 %v455, %v455
        %v563 = vmul.f32 %v456, %v456
        %v564 = vmul.f32 %v457, %v457
        %v565 = vmul.f32 %v458, %v458
        %v566 = vmul.f32 %v459, %v459
        %v567 = vmul.f32 %v460, %v460
        %v568 = vmul.f32 %v461, %v461
        %v569 = vmul.f32 %v462, %v462
        %v570 = vmul.f32 %v463, %v463
        %v571 = vmul.f32 %v464, %v464
        %v572 = vmul.f32 %v465, %v465
        %v573 = vmul.f32 %v466, %v466
        %v574 = vmul.f32 %v467, %v467
        %v575 = vmul.f32 %v468, %v468
        %v576 = vmul.f32 %v469, %v469
        %v577 = vmul.f32 %v470, %v470
        %v578 = vmul.f32 %v471, %v471
        %v579 = vsel %vm474, %v547, 0.0
        %v580 = vsel %vm474, %v548, 0.0
        %v581 = vadd.f32 %v579, %v580
        %v582 = vsel %vm474, %v549, 0.0
        %v583 = vadd.f32 %v581, %v582
        %v584 = vsel %vm474, %v550, 0.0
        %v585 = vadd.f32 %v583, %v584
        %v586 = vsel %vm474, %v551, 0.0
        %v587 = vadd.f32 %v585, %v586
        %v588 = vsel %vm474, %v552, 0.0
        %v589 = vadd.f32 %v587, %v588
        %v590 = vsel %vm474, %v553, 0.0
        %v591 = vadd.f32 %v589, %v590
        %v592 = vsel %vm474, %v554, 0.0
        %v593 = vadd.f32 %v591, %v592
        %v594 = vsel %vm474, %v555, 0.0
        %v595 = vadd.f32 %v593, %v594
        %v596 = vsel %vm474, %v556, 0.0
        %v597 = vadd.f32 %v595, %v596
        %v598 = vsel %vm474, %v557, 0.0
        %v599 = vadd.f32 %v597, %v598
        %v600 = vsel %vm474, %v558, 0.0
        %v601 = vadd.f32 %v599, %v600
        %v602 = vsel %vm474, %v559, 0.0
        %v603 = vadd.f32 %v601, %v602
        %v604 = vsel %vm474, %v560, 0.0
        %v605 = vadd.f32 %v603, %v604
        %v606 = vsel %vm474, %v561, 0.0
        %v607 = vadd.f32 %v605, %v606
        %v608 = vsel %vm474, %v562, 0.0
        %v609 = vadd.f32 %v607, %v608
        %v610 = vsel %vm474, %v563, 0.0
        %v611 = vadd.f32 %v609, %v610
        %v612 = vsel %vm474, %v564, 0.0
        %v613 = vadd.f32 %v611, %v612
        %v614 = vsel %vm474, %v565, 0.0
        %v615 = vadd.f32 %v613, %v614
        %v616 = vsel %vm474, %v566, 0.0
        %v617 = vadd.f32 %v615, %v616
        %v618 = vsel %vm474, %v567, 0.0
        %v619 = vadd.f32 %v617, %v618
        %v620 = vsel %vm474, %v568, 0.0
        %v621 = vadd.f32 %v619, %v620
        %v622 = vsel %vm474, %v569, 0.0
        %v623 = vadd.f32 %v621, %v622
        %v624 = vsel %vm474, %v570, 0.0
        %v625 = vadd.f32 %v623, %v624
        %v626 = vsel %vm474, %v571, 0.0
        %v627 = vadd.f32 %v625, %v626
        %v628 = vsel %vm474, %v572, 0.0
        %v629 = vadd.f32 %v627, %v628
        %v630 = vsel %vm474, %v573, 0.0
        %v631 = vadd.f32 %v629, %v630
        %v632 = vsel %vm474, %v574, 0.0
        %v633 = vadd.f32 %v631, %v632
        %v634 = vsel %vm474, %v575, 0.0
        %v635 = vadd.f32 %v633, %v634
        %v636 = vsel %vm474, %v576, 0.0
        %v637 = vadd.f32 %v635, %v636
        %v638 = vsel %vm474, %v577, 0.0
        %v639 = vadd.f32 %v637, %v638
        %v640 = vsel %vm474, %v578, 0.0
        %v641 = vadd.f32 %v639, %v640
        %642 = vadd.xlane.f32.xlu0 %v641
        %v643 = vpop.xlane.xlu0 %642
        %v644 = vrot.slane %v643, 4
        %v645 = vadd.f32 %v643, %v644
        %v646 = vrot.slane %v645, 2
        %v647 = vadd.f32 %v645, %v646
        %v648 = vrot.slane %v647, 1
        %v649 = vadd.f32 %v647, %v648
        %s650 = vtos %v649
        %v651 = vrcp.pop 8192.0
        %s652 = vtos %v651
        %s653 = smul.f32 %s546, %s652
        %v654 = vrcp.pop 8192.0
        %s655 = vtos %v654
        %s656 = smul.f32 %s650, %s655
        %s657 = smul.f32 %s653, %s653
        %s658 = ssub.f32 %s656, %s657
        %s659 = smax.f32 %s658, 0.0
        %s660 = sadd.f32 %s659, 1e-05
        %v661 = vstv %s660
        %v662 = vrsqrt.pop %v661
        %s663 = vtos %v662
        %v664 = vstv %s663
        %v665 = vmul.f32 %v472, %v664
        %v666 = vstv %s653
        %v667 = vmul.f32 %v666, %v665
        %v668 = vsub.f32 %v473, %v667
        %v670 = vlaneseq
        %v671 = vshrl.u32 %v670, 7
        %v672 = vsub.s32 0, %v671
        %v673 = vrot.slane %v665, %v672
        %v675 = vmul.f32 %v440, %v673
        %v676 = vmul.f32 %v441, %v673
        %v677 = vmul.f32 %v442, %v673
        %v678 = vmul.f32 %v443, %v673
        %v679 = vmul.f32 %v444, %v673
        %v680 = vmul.f32 %v445, %v673
        %v681 = vmul.f32 %v446, %v673
        %v682 = vmul.f32 %v447, %v673
        %v683 = vmul.f32 %v448, %v673
        %v684 = vmul.f32 %v449, %v673
        %v685 = vmul.f32 %v450, %v673
        %v686 = vmul.f32 %v451, %v673
        %v687 = vmul.f32 %v452, %v673
        %v688 = vmul.f32 %v453, %v673
        %v689 = vmul.f32 %v454, %v673
        %v690 = vmul.f32 %v455, %v673
        %v691 = vmul.f32 %v456, %v673
        %v692 = vmul.f32 %v457, %v673
        %v693 = vmul.f32 %v458, %v673
        %v694 = vmul.f32 %v459, %v673
        %v695 = vmul.f32 %v460, %v673
        %v696 = vmul.f32 %v461, %v673
        %v697 = vmul.f32 %v462, %v673
        %v698 = vmul.f32 %v463, %v673
        %v699 = vmul.f32 %v464, %v673
        %v700 = vmul.f32 %v465, %v673
        %v701 = vmul.f32 %v466, %v673
        %v702 = vmul.f32 %v467, %v673
        %v703 = vmul.f32 %v468, %v673
        %v704 = vmul.f32 %v469, %v673
        %v705 = vmul.f32 %v470, %v673
        %v706 = vmul.f32 %v471, %v673
        %v708 = vlaneseq
        %v709 = vshrl.u32 %v708, 7
        %v710 = vsub.s32 0, %v709
        %v711 = vrot.slane %v668, %v710
        %v713 = vadd.f32 %v675, %v711
        %v714 = vadd.f32 %v676, %v711
        %v715 = vadd.f32 %v677, %v711
        %v716 = vadd.f32 %v678, %v711
        %v717 = vadd.f32 %v679, %v711
        %v718 = vadd.f32 %v680, %v711
        %v719 = vadd.f32 %v681, %v711
        %v720 = vadd.f32 %v682, %v711
        %v721 = vadd.f32 %v683, %v711
        %v722 = vadd.f32 %v684, %v711
        %v723 = vadd.f32 %v685, %v711
        %v724 = vadd.f32 %v686, %v711
        %v725 = vadd.f32 %v687, %v711
        %v726 = vadd.f32 %v688, %v711
        %v727 = vadd.f32 %v689, %v711
        %v728 = vadd.f32 %v690, %v711
        %v729 = vadd.f32 %v691, %v711
        %v730 = vadd.f32 %v692, %v711
        %v731 = vadd.f32 %v693, %v711
        %v732 = vadd.f32 %v694, %v711
        %v733 = vadd.f32 %v695, %v711
        %v734 = vadd.f32 %v696, %v711
        %v735 = vadd.f32 %v697, %v711
        %v736 = vadd.f32 %v698, %v711
        %v737 = vadd.f32 %v699, %v711
        %v738 = vadd.f32 %v700, %v711
        %v739 = vadd.f32 %v701, %v711
        %v740 = vadd.f32 %v702, %v711
        %v741 = vadd.f32 %v703, %v711
        %v742 = vadd.f32 %v704, %v711
        %v743 = vadd.f32 %v705, %v711
        %v744 = vadd.f32 %v706, %v711
        %v745 = vld [vmem:[%s3] sm:$0xf]
        %v746 = vld [vmem:[%s3 + $0x4] sm:$0xf]
        %v747 = vld [vmem:[%s3 + $0x8] sm:$0xf]
        %v748 = vld [vmem:[%s3 + $0xc] sm:$0xf]
        %v749 = vld [vmem:[%s3 + $0x10] sm:$0xf]
        %v750 = vld [vmem:[%s3 + $0x14] sm:$0xf]
        %v751 = vld [vmem:[%s3 + $0x18] sm:$0xf]
        %v752 = vld [vmem:[%s3 + $0x1c] sm:$0xf]
        %v753 = vld [vmem:[%s3 + $0x20] sm:$0xf]
        %v754 = vld [vmem:[%s3 + $0x24] sm:$0xf]
        %v755 = vld [vmem:[%s3 + $0x28] sm:$0xf]
        %v756 = vld [vmem:[%s3 + $0x2c] sm:$0xf]
        %v757 = vld [vmem:[%s3 + $0x30] sm:$0xf]
        %v758 = vld [vmem:[%s3 + $0x34] sm:$0xf]
        %v759 = vld [vmem:[%s3 + $0x38] sm:$0xf]
        %v760 = vld [vmem:[%s3 + $0x3c] sm:$0xf]
        %v761 = vld [vmem:[%s3 + $0x40] sm:$0xf]
        %v762 = vld [vmem:[%s3 + $0x44] sm:$0xf]
        %v763 = vld [vmem:[%s3 + $0x48] sm:$0xf]
        %v764 = vld [vmem:[%s3 + $0x4c] sm:$0xf]
        %v765 = vld [vmem:[%s3 + $0x50] sm:$0xf]
        %v766 = vld [vmem:[%s3 + $0x54] sm:$0xf]
        %v767 = vld [vmem:[%s3 + $0x58] sm:$0xf]
        %v768 = vld [vmem:[%s3 + $0x5c] sm:$0xf]
        %v769 = vld [vmem:[%s3 + $0x60] sm:$0xf]
        %v770 = vld [vmem:[%s3 + $0x64] sm:$0xf]
        %v771 = vld [vmem:[%s3 + $0x68] sm:$0xf]
        %v772 = vld [vmem:[%s3 + $0x6c] sm:$0xf]
        %v773 = vld [vmem:[%s3 + $0x70] sm:$0xf]
        %v774 = vld [vmem:[%s3 + $0x74] sm:$0xf]
        %v775 = vld [vmem:[%s3 + $0x78] sm:$0xf]
        %v776 = vld [vmem:[%s3 + $0x7c] sm:$0xf]
        %v777 = vld [vmem:[%s3 + $0x80] sm:$0xf]
        %v778 = vld [vmem:[%s3 + $0x84] sm:$0xf]
        %v779 = vld [vmem:[%s3 + $0x88] sm:$0xf]
        %v780 = vld [vmem:[%s3 + $0x8c] sm:$0xf]
        %v781 = vld [vmem:[%s4] sm:$0x1]
        %v798 = vrot.slane %v744, 7
        %v799 = vrot.slane %v714, 7
        %v800 = vrot.slane %v716, 7
        %v801 = vrot.slane %v718, 7
        %v802 = vrot.slane %v720, 7
        %v803 = vrot.slane %v722, 7
        %v804 = vrot.slane %v724, 7
        %v805 = vrot.slane %v726, 7
        %v806 = vrot.slane %v728, 7
        %v807 = vrot.slane %v730, 7
        %v808 = vrot.slane %v732, 7
        %v809 = vrot.slane %v734, 7
        %v810 = vrot.slane %v736, 7
        %v811 = vrot.slane %v738, 7
        %v812 = vrot.slane %v740, 7
        %v813 = vrot.slane %v742, 7
        %vm846 = vcmask 1040384
        %v847 = vrot.slane %v743, 7
        %v848 = vsel %vm846, %v847, %v798
        %v849 = vrot.slane %v713, 7
        %v850 = vsel %vm846, %v849, %v799
        %v851 = vrot.slane %v715, 7
        %v852 = vsel %vm846, %v851, %v800
        %v853 = vrot.slane %v717, 7
        %v854 = vsel %vm846, %v853, %v801
        %v855 = vrot.slane %v719, 7
        %v856 = vsel %vm846, %v855, %v802
        %v857 = vrot.slane %v721, 7
        %v858 = vsel %vm846, %v857, %v803
        %v859 = vrot.slane %v723, 7
        %v860 = vsel %vm846, %v859, %v804
        %v861 = vrot.slane %v725, 7
        %v862 = vsel %vm846, %v861, %v805
        %v863 = vrot.slane %v727, 7
        %v864 = vsel %vm846, %v863, %v806
        %v865 = vrot.slane %v729, 7
        %v866 = vsel %vm846, %v865, %v807
        %v867 = vrot.slane %v731, 7
        %v868 = vsel %vm846, %v867, %v808
        %v869 = vrot.slane %v733, 7
        %v870 = vsel %vm846, %v869, %v809
        %v871 = vrot.slane %v735, 7
        %v872 = vsel %vm846, %v871, %v810
        %v873 = vrot.slane %v737, 7
        %v874 = vsel %vm846, %v873, %v811
        %v875 = vrot.slane %v739, 7
        %v876 = vsel %vm846, %v875, %v812
        %v877 = vrot.slane %v741, 7
        %v878 = vsel %vm846, %v877, %v813
        %v911 = vsel %vm846, %v798, %v847
        %v912 = vsel %vm846, %v799, %v849
        %v913 = vsel %vm846, %v800, %v851
        %v914 = vsel %vm846, %v801, %v853
        %v915 = vsel %vm846, %v802, %v855
        %v916 = vsel %vm846, %v803, %v857
        %v917 = vsel %vm846, %v804, %v859
        %v918 = vsel %vm846, %v805, %v861
        %v919 = vsel %vm846, %v806, %v863
        %v920 = vsel %vm846, %v807, %v865
        %v921 = vsel %vm846, %v808, %v867
        %v922 = vsel %vm846, %v809, %v869
        %v923 = vsel %vm846, %v810, %v871
        %v924 = vsel %vm846, %v811, %v873
        %v925 = vsel %vm846, %v812, %v875
        %v926 = vsel %vm846, %v813, %v877
        %vm943 = vcmask 1046528
        %v944 = vrot.slane %v911, 1
        %v945 = vrot.slane %v848, 1
        %v946 = vsel %vm943, %v944, %v945
        %v947 = vsel %vm943, %v945, %v944
        %v948 = vrot.slane %v912, 1
        %v949 = vrot.slane %v850, 1
        %v950 = vsel %vm943, %v948, %v949
        %v951 = vsel %vm943, %v949, %v948
        %v952 = vrot.slane %v913, 1
        %v953 = vrot.slane %v852, 1
        %v954 = vsel %vm943, %v952, %v953
        %v955 = vsel %vm943, %v953, %v952
        %v956 = vrot.slane %v914, 1
        %v957 = vrot.slane %v854, 1
        %v958 = vsel %vm943, %v956, %v957
        %v959 = vsel %vm943, %v957, %v956
        %v960 = vrot.slane %v915, 1
        %v961 = vrot.slane %v856, 1
        %v962 = vsel %vm943, %v960, %v961
        %v963 = vsel %vm943, %v961, %v960
        %v964 = vrot.slane %v916, 1
        %v965 = vrot.slane %v858, 1
        %v966 = vsel %vm943, %v964, %v965
        %v967 = vsel %vm943, %v965, %v964
        %v968 = vrot.slane %v917, 1
        %v969 = vrot.slane %v860, 1
        %v970 = vsel %vm943, %v968, %v969
        %v971 = vsel %vm943, %v969, %v968
        %v972 = vrot.slane %v918, 1
        %v973 = vrot.slane %v862, 1
        %v974 = vsel %vm943, %v972, %v973
        %v975 = vsel %vm943, %v973, %v972
        %v976 = vrot.slane %v919, 1
        %v977 = vrot.slane %v864, 1
        %v978 = vsel %vm943, %v976, %v977
        %v979 = vsel %vm943, %v977, %v976
        %v980 = vrot.slane %v920, 1
        %v981 = vrot.slane %v866, 1
        %v982 = vsel %vm943, %v980, %v981
        %v983 = vsel %vm943, %v981, %v980
        %v984 = vrot.slane %v921, 1
        %v985 = vrot.slane %v868, 1
        %v986 = vsel %vm943, %v984, %v985
        %v987 = vsel %vm943, %v985, %v984
        %v988 = vrot.slane %v922, 1
        %v989 = vrot.slane %v870, 1
        %v990 = vsel %vm943, %v988, %v989
        %v991 = vsel %vm943, %v989, %v988
        %v992 = vrot.slane %v923, 1
        %v993 = vrot.slane %v872, 1
        %v994 = vsel %vm943, %v992, %v993
        %v995 = vsel %vm943, %v993, %v992
        %v996 = vrot.slane %v924, 1
        %v997 = vrot.slane %v874, 1
        %v998 = vsel %vm943, %v996, %v997
        %v999 = vsel %vm943, %v997, %v996
        %v1000 = vrot.slane %v925, 1
        %v1001 = vrot.slane %v876, 1
        %v1002 = vsel %vm943, %v1000, %v1001
        %v1003 = vsel %vm943, %v1001, %v1000
        %v1004 = vrot.slane %v926, 1
        %v1005 = vrot.slane %v878, 1
        %v1006 = vsel %vm943, %v1004, %v1005
        %v1007 = vsel %vm943, %v1005, %v1004
        %1008 = vrot.lane.b32.xlu0 %v946, 32
        %v1009 = vpop.permute.xlu0 %1008
        %1010 = vrot.lane.b32.xlu0 %v947, 32
        %v1011 = vpop.permute.xlu0 %1010
        %1012 = vrot.lane.b32.xlu0 %v950, 32
        %v1013 = vpop.permute.xlu0 %1012
        %1014 = vrot.lane.b32.xlu0 %v951, 32
        %v1015 = vpop.permute.xlu0 %1014
        %1016 = vrot.lane.b32.xlu0 %v954, 32
        %v1017 = vpop.permute.xlu0 %1016
        %1018 = vrot.lane.b32.xlu0 %v955, 32
        %v1019 = vpop.permute.xlu0 %1018
        %1020 = vrot.lane.b32.xlu0 %v958, 32
        %v1021 = vpop.permute.xlu0 %1020
        %1022 = vrot.lane.b32.xlu0 %v959, 32
        %v1023 = vpop.permute.xlu0 %1022
        %1024 = vrot.lane.b32.xlu0 %v962, 32
        %v1025 = vpop.permute.xlu0 %1024
        %1026 = vrot.lane.b32.xlu0 %v963, 32
        %v1027 = vpop.permute.xlu0 %1026
        %1028 = vrot.lane.b32.xlu0 %v966, 32
        %v1029 = vpop.permute.xlu0 %1028
        %1030 = vrot.lane.b32.xlu0 %v967, 32
        %v1031 = vpop.permute.xlu0 %1030
        %1032 = vrot.lane.b32.xlu0 %v970, 32
        %v1033 = vpop.permute.xlu0 %1032
        %1034 = vrot.lane.b32.xlu0 %v971, 32
        %v1035 = vpop.permute.xlu0 %1034
        %1036 = vrot.lane.b32.xlu0 %v974, 32
        %v1037 = vpop.permute.xlu0 %1036
        %1038 = vrot.lane.b32.xlu0 %v975, 32
        %v1039 = vpop.permute.xlu0 %1038
        %1040 = vrot.lane.b32.xlu0 %v978, 32
        %v1041 = vpop.permute.xlu0 %1040
        %1042 = vrot.lane.b32.xlu0 %v979, 32
        %v1043 = vpop.permute.xlu0 %1042
        %1044 = vrot.lane.b32.xlu0 %v982, 32
        %v1045 = vpop.permute.xlu0 %1044
        %1046 = vrot.lane.b32.xlu0 %v983, 32
        %v1047 = vpop.permute.xlu0 %1046
        %1048 = vrot.lane.b32.xlu0 %v986, 32
        %v1049 = vpop.permute.xlu0 %1048
        %1050 = vrot.lane.b32.xlu0 %v987, 32
        %v1051 = vpop.permute.xlu0 %1050
        %1052 = vrot.lane.b32.xlu0 %v990, 32
        %v1053 = vpop.permute.xlu0 %1052
        %1054 = vrot.lane.b32.xlu0 %v991, 32
        %v1055 = vpop.permute.xlu0 %1054
        %1056 = vrot.lane.b32.xlu0 %v994, 32
        %v1057 = vpop.permute.xlu0 %1056
        %1058 = vrot.lane.b32.xlu0 %v995, 32
        %v1059 = vpop.permute.xlu0 %1058
        %1060 = vrot.lane.b32.xlu0 %v998, 32
        %v1061 = vpop.permute.xlu0 %1060
        %1062 = vrot.lane.b32.xlu0 %v999, 32
        %v1063 = vpop.permute.xlu0 %1062
        %1064 = vrot.lane.b32.xlu0 %v1002, 32
        %v1065 = vpop.permute.xlu0 %1064
        %1066 = vrot.lane.b32.xlu0 %v1003, 32
        %v1067 = vpop.permute.xlu0 %1066
        %1068 = vrot.lane.b32.xlu0 %v1006, 32
        %v1069 = vpop.permute.xlu0 %1068
        %1070 = vrot.lane.b32.xlu0 %v1007, 32
        %v1071 = vpop.permute.xlu0 %1070
        %vm1104 = vcmask 1045504
        %v1105 = vrot.slane %v911, 2
        %v1106 = vrot.slane %v848, 2
        %v1107 = vsel %vm1104, %v1105, %v1106
        %v1108 = vsel %vm1104, %v1106, %v1105
        %v1109 = vrot.slane %v912, 2
        %v1110 = vrot.slane %v850, 2
        %v1111 = vsel %vm1104, %v1109, %v1110
        %v1112 = vsel %vm1104, %v1110, %v1109
        %v1113 = vrot.slane %v913, 2
        %v1114 = vrot.slane %v852, 2
        %v1115 = vsel %vm1104, %v1113, %v1114
        %v1116 = vsel %vm1104, %v1114, %v1113
        %v1117 = vrot.slane %v914, 2
        %v1118 = vrot.slane %v854, 2
        %v1119 = vsel %vm1104, %v1117, %v1118
        %v1120 = vsel %vm1104, %v1118, %v1117
        %v1121 = vrot.slane %v915, 2
        %v1122 = vrot.slane %v856, 2
        %v1123 = vsel %vm1104, %v1121, %v1122
        %v1124 = vsel %vm1104, %v1122, %v1121
        %v1125 = vrot.slane %v916, 2
        %v1126 = vrot.slane %v858, 2
        %v1127 = vsel %vm1104, %v1125, %v1126
        %v1128 = vsel %vm1104, %v1126, %v1125
        %v1129 = vrot.slane %v917, 2
        %v1130 = vrot.slane %v860, 2
        %v1131 = vsel %vm1104, %v1129, %v1130
        %v1132 = vsel %vm1104, %v1130, %v1129
        %v1133 = vrot.slane %v918, 2
        %v1134 = vrot.slane %v862, 2
        %v1135 = vsel %vm1104, %v1133, %v1134
        %v1136 = vsel %vm1104, %v1134, %v1133
        %v1137 = vrot.slane %v919, 2
        %v1138 = vrot.slane %v864, 2
        %v1139 = vsel %vm1104, %v1137, %v1138
        %v1140 = vsel %vm1104, %v1138, %v1137
        %v1141 = vrot.slane %v920, 2
        %v1142 = vrot.slane %v866, 2
        %v1143 = vsel %vm1104, %v1141, %v1142
        %v1144 = vsel %vm1104, %v1142, %v1141
        %v1145 = vrot.slane %v921, 2
        %v1146 = vrot.slane %v868, 2
        %v1147 = vsel %vm1104, %v1145, %v1146
        %v1148 = vsel %vm1104, %v1146, %v1145
        %v1149 = vrot.slane %v922, 2
        %v1150 = vrot.slane %v870, 2
        %v1151 = vsel %vm1104, %v1149, %v1150
        %v1152 = vsel %vm1104, %v1150, %v1149
        %v1153 = vrot.slane %v923, 2
        %v1154 = vrot.slane %v872, 2
        %v1155 = vsel %vm1104, %v1153, %v1154
        %v1156 = vsel %vm1104, %v1154, %v1153
        %v1157 = vrot.slane %v924, 2
        %v1158 = vrot.slane %v874, 2
        %v1159 = vsel %vm1104, %v1157, %v1158
        %v1160 = vsel %vm1104, %v1158, %v1157
        %v1161 = vrot.slane %v925, 2
        %v1162 = vrot.slane %v876, 2
        %v1163 = vsel %vm1104, %v1161, %v1162
        %v1164 = vsel %vm1104, %v1162, %v1161
        %v1165 = vrot.slane %v926, 2
        %v1166 = vrot.slane %v878, 2
        %v1167 = vsel %vm1104, %v1165, %v1166
        %v1168 = vsel %vm1104, %v1166, %v1165
        %1169 = vrot.lane.b32.xlu0 %v1107, 64
        %v1170 = vpop.permute.xlu0 %1169
        %1171 = vrot.lane.b32.xlu0 %v1108, 64
        %v1172 = vpop.permute.xlu0 %1171
        %1173 = vrot.lane.b32.xlu0 %v1111, 64
        %v1174 = vpop.permute.xlu0 %1173
        %1175 = vrot.lane.b32.xlu0 %v1112, 64
        %v1176 = vpop.permute.xlu0 %1175
        %1177 = vrot.lane.b32.xlu0 %v1115, 64
        %v1178 = vpop.permute.xlu0 %1177
        %1179 = vrot.lane.b32.xlu0 %v1116, 64
        %v1180 = vpop.permute.xlu0 %1179
        %1181 = vrot.lane.b32.xlu0 %v1119, 64
        %v1182 = vpop.permute.xlu0 %1181
        %1183 = vrot.lane.b32.xlu0 %v1120, 64
        %v1184 = vpop.permute.xlu0 %1183
        %1185 = vrot.lane.b32.xlu0 %v1123, 64
        %v1186 = vpop.permute.xlu0 %1185
        %1187 = vrot.lane.b32.xlu0 %v1124, 64
        %v1188 = vpop.permute.xlu0 %1187
        %1189 = vrot.lane.b32.xlu0 %v1127, 64
        %v1190 = vpop.permute.xlu0 %1189
        %1191 = vrot.lane.b32.xlu0 %v1128, 64
        %v1192 = vpop.permute.xlu0 %1191
        %1193 = vrot.lane.b32.xlu0 %v1131, 64
        %v1194 = vpop.permute.xlu0 %1193
        %1195 = vrot.lane.b32.xlu0 %v1132, 64
        %v1196 = vpop.permute.xlu0 %1195
        %1197 = vrot.lane.b32.xlu0 %v1135, 64
        %v1198 = vpop.permute.xlu0 %1197
        %1199 = vrot.lane.b32.xlu0 %v1136, 64
        %v1200 = vpop.permute.xlu0 %1199
        %1201 = vrot.lane.b32.xlu0 %v1139, 64
        %v1202 = vpop.permute.xlu0 %1201
        %1203 = vrot.lane.b32.xlu0 %v1140, 64
        %v1204 = vpop.permute.xlu0 %1203
        %1205 = vrot.lane.b32.xlu0 %v1143, 64
        %v1206 = vpop.permute.xlu0 %1205
        %1207 = vrot.lane.b32.xlu0 %v1144, 64
        %v1208 = vpop.permute.xlu0 %1207
        %1209 = vrot.lane.b32.xlu0 %v1147, 64
        %v1210 = vpop.permute.xlu0 %1209
        %1211 = vrot.lane.b32.xlu0 %v1148, 64
        %v1212 = vpop.permute.xlu0 %1211
        %1213 = vrot.lane.b32.xlu0 %v1151, 64
        %v1214 = vpop.permute.xlu0 %1213
        %1215 = vrot.lane.b32.xlu0 %v1152, 64
        %v1216 = vpop.permute.xlu0 %1215
        %1217 = vrot.lane.b32.xlu0 %v1155, 64
        %v1218 = vpop.permute.xlu0 %1217
        %1219 = vrot.lane.b32.xlu0 %v1156, 64
        %v1220 = vpop.permute.xlu0 %1219
        %1221 = vrot.lane.b32.xlu0 %v1159, 64
        %v1222 = vpop.permute.xlu0 %1221
        %1223 = vrot.lane.b32.xlu0 %v1160, 64
        %v1224 = vpop.permute.xlu0 %1223
        %1225 = vrot.lane.b32.xlu0 %v1163, 64
        %v1226 = vpop.permute.xlu0 %1225
        %1227 = vrot.lane.b32.xlu0 %v1164, 64
        %v1228 = vpop.permute.xlu0 %1227
        %1229 = vrot.lane.b32.xlu0 %v1167, 64
        %v1230 = vpop.permute.xlu0 %1229
        %1231 = vrot.lane.b32.xlu0 %v1168, 64
        %v1232 = vpop.permute.xlu0 %1231
        %1265 = vrot.lane.b32.xlu0 %v912, 96
        %v1266 = vpop.permute.xlu0 %1265
        %1267 = vrot.lane.b32.xlu0 %v850, 96
        %v1268 = vpop.permute.xlu0 %1267
        %1269 = vrot.lane.b32.xlu0 %v913, 96
        %v1270 = vpop.permute.xlu0 %1269
        %1271 = vrot.lane.b32.xlu0 %v852, 96
        %v1272 = vpop.permute.xlu0 %1271
        %1273 = vrot.lane.b32.xlu0 %v914, 96
        %v1274 = vpop.permute.xlu0 %1273
        %1275 = vrot.lane.b32.xlu0 %v854, 96
        %v1276 = vpop.permute.xlu0 %1275
        %1277 = vrot.lane.b32.xlu0 %v915, 96
        %v1278 = vpop.permute.xlu0 %1277
        %1279 = vrot.lane.b32.xlu0 %v856, 96
        %v1280 = vpop.permute.xlu0 %1279
        %1281 = vrot.lane.b32.xlu0 %v916, 96
        %v1282 = vpop.permute.xlu0 %1281
        %1283 = vrot.lane.b32.xlu0 %v858, 96
        %v1284 = vpop.permute.xlu0 %1283
        %1285 = vrot.lane.b32.xlu0 %v917, 96
        %v1286 = vpop.permute.xlu0 %1285
        %1287 = vrot.lane.b32.xlu0 %v860, 96
        %v1288 = vpop.permute.xlu0 %1287
        %1289 = vrot.lane.b32.xlu0 %v918, 96
        %v1290 = vpop.permute.xlu0 %1289
        %1291 = vrot.lane.b32.xlu0 %v862, 96
        %v1292 = vpop.permute.xlu0 %1291
        %1293 = vrot.lane.b32.xlu0 %v919, 96
        %v1294 = vpop.permute.xlu0 %1293
        %1295 = vrot.lane.b32.xlu0 %v864, 96
        %v1296 = vpop.permute.xlu0 %1295
        %1297 = vrot.lane.b32.xlu0 %v920, 96
        %v1298 = vpop.permute.xlu0 %1297
        %1299 = vrot.lane.b32.xlu0 %v866, 96
        %v1300 = vpop.permute.xlu0 %1299
        %1301 = vrot.lane.b32.xlu0 %v921, 96
        %v1302 = vpop.permute.xlu0 %1301
        %1303 = vrot.lane.b32.xlu0 %v868, 96
        %v1304 = vpop.permute.xlu0 %1303
        %1305 = vrot.lane.b32.xlu0 %v922, 96
        %v1306 = vpop.permute.xlu0 %1305
        %1307 = vrot.lane.b32.xlu0 %v870, 96
        %v1308 = vpop.permute.xlu0 %1307
        %1309 = vrot.lane.b32.xlu0 %v923, 96
        %v1310 = vpop.permute.xlu0 %1309
        %1311 = vrot.lane.b32.xlu0 %v872, 96
        %v1312 = vpop.permute.xlu0 %1311
        %1313 = vrot.lane.b32.xlu0 %v924, 96
        %v1314 = vpop.permute.xlu0 %1313
        %1315 = vrot.lane.b32.xlu0 %v874, 96
        %v1316 = vpop.permute.xlu0 %1315
        %1317 = vrot.lane.b32.xlu0 %v925, 96
        %v1318 = vpop.permute.xlu0 %1317
        %1319 = vrot.lane.b32.xlu0 %v876, 96
        %v1320 = vpop.permute.xlu0 %1319
        %1321 = vrot.lane.b32.xlu0 %v926, 96
        %v1322 = vpop.permute.xlu0 %1321
        %1323 = vrot.lane.b32.xlu0 %v878, 96
        %v1324 = vpop.permute.xlu0 %1323
        %1325 = vrot.lane.b32.xlu0 %v911, 96
        %v1326 = vpop.permute.xlu0 %1325
        %1327 = vrot.lane.b32.xlu0 %v848, 96
        %v1328 = vpop.permute.xlu0 %1327
        %1393 = vrot.lane.b32.xlu0 %v1111, 32
        %v1394 = vpop.permute.xlu0 %1393
        %1395 = vrot.lane.b32.xlu0 %v1112, 32
        %v1396 = vpop.permute.xlu0 %1395
        %1397 = vrot.lane.b32.xlu0 %v1115, 32
        %v1398 = vpop.permute.xlu0 %1397
        %1399 = vrot.lane.b32.xlu0 %v1116, 32
        %v1400 = vpop.permute.xlu0 %1399
        %1401 = vrot.lane.b32.xlu0 %v1119, 32
        %v1402 = vpop.permute.xlu0 %1401
        %1403 = vrot.lane.b32.xlu0 %v1120, 32
        %v1404 = vpop.permute.xlu0 %1403
        %1405 = vrot.lane.b32.xlu0 %v1123, 32
        %v1406 = vpop.permute.xlu0 %1405
        %1407 = vrot.lane.b32.xlu0 %v1124, 32
        %v1408 = vpop.permute.xlu0 %1407
        %1409 = vrot.lane.b32.xlu0 %v1127, 32
        %v1410 = vpop.permute.xlu0 %1409
        %1411 = vrot.lane.b32.xlu0 %v1128, 32
        %v1412 = vpop.permute.xlu0 %1411
        %1413 = vrot.lane.b32.xlu0 %v1131, 32
        %v1414 = vpop.permute.xlu0 %1413
        %1415 = vrot.lane.b32.xlu0 %v1132, 32
        %v1416 = vpop.permute.xlu0 %1415
        %1417 = vrot.lane.b32.xlu0 %v1135, 32
        %v1418 = vpop.permute.xlu0 %1417
        %1419 = vrot.lane.b32.xlu0 %v1136, 32
        %v1420 = vpop.permute.xlu0 %1419
        %1421 = vrot.lane.b32.xlu0 %v1139, 32
        %v1422 = vpop.permute.xlu0 %1421
        %1423 = vrot.lane.b32.xlu0 %v1140, 32
        %v1424 = vpop.permute.xlu0 %1423
        %1425 = vrot.lane.b32.xlu0 %v1143, 32
        %v1426 = vpop.permute.xlu0 %1425
        %1427 = vrot.lane.b32.xlu0 %v1144, 32
        %v1428 = vpop.permute.xlu0 %1427
        %1429 = vrot.lane.b32.xlu0 %v1147, 32
        %v1430 = vpop.permute.xlu0 %1429
        %1431 = vrot.lane.b32.xlu0 %v1148, 32
        %v1432 = vpop.permute.xlu0 %1431
        %1433 = vrot.lane.b32.xlu0 %v1151, 32
        %v1434 = vpop.permute.xlu0 %1433
        %1435 = vrot.lane.b32.xlu0 %v1152, 32
        %v1436 = vpop.permute.xlu0 %1435
        %1437 = vrot.lane.b32.xlu0 %v1155, 32
        %v1438 = vpop.permute.xlu0 %1437
        %1439 = vrot.lane.b32.xlu0 %v1156, 32
        %v1440 = vpop.permute.xlu0 %1439
        %1441 = vrot.lane.b32.xlu0 %v1159, 32
        %v1442 = vpop.permute.xlu0 %1441
        %1443 = vrot.lane.b32.xlu0 %v1160, 32
        %v1444 = vpop.permute.xlu0 %1443
        %1445 = vrot.lane.b32.xlu0 %v1163, 32
        %v1446 = vpop.permute.xlu0 %1445
        %1447 = vrot.lane.b32.xlu0 %v1164, 32
        %v1448 = vpop.permute.xlu0 %1447
        %1449 = vrot.lane.b32.xlu0 %v1167, 32
        %v1450 = vpop.permute.xlu0 %1449
        %1451 = vrot.lane.b32.xlu0 %v1168, 32
        %v1452 = vpop.permute.xlu0 %1451
        %1453 = vrot.lane.b32.xlu0 %v1107, 32
        %v1454 = vpop.permute.xlu0 %1453
        %1455 = vrot.lane.b32.xlu0 %v1108, 32
        %v1456 = vpop.permute.xlu0 %1455
        %1489 = vrot.lane.b32.xlu0 %v913, 64
        %v1490 = vpop.permute.xlu0 %1489
        %1491 = vrot.lane.b32.xlu0 %v852, 64
        %v1492 = vpop.permute.xlu0 %1491
        %1493 = vrot.lane.b32.xlu0 %v914, 64
        %v1494 = vpop.permute.xlu0 %1493
        %1495 = vrot.lane.b32.xlu0 %v854, 64
        %v1496 = vpop.permute.xlu0 %1495
        %1497 = vrot.lane.b32.xlu0 %v915, 64
        %v1498 = vpop.permute.xlu0 %1497
        %1499 = vrot.lane.b32.xlu0 %v856, 64
        %v1500 = vpop.permute.xlu0 %1499
        %1501 = vrot.lane.b32.xlu0 %v916, 64
        %v1502 = vpop.permute.xlu0 %1501
        %1503 = vrot.lane.b32.xlu0 %v858, 64
        %v1504 = vpop.permute.xlu0 %1503
        %1505 = vrot.lane.b32.xlu0 %v917, 64
        %v1506 = vpop.permute.xlu0 %1505
        %1507 = vrot.lane.b32.xlu0 %v860, 64
        %v1508 = vpop.permute.xlu0 %1507
        %1509 = vrot.lane.b32.xlu0 %v918, 64
        %v1510 = vpop.permute.xlu0 %1509
        %1511 = vrot.lane.b32.xlu0 %v862, 64
        %v1512 = vpop.permute.xlu0 %1511
        %1513 = vrot.lane.b32.xlu0 %v919, 64
        %v1514 = vpop.permute.xlu0 %1513
        %1515 = vrot.lane.b32.xlu0 %v864, 64
        %v1516 = vpop.permute.xlu0 %1515
        %1517 = vrot.lane.b32.xlu0 %v920, 64
        %v1518 = vpop.permute.xlu0 %1517
        %1519 = vrot.lane.b32.xlu0 %v866, 64
        %v1520 = vpop.permute.xlu0 %1519
        %1521 = vrot.lane.b32.xlu0 %v921, 64
        %v1522 = vpop.permute.xlu0 %1521
        %1523 = vrot.lane.b32.xlu0 %v868, 64
        %v1524 = vpop.permute.xlu0 %1523
        %1525 = vrot.lane.b32.xlu0 %v922, 64
        %v1526 = vpop.permute.xlu0 %1525
        %1527 = vrot.lane.b32.xlu0 %v870, 64
        %v1528 = vpop.permute.xlu0 %1527
        %1529 = vrot.lane.b32.xlu0 %v923, 64
        %v1530 = vpop.permute.xlu0 %1529
        %1531 = vrot.lane.b32.xlu0 %v872, 64
        %v1532 = vpop.permute.xlu0 %1531
        %1533 = vrot.lane.b32.xlu0 %v924, 64
        %v1534 = vpop.permute.xlu0 %1533
        %1535 = vrot.lane.b32.xlu0 %v874, 64
        %v1536 = vpop.permute.xlu0 %1535
        %1537 = vrot.lane.b32.xlu0 %v925, 64
        %v1538 = vpop.permute.xlu0 %1537
        %1539 = vrot.lane.b32.xlu0 %v876, 64
        %v1540 = vpop.permute.xlu0 %1539
        %1541 = vrot.lane.b32.xlu0 %v926, 64
        %v1542 = vpop.permute.xlu0 %1541
        %1543 = vrot.lane.b32.xlu0 %v878, 64
        %v1544 = vpop.permute.xlu0 %1543
        %1545 = vrot.lane.b32.xlu0 %v911, 64
        %v1546 = vpop.permute.xlu0 %1545
        %1547 = vrot.lane.b32.xlu0 %v848, 64
        %v1548 = vpop.permute.xlu0 %1547
        %1549 = vrot.lane.b32.xlu0 %v912, 64
        %v1550 = vpop.permute.xlu0 %1549
        %1551 = vrot.lane.b32.xlu0 %v850, 64
        %v1552 = vpop.permute.xlu0 %1551
        %1585 = vrot.lane.b32.xlu0 %v954, 96
        %v1586 = vpop.permute.xlu0 %1585
        %1587 = vrot.lane.b32.xlu0 %v955, 96
        %v1588 = vpop.permute.xlu0 %1587
        %1589 = vrot.lane.b32.xlu0 %v958, 96
        %v1590 = vpop.permute.xlu0 %1589
        %1591 = vrot.lane.b32.xlu0 %v959, 96
        %v1592 = vpop.permute.xlu0 %1591
        %1593 = vrot.lane.b32.xlu0 %v962, 96
        %v1594 = vpop.permute.xlu0 %1593
        %1595 = vrot.lane.b32.xlu0 %v963, 96
        %v1596 = vpop.permute.xlu0 %1595
        %1597 = vrot.lane.b32.xlu0 %v966, 96
        %v1598 = vpop.permute.xlu0 %1597
        %1599 = vrot.lane.b32.xlu0 %v967, 96
        %v1600 = vpop.permute.xlu0 %1599
        %1601 = vrot.lane.b32.xlu0 %v970, 96
        %v1602 = vpop.permute.xlu0 %1601
        %1603 = vrot.lane.b32.xlu0 %v971, 96
        %v1604 = vpop.permute.xlu0 %1603
        %1605 = vrot.lane.b32.xlu0 %v974, 96
        %v1606 = vpop.permute.xlu0 %1605
        %1607 = vrot.lane.b32.xlu0 %v975, 96
        %v1608 = vpop.permute.xlu0 %1607
        %1609 = vrot.lane.b32.xlu0 %v978, 96
        %v1610 = vpop.permute.xlu0 %1609
        %1611 = vrot.lane.b32.xlu0 %v979, 96
        %v1612 = vpop.permute.xlu0 %1611
        %1613 = vrot.lane.b32.xlu0 %v982, 96
        %v1614 = vpop.permute.xlu0 %1613
        %1615 = vrot.lane.b32.xlu0 %v983, 96
        %v1616 = vpop.permute.xlu0 %1615
        %1617 = vrot.lane.b32.xlu0 %v986, 96
        %v1618 = vpop.permute.xlu0 %1617
        %1619 = vrot.lane.b32.xlu0 %v987, 96
        %v1620 = vpop.permute.xlu0 %1619
        %1621 = vrot.lane.b32.xlu0 %v990, 96
        %v1622 = vpop.permute.xlu0 %1621
        %1623 = vrot.lane.b32.xlu0 %v991, 96
        %v1624 = vpop.permute.xlu0 %1623
        %1625 = vrot.lane.b32.xlu0 %v994, 96
        %v1626 = vpop.permute.xlu0 %1625
        %1627 = vrot.lane.b32.xlu0 %v995, 96
        %v1628 = vpop.permute.xlu0 %1627
        %1629 = vrot.lane.b32.xlu0 %v998, 96
        %v1630 = vpop.permute.xlu0 %1629
        %1631 = vrot.lane.b32.xlu0 %v999, 96
        %v1632 = vpop.permute.xlu0 %1631
        %1633 = vrot.lane.b32.xlu0 %v1002, 96
        %v1634 = vpop.permute.xlu0 %1633
        %1635 = vrot.lane.b32.xlu0 %v1003, 96
        %v1636 = vpop.permute.xlu0 %1635
        %1637 = vrot.lane.b32.xlu0 %v1006, 96
        %v1638 = vpop.permute.xlu0 %1637
        %1639 = vrot.lane.b32.xlu0 %v1007, 96
        %v1640 = vpop.permute.xlu0 %1639
        %1641 = vrot.lane.b32.xlu0 %v946, 96
        %v1642 = vpop.permute.xlu0 %1641
        %1643 = vrot.lane.b32.xlu0 %v947, 96
        %v1644 = vpop.permute.xlu0 %1643
        %1645 = vrot.lane.b32.xlu0 %v950, 96
        %v1646 = vpop.permute.xlu0 %1645
        %1647 = vrot.lane.b32.xlu0 %v951, 96
        %v1648 = vpop.permute.xlu0 %1647
        %v1713 = vsel %vm474, %v911, %v1009
        %v1714 = vsel %vm474, %v848, %v1011
        %v1715 = vsel %vm474, %v912, %v1013
        %v1716 = vsel %vm474, %v850, %v1015
        %v1717 = vsel %vm474, %v913, %v1017
        %v1718 = vsel %vm474, %v852, %v1019
        %v1719 = vsel %vm474, %v914, %v1021
        %v1720 = vsel %vm474, %v854, %v1023
        %v1721 = vsel %vm474, %v915, %v1025
        %v1722 = vsel %vm474, %v856, %v1027
        %v1723 = vsel %vm474, %v916, %v1029
        %v1724 = vsel %vm474, %v858, %v1031
        %v1725 = vsel %vm474, %v917, %v1033
        %v1726 = vsel %vm474, %v860, %v1035
        %v1727 = vsel %vm474, %v918, %v1037
        %v1728 = vsel %vm474, %v862, %v1039
        %v1729 = vsel %vm474, %v919, %v1041
        %v1730 = vsel %vm474, %v864, %v1043
        %v1731 = vsel %vm474, %v920, %v1045
        %v1732 = vsel %vm474, %v866, %v1047
        %v1733 = vsel %vm474, %v921, %v1049
        %v1734 = vsel %vm474, %v868, %v1051
        %v1735 = vsel %vm474, %v922, %v1053
        %v1736 = vsel %vm474, %v870, %v1055
        %v1737 = vsel %vm474, %v923, %v1057
        %v1738 = vsel %vm474, %v872, %v1059
        %v1739 = vsel %vm474, %v924, %v1061
        %v1740 = vsel %vm474, %v874, %v1063
        %v1741 = vsel %vm474, %v925, %v1065
        %v1742 = vsel %vm474, %v876, %v1067
        %v1743 = vsel %vm474, %v926, %v1069
        %v1744 = vsel %vm474, %v878, %v1071
        %vm1745 = vcmask 523264
        %v1746 = vsel %vm1745, %v1713, %v1170
        %v1747 = vsel %vm1745, %v1714, %v1172
        %v1748 = vsel %vm1745, %v1715, %v1174
        %v1749 = vsel %vm1745, %v1716, %v1176
        %v1750 = vsel %vm1745, %v1717, %v1178
        %v1751 = vsel %vm1745, %v1718, %v1180
        %v1752 = vsel %vm1745, %v1719, %v1182
        %v1753 = vsel %vm1745, %v1720, %v1184
        %v1754 = vsel %vm1745, %v1721, %v1186
        %v1755 = vsel %vm1745, %v1722, %v1188
        %v1756 = vsel %vm1745, %v1723, %v1190
        %v1757 = vsel %vm1745, %v1724, %v1192
        %v1758 = vsel %vm1745, %v1725, %v1194
        %v1759 = vsel %vm1745, %v1726, %v1196
        %v1760 = vsel %vm1745, %v1727, %v1198
        %v1761 = vsel %vm1745, %v1728, %v1200
        %v1762 = vsel %vm1745, %v1729, %v1202
        %v1763 = vsel %vm1745, %v1730, %v1204
        %v1764 = vsel %vm1745, %v1731, %v1206
        %v1765 = vsel %vm1745, %v1732, %v1208
        %v1766 = vsel %vm1745, %v1733, %v1210
        %v1767 = vsel %vm1745, %v1734, %v1212
        %v1768 = vsel %vm1745, %v1735, %v1214
        %v1769 = vsel %vm1745, %v1736, %v1216
        %v1770 = vsel %vm1745, %v1737, %v1218
        %v1771 = vsel %vm1745, %v1738, %v1220
        %v1772 = vsel %vm1745, %v1739, %v1222
        %v1773 = vsel %vm1745, %v1740, %v1224
        %v1774 = vsel %vm1745, %v1741, %v1226
        %v1775 = vsel %vm1745, %v1742, %v1228
        %v1776 = vsel %vm1745, %v1743, %v1230
        %v1777 = vsel %vm1745, %v1744, %v1232
        %vm1778 = vcmask 785408
        %v1779 = vsel %vm1778, %v1746, %v1266
        %v1780 = vsel %vm1778, %v1747, %v1268
        %v1781 = vsel %vm1778, %v1748, %v1270
        %v1782 = vsel %vm1778, %v1749, %v1272
        %v1783 = vsel %vm1778, %v1750, %v1274
        %v1784 = vsel %vm1778, %v1751, %v1276
        %v1785 = vsel %vm1778, %v1752, %v1278
        %v1786 = vsel %vm1778, %v1753, %v1280
        %v1787 = vsel %vm1778, %v1754, %v1282
        %v1788 = vsel %vm1778, %v1755, %v1284
        %v1789 = vsel %vm1778, %v1756, %v1286
        %v1790 = vsel %vm1778, %v1757, %v1288
        %v1791 = vsel %vm1778, %v1758, %v1290
        %v1792 = vsel %vm1778, %v1759, %v1292
        %v1793 = vsel %vm1778, %v1760, %v1294
        %v1794 = vsel %vm1778, %v1761, %v1296
        %v1795 = vsel %vm1778, %v1762, %v1298
        %v1796 = vsel %vm1778, %v1763, %v1300
        %v1797 = vsel %vm1778, %v1764, %v1302
        %v1798 = vsel %vm1778, %v1765, %v1304
        %v1799 = vsel %vm1778, %v1766, %v1306
        %v1800 = vsel %vm1778, %v1767, %v1308
        %v1801 = vsel %vm1778, %v1768, %v1310
        %v1802 = vsel %vm1778, %v1769, %v1312
        %v1803 = vsel %vm1778, %v1770, %v1314
        %v1804 = vsel %vm1778, %v1771, %v1316
        %v1805 = vsel %vm1778, %v1772, %v1318
        %v1806 = vsel %vm1778, %v1773, %v1320
        %v1807 = vsel %vm1778, %v1774, %v1322
        %v1808 = vsel %vm1778, %v1775, %v1324
        %v1809 = vsel %vm1778, %v1776, %v1326
        %v1810 = vsel %vm1778, %v1777, %v1328
        %v1811 = vsel %vm474, %v950, %v1394
        %v1812 = vsel %vm474, %v951, %v1396
        %v1813 = vsel %vm474, %v954, %v1398
        %v1814 = vsel %vm474, %v955, %v1400
        %v1815 = vsel %vm474, %v958, %v1402
        %v1816 = vsel %vm474, %v959, %v1404
        %v1817 = vsel %vm474, %v962, %v1406
        %v1818 = vsel %vm474, %v963, %v1408
        %v1819 = vsel %vm474, %v966, %v1410
        %v1820 = vsel %vm474, %v967, %v1412
        %v1821 = vsel %vm474, %v970, %v1414
        %v1822 = vsel %vm474, %v971, %v1416
        %v1823 = vsel %vm474, %v974, %v1418
        %v1824 = vsel %vm474, %v975, %v1420
        %v1825 = vsel %vm474, %v978, %v1422
        %v1826 = vsel %vm474, %v979, %v1424
        %v1827 = vsel %vm474, %v982, %v1426
        %v1828 = vsel %vm474, %v983, %v1428
        %v1829 = vsel %vm474, %v986, %v1430
        %v1830 = vsel %vm474, %v987, %v1432
        %v1831 = vsel %vm474, %v990, %v1434
        %v1832 = vsel %vm474, %v991, %v1436
        %v1833 = vsel %vm474, %v994, %v1438
        %v1834 = vsel %vm474, %v995, %v1440
        %v1835 = vsel %vm474, %v998, %v1442
        %v1836 = vsel %vm474, %v999, %v1444
        %v1837 = vsel %vm474, %v1002, %v1446
        %v1838 = vsel %vm474, %v1003, %v1448
        %v1839 = vsel %vm474, %v1006, %v1450
        %v1840 = vsel %vm474, %v1007, %v1452
        %v1841 = vsel %vm474, %v946, %v1454
        %v1842 = vsel %vm474, %v947, %v1456
        %v1843 = vsel %vm1745, %v1811, %v1490
        %v1844 = vsel %vm1745, %v1812, %v1492
        %v1845 = vsel %vm1745, %v1813, %v1494
        %v1846 = vsel %vm1745, %v1814, %v1496
        %v1847 = vsel %vm1745, %v1815, %v1498
        %v1848 = vsel %vm1745, %v1816, %v1500
        %v1849 = vsel %vm1745, %v1817, %v1502
        %v1850 = vsel %vm1745, %v1818, %v1504
        %v1851 = vsel %vm1745, %v1819, %v1506
        %v1852 = vsel %vm1745, %v1820, %v1508
        %v1853 = vsel %vm1745, %v1821, %v1510
        %v1854 = vsel %vm1745, %v1822, %v1512
        %v1855 = vsel %vm1745, %v1823, %v1514
        %v1856 = vsel %vm1745, %v1824, %v1516
        %v1857 = vsel %vm1745, %v1825, %v1518
        %v1858 = vsel %vm1745, %v1826, %v1520
        %v1859 = vsel %vm1745, %v1827, %v1522
        %v1860 = vsel %vm1745, %v1828, %v1524
        %v1861 = vsel %vm1745, %v1829, %v1526
        %v1862 = vsel %vm1745, %v1830, %v1528
        %v1863 = vsel %vm1745, %v1831, %v1530
        %v1864 = vsel %vm1745, %v1832, %v1532
        %v1865 = vsel %vm1745, %v1833, %v1534
        %v1866 = vsel %vm1745, %v1834, %v1536
        %v1867 = vsel %vm1745, %v1835, %v1538
        %v1868 = vsel %vm1745, %v1836, %v1540
        %v1869 = vsel %vm1745, %v1837, %v1542
        %v1870 = vsel %vm1745, %v1838, %v1544
        %v1871 = vsel %vm1745, %v1839, %v1546
        %v1872 = vsel %vm1745, %v1840, %v1548
        %v1873 = vsel %vm1745, %v1841, %v1550
        %v1874 = vsel %vm1745, %v1842, %v1552
        %v1875 = vsel %vm1778, %v1843, %v1586
        %v1876 = vsel %vm1778, %v1844, %v1588
        %v1877 = vsel %vm1778, %v1845, %v1590
        %v1878 = vsel %vm1778, %v1846, %v1592
        %v1879 = vsel %vm1778, %v1847, %v1594
        %v1880 = vsel %vm1778, %v1848, %v1596
        %v1881 = vsel %vm1778, %v1849, %v1598
        %v1882 = vsel %vm1778, %v1850, %v1600
        %v1883 = vsel %vm1778, %v1851, %v1602
        %v1884 = vsel %vm1778, %v1852, %v1604
        %v1885 = vsel %vm1778, %v1853, %v1606
        %v1886 = vsel %vm1778, %v1854, %v1608
        %v1887 = vsel %vm1778, %v1855, %v1610
        %v1888 = vsel %vm1778, %v1856, %v1612
        %v1889 = vsel %vm1778, %v1857, %v1614
        %v1890 = vsel %vm1778, %v1858, %v1616
        %v1891 = vsel %vm1778, %v1859, %v1618
        %v1892 = vsel %vm1778, %v1860, %v1620
        %v1893 = vsel %vm1778, %v1861, %v1622
        %v1894 = vsel %vm1778, %v1862, %v1624
        %v1895 = vsel %vm1778, %v1863, %v1626
        %v1896 = vsel %vm1778, %v1864, %v1628
        %v1897 = vsel %vm1778, %v1865, %v1630
        %v1898 = vsel %vm1778, %v1866, %v1632
        %v1899 = vsel %vm1778, %v1867, %v1634
        %v1900 = vsel %vm1778, %v1868, %v1636
        %v1901 = vsel %vm1778, %v1869, %v1638
        %v1902 = vsel %vm1778, %v1870, %v1640
        %v1903 = vsel %vm1778, %v1871, %v1642
        %v1904 = vsel %vm1778, %v1872, %v1644
        %v1905 = vsel %vm1778, %v1873, %v1646
        %v1906 = vsel %vm1778, %v1874, %v1648
        %v1907 = vpack.c.bf16 %v1780, %v1779
        %v1908 = vpack.c.bf16 %v1876, %v1875
        %v1909 = vpack.c.bf16 %v1116, %v1115
        %v1910 = vpack.c.bf16 %v1782, %v1781
        %v1911 = vpack.c.bf16 %v1878, %v1877
        %v1912 = vpack.c.bf16 %v1120, %v1119
        %v1913 = vpack.c.bf16 %v1784, %v1783
        %v1914 = vpack.c.bf16 %v1880, %v1879
        %v1915 = vpack.c.bf16 %v1124, %v1123
        %v1916 = vpack.c.bf16 %v1786, %v1785
        %v1917 = vpack.c.bf16 %v1882, %v1881
        %v1918 = vpack.c.bf16 %v1128, %v1127
        %v1919 = vpack.c.bf16 %v1788, %v1787
        %v1920 = vpack.c.bf16 %v1884, %v1883
        %v1921 = vpack.c.bf16 %v1132, %v1131
        %v1922 = vpack.c.bf16 %v1790, %v1789
        %v1923 = vpack.c.bf16 %v1886, %v1885
        %v1924 = vpack.c.bf16 %v1136, %v1135
        %v1925 = vpack.c.bf16 %v1792, %v1791
        %v1926 = vpack.c.bf16 %v1888, %v1887
        %v1927 = vpack.c.bf16 %v1140, %v1139
        %v1928 = vpack.c.bf16 %v1794, %v1793
        %v1929 = vpack.c.bf16 %v1890, %v1889
        %v1930 = vpack.c.bf16 %v1144, %v1143
        %v1931 = vpack.c.bf16 %v1796, %v1795
        %v1932 = vpack.c.bf16 %v1892, %v1891
        %v1933 = vpack.c.bf16 %v1148, %v1147
        %v1934 = vpack.c.bf16 %v1798, %v1797
        %v1935 = vpack.c.bf16 %v1894, %v1893
        %v1936 = vpack.c.bf16 %v1152, %v1151
        %v1937 = vpack.c.bf16 %v1800, %v1799
        %v1938 = vpack.c.bf16 %v1896, %v1895
        %v1939 = vpack.c.bf16 %v1156, %v1155
        %v1940 = vpack.c.bf16 %v1802, %v1801
        %v1941 = vpack.c.bf16 %v1898, %v1897
        %v1942 = vpack.c.bf16 %v1160, %v1159
        %v1943 = vpack.c.bf16 %v1804, %v1803
        %v1944 = vpack.c.bf16 %v1900, %v1899
        %v1945 = vpack.c.bf16 %v1164, %v1163
        %v1946 = vpack.c.bf16 %v1806, %v1805
        %v1947 = vpack.c.bf16 %v1902, %v1901
        %v1948 = vpack.c.bf16 %v1168, %v1167
        %v1949 = vpack.c.bf16 %v1808, %v1807
        %v1950 = vpack.c.bf16 %v1904, %v1903
        %v1951 = vpack.c.bf16 %v1108, %v1107
        %v1952 = vpack.c.bf16 %v1810, %v1809
        %v1953 = vpack.c.bf16 %v1906, %v1905
        %v1954 = vpack.c.bf16 %v1112, %v1111
        %v1956 = vlaneseq
        %v1957 = vshrl.u32 %v1956, 7
        %v1958 = vsub.s32 0, %v1957
        %v1959 = vrot.slane %v781, %v1958
        %v1997 = vunpack.c.l.b16 %v745
        %v1998 = vunpack.c.l.b16 %v746
        %v1999 = vunpack.c.l.b16 %v747
        %v2000 = vunpack.c.l.b16 %v748
        %v2001 = vunpack.c.l.b16 %v749
        %v2002 = vunpack.c.l.b16 %v750
        %v2003 = vunpack.c.l.b16 %v751
        %v2004 = vunpack.c.l.b16 %v752
        %v2005 = vunpack.c.l.b16 %v753
        %v2006 = vunpack.c.l.b16 %v754
        %v2007 = vunpack.c.l.b16 %v755
        %v2008 = vunpack.c.l.b16 %v756
        %v2009 = vunpack.c.l.b16 %v757
        %v2010 = vunpack.c.l.b16 %v758
        %v2011 = vunpack.c.l.b16 %v759
        %v2012 = vunpack.c.l.b16 %v760
        %v2013 = vunpack.c.l.b16 %v761
        %v2014 = vunpack.c.l.b16 %v762
        %v2015 = vunpack.c.l.b16 %v763
        %v2016 = vunpack.c.l.b16 %v764
        %v2017 = vunpack.c.l.b16 %v765
        %v2018 = vunpack.c.l.b16 %v766
        %v2019 = vunpack.c.l.b16 %v767
        %v2020 = vunpack.c.l.b16 %v768
        %v2021 = vunpack.c.l.b16 %v769
        %v2022 = vunpack.c.l.b16 %v770
        %v2023 = vunpack.c.l.b16 %v771
        %v2024 = vunpack.c.l.b16 %v772
        %v2025 = vunpack.c.l.b16 %v773
        %v2026 = vunpack.c.l.b16 %v774
        %v2027 = vunpack.c.l.b16 %v775
        %v2028 = vunpack.c.l.b16 %v776
        %v2029 = vunpack.c.l.b16 %v777
        %v2030 = vunpack.c.l.b16 %v778
        %v2031 = vunpack.c.l.b16 %v779
        %v2032 = vunpack.c.l.b16 %v780
        %v2033 = vpack.c.b16 %v1998, %v1997
        %v2034 = vpack.c.b16 %v2000, %v1999
        %v2035 = vpack.c.b16 %v2002, %v2001
        %v2036 = vpack.c.b16 %v2004, %v2003
        %v2037 = vpack.c.b16 %v2006, %v2005
        %v2038 = vpack.c.b16 %v2008, %v2007
        %v2039 = vpack.c.b16 %v2010, %v2009
        %v2040 = vpack.c.b16 %v2012, %v2011
        %v2041 = vpack.c.b16 %v2014, %v2013
        %v2042 = vpack.c.b16 %v2016, %v2015
        %v2043 = vpack.c.b16 %v2018, %v2017
        %v2044 = vpack.c.b16 %v2020, %v2019
        %v2045 = vpack.c.b16 %v2022, %v2021
        %v2046 = vpack.c.b16 %v2024, %v2023
        %v2047 = vpack.c.b16 %v2026, %v2025
        %v2048 = vpack.c.b16 %v2028, %v2027
        %v2049 = vpack.c.b16 %v2030, %v2029
        %v2050 = vpack.c.b16 %v2032, %v2031
        %v2070 = vsel %vm474, %v1909, 0
        %v2073 = vsel %vm474, %v1912, 0
        %v2076 = vsel %vm474, %v1915, 0
        %v2079 = vsel %vm474, %v1918, 0
        %v2082 = vsel %vm474, %v1921, 0
        %v2085 = vsel %vm474, %v1924, 0
        %v2088 = vsel %vm474, %v1927, 0
        %v2091 = vsel %vm474, %v1930, 0
        %v2094 = vsel %vm474, %v1933, 0
        %v2097 = vsel %vm474, %v1936, 0
        %v2100 = vsel %vm474, %v1939, 0
        %v2103 = vsel %vm474, %v1942, 0
        %v2106 = vsel %vm474, %v1945, 0
        %v2109 = vsel %vm474, %v1948, 0
        %v2112 = vsel %vm474, %v1951, 0
        %v2115 = vsel %vm474, %v1954, 0
        %2117 = vmatprep.subr.bf16.mxu0 0
        %2118 = vmatpush1.bf16.msra.mxu0 %v2040
        %2119 = vmatprep.subr.bf16.mxu0 0
        %2120 = vmatpush1.bf16.msra.mxu0 %v2039
        %2121 = vmatprep.subr.bf16.mxu0 0
        %2122 = vmatpush1.bf16.msra.mxu0 %v2038
        %2123 = vmatprep.subr.bf16.mxu0 0
        %2124 = vmatpush1.bf16.msra.mxu0 %v2037
        %2125 = vmatprep.subr.bf16.mxu0 0
        %2126 = vmatpush1.bf16.msra.mxu0 %v2036
        %2127 = vmatprep.subr.bf16.mxu0 0
        %2128 = vmatpush1.bf16.msra.mxu0 %v2035
        %2129 = vmatprep.subr.bf16.mxu0 0
        %2130 = vmatpush1.bf16.msra.mxu0 %v2034
        %2131 = vmatprep.subr.bf16.mxu0 0
        %2132 = vmatpush1.bf16.msra.mxu0 %v2033
        %2133 = vmatprep.subr.bf16.mxu0 0
        %2134 = vmatpush2.bf16.msra.mxu0 %v2048
        %2135 = vmatprep.subr.bf16.mxu0 0
        %2136 = vmatpush2.bf16.msra.mxu0 %v2047
        %2137 = vmatprep.subr.bf16.mxu0 0
        %2138 = vmatpush2.bf16.msra.mxu0 %v2046
        %2139 = vmatprep.subr.bf16.mxu0 0
        %2140 = vmatpush2.bf16.msra.mxu0 %v2045
        %2141 = vmatprep.subr.bf16.mxu0 0
        %2142 = vmatpush2.bf16.msra.mxu0 %v2044
        %2143 = vmatprep.subr.bf16.mxu0 0
        %2144 = vmatpush2.bf16.msra.mxu0 %v2043
        %2145 = vmatprep.subr.bf16.mxu0 0
        %2146 = vmatpush2.bf16.msra.mxu0 %v2042
        %2147 = vmatprep.subr.bf16.mxu0 0
        %2148 = vmatpush2.bf16.msra.mxu0 %v2041
        %2149 = vmatprep.mubr.bf16.mxu0 %v1908
        %2150 = vmatmul.mubr.bf16.gmra.mxu0 %v1907
        %v2151 = vpop.f32.mrf.mxu0
        %v2152 = vadd.f32 %v1959, %v2151
        %v2153 = vpop.f32.mrf.mxu0
        %v2154 = vpop.f32.mrf.mxu0
        %v2155 = vadd.f32 %v1959, %v2154
        %v2156 = vpop.f32.mrf.mxu0
        %2157 = vmatprep.mubr.bf16.mxu0 %v1911
        %2158 = vmatmul.mubr.bf16.gmra.mxu0 %v1910
        %v2159 = vpop.f32.mrf.mxu0
        %v2160 = vadd.f32 %v1959, %v2159
        %v2161 = vpop.f32.mrf.mxu0
        %v2162 = vpop.f32.mrf.mxu0
        %v2163 = vadd.f32 %v1959, %v2162
        %v2164 = vpop.f32.mrf.mxu0
        %2165 = vmatprep.mubr.bf16.mxu0 %v1914
        %2166 = vmatmul.mubr.bf16.gmra.mxu0 %v1913
        %v2167 = vpop.f32.mrf.mxu0
        %v2168 = vadd.f32 %v1959, %v2167
        %v2169 = vpop.f32.mrf.mxu0
        %v2170 = vpop.f32.mrf.mxu0
        %v2171 = vadd.f32 %v1959, %v2170
        %v2172 = vpop.f32.mrf.mxu0
        %2173 = vmatprep.mubr.bf16.mxu0 %v1917
        %2174 = vmatmul.mubr.bf16.gmra.mxu0 %v1916
        %v2175 = vpop.f32.mrf.mxu0
        %v2176 = vadd.f32 %v1959, %v2175
        %v2177 = vpop.f32.mrf.mxu0
        %v2178 = vpop.f32.mrf.mxu0
        %v2179 = vadd.f32 %v1959, %v2178
        %v2180 = vpop.f32.mrf.mxu0
        %2181 = vmatprep.mubr.bf16.mxu0 %v1920
        %2182 = vmatmul.mubr.bf16.gmra.mxu0 %v1919
        %v2183 = vpop.f32.mrf.mxu0
        %v2184 = vadd.f32 %v1959, %v2183
        %v2185 = vpop.f32.mrf.mxu0
        %v2186 = vpop.f32.mrf.mxu0
        %v2187 = vadd.f32 %v1959, %v2186
        %v2188 = vpop.f32.mrf.mxu0
        %2189 = vmatprep.mubr.bf16.mxu0 %v1923
        %2190 = vmatmul.mubr.bf16.gmra.mxu0 %v1922
        %v2191 = vpop.f32.mrf.mxu0
        %v2192 = vadd.f32 %v1959, %v2191
        %v2193 = vpop.f32.mrf.mxu0
        %v2194 = vpop.f32.mrf.mxu0
        %v2195 = vadd.f32 %v1959, %v2194
        %v2196 = vpop.f32.mrf.mxu0
        %2197 = vmatprep.mubr.bf16.mxu0 %v1926
        %2198 = vmatmul.mubr.bf16.gmra.mxu0 %v1925
        %v2199 = vpop.f32.mrf.mxu0
        %v2200 = vadd.f32 %v1959, %v2199
        %v2201 = vpop.f32.mrf.mxu0
        %v2202 = vpop.f32.mrf.mxu0
        %v2203 = vadd.f32 %v1959, %v2202
        %v2204 = vpop.f32.mrf.mxu0
        %2205 = vmatprep.mubr.bf16.mxu0 %v1929
        %2206 = vmatmul.mubr.bf16.gmra.mxu0 %v1928
        %v2207 = vpop.f32.mrf.mxu0
        %v2208 = vadd.f32 %v1959, %v2207
        %v2209 = vpop.f32.mrf.mxu0
        %v2210 = vpop.f32.mrf.mxu0
        %v2211 = vadd.f32 %v1959, %v2210
        %v2212 = vpop.f32.mrf.mxu0
        %2213 = vmatprep.mubr.bf16.mxu0 %v1932
        %2214 = vmatmul.mubr.bf16.gmra.mxu0 %v1931
        %v2215 = vpop.f32.mrf.mxu0
        %v2216 = vadd.f32 %v1959, %v2215
        %v2217 = vpop.f32.mrf.mxu0
        %v2218 = vpop.f32.mrf.mxu0
        %v2219 = vadd.f32 %v1959, %v2218
        %v2220 = vpop.f32.mrf.mxu0
        %2221 = vmatprep.mubr.bf16.mxu0 %v1935
        %2222 = vmatmul.mubr.bf16.gmra.mxu0 %v1934
        %v2223 = vpop.f32.mrf.mxu0
        %v2224 = vadd.f32 %v1959, %v2223
        %v2225 = vpop.f32.mrf.mxu0
        %v2226 = vpop.f32.mrf.mxu0
        %v2227 = vadd.f32 %v1959, %v2226
        %v2228 = vpop.f32.mrf.mxu0
        %2229 = vmatprep.mubr.bf16.mxu0 %v1938
        %2230 = vmatmul.mubr.bf16.gmra.mxu0 %v1937
        %v2231 = vpop.f32.mrf.mxu0
        %v2232 = vadd.f32 %v1959, %v2231
        %v2233 = vpop.f32.mrf.mxu0
        %v2234 = vpop.f32.mrf.mxu0
        %v2235 = vadd.f32 %v1959, %v2234
        %v2236 = vpop.f32.mrf.mxu0
        %2237 = vmatprep.mubr.bf16.mxu0 %v1941
        %2238 = vmatmul.mubr.bf16.gmra.mxu0 %v1940
        %v2239 = vpop.f32.mrf.mxu0
        %v2240 = vadd.f32 %v1959, %v2239
        %v2241 = vpop.f32.mrf.mxu0
        %v2242 = vpop.f32.mrf.mxu0
        %v2243 = vadd.f32 %v1959, %v2242
        %v2244 = vpop.f32.mrf.mxu0
        %2245 = vmatprep.mubr.bf16.mxu0 %v1944
        %2246 = vmatmul.mubr.bf16.gmra.mxu0 %v1943
        %v2247 = vpop.f32.mrf.mxu0
        %v2248 = vadd.f32 %v1959, %v2247
        %v2249 = vpop.f32.mrf.mxu0
        %v2250 = vpop.f32.mrf.mxu0
        %v2251 = vadd.f32 %v1959, %v2250
        %v2252 = vpop.f32.mrf.mxu0
        %2253 = vmatprep.mubr.bf16.mxu0 %v1947
        %2254 = vmatmul.mubr.bf16.gmra.mxu0 %v1946
        %v2255 = vpop.f32.mrf.mxu0
        %v2256 = vadd.f32 %v1959, %v2255
        %v2257 = vpop.f32.mrf.mxu0
        %v2258 = vpop.f32.mrf.mxu0
        %v2259 = vadd.f32 %v1959, %v2258
        %v2260 = vpop.f32.mrf.mxu0
        %2261 = vmatprep.mubr.bf16.mxu0 %v1950
        %2262 = vmatmul.mubr.bf16.gmra.mxu0 %v1949
        %v2263 = vpop.f32.mrf.mxu0
        %v2264 = vadd.f32 %v1959, %v2263
        %v2265 = vpop.f32.mrf.mxu0
        %v2266 = vpop.f32.mrf.mxu0
        %v2267 = vadd.f32 %v1959, %v2266
        %v2268 = vpop.f32.mrf.mxu0
        %2269 = vmatprep.mubr.bf16.mxu0 %v1953
        %2270 = vmatmul.mubr.bf16.gmra.mxu0 %v1952
        %v2271 = vpop.f32.mrf.mxu0
        %v2272 = vadd.f32 %v1959, %v2271
        %v2273 = vpop.f32.mrf.mxu0
        %v2274 = vpop.f32.mrf.mxu0
        %v2275 = vadd.f32 %v1959, %v2274
        %v2276 = vpop.f32.mrf.mxu0
        %2277 = vdwg.mxu0
        %2278 = vmatprep.subr.bf16.mxu0 0
        %2279 = vmatpush1.bf16.msra.mxu0 0
        %2280 = vmatprep.subr.bf16.mxu0 0
        %2281 = vmatpush1.bf16.msra.mxu0 0
        %2282 = vmatprep.subr.bf16.mxu0 0
        %2283 = vmatpush1.bf16.msra.mxu0 0
        %2284 = vmatprep.subr.bf16.mxu0 0
        %2285 = vmatpush1.bf16.msra.mxu0 0
        %2286 = vmatprep.subr.bf16.mxu0 0
        %2287 = vmatpush1.bf16.msra.mxu0 0
        %2288 = vmatprep.subr.bf16.mxu0 0
        %2289 = vmatpush1.bf16.msra.mxu0 0
        %2290 = vmatprep.subr.bf16.mxu0 0
        %2291 = vmatpush1.bf16.msra.mxu0 %v2050
        %2292 = vmatprep.subr.bf16.mxu0 0
        %2293 = vmatpush1.bf16.msra.mxu0 %v2049
        %2294 = vmatprep.subr.bf16.mxu0 0
        %2295 = vmatpush2.bf16.msra.mxu0 0
        %2296 = vmatprep.subr.bf16.mxu0 0
        %2297 = vmatpush2.bf16.msra.mxu0 0
        %2298 = vmatprep.subr.bf16.mxu0 0
        %2299 = vmatpush2.bf16.msra.mxu0 0
        %2300 = vmatprep.subr.bf16.mxu0 0
        %2301 = vmatpush2.bf16.msra.mxu0 0
        %2302 = vmatprep.subr.bf16.mxu0 0
        %2303 = vmatpush2.bf16.msra.mxu0 0
        %2304 = vmatprep.subr.bf16.mxu0 0
        %2305 = vmatpush2.bf16.msra.mxu0 0
        %2306 = vmatprep.subr.bf16.mxu0 0
        %2307 = vmatpush2.bf16.msra.mxu0 0
        %2308 = vmatprep.subr.bf16.mxu0 0
        %2309 = vmatpush2.bf16.msra.mxu0 0
        %2310 = vmatprep.mubr.bf16.mxu0 0
        %2311 = vmatmul.mubr.bf16.gmra.mxu0 %v2070
        %v2312 = vpop.f32.mrf.mxu0
        %v2313 = vadd.f32 %v2152, %v2312
        %v2314 = vpop.f32.mrf.mxu0
        %v2315 = vpop.f32.mrf.mxu0
        %v2316 = vadd.f32 %v2155, %v2315
        %v2317 = vpop.f32.mrf.mxu0
        %2318 = vmatprep.mubr.bf16.mxu0 0
        %2319 = vmatmul.mubr.bf16.gmra.mxu0 %v2073
        %v2320 = vpop.f32.mrf.mxu0
        %v2321 = vadd.f32 %v2160, %v2320
        %v2322 = vpop.f32.mrf.mxu0
        %v2323 = vpop.f32.mrf.mxu0
        %v2324 = vadd.f32 %v2163, %v2323
        %v2325 = vpop.f32.mrf.mxu0
        %2326 = vmatprep.mubr.bf16.mxu0 0
        %2327 = vmatmul.mubr.bf16.gmra.mxu0 %v2076
        %v2328 = vpop.f32.mrf.mxu0
        %v2329 = vadd.f32 %v2168, %v2328
        %v2330 = vpop.f32.mrf.mxu0
        %v2331 = vpop.f32.mrf.mxu0
        %v2332 = vadd.f32 %v2171, %v2331
        %v2333 = vpop.f32.mrf.mxu0
        %2334 = vmatprep.mubr.bf16.mxu0 0
        %2335 = vmatmul.mubr.bf16.gmra.mxu0 %v2079
        %v2336 = vpop.f32.mrf.mxu0
        %v2337 = vadd.f32 %v2176, %v2336
        %v2338 = vpop.f32.mrf.mxu0
        %v2339 = vpop.f32.mrf.mxu0
        %v2340 = vadd.f32 %v2179, %v2339
        %v2341 = vpop.f32.mrf.mxu0
        %2342 = vmatprep.mubr.bf16.mxu0 0
        %2343 = vmatmul.mubr.bf16.gmra.mxu0 %v2082
        %v2344 = vpop.f32.mrf.mxu0
        %v2345 = vadd.f32 %v2184, %v2344
        %v2346 = vpop.f32.mrf.mxu0
        %v2347 = vpop.f32.mrf.mxu0
        %v2348 = vadd.f32 %v2187, %v2347
        %v2349 = vpop.f32.mrf.mxu0
        %2350 = vmatprep.mubr.bf16.mxu0 0
        %2351 = vmatmul.mubr.bf16.gmra.mxu0 %v2085
        %v2352 = vpop.f32.mrf.mxu0
        %v2353 = vadd.f32 %v2192, %v2352
        %v2354 = vpop.f32.mrf.mxu0
        %v2355 = vpop.f32.mrf.mxu0
        %v2356 = vadd.f32 %v2195, %v2355
        %v2357 = vpop.f32.mrf.mxu0
        %2358 = vmatprep.mubr.bf16.mxu0 0
        %2359 = vmatmul.mubr.bf16.gmra.mxu0 %v2088
        %v2360 = vpop.f32.mrf.mxu0
        %v2361 = vadd.f32 %v2200, %v2360
        %v2362 = vpop.f32.mrf.mxu0
        %v2363 = vpop.f32.mrf.mxu0
        %v2364 = vadd.f32 %v2203, %v2363
        %v2365 = vpop.f32.mrf.mxu0
        %2366 = vmatprep.mubr.bf16.mxu0 0
        %2367 = vmatmul.mubr.bf16.gmra.mxu0 %v2091
        %v2368 = vpop.f32.mrf.mxu0
        %v2369 = vadd.f32 %v2208, %v2368
        %v2370 = vpop.f32.mrf.mxu0
        %v2371 = vpop.f32.mrf.mxu0
        %v2372 = vadd.f32 %v2211, %v2371
        %v2373 = vpop.f32.mrf.mxu0
        %2374 = vmatprep.mubr.bf16.mxu0 0
        %2375 = vmatmul.mubr.bf16.gmra.mxu0 %v2094
        %v2376 = vpop.f32.mrf.mxu0
        %v2377 = vadd.f32 %v2216, %v2376
        %v2378 = vpop.f32.mrf.mxu0
        %v2379 = vpop.f32.mrf.mxu0
        %v2380 = vadd.f32 %v2219, %v2379
        %v2381 = vpop.f32.mrf.mxu0
        %2382 = vmatprep.mubr.bf16.mxu0 0
        %2383 = vmatmul.mubr.bf16.gmra.mxu0 %v2097
        %v2384 = vpop.f32.mrf.mxu0
        %v2385 = vadd.f32 %v2224, %v2384
        %v2386 = vpop.f32.mrf.mxu0
        %v2387 = vpop.f32.mrf.mxu0
        %v2388 = vadd.f32 %v2227, %v2387
        %v2389 = vpop.f32.mrf.mxu0
        %2390 = vmatprep.mubr.bf16.mxu0 0
        %2391 = vmatmul.mubr.bf16.gmra.mxu0 %v2100
        %v2392 = vpop.f32.mrf.mxu0
        %v2393 = vadd.f32 %v2232, %v2392
        %v2394 = vpop.f32.mrf.mxu0
        %v2395 = vpop.f32.mrf.mxu0
        %v2396 = vadd.f32 %v2235, %v2395
        %v2397 = vpop.f32.mrf.mxu0
        %2398 = vmatprep.mubr.bf16.mxu0 0
        %2399 = vmatmul.mubr.bf16.gmra.mxu0 %v2103
        %v2400 = vpop.f32.mrf.mxu0
        %v2401 = vadd.f32 %v2240, %v2400
        %v2402 = vpop.f32.mrf.mxu0
        %v2403 = vpop.f32.mrf.mxu0
        %v2404 = vadd.f32 %v2243, %v2403
        %v2405 = vpop.f32.mrf.mxu0
        %2406 = vmatprep.mubr.bf16.mxu0 0
        %2407 = vmatmul.mubr.bf16.gmra.mxu0 %v2106
        %v2408 = vpop.f32.mrf.mxu0
        %v2409 = vadd.f32 %v2248, %v2408
        %v2410 = vpop.f32.mrf.mxu0
        %v2411 = vpop.f32.mrf.mxu0
        %v2412 = vadd.f32 %v2251, %v2411
        %v2413 = vpop.f32.mrf.mxu0
        %2414 = vmatprep.mubr.bf16.mxu0 0
        %2415 = vmatmul.mubr.bf16.gmra.mxu0 %v2109
        %v2416 = vpop.f32.mrf.mxu0
        %v2417 = vadd.f32 %v2256, %v2416
        %v2418 = vpop.f32.mrf.mxu0
        %v2419 = vpop.f32.mrf.mxu0
        %v2420 = vadd.f32 %v2259, %v2419
        %v2421 = vpop.f32.mrf.mxu0
        %2422 = vmatprep.mubr.bf16.mxu0 0
        %2423 = vmatmul.mubr.bf16.gmra.mxu0 %v2112
        %v2424 = vpop.f32.mrf.mxu0
        %v2425 = vadd.f32 %v2264, %v2424
        %v2426 = vpop.f32.mrf.mxu0
        %v2427 = vpop.f32.mrf.mxu0
        %v2428 = vadd.f32 %v2267, %v2427
        %v2429 = vpop.f32.mrf.mxu0
        %2430 = vmatprep.mubr.bf16.mxu0 0
        %2431 = vmatmul.mubr.bf16.gmra.mxu0 %v2115
        %v2432 = vpop.f32.mrf.mxu0
        %v2433 = vadd.f32 %v2272, %v2432
        %v2434 = vpop.f32.mrf.mxu0
        %v2435 = vpop.f32.mrf.mxu0
        %v2436 = vadd.f32 %v2275, %v2435
        %v2437 = vpop.f32.mrf.mxu0
        %2438 = vdwg.mxu0
        %v2439 = vmul.f32 %v2313, 0.5
        %v2440 = vmul.f32 %v2316, 0.5
        %v2441 = vmul.f32 %v2321, 0.5
        %v2442 = vmul.f32 %v2324, 0.5
        %v2443 = vmul.f32 %v2329, 0.5
        %v2444 = vmul.f32 %v2332, 0.5
        %v2445 = vmul.f32 %v2337, 0.5
        %v2446 = vmul.f32 %v2340, 0.5
        %v2447 = vmul.f32 %v2345, 0.5
        %v2448 = vmul.f32 %v2348, 0.5
        %v2449 = vmul.f32 %v2353, 0.5
        %v2450 = vmul.f32 %v2356, 0.5
        %v2451 = vmul.f32 %v2361, 0.5
        %v2452 = vmul.f32 %v2364, 0.5
        %v2453 = vmul.f32 %v2369, 0.5
        %v2454 = vmul.f32 %v2372, 0.5
        %v2455 = vmul.f32 %v2377, 0.5
        %v2456 = vmul.f32 %v2380, 0.5
        %v2457 = vmul.f32 %v2385, 0.5
        %v2458 = vmul.f32 %v2388, 0.5
        %v2459 = vmul.f32 %v2393, 0.5
        %v2460 = vmul.f32 %v2396, 0.5
        %v2461 = vmul.f32 %v2401, 0.5
        %v2462 = vmul.f32 %v2404, 0.5
        %v2463 = vmul.f32 %v2409, 0.5
        %v2464 = vmul.f32 %v2412, 0.5
        %v2465 = vmul.f32 %v2417, 0.5
        %v2466 = vmul.f32 %v2420, 0.5
        %v2467 = vmul.f32 %v2425, 0.5
        %v2468 = vmul.f32 %v2428, 0.5
        %v2469 = vmul.f32 %v2433, 0.5
        %v2470 = vmul.f32 %v2436, 0.5
        %v2471 = vmul.f32 %v2313, 0.044715
        %v2472 = vmul.f32 %v2316, 0.044715
        %v2473 = vmul.f32 %v2321, 0.044715
        %v2474 = vmul.f32 %v2324, 0.044715
        %v2475 = vmul.f32 %v2329, 0.044715
        %v2476 = vmul.f32 %v2332, 0.044715
        %v2477 = vmul.f32 %v2337, 0.044715
        %v2478 = vmul.f32 %v2340, 0.044715
        %v2479 = vmul.f32 %v2345, 0.044715
        %v2480 = vmul.f32 %v2348, 0.044715
        %v2481 = vmul.f32 %v2353, 0.044715
        %v2482 = vmul.f32 %v2356, 0.044715
        %v2483 = vmul.f32 %v2361, 0.044715
        %v2484 = vmul.f32 %v2364, 0.044715
        %v2485 = vmul.f32 %v2369, 0.044715
        %v2486 = vmul.f32 %v2372, 0.044715
        %v2487 = vmul.f32 %v2377, 0.044715
        %v2488 = vmul.f32 %v2380, 0.044715
        %v2489 = vmul.f32 %v2385, 0.044715
        %v2490 = vmul.f32 %v2388, 0.044715
        %v2491 = vmul.f32 %v2393, 0.044715
        %v2492 = vmul.f32 %v2396, 0.044715
        %v2493 = vmul.f32 %v2401, 0.044715
        %v2494 = vmul.f32 %v2404, 0.044715
        %v2495 = vmul.f32 %v2409, 0.044715
        %v2496 = vmul.f32 %v2412, 0.044715
        %v2497 = vmul.f32 %v2417, 0.044715
        %v2498 = vmul.f32 %v2420, 0.044715
        %v2499 = vmul.f32 %v2425, 0.044715
        %v2500 = vmul.f32 %v2428, 0.044715
        %v2501 = vmul.f32 %v2433, 0.044715
        %v2502 = vmul.f32 %v2436, 0.044715
        %v2503 = vmul.f32 %v2471, %v2313
        %v2504 = vmul.f32 %v2472, %v2316
        %v2505 = vmul.f32 %v2473, %v2321
        %v2506 = vmul.f32 %v2474, %v2324
        %v2507 = vmul.f32 %v2475, %v2329
        %v2508 = vmul.f32 %v2476, %v2332
        %v2509 = vmul.f32 %v2477, %v2337
        %v2510 = vmul.f32 %v2478, %v2340
        %v2511 = vmul.f32 %v2479, %v2345
        %v2512 = vmul.f32 %v2480, %v2348
        %v2513 = vmul.f32 %v2481, %v2353
        %v2514 = vmul.f32 %v2482, %v2356
        %v2515 = vmul.f32 %v2483, %v2361
        %v2516 = vmul.f32 %v2484, %v2364
        %v2517 = vmul.f32 %v2485, %v2369
        %v2518 = vmul.f32 %v2486, %v2372
        %v2519 = vmul.f32 %v2487, %v2377
        %v2520 = vmul.f32 %v2488, %v2380
        %v2521 = vmul.f32 %v2489, %v2385
        %v2522 = vmul.f32 %v2490, %v2388
        %v2523 = vmul.f32 %v2491, %v2393
        %v2524 = vmul.f32 %v2492, %v2396
        %v2525 = vmul.f32 %v2493, %v2401
        %v2526 = vmul.f32 %v2494, %v2404
        %v2527 = vmul.f32 %v2495, %v2409
        %v2528 = vmul.f32 %v2496, %v2412
        %v2529 = vmul.f32 %v2497, %v2417
        %v2530 = vmul.f32 %v2498, %v2420
        %v2531 = vmul.f32 %v2499, %v2425
        %v2532 = vmul.f32 %v2500, %v2428
        %v2533 = vmul.f32 %v2501, %v2433
        %v2534 = vmul.f32 %v2502, %v2436
        %v2535 = vmul.f32 %v2503, %v2313
        %v2536 = vmul.f32 %v2504, %v2316
        %v2537 = vmul.f32 %v2505, %v2321
        %v2538 = vmul.f32 %v2506, %v2324
        %v2539 = vmul.f32 %v2507, %v2329
        %v2540 = vmul.f32 %v2508, %v2332
        %v2541 = vmul.f32 %v2509, %v2337
        %v2542 = vmul.f32 %v2510, %v2340
        %v2543 = vmul.f32 %v2511, %v2345
        %v2544 = vmul.f32 %v2512, %v2348
        %v2545 = vmul.f32 %v2513, %v2353
        %v2546 = vmul.f32 %v2514, %v2356
        %v2547 = vmul.f32 %v2515, %v2361
        %v2548 = vmul.f32 %v2516, %v2364
        %v2549 = vmul.f32 %v2517, %v2369
        %v2550 = vmul.f32 %v2518, %v2372
        %v2551 = vmul.f32 %v2519, %v2377
        %v2552 = vmul.f32 %v2520, %v2380
        %v2553 = vmul.f32 %v2521, %v2385
        %v2554 = vmul.f32 %v2522, %v2388
        %v2555 = vmul.f32 %v2523, %v2393
        %v2556 = vmul.f32 %v2524, %v2396
        %v2557 = vmul.f32 %v2525, %v2401
        %v2558 = vmul.f32 %v2526, %v2404
        %v2559 = vmul.f32 %v2527, %v2409
        %v2560 = vmul.f32 %v2528, %v2412
        %v2561 = vmul.f32 %v2529, %v2417
        %v2562 = vmul.f32 %v2530, %v2420
        %v2563 = vmul.f32 %v2531, %v2425
        %v2564 = vmul.f32 %v2532, %v2428
        %v2565 = vmul.f32 %v2533, %v2433
        %v2566 = vmul.f32 %v2534, %v2436
        %v2567 = vadd.f32 %v2313, %v2535
        %v2568 = vadd.f32 %v2316, %v2536
        %v2569 = vadd.f32 %v2321, %v2537
        %v2570 = vadd.f32 %v2324, %v2538
        %v2571 = vadd.f32 %v2329, %v2539
        %v2572 = vadd.f32 %v2332, %v2540
        %v2573 = vadd.f32 %v2337, %v2541
        %v2574 = vadd.f32 %v2340, %v2542
        %v2575 = vadd.f32 %v2345, %v2543
        %v2576 = vadd.f32 %v2348, %v2544
        %v2577 = vadd.f32 %v2353, %v2545
        %v2578 = vadd.f32 %v2356, %v2546
        %v2579 = vadd.f32 %v2361, %v2547
        %v2580 = vadd.f32 %v2364, %v2548
        %v2581 = vadd.f32 %v2369, %v2549
        %v2582 = vadd.f32 %v2372, %v2550
        %v2583 = vadd.f32 %v2377, %v2551
        %v2584 = vadd.f32 %v2380, %v2552
        %v2585 = vadd.f32 %v2385, %v2553
        %v2586 = vadd.f32 %v2388, %v2554
        %v2587 = vadd.f32 %v2393, %v2555
        %v2588 = vadd.f32 %v2396, %v2556
        %v2589 = vadd.f32 %v2401, %v2557
        %v2590 = vadd.f32 %v2404, %v2558
        %v2591 = vadd.f32 %v2409, %v2559
        %v2592 = vadd.f32 %v2412, %v2560
        %v2593 = vadd.f32 %v2417, %v2561
        %v2594 = vadd.f32 %v2420, %v2562
        %v2595 = vadd.f32 %v2425, %v2563
        %v2596 = vadd.f32 %v2428, %v2564
        %v2597 = vadd.f32 %v2433, %v2565
        %v2598 = vadd.f32 %v2436, %v2566
        %v2599 = vmul.f32 %v2567, 0.7978846
        %v2600 = vmul.f32 %v2568, 0.7978846
        %v2601 = vmul.f32 %v2569, 0.7978846
        %v2602 = vmul.f32 %v2570, 0.7978846
        %v2603 = vmul.f32 %v2571, 0.7978846
        %v2604 = vmul.f32 %v2572, 0.7978846
        %v2605 = vmul.f32 %v2573, 0.7978846
        %v2606 = vmul.f32 %v2574, 0.7978846
        %v2607 = vmul.f32 %v2575, 0.7978846
        %v2608 = vmul.f32 %v2576, 0.7978846
        %v2609 = vmul.f32 %v2577, 0.7978846
        %v2610 = vmul.f32 %v2578, 0.7978846
        %v2611 = vmul.f32 %v2579, 0.7978846
        %v2612 = vmul.f32 %v2580, 0.7978846
        %v2613 = vmul.f32 %v2581, 0.7978846
        %v2614 = vmul.f32 %v2582, 0.7978846
        %v2615 = vmul.f32 %v2583, 0.7978846
        %v2616 = vmul.f32 %v2584, 0.7978846
        %v2617 = vmul.f32 %v2585, 0.7978846
        %v2618 = vmul.f32 %v2586, 0.7978846
        %v2619 = vmul.f32 %v2587, 0.7978846
        %v2620 = vmul.f32 %v2588, 0.7978846
        %v2621 = vmul.f32 %v2589, 0.7978846
        %v2622 = vmul.f32 %v2590, 0.7978846
        %v2623 = vmul.f32 %v2591, 0.7978846
        %v2624 = vmul.f32 %v2592, 0.7978846
        %v2625 = vmul.f32 %v2593, 0.7978846
        %v2626 = vmul.f32 %v2594, 0.7978846
        %v2627 = vmul.f32 %v2595, 0.7978846
        %v2628 = vmul.f32 %v2596, 0.7978846
        %v2629 = vmul.f32 %v2597, 0.7978846
        %v2630 = vmul.f32 %v2598, 0.7978846
        %v2631 = vtanh.pop %v2599
        %v2632 = vtanh.pop %v2600
        %v2633 = vtanh.pop %v2601
        %v2634 = vtanh.pop %v2602
        %v2635 = vtanh.pop %v2603
        %v2636 = vtanh.pop %v2604
        %v2637 = vtanh.pop %v2605
        %v2638 = vtanh.pop %v2606
        %v2639 = vtanh.pop %v2607
        %v2640 = vtanh.pop %v2608
        %v2641 = vtanh.pop %v2609
        %v2642 = vtanh.pop %v2610
        %v2643 = vtanh.pop %v2611
        %v2644 = vtanh.pop %v2612
        %v2645 = vtanh.pop %v2613
        %v2646 = vtanh.pop %v2614
        %v2647 = vtanh.pop %v2615
        %v2648 = vtanh.pop %v2616
        %v2649 = vtanh.pop %v2617
        %v2650 = vtanh.pop %v2618
        %v2651 = vtanh.pop %v2619
        %v2652 = vtanh.pop %v2620
        %v2653 = vtanh.pop %v2621
        %v2654 = vtanh.pop %v2622
        %v2655 = vtanh.pop %v2623
        %v2656 = vtanh.pop %v2624
        %v2657 = vtanh.pop %v2625
        %v2658 = vtanh.pop %v2626
        %v2659 = vtanh.pop %v2627
        %v2660 = vtanh.pop %v2628
        %v2661 = vtanh.pop %v2629
        %v2662 = vtanh.pop %v2630
        %v2663 = vadd.f32 %v2631, 1.0
        %v2664 = vadd.f32 %v2632, 1.0
        %v2665 = vadd.f32 %v2633, 1.0
        %v2666 = vadd.f32 %v2634, 1.0
        %v2667 = vadd.f32 %v2635, 1.0
        %v2668 = vadd.f32 %v2636, 1.0
        %v2669 = vadd.f32 %v2637, 1.0
        %v2670 = vadd.f32 %v2638, 1.0
        %v2671 = vadd.f32 %v2639, 1.0
        %v2672 = vadd.f32 %v2640, 1.0
        %v2673 = vadd.f32 %v2641, 1.0
        %v2674 = vadd.f32 %v2642, 1.0
        %v2675 = vadd.f32 %v2643, 1.0
        %v2676 = vadd.f32 %v2644, 1.0
        %v2677 = vadd.f32 %v2645, 1.0
        %v2678 = vadd.f32 %v2646, 1.0
        %v2679 = vadd.f32 %v2647, 1.0
        %v2680 = vadd.f32 %v2648, 1.0
        %v2681 = vadd.f32 %v2649, 1.0
        %v2682 = vadd.f32 %v2650, 1.0
        %v2683 = vadd.f32 %v2651, 1.0
        %v2684 = vadd.f32 %v2652, 1.0
        %v2685 = vadd.f32 %v2653, 1.0
        %v2686 = vadd.f32 %v2654, 1.0
        %v2687 = vadd.f32 %v2655, 1.0
        %v2688 = vadd.f32 %v2656, 1.0
        %v2689 = vadd.f32 %v2657, 1.0
        %v2690 = vadd.f32 %v2658, 1.0
        %v2691 = vadd.f32 %v2659, 1.0
        %v2692 = vadd.f32 %v2660, 1.0
        %v2693 = vadd.f32 %v2661, 1.0
        %v2694 = vadd.f32 %v2662, 1.0
        %v2695 = vmul.f32 %v2439, %v2663
        %v2696 = vmul.f32 %v2440, %v2664
        %v2697 = vmul.f32 %v2441, %v2665
        %v2698 = vmul.f32 %v2442, %v2666
        %v2699 = vmul.f32 %v2443, %v2667
        %v2700 = vmul.f32 %v2444, %v2668
        %v2701 = vmul.f32 %v2445, %v2669
        %v2702 = vmul.f32 %v2446, %v2670
        %v2703 = vmul.f32 %v2447, %v2671
        %v2704 = vmul.f32 %v2448, %v2672
        %v2705 = vmul.f32 %v2449, %v2673
        %v2706 = vmul.f32 %v2450, %v2674
        %v2707 = vmul.f32 %v2451, %v2675
        %v2708 = vmul.f32 %v2452, %v2676
        %v2709 = vmul.f32 %v2453, %v2677
        %v2710 = vmul.f32 %v2454, %v2678
        %v2711 = vmul.f32 %v2455, %v2679
        %v2712 = vmul.f32 %v2456, %v2680
        %v2713 = vmul.f32 %v2457, %v2681
        %v2714 = vmul.f32 %v2458, %v2682
        %v2715 = vmul.f32 %v2459, %v2683
        %v2716 = vmul.f32 %v2460, %v2684
        %v2717 = vmul.f32 %v2461, %v2685
        %v2718 = vmul.f32 %v2462, %v2686
        %v2719 = vmul.f32 %v2463, %v2687
        %v2720 = vmul.f32 %v2464, %v2688
        %v2721 = vmul.f32 %v2465, %v2689
        %v2722 = vmul.f32 %v2466, %v2690
        %v2723 = vmul.f32 %v2467, %v2691
        %v2724 = vmul.f32 %v2468, %v2692
        %v2725 = vmul.f32 %v2469, %v2693
        %v2726 = vmul.f32 %v2470, %v2694
        %v2727 = vld [vmem:[%s5] sm:$0xf]
        %v2728 = vld [vmem:[%s5 + $0x4] sm:$0xf]
        %v2729 = vld [vmem:[%s5 + $0x8] sm:$0xf]
        %v2730 = vld [vmem:[%s5 + $0xc] sm:$0xf]
        %v2731 = vld [vmem:[%s5 + $0x10] sm:$0xf]
        %v2732 = vld [vmem:[%s5 + $0x14] sm:$0xf]
        %v2733 = vld [vmem:[%s5 + $0x18] sm:$0xf]
        %v2734 = vld [vmem:[%s5 + $0x1c] sm:$0xf]
        %v2735 = vld [vmem:[%s5 + $0x20] sm:$0xf]
        %v2736 = vld [vmem:[%s5 + $0x24] sm:$0xf]
        %v2737 = vld [vmem:[%s5 + $0x28] sm:$0xf]
        %v2738 = vld [vmem:[%s5 + $0x2c] sm:$0xf]
        %v2739 = vld [vmem:[%s5 + $0x30] sm:$0xf]
        %v2740 = vld [vmem:[%s5 + $0x34] sm:$0xf]
        %v2741 = vld [vmem:[%s5 + $0x38] sm:$0xf]
        %v2742 = vld [vmem:[%s5 + $0x3c] sm:$0xf]
        %v2743 = vld [vmem:[%s5 + $0x40] sm:$0xf]
        %v2744 = vld [vmem:[%s5 + $0x44] sm:$0xf]
        %v2745 = vld [vmem:[%s5 + $0x48] sm:$0xf]
        %v2746 = vld [vmem:[%s5 + $0x4c] sm:$0xf]
        %v2747 = vld [vmem:[%s5 + $0x50] sm:$0xf]
        %v2748 = vld [vmem:[%s5 + $0x54] sm:$0xf]
        %v2749 = vld [vmem:[%s5 + $0x58] sm:$0xf]
        %v2750 = vld [vmem:[%s5 + $0x5c] sm:$0xf]
        %v2751 = vld [vmem:[%s5 + $0x60] sm:$0xf]
        %v2752 = vld [vmem:[%s5 + $0x64] sm:$0xf]
        %v2753 = vld [vmem:[%s5 + $0x68] sm:$0xf]
        %v2754 = vld [vmem:[%s5 + $0x6c] sm:$0xf]
        %v2755 = vld [vmem:[%s5 + $0x70] sm:$0xf]
        %v2756 = vld [vmem:[%s5 + $0x74] sm:$0xf]
        %v2757 = vld [vmem:[%s5 + $0x78] sm:$0xf]
        %v2758 = vld [vmem:[%s5 + $0x7c] sm:$0xf]
        %v2759 = vld [vmem:[%s5 + $0x80] sm:$0xf]
        %v2760 = vld [vmem:[%s5 + $0x84] sm:$0xf]
        %v2761 = vld [vmem:[%s5 + $0x88] sm:$0xf]
        %v2762 = vld [vmem:[%s5 + $0x8c] sm:$0xf]
        %v2763 = vld [vmem:[%s6] sm:$0x1]
        %v2780 = vrot.slane %v2724, 6
        %v2781 = vrot.slane %v2726, 6
        %v2782 = vrot.slane %v2696, 6
        %v2783 = vrot.slane %v2698, 6
        %v2784 = vrot.slane %v2700, 6
        %v2785 = vrot.slane %v2702, 6
        %v2786 = vrot.slane %v2704, 6
        %v2787 = vrot.slane %v2706, 6
        %v2788 = vrot.slane %v2708, 6
        %v2789 = vrot.slane %v2710, 6
        %v2790 = vrot.slane %v2712, 6
        %v2791 = vrot.slane %v2714, 6
        %v2792 = vrot.slane %v2716, 6
        %v2793 = vrot.slane %v2718, 6
        %v2794 = vrot.slane %v2720, 6
        %v2795 = vrot.slane %v2722, 6
        %vm2828 = vcmask 1041408
        %v2829 = vrot.slane %v2723, 6
        %v2830 = vsel %vm2828, %v2829, %v2780
        %v2831 = vrot.slane %v2725, 6
        %v2832 = vsel %vm2828, %v2831, %v2781
        %v2833 = vrot.slane %v2695, 6
        %v2834 = vsel %vm2828, %v2833, %v2782
        %v2835 = vrot.slane %v2697, 6
        %v2836 = vsel %vm2828, %v2835, %v2783
        %v2837 = vrot.slane %v2699, 6
        %v2838 = vsel %vm2828, %v2837, %v2784
        %v2839 = vrot.slane %v2701, 6
        %v2840 = vsel %vm2828, %v2839, %v2785
        %v2841 = vrot.slane %v2703, 6
        %v2842 = vsel %vm2828, %v2841, %v2786
        %v2843 = vrot.slane %v2705, 6
        %v2844 = vsel %vm2828, %v2843, %v2787
        %v2845 = vrot.slane %v2707, 6
        %v2846 = vsel %vm2828, %v2845, %v2788
        %v2847 = vrot.slane %v2709, 6
        %v2848 = vsel %vm2828, %v2847, %v2789
        %v2849 = vrot.slane %v2711, 6
        %v2850 = vsel %vm2828, %v2849, %v2790
        %v2851 = vrot.slane %v2713, 6
        %v2852 = vsel %vm2828, %v2851, %v2791
        %v2853 = vrot.slane %v2715, 6
        %v2854 = vsel %vm2828, %v2853, %v2792
        %v2855 = vrot.slane %v2717, 6
        %v2856 = vsel %vm2828, %v2855, %v2793
        %v2857 = vrot.slane %v2719, 6
        %v2858 = vsel %vm2828, %v2857, %v2794
        %v2859 = vrot.slane %v2721, 6
        %v2860 = vsel %vm2828, %v2859, %v2795
        %v2893 = vsel %vm2828, %v2780, %v2829
        %v2894 = vsel %vm2828, %v2781, %v2831
        %v2895 = vsel %vm2828, %v2782, %v2833
        %v2896 = vsel %vm2828, %v2783, %v2835
        %v2897 = vsel %vm2828, %v2784, %v2837
        %v2898 = vsel %vm2828, %v2785, %v2839
        %v2899 = vsel %vm2828, %v2786, %v2841
        %v2900 = vsel %vm2828, %v2787, %v2843
        %v2901 = vsel %vm2828, %v2788, %v2845
        %v2902 = vsel %vm2828, %v2789, %v2847
        %v2903 = vsel %vm2828, %v2790, %v2849
        %v2904 = vsel %vm2828, %v2791, %v2851
        %v2905 = vsel %vm2828, %v2792, %v2853
        %v2906 = vsel %vm2828, %v2793, %v2855
        %v2907 = vsel %vm2828, %v2794, %v2857
        %v2908 = vsel %vm2828, %v2795, %v2859
        %v2925 = vrot.slane %v2893, 2
        %v2926 = vrot.slane %v2830, 2
        %v2927 = vsel %vm1104, %v2925, %v2926
        %v2928 = vsel %vm1104, %v2926, %v2925
        %v2929 = vrot.slane %v2894, 2
        %v2930 = vrot.slane %v2832, 2
        %v2931 = vsel %vm1104, %v2929, %v2930
        %v2932 = vsel %vm1104, %v2930, %v2929
        %v2933 = vrot.slane %v2895, 2
        %v2934 = vrot.slane %v2834, 2
        %v2935 = vsel %vm1104, %v2933, %v2934
        %v2936 = vsel %vm1104, %v2934, %v2933
        %v2937 = vrot.slane %v2896, 2
        %v2938 = vrot.slane %v2836, 2
        %v2939 = vsel %vm1104, %v2937, %v2938
        %v2940 = vsel %vm1104, %v2938, %v2937
        %v2941 = vrot.slane %v2897, 2
        %v2942 = vrot.slane %v2838, 2
        %v2943 = vsel %vm1104, %v2941, %v2942
        %v2944 = vsel %vm1104, %v2942, %v2941
        %v2945 = vrot.slane %v2898, 2
        %v2946 = vrot.slane %v2840, 2
        %v2947 = vsel %vm1104, %v2945, %v2946
        %v2948 = vsel %vm1104, %v2946, %v2945
        %v2949 = vrot.slane %v2899, 2
        %v2950 = vrot.slane %v2842, 2
        %v2951 = vsel %vm1104, %v2949, %v2950
        %v2952 = vsel %vm1104, %v2950, %v2949
        %v2953 = vrot.slane %v2900, 2
        %v2954 = vrot.slane %v2844, 2
        %v2955 = vsel %vm1104, %v2953, %v2954
        %v2956 = vsel %vm1104, %v2954, %v2953
        %v2957 = vrot.slane %v2901, 2
        %v2958 = vrot.slane %v2846, 2
        %v2959 = vsel %vm1104, %v2957, %v2958
        %v2960 = vsel %vm1104, %v2958, %v2957
        %v2961 = vrot.slane %v2902, 2
        %v2962 = vrot.slane %v2848, 2
        %v2963 = vsel %vm1104, %v2961, %v2962
        %v2964 = vsel %vm1104, %v2962, %v2961
        %v2965 = vrot.slane %v2903, 2
        %v2966 = vrot.slane %v2850, 2
        %v2967 = vsel %vm1104, %v2965, %v2966
        %v2968 = vsel %vm1104, %v2966, %v2965
        %v2969 = vrot.slane %v2904, 2
        %v2970 = vrot.slane %v2852, 2
        %v2971 = vsel %vm1104, %v2969, %v2970
        %v2972 = vsel %vm1104, %v2970, %v2969
        %v2973 = vrot.slane %v2905, 2
        %v2974 = vrot.slane %v2854, 2
        %v2975 = vsel %vm1104, %v2973, %v2974
        %v2976 = vsel %vm1104, %v2974, %v2973
        %v2977 = vrot.slane %v2906, 2
        %v2978 = vrot.slane %v2856, 2
        %v2979 = vsel %vm1104, %v2977, %v2978
        %v2980 = vsel %vm1104, %v2978, %v2977
        %v2981 = vrot.slane %v2907, 2
        %v2982 = vrot.slane %v2858, 2
        %v2983 = vsel %vm1104, %v2981, %v2982
        %v2984 = vsel %vm1104, %v2982, %v2981
        %v2985 = vrot.slane %v2908, 2
        %v2986 = vrot.slane %v2860, 2
        %v2987 = vsel %vm1104, %v2985, %v2986
        %v2988 = vsel %vm1104, %v2986, %v2985
        %2989 = vrot.lane.b32.xlu0 %v2927, 32
        %v2990 = vpop.permute.xlu0 %2989
        %2991 = vrot.lane.b32.xlu0 %v2928, 32
        %v2992 = vpop.permute.xlu0 %2991
        %2993 = vrot.lane.b32.xlu0 %v2931, 32
        %v2994 = vpop.permute.xlu0 %2993
        %2995 = vrot.lane.b32.xlu0 %v2932, 32
        %v2996 = vpop.permute.xlu0 %2995
        %2997 = vrot.lane.b32.xlu0 %v2935, 32
        %v2998 = vpop.permute.xlu0 %2997
        %2999 = vrot.lane.b32.xlu0 %v2936, 32
        %v3000 = vpop.permute.xlu0 %2999
        %3001 = vrot.lane.b32.xlu0 %v2939, 32
        %v3002 = vpop.permute.xlu0 %3001
        %3003 = vrot.lane.b32.xlu0 %v2940, 32
        %v3004 = vpop.permute.xlu0 %3003
        %3005 = vrot.lane.b32.xlu0 %v2943, 32
        %v3006 = vpop.permute.xlu0 %3005
        %3007 = vrot.lane.b32.xlu0 %v2944, 32
        %v3008 = vpop.permute.xlu0 %3007
        %3009 = vrot.lane.b32.xlu0 %v2947, 32
        %v3010 = vpop.permute.xlu0 %3009
        %3011 = vrot.lane.b32.xlu0 %v2948, 32
        %v3012 = vpop.permute.xlu0 %3011
        %3013 = vrot.lane.b32.xlu0 %v2951, 32
        %v3014 = vpop.permute.xlu0 %3013
        %3015 = vrot.lane.b32.xlu0 %v2952, 32
        %v3016 = vpop.permute.xlu0 %3015
        %3017 = vrot.lane.b32.xlu0 %v2955, 32
        %v3018 = vpop.permute.xlu0 %3017
        %3019 = vrot.lane.b32.xlu0 %v2956, 32
        %v3020 = vpop.permute.xlu0 %3019
        %3021 = vrot.lane.b32.xlu0 %v2959, 32
        %v3022 = vpop.permute.xlu0 %3021
        %3023 = vrot.lane.b32.xlu0 %v2960, 32
        %v3024 = vpop.permute.xlu0 %3023
        %3025 = vrot.lane.b32.xlu0 %v2963, 32
        %v3026 = vpop.permute.xlu0 %3025
        %3027 = vrot.lane.b32.xlu0 %v2964, 32
        %v3028 = vpop.permute.xlu0 %3027
        %3029 = vrot.lane.b32.xlu0 %v2967, 32
        %v3030 = vpop.permute.xlu0 %3029
        %3031 = vrot.lane.b32.xlu0 %v2968, 32
        %v3032 = vpop.permute.xlu0 %3031
        %3033 = vrot.lane.b32.xlu0 %v2971, 32
        %v3034 = vpop.permute.xlu0 %3033
        %3035 = vrot.lane.b32.xlu0 %v2972, 32
        %v3036 = vpop.permute.xlu0 %3035
        %3037 = vrot.lane.b32.xlu0 %v2975, 32
        %v3038 = vpop.permute.xlu0 %3037
        %3039 = vrot.lane.b32.xlu0 %v2976, 32
        %v3040 = vpop.permute.xlu0 %3039
        %3041 = vrot.lane.b32.xlu0 %v2979, 32
        %v3042 = vpop.permute.xlu0 %3041
        %3043 = vrot.lane.b32.xlu0 %v2980, 32
        %v3044 = vpop.permute.xlu0 %3043
        %3045 = vrot.lane.b32.xlu0 %v2983, 32
        %v3046 = vpop.permute.xlu0 %3045
        %3047 = vrot.lane.b32.xlu0 %v2984, 32
        %v3048 = vpop.permute.xlu0 %3047
        %3049 = vrot.lane.b32.xlu0 %v2987, 32
        %v3050 = vpop.permute.xlu0 %3049
        %3051 = vrot.lane.b32.xlu0 %v2988, 32
        %v3052 = vpop.permute.xlu0 %3051
        %vm3085 = vcmask 1043456
        %v3086 = vrot.slane %v2893, 4
        %v3087 = vrot.slane %v2830, 4
        %v3088 = vsel %vm3085, %v3086, %v3087
        %v3089 = vsel %vm3085, %v3087, %v3086
        %v3090 = vrot.slane %v2894, 4
        %v3091 = vrot.slane %v2832, 4
        %v3092 = vsel %vm3085, %v3090, %v3091
        %v3093 = vsel %vm3085, %v3091, %v3090
        %v3094 = vrot.slane %v2895, 4
        %v3095 = vrot.slane %v2834, 4
        %v3096 = vsel %vm3085, %v3094, %v3095
        %v3097 = vsel %vm3085, %v3095, %v3094
        %v3098 = vrot.slane %v2896, 4
        %v3099 = vrot.slane %v2836, 4
        %v3100 = vsel %vm3085, %v3098, %v3099
        %v3101 = vsel %vm3085, %v3099, %v3098
        %v3102 = vrot.slane %v2897, 4
        %v3103 = vrot.slane %v2838, 4
        %v3104 = vsel %vm3085, %v3102, %v3103
        %v3105 = vsel %vm3085, %v3103, %v3102
        %v3106 = vrot.slane %v2898, 4
        %v3107 = vrot.slane %v2840, 4
        %v3108 = vsel %vm3085, %v3106, %v3107
        %v3109 = vsel %vm3085, %v3107, %v3106
        %v3110 = vrot.slane %v2899, 4
        %v3111 = vrot.slane %v2842, 4
        %v3112 = vsel %vm3085, %v3110, %v3111
        %v3113 = vsel %vm3085, %v3111, %v3110
        %v3114 = vrot.slane %v2900, 4
        %v3115 = vrot.slane %v2844, 4
        %v3116 = vsel %vm3085, %v3114, %v3115
        %v3117 = vsel %vm3085, %v3115, %v3114
        %v3118 = vrot.slane %v2901, 4
        %v3119 = vrot.slane %v2846, 4
        %v3120 = vsel %vm3085, %v3118, %v3119
        %v3121 = vsel %vm3085, %v3119, %v3118
        %v3122 = vrot.slane %v2902, 4
        %v3123 = vrot.slane %v2848, 4
        %v3124 = vsel %vm3085, %v3122, %v3123
        %v3125 = vsel %vm3085, %v3123, %v3122
        %v3126 = vrot.slane %v2903, 4
        %v3127 = vrot.slane %v2850, 4
        %v3128 = vsel %vm3085, %v3126, %v3127
        %v3129 = vsel %vm3085, %v3127, %v3126
        %v3130 = vrot.slane %v2904, 4
        %v3131 = vrot.slane %v2852, 4
        %v3132 = vsel %vm3085, %v3130, %v3131
        %v3133 = vsel %vm3085, %v3131, %v3130
        %v3134 = vrot.slane %v2905, 4
        %v3135 = vrot.slane %v2854, 4
        %v3136 = vsel %vm3085, %v3134, %v3135
        %v3137 = vsel %vm3085, %v3135, %v3134
        %v3138 = vrot.slane %v2906, 4
        %v3139 = vrot.slane %v2856, 4
        %v3140 = vsel %vm3085, %v3138, %v3139
        %v3141 = vsel %vm3085, %v3139, %v3138
        %v3142 = vrot.slane %v2907, 4
        %v3143 = vrot.slane %v2858, 4
        %v3144 = vsel %vm3085, %v3142, %v3143
        %v3145 = vsel %vm3085, %v3143, %v3142
        %v3146 = vrot.slane %v2908, 4
        %v3147 = vrot.slane %v2860, 4
        %v3148 = vsel %vm3085, %v3146, %v3147
        %v3149 = vsel %vm3085, %v3147, %v3146
        %3150 = vrot.lane.b32.xlu0 %v3088, 64
        %v3151 = vpop.permute.xlu0 %3150
        %3152 = vrot.lane.b32.xlu0 %v3089, 64
        %v3153 = vpop.permute.xlu0 %3152
        %3154 = vrot.lane.b32.xlu0 %v3092, 64
        %v3155 = vpop.permute.xlu0 %3154
        %3156 = vrot.lane.b32.xlu0 %v3093, 64
        %v3157 = vpop.permute.xlu0 %3156
        %3158 = vrot.lane.b32.xlu0 %v3096, 64
        %v3159 = vpop.permute.xlu0 %3158
        %3160 = vrot.lane.b32.xlu0 %v3097, 64
        %v3161 = vpop.permute.xlu0 %3160
        %3162 = vrot.lane.b32.xlu0 %v3100, 64
        %v3163 = vpop.permute.xlu0 %3162
        %3164 = vrot.lane.b32.xlu0 %v3101, 64
        %v3165 = vpop.permute.xlu0 %3164
        %3166 = vrot.lane.b32.xlu0 %v3104, 64
        %v3167 = vpop.permute.xlu0 %3166
        %3168 = vrot.lane.b32.xlu0 %v3105, 64
        %v3169 = vpop.permute.xlu0 %3168
        %3170 = vrot.lane.b32.xlu0 %v3108, 64
        %v3171 = vpop.permute.xlu0 %3170
        %3172 = vrot.lane.b32.xlu0 %v3109, 64
        %v3173 = vpop.permute.xlu0 %3172
        %3174 = vrot.lane.b32.xlu0 %v3112, 64
        %v3175 = vpop.permute.xlu0 %3174
        %3176 = vrot.lane.b32.xlu0 %v3113, 64
        %v3177 = vpop.permute.xlu0 %3176
        %3178 = vrot.lane.b32.xlu0 %v3116, 64
        %v3179 = vpop.permute.xlu0 %3178
        %3180 = vrot.lane.b32.xlu0 %v3117, 64
        %v3181 = vpop.permute.xlu0 %3180
        %3182 = vrot.lane.b32.xlu0 %v3120, 64
        %v3183 = vpop.permute.xlu0 %3182
        %3184 = vrot.lane.b32.xlu0 %v3121, 64
        %v3185 = vpop.permute.xlu0 %3184
        %3186 = vrot.lane.b32.xlu0 %v3124, 64
        %v3187 = vpop.permute.xlu0 %3186
        %3188 = vrot.lane.b32.xlu0 %v3125, 64
        %v3189 = vpop.permute.xlu0 %3188
        %3190 = vrot.lane.b32.xlu0 %v3128, 64
        %v3191 = vpop.permute.xlu0 %3190
        %3192 = vrot.lane.b32.xlu0 %v3129, 64
        %v3193 = vpop.permute.xlu0 %3192
        %3194 = vrot.lane.b32.xlu0 %v3132, 64
        %v3195 = vpop.permute.xlu0 %3194
        %3196 = vrot.lane.b32.xlu0 %v3133, 64
        %v3197 = vpop.permute.xlu0 %3196
        %3198 = vrot.lane.b32.xlu0 %v3136, 64
        %v3199 = vpop.permute.xlu0 %3198
        %3200 = vrot.lane.b32.xlu0 %v3137, 64
        %v3201 = vpop.permute.xlu0 %3200
        %3202 = vrot.lane.b32.xlu0 %v3140, 64
        %v3203 = vpop.permute.xlu0 %3202
        %3204 = vrot.lane.b32.xlu0 %v3141, 64
        %v3205 = vpop.permute.xlu0 %3204
        %3206 = vrot.lane.b32.xlu0 %v3144, 64
        %v3207 = vpop.permute.xlu0 %3206
        %3208 = vrot.lane.b32.xlu0 %v3145, 64
        %v3209 = vpop.permute.xlu0 %3208
        %3210 = vrot.lane.b32.xlu0 %v3148, 64
        %v3211 = vpop.permute.xlu0 %3210
        %3212 = vrot.lane.b32.xlu0 %v3149, 64
        %v3213 = vpop.permute.xlu0 %3212
        %3246 = vrot.lane.b32.xlu0 %v2895, 96
        %v3247 = vpop.permute.xlu0 %3246
        %3248 = vrot.lane.b32.xlu0 %v2834, 96
        %v3249 = vpop.permute.xlu0 %3248
        %3250 = vrot.lane.b32.xlu0 %v2896, 96
        %v3251 = vpop.permute.xlu0 %3250
        %3252 = vrot.lane.b32.xlu0 %v2836, 96
        %v3253 = vpop.permute.xlu0 %3252
        %3254 = vrot.lane.b32.xlu0 %v2897, 96
        %v3255 = vpop.permute.xlu0 %3254
        %3256 = vrot.lane.b32.xlu0 %v2838, 96
        %v3257 = vpop.permute.xlu0 %3256
        %3258 = vrot.lane.b32.xlu0 %v2898, 96
        %v3259 = vpop.permute.xlu0 %3258
        %3260 = vrot.lane.b32.xlu0 %v2840, 96
        %v3261 = vpop.permute.xlu0 %3260
        %3262 = vrot.lane.b32.xlu0 %v2899, 96
        %v3263 = vpop.permute.xlu0 %3262
        %3264 = vrot.lane.b32.xlu0 %v2842, 96
        %v3265 = vpop.permute.xlu0 %3264
        %3266 = vrot.lane.b32.xlu0 %v2900, 96
        %v3267 = vpop.permute.xlu0 %3266
        %3268 = vrot.lane.b32.xlu0 %v2844, 96
        %v3269 = vpop.permute.xlu0 %3268
        %3270 = vrot.lane.b32.xlu0 %v2901, 96
        %v3271 = vpop.permute.xlu0 %3270
        %3272 = vrot.lane.b32.xlu0 %v2846, 96
        %v3273 = vpop.permute.xlu0 %3272
        %3274 = vrot.lane.b32.xlu0 %v2902, 96
        %v3275 = vpop.permute.xlu0 %3274
        %3276 = vrot.lane.b32.xlu0 %v2848, 96
        %v3277 = vpop.permute.xlu0 %3276
        %3278 = vrot.lane.b32.xlu0 %v2903, 96
        %v3279 = vpop.permute.xlu0 %3278
        %3280 = vrot.lane.b32.xlu0 %v2850, 96
        %v3281 = vpop.permute.xlu0 %3280
        %3282 = vrot.lane.b32.xlu0 %v2904, 96
        %v3283 = vpop.permute.xlu0 %3282
        %3284 = vrot.lane.b32.xlu0 %v2852, 96
        %v3285 = vpop.permute.xlu0 %3284
        %3286 = vrot.lane.b32.xlu0 %v2905, 96
        %v3287 = vpop.permute.xlu0 %3286
        %3288 = vrot.lane.b32.xlu0 %v2854, 96
        %v3289 = vpop.permute.xlu0 %3288
        %3290 = vrot.lane.b32.xlu0 %v2906, 96
        %v3291 = vpop.permute.xlu0 %3290
        %3292 = vrot.lane.b32.xlu0 %v2856, 96
        %v3293 = vpop.permute.xlu0 %3292
        %3294 = vrot.lane.b32.xlu0 %v2907, 96
        %v3295 = vpop.permute.xlu0 %3294
        %3296 = vrot.lane.b32.xlu0 %v2858, 96
        %v3297 = vpop.permute.xlu0 %3296
        %3298 = vrot.lane.b32.xlu0 %v2908, 96
        %v3299 = vpop.permute.xlu0 %3298
        %3300 = vrot.lane.b32.xlu0 %v2860, 96
        %v3301 = vpop.permute.xlu0 %3300
        %3302 = vrot.lane.b32.xlu0 %v2893, 96
        %v3303 = vpop.permute.xlu0 %3302
        %3304 = vrot.lane.b32.xlu0 %v2830, 96
        %v3305 = vpop.permute.xlu0 %3304
        %3306 = vrot.lane.b32.xlu0 %v2894, 96
        %v3307 = vpop.permute.xlu0 %3306
        %3308 = vrot.lane.b32.xlu0 %v2832, 96
        %v3309 = vpop.permute.xlu0 %3308
        %3374 = vrot.lane.b32.xlu0 %v3096, 32
        %v3375 = vpop.permute.xlu0 %3374
        %3376 = vrot.lane.b32.xlu0 %v3097, 32
        %v3377 = vpop.permute.xlu0 %3376
        %3378 = vrot.lane.b32.xlu0 %v3100, 32
        %v3379 = vpop.permute.xlu0 %3378
        %3380 = vrot.lane.b32.xlu0 %v3101, 32
        %v3381 = vpop.permute.xlu0 %3380
        %3382 = vrot.lane.b32.xlu0 %v3104, 32
        %v3383 = vpop.permute.xlu0 %3382
        %3384 = vrot.lane.b32.xlu0 %v3105, 32
        %v3385 = vpop.permute.xlu0 %3384
        %3386 = vrot.lane.b32.xlu0 %v3108, 32
        %v3387 = vpop.permute.xlu0 %3386
        %3388 = vrot.lane.b32.xlu0 %v3109, 32
        %v3389 = vpop.permute.xlu0 %3388
        %3390 = vrot.lane.b32.xlu0 %v3112, 32
        %v3391 = vpop.permute.xlu0 %3390
        %3392 = vrot.lane.b32.xlu0 %v3113, 32
        %v3393 = vpop.permute.xlu0 %3392
        %3394 = vrot.lane.b32.xlu0 %v3116, 32
        %v3395 = vpop.permute.xlu0 %3394
        %3396 = vrot.lane.b32.xlu0 %v3117, 32
        %v3397 = vpop.permute.xlu0 %3396
        %3398 = vrot.lane.b32.xlu0 %v3120, 32
        %v3399 = vpop.permute.xlu0 %3398
        %3400 = vrot.lane.b32.xlu0 %v3121, 32
        %v3401 = vpop.permute.xlu0 %3400
        %3402 = vrot.lane.b32.xlu0 %v3124, 32
        %v3403 = vpop.permute.xlu0 %3402
        %3404 = vrot.lane.b32.xlu0 %v3125, 32
        %v3405 = vpop.permute.xlu0 %3404
        %3406 = vrot.lane.b32.xlu0 %v3128, 32
        %v3407 = vpop.permute.xlu0 %3406
        %3408 = vrot.lane.b32.xlu0 %v3129, 32
        %v3409 = vpop.permute.xlu0 %3408
        %3410 = vrot.lane.b32.xlu0 %v3132, 32
        %v3411 = vpop.permute.xlu0 %3410
        %3412 = vrot.lane.b32.xlu0 %v3133, 32
        %v3413 = vpop.permute.xlu0 %3412
        %3414 = vrot.lane.b32.xlu0 %v3136, 32
        %v3415 = vpop.permute.xlu0 %3414
        %3416 = vrot.lane.b32.xlu0 %v3137, 32
        %v3417 = vpop.permute.xlu0 %3416
        %3418 = vrot.lane.b32.xlu0 %v3140, 32
        %v3419 = vpop.permute.xlu0 %3418
        %3420 = vrot.lane.b32.xlu0 %v3141, 32
        %v3421 = vpop.permute.xlu0 %3420
        %3422 = vrot.lane.b32.xlu0 %v3144, 32
        %v3423 = vpop.permute.xlu0 %3422
        %3424 = vrot.lane.b32.xlu0 %v3145, 32
        %v3425 = vpop.permute.xlu0 %3424
        %3426 = vrot.lane.b32.xlu0 %v3148, 32
        %v3427 = vpop.permute.xlu0 %3426
        %3428 = vrot.lane.b32.xlu0 %v3149, 32
        %v3429 = vpop.permute.xlu0 %3428
        %3430 = vrot.lane.b32.xlu0 %v3088, 32
        %v3431 = vpop.permute.xlu0 %3430
        %3432 = vrot.lane.b32.xlu0 %v3089, 32
        %v3433 = vpop.permute.xlu0 %3432
        %3434 = vrot.lane.b32.xlu0 %v3092, 32
        %v3435 = vpop.permute.xlu0 %3434
        %3436 = vrot.lane.b32.xlu0 %v3093, 32
        %v3437 = vpop.permute.xlu0 %3436
        %3470 = vrot.lane.b32.xlu0 %v2897, 64
        %v3471 = vpop.permute.xlu0 %3470
        %3472 = vrot.lane.b32.xlu0 %v2838, 64
        %v3473 = vpop.permute.xlu0 %3472
        %3474 = vrot.lane.b32.xlu0 %v2898, 64
        %v3475 = vpop.permute.xlu0 %3474
        %3476 = vrot.lane.b32.xlu0 %v2840, 64
        %v3477 = vpop.permute.xlu0 %3476
        %3478 = vrot.lane.b32.xlu0 %v2899, 64
        %v3479 = vpop.permute.xlu0 %3478
        %3480 = vrot.lane.b32.xlu0 %v2842, 64
        %v3481 = vpop.permute.xlu0 %3480
        %3482 = vrot.lane.b32.xlu0 %v2900, 64
        %v3483 = vpop.permute.xlu0 %3482
        %3484 = vrot.lane.b32.xlu0 %v2844, 64
        %v3485 = vpop.permute.xlu0 %3484
        %3486 = vrot.lane.b32.xlu0 %v2901, 64
        %v3487 = vpop.permute.xlu0 %3486
        %3488 = vrot.lane.b32.xlu0 %v2846, 64
        %v3489 = vpop.permute.xlu0 %3488
        %3490 = vrot.lane.b32.xlu0 %v2902, 64
        %v3491 = vpop.permute.xlu0 %3490
        %3492 = vrot.lane.b32.xlu0 %v2848, 64
        %v3493 = vpop.permute.xlu0 %3492
        %3494 = vrot.lane.b32.xlu0 %v2903, 64
        %v3495 = vpop.permute.xlu0 %3494
        %3496 = vrot.lane.b32.xlu0 %v2850, 64
        %v3497 = vpop.permute.xlu0 %3496
        %3498 = vrot.lane.b32.xlu0 %v2904, 64
        %v3499 = vpop.permute.xlu0 %3498
        %3500 = vrot.lane.b32.xlu0 %v2852, 64
        %v3501 = vpop.permute.xlu0 %3500
        %3502 = vrot.lane.b32.xlu0 %v2905, 64
        %v3503 = vpop.permute.xlu0 %3502
        %3504 = vrot.lane.b32.xlu0 %v2854, 64
        %v3505 = vpop.permute.xlu0 %3504
        %3506 = vrot.lane.b32.xlu0 %v2906, 64
        %v3507 = vpop.permute.xlu0 %3506
        %3508 = vrot.lane.b32.xlu0 %v2856, 64
        %v3509 = vpop.permute.xlu0 %3508
        %3510 = vrot.lane.b32.xlu0 %v2907, 64
        %v3511 = vpop.permute.xlu0 %3510
        %3512 = vrot.lane.b32.xlu0 %v2858, 64
        %v3513 = vpop.permute.xlu0 %3512
        %3514 = vrot.lane.b32.xlu0 %v2908, 64
        %v3515 = vpop.permute.xlu0 %3514
        %3516 = vrot.lane.b32.xlu0 %v2860, 64
        %v3517 = vpop.permute.xlu0 %3516
        %3518 = vrot.lane.b32.xlu0 %v2893, 64
        %v3519 = vpop.permute.xlu0 %3518
        %3520 = vrot.lane.b32.xlu0 %v2830, 64
        %v3521 = vpop.permute.xlu0 %3520
        %3522 = vrot.lane.b32.xlu0 %v2894, 64
        %v3523 = vpop.permute.xlu0 %3522
        %3524 = vrot.lane.b32.xlu0 %v2832, 64
        %v3525 = vpop.permute.xlu0 %3524
        %3526 = vrot.lane.b32.xlu0 %v2895, 64
        %v3527 = vpop.permute.xlu0 %3526
        %3528 = vrot.lane.b32.xlu0 %v2834, 64
        %v3529 = vpop.permute.xlu0 %3528
        %3530 = vrot.lane.b32.xlu0 %v2896, 64
        %v3531 = vpop.permute.xlu0 %3530
        %3532 = vrot.lane.b32.xlu0 %v2836, 64
        %v3533 = vpop.permute.xlu0 %3532
        %3566 = vrot.lane.b32.xlu0 %v2943, 96
        %v3567 = vpop.permute.xlu0 %3566
        %3568 = vrot.lane.b32.xlu0 %v2944, 96
        %v3569 = vpop.permute.xlu0 %3568
        %3570 = vrot.lane.b32.xlu0 %v2947, 96
        %v3571 = vpop.permute.xlu0 %3570
        %3572 = vrot.lane.b32.xlu0 %v2948, 96
        %v3573 = vpop.permute.xlu0 %3572
        %3574 = vrot.lane.b32.xlu0 %v2951, 96
        %v3575 = vpop.permute.xlu0 %3574
        %3576 = vrot.lane.b32.xlu0 %v2952, 96
        %v3577 = vpop.permute.xlu0 %3576
        %3578 = vrot.lane.b32.xlu0 %v2955, 96
        %v3579 = vpop.permute.xlu0 %3578
        %3580 = vrot.lane.b32.xlu0 %v2956, 96
        %v3581 = vpop.permute.xlu0 %3580
        %3582 = vrot.lane.b32.xlu0 %v2959, 96
        %v3583 = vpop.permute.xlu0 %3582
        %3584 = vrot.lane.b32.xlu0 %v2960, 96
        %v3585 = vpop.permute.xlu0 %3584
        %3586 = vrot.lane.b32.xlu0 %v2963, 96
        %v3587 = vpop.permute.xlu0 %3586
        %3588 = vrot.lane.b32.xlu0 %v2964, 96
        %v3589 = vpop.permute.xlu0 %3588
        %3590 = vrot.lane.b32.xlu0 %v2967, 96
        %v3591 = vpop.permute.xlu0 %3590
        %3592 = vrot.lane.b32.xlu0 %v2968, 96
        %v3593 = vpop.permute.xlu0 %3592
        %3594 = vrot.lane.b32.xlu0 %v2971, 96
        %v3595 = vpop.permute.xlu0 %3594
        %3596 = vrot.lane.b32.xlu0 %v2972, 96
        %v3597 = vpop.permute.xlu0 %3596
        %3598 = vrot.lane.b32.xlu0 %v2975, 96
        %v3599 = vpop.permute.xlu0 %3598
        %3600 = vrot.lane.b32.xlu0 %v2976, 96
        %v3601 = vpop.permute.xlu0 %3600
        %3602 = vrot.lane.b32.xlu0 %v2979, 96
        %v3603 = vpop.permute.xlu0 %3602
        %3604 = vrot.lane.b32.xlu0 %v2980, 96
        %v3605 = vpop.permute.xlu0 %3604
        %3606 = vrot.lane.b32.xlu0 %v2983, 96
        %v3607 = vpop.permute.xlu0 %3606
        %3608 = vrot.lane.b32.xlu0 %v2984, 96
        %v3609 = vpop.permute.xlu0 %3608
        %3610 = vrot.lane.b32.xlu0 %v2987, 96
        %v3611 = vpop.permute.xlu0 %3610
        %3612 = vrot.lane.b32.xlu0 %v2988, 96
        %v3613 = vpop.permute.xlu0 %3612
        %3614 = vrot.lane.b32.xlu0 %v2927, 96
        %v3615 = vpop.permute.xlu0 %3614
        %3616 = vrot.lane.b32.xlu0 %v2928, 96
        %v3617 = vpop.permute.xlu0 %3616
        %3618 = vrot.lane.b32.xlu0 %v2931, 96
        %v3619 = vpop.permute.xlu0 %3618
        %3620 = vrot.lane.b32.xlu0 %v2932, 96
        %v3621 = vpop.permute.xlu0 %3620
        %3622 = vrot.lane.b32.xlu0 %v2935, 96
        %v3623 = vpop.permute.xlu0 %3622
        %3624 = vrot.lane.b32.xlu0 %v2936, 96
        %v3625 = vpop.permute.xlu0 %3624
        %3626 = vrot.lane.b32.xlu0 %v2939, 96
        %v3627 = vpop.permute.xlu0 %3626
        %3628 = vrot.lane.b32.xlu0 %v2940, 96
        %v3629 = vpop.permute.xlu0 %3628
        %v3694 = vsel %vm474, %v2893, %v2990
        %v3695 = vsel %vm474, %v2830, %v2992
        %v3696 = vsel %vm474, %v2894, %v2994
        %v3697 = vsel %vm474, %v2832, %v2996
        %v3698 = vsel %vm474, %v2895, %v2998
        %v3699 = vsel %vm474, %v2834, %v3000
        %v3700 = vsel %vm474, %v2896, %v3002
        %v3701 = vsel %vm474, %v2836, %v3004
        %v3702 = vsel %vm474, %v2897, %v3006
        %v3703 = vsel %vm474, %v2838, %v3008
        %v3704 = vsel %vm474, %v2898, %v3010
        %v3705 = vsel %vm474, %v2840, %v3012
        %v3706 = vsel %vm474, %v2899, %v3014
        %v3707 = vsel %vm474, %v2842, %v3016
        %v3708 = vsel %vm474, %v2900, %v3018
        %v3709 = vsel %vm474, %v2844, %v3020
        %v3710 = vsel %vm474, %v2901, %v3022
        %v3711 = vsel %vm474, %v2846, %v3024
        %v3712 = vsel %vm474, %v2902, %v3026
        %v3713 = vsel %vm474, %v2848, %v3028
        %v3714 = vsel %vm474, %v2903, %v3030
        %v3715 = vsel %vm474, %v2850, %v3032
        %v3716 = vsel %vm474, %v2904, %v3034
        %v3717 = vsel %vm474, %v2852, %v3036
        %v3718 = vsel %vm474, %v2905, %v3038
        %v3719 = vsel %vm474, %v2854, %v3040
        %v3720 = vsel %vm474, %v2906, %v3042
        %v3721 = vsel %vm474, %v2856, %v3044
        %v3722 = vsel %vm474, %v2907, %v3046
        %v3723 = vsel %vm474, %v2858, %v3048
        %v3724 = vsel %vm474, %v2908, %v3050
        %v3725 = vsel %vm474, %v2860, %v3052
        %v3726 = vsel %vm1745, %v3694, %v3151
        %v3727 = vsel %vm1745, %v3695, %v3153
        %v3728 = vsel %vm1745, %v3696, %v3155
        %v3729 = vsel %vm1745, %v3697, %v3157
        %v3730 = vsel %vm1745, %v3698, %v3159
        %v3731 = vsel %vm1745, %v3699, %v3161
        %v3732 = vsel %vm1745, %v3700, %v3163
        %v3733 = vsel %vm1745, %v3701, %v3165
        %v3734 = vsel %vm1745, %v3702, %v3167
        %v3735 = vsel %vm1745, %v3703, %v3169
        %v3736 = vsel %vm1745, %v3704, %v3171
        %v3737 = vsel %vm1745, %v3705, %v3173
        %v3738 = vsel %vm1745, %v3706, %v3175
        %v3739 = vsel %vm1745, %v3707, %v3177
        %v3740 = vsel %vm1745, %v3708, %v3179
        %v3741 = vsel %vm1745, %v3709, %v3181
        %v3742 = vsel %vm1745, %v3710, %v3183
        %v3743 = vsel %vm1745, %v3711, %v3185
        %v3744 = vsel %vm1745, %v3712, %v3187
        %v3745 = vsel %vm1745, %v3713, %v3189
        %v3746 = vsel %vm1745, %v3714, %v3191
        %v3747 = vsel %vm1745, %v3715, %v3193
        %v3748 = vsel %vm1745, %v3716, %v3195
        %v3749 = vsel %vm1745, %v3717, %v3197
        %v3750 = vsel %vm1745, %v3718, %v3199
        %v3751 = vsel %vm1745, %v3719, %v3201
        %v3752 = vsel %vm1745, %v3720, %v3203
        %v3753 = vsel %vm1745, %v3721, %v3205
        %v3754 = vsel %vm1745, %v3722, %v3207
        %v3755 = vsel %vm1745, %v3723, %v3209
        %v3756 = vsel %vm1745, %v3724, %v3211
        %v3757 = vsel %vm1745, %v3725, %v3213
        %v3758 = vsel %vm1778, %v3726, %v3247
        %v3759 = vsel %vm1778, %v3727, %v3249
        %v3760 = vsel %vm1778, %v3728, %v3251
        %v3761 = vsel %vm1778, %v3729, %v3253
        %v3762 = vsel %vm1778, %v3730, %v3255
        %v3763 = vsel %vm1778, %v3731, %v3257
        %v3764 = vsel %vm1778, %v3732, %v3259
        %v3765 = vsel %vm1778, %v3733, %v3261
        %v3766 = vsel %vm1778, %v3734, %v3263
        %v3767 = vsel %vm1778, %v3735, %v3265
        %v3768 = vsel %vm1778, %v3736, %v3267
        %v3769 = vsel %vm1778, %v3737, %v3269
        %v3770 = vsel %vm1778, %v3738, %v3271
        %v3771 = vsel %vm1778, %v3739, %v3273
        %v3772 = vsel %vm1778, %v3740, %v3275
        %v3773 = vsel %vm1778, %v3741, %v3277
        %v3774 = vsel %vm1778, %v3742, %v3279
        %v3775 = vsel %vm1778, %v3743, %v3281
        %v3776 = vsel %vm1778, %v3744, %v3283
        %v3777 = vsel %vm1778, %v3745, %v3285
        %v3778 = vsel %vm1778, %v3746, %v3287
        %v3779 = vsel %vm1778, %v3747, %v3289
        %v3780 = vsel %vm1778, %v3748, %v3291
        %v3781 = vsel %vm1778, %v3749, %v3293
        %v3782 = vsel %vm1778, %v3750, %v3295
        %v3783 = vsel %vm1778, %v3751, %v3297
        %v3784 = vsel %vm1778, %v3752, %v3299
        %v3785 = vsel %vm1778, %v3753, %v3301
        %v3786 = vsel %vm1778, %v3754, %v3303
        %v3787 = vsel %vm1778, %v3755, %v3305
        %v3788 = vsel %vm1778, %v3756, %v3307
        %v3789 = vsel %vm1778, %v3757, %v3309
        %v3790 = vsel %vm474, %v2935, %v3375
        %v3791 = vsel %vm474, %v2936, %v3377
        %v3792 = vsel %vm474, %v2939, %v3379
        %v3793 = vsel %vm474, %v2940, %v3381
        %v3794 = vsel %vm474, %v2943, %v3383
        %v3795 = vsel %vm474, %v2944, %v3385
        %v3796 = vsel %vm474, %v2947, %v3387
        %v3797 = vsel %vm474, %v2948, %v3389
        %v3798 = vsel %vm474, %v2951, %v3391
        %v3799 = vsel %vm474, %v2952, %v3393
        %v3800 = vsel %vm474, %v2955, %v3395
        %v3801 = vsel %vm474, %v2956, %v3397
        %v3802 = vsel %vm474, %v2959, %v3399
        %v3803 = vsel %vm474, %v2960, %v3401
        %v3804 = vsel %vm474, %v2963, %v3403
        %v3805 = vsel %vm474, %v2964, %v3405
        %v3806 = vsel %vm474, %v2967, %v3407
        %v3807 = vsel %vm474, %v2968, %v3409
        %v3808 = vsel %vm474, %v2971, %v3411
        %v3809 = vsel %vm474, %v2972, %v3413
        %v3810 = vsel %vm474, %v2975, %v3415
        %v3811 = vsel %vm474, %v2976, %v3417
        %v3812 = vsel %vm474, %v2979, %v3419
        %v3813 = vsel %vm474, %v2980, %v3421
        %v3814 = vsel %vm474, %v2983, %v3423
        %v3815 = vsel %vm474, %v2984, %v3425
        %v3816 = vsel %vm474, %v2987, %v3427
        %v3817 = vsel %vm474, %v2988, %v3429
        %v3818 = vsel %vm474, %v2927, %v3431
        %v3819 = vsel %vm474, %v2928, %v3433
        %v3820 = vsel %vm474, %v2931, %v3435
        %v3821 = vsel %vm474, %v2932, %v3437
        %v3822 = vsel %vm1745, %v3790, %v3471
        %v3823 = vsel %vm1745, %v3791, %v3473
        %v3824 = vsel %vm1745, %v3792, %v3475
        %v3825 = vsel %vm1745, %v3793, %v3477
        %v3826 = vsel %vm1745, %v3794, %v3479
        %v3827 = vsel %vm1745, %v3795, %v3481
        %v3828 = vsel %vm1745, %v3796, %v3483
        %v3829 = vsel %vm1745, %v3797, %v3485
        %v3830 = vsel %vm1745, %v3798, %v3487
        %v3831 = vsel %vm1745, %v3799, %v3489
        %v3832 = vsel %vm1745, %v3800, %v3491
        %v3833 = vsel %vm1745, %v3801, %v3493
        %v3834 = vsel %vm1745, %v3802, %v3495
        %v3835 = vsel %vm1745, %v3803, %v3497
        %v3836 = vsel %vm1745, %v3804, %v3499
        %v3837 = vsel %vm1745, %v3805, %v3501
        %v3838 = vsel %vm1745, %v3806, %v3503
        %v3839 = vsel %vm1745, %v3807, %v3505
        %v3840 = vsel %vm1745, %v3808, %v3507
        %v3841 = vsel %vm1745, %v3809, %v3509
        %v3842 = vsel %vm1745, %v3810, %v3511
        %v3843 = vsel %vm1745, %v3811, %v3513
        %v3844 = vsel %vm1745, %v3812, %v3515
        %v3845 = vsel %vm1745, %v3813, %v3517
        %v3846 = vsel %vm1745, %v3814, %v3519
        %v3847 = vsel %vm1745, %v3815, %v3521
        %v3848 = vsel %vm1745, %v3816, %v3523
        %v3849 = vsel %vm1745, %v3817, %v3525
        %v3850 = vsel %vm1745, %v3818, %v3527
        %v3851 = vsel %vm1745, %v3819, %v3529
        %v3852 = vsel %vm1745, %v3820, %v3531
        %v3853 = vsel %vm1745, %v3821, %v3533
        %v3854 = vsel %vm1778, %v3822, %v3567
        %v3855 = vsel %vm1778, %v3823, %v3569
        %v3856 = vsel %vm1778, %v3824, %v3571
        %v3857 = vsel %vm1778, %v3825, %v3573
        %v3858 = vsel %vm1778, %v3826, %v3575
        %v3859 = vsel %vm1778, %v3827, %v3577
        %v3860 = vsel %vm1778, %v3828, %v3579
        %v3861 = vsel %vm1778, %v3829, %v3581
        %v3862 = vsel %vm1778, %v3830, %v3583
        %v3863 = vsel %vm1778, %v3831, %v3585
        %v3864 = vsel %vm1778, %v3832, %v3587
        %v3865 = vsel %vm1778, %v3833, %v3589
        %v3866 = vsel %vm1778, %v3834, %v3591
        %v3867 = vsel %vm1778, %v3835, %v3593
        %v3868 = vsel %vm1778, %v3836, %v3595
        %v3869 = vsel %vm1778, %v3837, %v3597
        %v3870 = vsel %vm1778, %v3838, %v3599
        %v3871 = vsel %vm1778, %v3839, %v3601
        %v3872 = vsel %vm1778, %v3840, %v3603
        %v3873 = vsel %vm1778, %v3841, %v3605
        %v3874 = vsel %vm1778, %v3842, %v3607
        %v3875 = vsel %vm1778, %v3843, %v3609
        %v3876 = vsel %vm1778, %v3844, %v3611
        %v3877 = vsel %vm1778, %v3845, %v3613
        %v3878 = vsel %vm1778, %v3846, %v3615
        %v3879 = vsel %vm1778, %v3847, %v3617
        %v3880 = vsel %vm1778, %v3848, %v3619
        %v3881 = vsel %vm1778, %v3849, %v3621
        %v3882 = vsel %vm1778, %v3850, %v3623
        %v3883 = vsel %vm1778, %v3851, %v3625
        %v3884 = vsel %vm1778, %v3852, %v3627
        %v3885 = vsel %vm1778, %v3853, %v3629
        %v3886 = vpack.c.bf16 %v3759, %v3758
        %v3887 = vpack.c.bf16 %v3855, %v3854
        %v3888 = vpack.c.bf16 %v3105, %v3104
        %v3889 = vpack.c.bf16 %v3761, %v3760
        %v3890 = vpack.c.bf16 %v3857, %v3856
        %v3891 = vpack.c.bf16 %v3109, %v3108
        %v3892 = vpack.c.bf16 %v3763, %v3762
        %v3893 = vpack.c.bf16 %v3859, %v3858
        %v3894 = vpack.c.bf16 %v3113, %v3112
        %v3895 = vpack.c.bf16 %v3765, %v3764
        %v3896 = vpack.c.bf16 %v3861, %v3860
        %v3897 = vpack.c.bf16 %v3117, %v3116
        %v3898 = vpack.c.bf16 %v3767, %v3766
        %v3899 = vpack.c.bf16 %v3863, %v3862
        %v3900 = vpack.c.bf16 %v3121, %v3120
        %v3901 = vpack.c.bf16 %v3769, %v3768
        %v3902 = vpack.c.bf16 %v3865, %v3864
        %v3903 = vpack.c.bf16 %v3125, %v3124
        %v3904 = vpack.c.bf16 %v3771, %v3770
        %v3905 = vpack.c.bf16 %v3867, %v3866
        %v3906 = vpack.c.bf16 %v3129, %v3128
        %v3907 = vpack.c.bf16 %v3773, %v3772
        %v3908 = vpack.c.bf16 %v3869, %v3868
        %v3909 = vpack.c.bf16 %v3133, %v3132
        %v3910 = vpack.c.bf16 %v3775, %v3774
        %v3911 = vpack.c.bf16 %v3871, %v3870
        %v3912 = vpack.c.bf16 %v3137, %v3136
        %v3913 = vpack.c.bf16 %v3777, %v3776
        %v3914 = vpack.c.bf16 %v3873, %v3872
        %v3915 = vpack.c.bf16 %v3141, %v3140
        %v3916 = vpack.c.bf16 %v3779, %v3778
        %v3917 = vpack.c.bf16 %v3875, %v3874
        %v3918 = vpack.c.bf16 %v3145, %v3144
        %v3919 = vpack.c.bf16 %v3781, %v3780
        %v3920 = vpack.c.bf16 %v3877, %v3876
        %v3921 = vpack.c.bf16 %v3149, %v3148
        %v3922 = vpack.c.bf16 %v3783, %v3782
        %v3923 = vpack.c.bf16 %v3879, %v3878
        %v3924 = vpack.c.bf16 %v3089, %v3088
        %v3925 = vpack.c.bf16 %v3785, %v3784
        %v3926 = vpack.c.bf16 %v3881, %v3880
        %v3927 = vpack.c.bf16 %v3093, %v3092
        %v3928 = vpack.c.bf16 %v3787, %v3786
        %v3929 = vpack.c.bf16 %v3883, %v3882
        %v3930 = vpack.c.bf16 %v3097, %v3096
        %v3931 = vpack.c.bf16 %v3789, %v3788
        %v3932 = vpack.c.bf16 %v3885, %v3884
        %v3933 = vpack.c.bf16 %v3101, %v3100
        %v3935 = vlaneseq
        %v3936 = vshrl.u32 %v3935, 7
        %v3937 = vsub.s32 0, %v3936
        %v3938 = vrot.slane %v2763, %v3937
        %v3976 = vunpack.c.l.b16 %v2727
        %v3977 = vunpack.c.l.b16 %v2728
        %v3978 = vunpack.c.l.b16 %v2729
        %v3979 = vunpack.c.l.b16 %v2730
        %v3980 = vunpack.c.l.b16 %v2731
        %v3981 = vunpack.c.l.b16 %v2732
        %v3982 = vunpack.c.l.b16 %v2733
        %v3983 = vunpack.c.l.b16 %v2734
        %v3984 = vunpack.c.l.b16 %v2735
        %v3985 = vunpack.c.l.b16 %v2736
        %v3986 = vunpack.c.l.b16 %v2737
        %v3987 = vunpack.c.l.b16 %v2738
        %v3988 = vunpack.c.l.b16 %v2739
        %v3989 = vunpack.c.l.b16 %v2740
        %v3990 = vunpack.c.l.b16 %v2741
        %v3991 = vunpack.c.l.b16 %v2742
        %v3992 = vunpack.c.l.b16 %v2743
        %v3993 = vunpack.c.l.b16 %v2744
        %v3994 = vunpack.c.l.b16 %v2745
        %v3995 = vunpack.c.l.b16 %v2746
        %v3996 = vunpack.c.l.b16 %v2747
        %v3997 = vunpack.c.l.b16 %v2748
        %v3998 = vunpack.c.l.b16 %v2749
        %v3999 = vunpack.c.l.b16 %v2750
        %v4000 = vunpack.c.l.b16 %v2751
        %v4001 = vunpack.c.l.b16 %v2752
        %v4002 = vunpack.c.l.b16 %v2753
        %v4003 = vunpack.c.l.b16 %v2754
        %v4004 = vunpack.c.l.b16 %v2755
        %v4005 = vunpack.c.l.b16 %v2756
        %v4006 = vunpack.c.l.b16 %v2757
        %v4007 = vunpack.c.l.b16 %v2758
        %v4008 = vunpack.c.l.b16 %v2759
        %v4009 = vunpack.c.l.b16 %v2760
        %v4010 = vunpack.c.l.b16 %v2761
        %v4011 = vunpack.c.l.b16 %v2762
        %v4012 = vpack.c.b16 %v3977, %v3976
        %v4013 = vpack.c.b16 %v3979, %v3978
        %v4014 = vpack.c.b16 %v3981, %v3980
        %v4015 = vpack.c.b16 %v3983, %v3982
        %v4016 = vpack.c.b16 %v3985, %v3984
        %v4017 = vpack.c.b16 %v3987, %v3986
        %v4018 = vpack.c.b16 %v3989, %v3988
        %v4019 = vpack.c.b16 %v3991, %v3990
        %v4020 = vpack.c.b16 %v3993, %v3992
        %v4021 = vpack.c.b16 %v3995, %v3994
        %v4022 = vpack.c.b16 %v3997, %v3996
        %v4023 = vpack.c.b16 %v3999, %v3998
        %v4024 = vpack.c.b16 %v4001, %v4000
        %v4025 = vpack.c.b16 %v4003, %v4002
        %v4026 = vpack.c.b16 %v4005, %v4004
        %v4027 = vpack.c.b16 %v4007, %v4006
        %v4028 = vpack.c.b16 %v4009, %v4008
        %v4029 = vpack.c.b16 %v4011, %v4010
        %v4049 = vsel %vm474, %v3888, 0
        %v4052 = vsel %vm474, %v3891, 0
        %v4055 = vsel %vm474, %v3894, 0
        %v4058 = vsel %vm474, %v3897, 0
        %v4061 = vsel %vm474, %v3900, 0
        %v4064 = vsel %vm474, %v3903, 0
        %v4067 = vsel %vm474, %v3906, 0
        %v4070 = vsel %vm474, %v3909, 0
        %v4073 = vsel %vm474, %v3912, 0
        %v4076 = vsel %vm474, %v3915, 0
        %v4079 = vsel %vm474, %v3918, 0
        %v4082 = vsel %vm474, %v3921, 0
        %v4085 = vsel %vm474, %v3924, 0
        %v4088 = vsel %vm474, %v3927, 0
        %v4091 = vsel %vm474, %v3930, 0
        %v4094 = vsel %vm474, %v3933, 0
        %4096 = vmatprep.subr.bf16.mxu0 0
        %4097 = vmatpush1.bf16.msra.mxu0 %v4019
        %4098 = vmatprep.subr.bf16.mxu0 0
        %4099 = vmatpush1.bf16.msra.mxu0 %v4018
        %4100 = vmatprep.subr.bf16.mxu0 0
        %4101 = vmatpush1.bf16.msra.mxu0 %v4017
        %4102 = vmatprep.subr.bf16.mxu0 0
        %4103 = vmatpush1.bf16.msra.mxu0 %v4016
        %4104 = vmatprep.subr.bf16.mxu0 0
        %4105 = vmatpush1.bf16.msra.mxu0 %v4015
        %4106 = vmatprep.subr.bf16.mxu0 0
        %4107 = vmatpush1.bf16.msra.mxu0 %v4014
        %4108 = vmatprep.subr.bf16.mxu0 0
        %4109 = vmatpush1.bf16.msra.mxu0 %v4013
        %4110 = vmatprep.subr.bf16.mxu0 0
        %4111 = vmatpush1.bf16.msra.mxu0 %v4012
        %4112 = vmatprep.subr.bf16.mxu0 0
        %4113 = vmatpush2.bf16.msra.mxu0 %v4027
        %4114 = vmatprep.subr.bf16.mxu0 0
        %4115 = vmatpush2.bf16.msra.mxu0 %v4026
        %4116 = vmatprep.subr.bf16.mxu0 0
        %4117 = vmatpush2.bf16.msra.mxu0 %v4025
        %4118 = vmatprep.subr.bf16.mxu0 0
        %4119 = vmatpush2.bf16.msra.mxu0 %v4024
        %4120 = vmatprep.subr.bf16.mxu0 0
        %4121 = vmatpush2.bf16.msra.mxu0 %v4023
        %4122 = vmatprep.subr.bf16.mxu0 0
        %4123 = vmatpush2.bf16.msra.mxu0 %v4022
        %4124 = vmatprep.subr.bf16.mxu0 0
        %4125 = vmatpush2.bf16.msra.mxu0 %v4021
        %4126 = vmatprep.subr.bf16.mxu0 0
        %4127 = vmatpush2.bf16.msra.mxu0 %v4020
        %4128 = vmatprep.mubr.bf16.mxu0 %v3887
        %4129 = vmatmul.mubr.bf16.gmra.mxu0 %v3886
        %v4130 = vpop.f32.mrf.mxu0
        %v4131 = vadd.f32 %v3938, %v4130
        %v4132 = vpop.f32.mrf.mxu0
        %v4133 = vpop.f32.mrf.mxu0
        %v4134 = vadd.f32 %v3938, %v4133
        %v4135 = vpop.f32.mrf.mxu0
        %4136 = vmatprep.mubr.bf16.mxu0 %v3890
        %4137 = vmatmul.mubr.bf16.gmra.mxu0 %v3889
        %v4138 = vpop.f32.mrf.mxu0
        %v4139 = vadd.f32 %v3938, %v4138
        %v4140 = vpop.f32.mrf.mxu0
        %v4141 = vpop.f32.mrf.mxu0
        %v4142 = vadd.f32 %v3938, %v4141
        %v4143 = vpop.f32.mrf.mxu0
        %4144 = vmatprep.mubr.bf16.mxu0 %v3893
        %4145 = vmatmul.mubr.bf16.gmra.mxu0 %v3892
        %v4146 = vpop.f32.mrf.mxu0
        %v4147 = vadd.f32 %v3938, %v4146
        %v4148 = vpop.f32.mrf.mxu0
        %v4149 = vpop.f32.mrf.mxu0
        %v4150 = vadd.f32 %v3938, %v4149
        %v4151 = vpop.f32.mrf.mxu0
        %4152 = vmatprep.mubr.bf16.mxu0 %v3896
        %4153 = vmatmul.mubr.bf16.gmra.mxu0 %v3895
        %v4154 = vpop.f32.mrf.mxu0
        %v4155 = vadd.f32 %v3938, %v4154
        %v4156 = vpop.f32.mrf.mxu0
        %v4157 = vpop.f32.mrf.mxu0
        %v4158 = vadd.f32 %v3938, %v4157
        %v4159 = vpop.f32.mrf.mxu0
        %4160 = vmatprep.mubr.bf16.mxu0 %v3899
        %4161 = vmatmul.mubr.bf16.gmra.mxu0 %v3898
        %v4162 = vpop.f32.mrf.mxu0
        %v4163 = vadd.f32 %v3938, %v4162
        %v4164 = vpop.f32.mrf.mxu0
        %v4165 = vpop.f32.mrf.mxu0
        %v4166 = vadd.f32 %v3938, %v4165
        %v4167 = vpop.f32.mrf.mxu0
        %4168 = vmatprep.mubr.bf16.mxu0 %v3902
        %4169 = vmatmul.mubr.bf16.gmra.mxu0 %v3901
        %v4170 = vpop.f32.mrf.mxu0
        %v4171 = vadd.f32 %v3938, %v4170
        %v4172 = vpop.f32.mrf.mxu0
        %v4173 = vpop.f32.mrf.mxu0
        %v4174 = vadd.f32 %v3938, %v4173
        %v4175 = vpop.f32.mrf.mxu0
        %4176 = vmatprep.mubr.bf16.mxu0 %v3905
        %4177 = vmatmul.mubr.bf16.gmra.mxu0 %v3904
        %v4178 = vpop.f32.mrf.mxu0
        %v4179 = vadd.f32 %v3938, %v4178
        %v4180 = vpop.f32.mrf.mxu0
        %v4181 = vpop.f32.mrf.mxu0
        %v4182 = vadd.f32 %v3938, %v4181
        %v4183 = vpop.f32.mrf.mxu0
        %4184 = vmatprep.mubr.bf16.mxu0 %v3908
        %4185 = vmatmul.mubr.bf16.gmra.mxu0 %v3907
        %v4186 = vpop.f32.mrf.mxu0
        %v4187 = vadd.f32 %v3938, %v4186
        %v4188 = vpop.f32.mrf.mxu0
        %v4189 = vpop.f32.mrf.mxu0
        %v4190 = vadd.f32 %v3938, %v4189
        %v4191 = vpop.f32.mrf.mxu0
        %4192 = vmatprep.mubr.bf16.mxu0 %v3911
        %4193 = vmatmul.mubr.bf16.gmra.mxu0 %v3910
        %v4194 = vpop.f32.mrf.mxu0
        %v4195 = vadd.f32 %v3938, %v4194
        %v4196 = vpop.f32.mrf.mxu0
        %v4197 = vpop.f32.mrf.mxu0
        %v4198 = vadd.f32 %v3938, %v4197
        %v4199 = vpop.f32.mrf.mxu0
        %4200 = vmatprep.mubr.bf16.mxu0 %v3914
        %4201 = vmatmul.mubr.bf16.gmra.mxu0 %v3913
        %v4202 = vpop.f32.mrf.mxu0
        %v4203 = vadd.f32 %v3938, %v4202
        %v4204 = vpop.f32.mrf.mxu0
        %v4205 = vpop.f32.mrf.mxu0
        %v4206 = vadd.f32 %v3938, %v4205
        %v4207 = vpop.f32.mrf.mxu0
        %4208 = vmatprep.mubr.bf16.mxu0 %v3917
        %4209 = vmatmul.mubr.bf16.gmra.mxu0 %v3916
        %v4210 = vpop.f32.mrf.mxu0
        %v4211 = vadd.f32 %v3938, %v4210
        %v4212 = vpop.f32.mrf.mxu0
        %v4213 = vpop.f32.mrf.mxu0
        %v4214 = vadd.f32 %v3938, %v4213
        %v4215 = vpop.f32.mrf.mxu0
        %4216 = vmatprep.mubr.bf16.mxu0 %v3920
        %4217 = vmatmul.mubr.bf16.gmra.mxu0 %v3919
        %v4218 = vpop.f32.mrf.mxu0
        %v4219 = vadd.f32 %v3938, %v4218
        %v4220 = vpop.f32.mrf.mxu0
        %v4221 = vpop.f32.mrf.mxu0
        %v4222 = vadd.f32 %v3938, %v4221
        %v4223 = vpop.f32.mrf.mxu0
        %4224 = vmatprep.mubr.bf16.mxu0 %v3923
        %4225 = vmatmul.mubr.bf16.gmra.mxu0 %v3922
        %v4226 = vpop.f32.mrf.mxu0
        %v4227 = vadd.f32 %v3938, %v4226
        %v4228 = vpop.f32.mrf.mxu0
        %v4229 = vpop.f32.mrf.mxu0
        %v4230 = vadd.f32 %v3938, %v4229
        %v4231 = vpop.f32.mrf.mxu0
        %4232 = vmatprep.mubr.bf16.mxu0 %v3926
        %4233 = vmatmul.mubr.bf16.gmra.mxu0 %v3925
        %v4234 = vpop.f32.mrf.mxu0
        %v4235 = vadd.f32 %v3938, %v4234
        %v4236 = vpop.f32.mrf.mxu0
        %v4237 = vpop.f32.mrf.mxu0
        %v4238 = vadd.f32 %v3938, %v4237
        %v4239 = vpop.f32.mrf.mxu0
        %4240 = vmatprep.mubr.bf16.mxu0 %v3929
        %4241 = vmatmul.mubr.bf16.gmra.mxu0 %v3928
        %v4242 = vpop.f32.mrf.mxu0
        %v4243 = vadd.f32 %v3938, %v4242
        %v4244 = vpop.f32.mrf.mxu0
        %v4245 = vpop.f32.mrf.mxu0
        %v4246 = vadd.f32 %v3938, %v4245
        %v4247 = vpop.f32.mrf.mxu0
        %4248 = vmatprep.mubr.bf16.mxu0 %v3932
        %4249 = vmatmul.mubr.bf16.gmra.mxu0 %v3931
        %v4250 = vpop.f32.mrf.mxu0
        %v4251 = vadd.f32 %v3938, %v4250
        %v4252 = vpop.f32.mrf.mxu0
        %v4253 = vpop.f32.mrf.mxu0
        %v4254 = vadd.f32 %v3938, %v4253
        %v4255 = vpop.f32.mrf.mxu0
        %4256 = vdwg.mxu0
        %4257 = vmatprep.subr.bf16.mxu0 0
        %4258 = vmatpush1.bf16.msra.mxu0 0
        %4259 = vmatprep.subr.bf16.mxu0 0
        %4260 = vmatpush1.bf16.msra.mxu0 0
        %4261 = vmatprep.subr.bf16.mxu0 0
        %4262 = vmatpush1.bf16.msra.mxu0 0
        %4263 = vmatprep.subr.bf16.mxu0 0
        %4264 = vmatpush1.bf16.msra.mxu0 0
        %4265 = vmatprep.subr.bf16.mxu0 0
        %4266 = vmatpush1.bf16.msra.mxu0 0
        %4267 = vmatprep.subr.bf16.mxu0 0
        %4268 = vmatpush1.bf16.msra.mxu0 0
        %4269 = vmatprep.subr.bf16.mxu0 0
        %4270 = vmatpush1.bf16.msra.mxu0 %v4029
        %4271 = vmatprep.subr.bf16.mxu0 0
        %4272 = vmatpush1.bf16.msra.mxu0 %v4028
        %4273 = vmatprep.subr.bf16.mxu0 0
        %4274 = vmatpush2.bf16.msra.mxu0 0
        %4275 = vmatprep.subr.bf16.mxu0 0
        %4276 = vmatpush2.bf16.msra.mxu0 0
        %4277 = vmatprep.subr.bf16.mxu0 0
        %4278 = vmatpush2.bf16.msra.mxu0 0
        %4279 = vmatprep.subr.bf16.mxu0 0
        %4280 = vmatpush2.bf16.msra.mxu0 0
        %4281 = vmatprep.subr.bf16.mxu0 0
        %4282 = vmatpush2.bf16.msra.mxu0 0
        %4283 = vmatprep.subr.bf16.mxu0 0
        %4284 = vmatpush2.bf16.msra.mxu0 0
        %4285 = vmatprep.subr.bf16.mxu0 0
        %4286 = vmatpush2.bf16.msra.mxu0 0
        %4287 = vmatprep.subr.bf16.mxu0 0
        %4288 = vmatpush2.bf16.msra.mxu0 0
        %4289 = vmatprep.mubr.bf16.mxu0 0
        %4290 = vmatmul.mubr.bf16.gmra.mxu0 %v4049
        %v4291 = vpop.f32.mrf.mxu0
        %v4292 = vadd.f32 %v4131, %v4291
        %v4293 = vpop.f32.mrf.mxu0
        %v4294 = vpop.f32.mrf.mxu0
        %v4295 = vadd.f32 %v4134, %v4294
        %v4296 = vpop.f32.mrf.mxu0
        %4297 = vmatprep.mubr.bf16.mxu0 0
        %4298 = vmatmul.mubr.bf16.gmra.mxu0 %v4052
        %v4299 = vpop.f32.mrf.mxu0
        %v4300 = vadd.f32 %v4139, %v4299
        %v4301 = vpop.f32.mrf.mxu0
        %v4302 = vpop.f32.mrf.mxu0
        %v4303 = vadd.f32 %v4142, %v4302
        %v4304 = vpop.f32.mrf.mxu0
        %4305 = vmatprep.mubr.bf16.mxu0 0
        %4306 = vmatmul.mubr.bf16.gmra.mxu0 %v4055
        %v4307 = vpop.f32.mrf.mxu0
        %v4308 = vadd.f32 %v4147, %v4307
        %v4309 = vpop.f32.mrf.mxu0
        %v4310 = vpop.f32.mrf.mxu0
        %v4311 = vadd.f32 %v4150, %v4310
        %v4312 = vpop.f32.mrf.mxu0
        %4313 = vmatprep.mubr.bf16.mxu0 0
        %4314 = vmatmul.mubr.bf16.gmra.mxu0 %v4058
        %v4315 = vpop.f32.mrf.mxu0
        %v4316 = vadd.f32 %v4155, %v4315
        %v4317 = vpop.f32.mrf.mxu0
        %v4318 = vpop.f32.mrf.mxu0
        %v4319 = vadd.f32 %v4158, %v4318
        %v4320 = vpop.f32.mrf.mxu0
        %4321 = vmatprep.mubr.bf16.mxu0 0
        %4322 = vmatmul.mubr.bf16.gmra.mxu0 %v4061
        %v4323 = vpop.f32.mrf.mxu0
        %v4324 = vadd.f32 %v4163, %v4323
        %v4325 = vpop.f32.mrf.mxu0
        %v4326 = vpop.f32.mrf.mxu0
        %v4327 = vadd.f32 %v4166, %v4326
        %v4328 = vpop.f32.mrf.mxu0
        %4329 = vmatprep.mubr.bf16.mxu0 0
        %4330 = vmatmul.mubr.bf16.gmra.mxu0 %v4064
        %v4331 = vpop.f32.mrf.mxu0
        %v4332 = vadd.f32 %v4171, %v4331
        %v4333 = vpop.f32.mrf.mxu0
        %v4334 = vpop.f32.mrf.mxu0
        %v4335 = vadd.f32 %v4174, %v4334
        %v4336 = vpop.f32.mrf.mxu0
        %4337 = vmatprep.mubr.bf16.mxu0 0
        %4338 = vmatmul.mubr.bf16.gmra.mxu0 %v4067
        %v4339 = vpop.f32.mrf.mxu0
        %v4340 = vadd.f32 %v4179, %v4339
        %v4341 = vpop.f32.mrf.mxu0
        %v4342 = vpop.f32.mrf.mxu0
        %v4343 = vadd.f32 %v4182, %v4342
        %v4344 = vpop.f32.mrf.mxu0
        %4345 = vmatprep.mubr.bf16.mxu0 0
        %4346 = vmatmul.mubr.bf16.gmra.mxu0 %v4070
        %v4347 = vpop.f32.mrf.mxu0
        %v4348 = vadd.f32 %v4187, %v4347
        %v4349 = vpop.f32.mrf.mxu0
        %v4350 = vpop.f32.mrf.mxu0
        %v4351 = vadd.f32 %v4190, %v4350
        %v4352 = vpop.f32.mrf.mxu0
        %4353 = vmatprep.mubr.bf16.mxu0 0
        %4354 = vmatmul.mubr.bf16.gmra.mxu0 %v4073
        %v4355 = vpop.f32.mrf.mxu0
        %v4356 = vadd.f32 %v4195, %v4355
        %v4357 = vpop.f32.mrf.mxu0
        %v4358 = vpop.f32.mrf.mxu0
        %v4359 = vadd.f32 %v4198, %v4358
        %v4360 = vpop.f32.mrf.mxu0
        %4361 = vmatprep.mubr.bf16.mxu0 0
        %4362 = vmatmul.mubr.bf16.gmra.mxu0 %v4076
        %v4363 = vpop.f32.mrf.mxu0
        %v4364 = vadd.f32 %v4203, %v4363
        %v4365 = vpop.f32.mrf.mxu0
        %v4366 = vpop.f32.mrf.mxu0
        %v4367 = vadd.f32 %v4206, %v4366
        %v4368 = vpop.f32.mrf.mxu0
        %4369 = vmatprep.mubr.bf16.mxu0 0
        %4370 = vmatmul.mubr.bf16.gmra.mxu0 %v4079
        %v4371 = vpop.f32.mrf.mxu0
        %v4372 = vadd.f32 %v4211, %v4371
        %v4373 = vpop.f32.mrf.mxu0
        %v4374 = vpop.f32.mrf.mxu0
        %v4375 = vadd.f32 %v4214, %v4374
        %v4376 = vpop.f32.mrf.mxu0
        %4377 = vmatprep.mubr.bf16.mxu0 0
        %4378 = vmatmul.mubr.bf16.gmra.mxu0 %v4082
        %v4379 = vpop.f32.mrf.mxu0
        %v4380 = vadd.f32 %v4219, %v4379
        %v4381 = vpop.f32.mrf.mxu0
        %v4382 = vpop.f32.mrf.mxu0
        %v4383 = vadd.f32 %v4222, %v4382
        %v4384 = vpop.f32.mrf.mxu0
        %4385 = vmatprep.mubr.bf16.mxu0 0
        %4386 = vmatmul.mubr.bf16.gmra.mxu0 %v4085
        %v4387 = vpop.f32.mrf.mxu0
        %v4388 = vadd.f32 %v4227, %v4387
        %v4389 = vpop.f32.mrf.mxu0
        %v4390 = vpop.f32.mrf.mxu0
        %v4391 = vadd.f32 %v4230, %v4390
        %v4392 = vpop.f32.mrf.mxu0
        %4393 = vmatprep.mubr.bf16.mxu0 0
        %4394 = vmatmul.mubr.bf16.gmra.mxu0 %v4088
        %v4395 = vpop.f32.mrf.mxu0
        %v4396 = vadd.f32 %v4235, %v4395
        %v4397 = vpop.f32.mrf.mxu0
        %v4398 = vpop.f32.mrf.mxu0
        %v4399 = vadd.f32 %v4238, %v4398
        %v4400 = vpop.f32.mrf.mxu0
        %4401 = vmatprep.mubr.bf16.mxu0 0
        %4402 = vmatmul.mubr.bf16.gmra.mxu0 %v4091
        %v4403 = vpop.f32.mrf.mxu0
        %v4404 = vadd.f32 %v4243, %v4403
        %v4405 = vpop.f32.mrf.mxu0
        %v4406 = vpop.f32.mrf.mxu0
        %v4407 = vadd.f32 %v4246, %v4406
        %v4408 = vpop.f32.mrf.mxu0
        %4409 = vmatprep.mubr.bf16.mxu0 0
        %4410 = vmatmul.mubr.bf16.gmra.mxu0 %v4094
        %v4411 = vpop.f32.mrf.mxu0
        %v4412 = vadd.f32 %v4251, %v4411
        %v4413 = vpop.f32.mrf.mxu0
        %v4414 = vpop.f32.mrf.mxu0
        %v4415 = vadd.f32 %v4254, %v4414
        %v4416 = vpop.f32.mrf.mxu0
        %4417 = vdwg.mxu0
        %v4418 = vmul.f32 %v4292, 0.5
        %v4419 = vmul.f32 %v4295, 0.5
        %v4420 = vmul.f32 %v4300, 0.5
        %v4421 = vmul.f32 %v4303, 0.5
        %v4422 = vmul.f32 %v4308, 0.5
        %v4423 = vmul.f32 %v4311, 0.5
        %v4424 = vmul.f32 %v4316, 0.5
        %v4425 = vmul.f32 %v4319, 0.5
        %v4426 = vmul.f32 %v4324, 0.5
        %v4427 = vmul.f32 %v4327, 0.5
        %v4428 = vmul.f32 %v4332, 0.5
        %v4429 = vmul.f32 %v4335, 0.5
        %v4430 = vmul.f32 %v4340, 0.5
        %v4431 = vmul.f32 %v4343, 0.5
        %v4432 = vmul.f32 %v4348, 0.5
        %v4433 = vmul.f32 %v4351, 0.5
        %v4434 = vmul.f32 %v4356, 0.5
        %v4435 = vmul.f32 %v4359, 0.5
        %v4436 = vmul.f32 %v4364, 0.5
        %v4437 = vmul.f32 %v4367, 0.5
        %v4438 = vmul.f32 %v4372, 0.5
        %v4439 = vmul.f32 %v4375, 0.5
        %v4440 = vmul.f32 %v4380, 0.5
        %v4441 = vmul.f32 %v4383, 0.5
        %v4442 = vmul.f32 %v4388, 0.5
        %v4443 = vmul.f32 %v4391, 0.5
        %v4444 = vmul.f32 %v4396, 0.5
        %v4445 = vmul.f32 %v4399, 0.5
        %v4446 = vmul.f32 %v4404, 0.5
        %v4447 = vmul.f32 %v4407, 0.5
        %v4448 = vmul.f32 %v4412, 0.5
        %v4449 = vmul.f32 %v4415, 0.5
        %v4450 = vmul.f32 %v4292, 0.044715
        %v4451 = vmul.f32 %v4295, 0.044715
        %v4452 = vmul.f32 %v4300, 0.044715
        %v4453 = vmul.f32 %v4303, 0.044715
        %v4454 = vmul.f32 %v4308, 0.044715
        %v4455 = vmul.f32 %v4311, 0.044715
        %v4456 = vmul.f32 %v4316, 0.044715
        %v4457 = vmul.f32 %v4319, 0.044715
        %v4458 = vmul.f32 %v4324, 0.044715
        %v4459 = vmul.f32 %v4327, 0.044715
        %v4460 = vmul.f32 %v4332, 0.044715
        %v4461 = vmul.f32 %v4335, 0.044715
        %v4462 = vmul.f32 %v4340, 0.044715
        %v4463 = vmul.f32 %v4343, 0.044715
        %v4464 = vmul.f32 %v4348, 0.044715
        %v4465 = vmul.f32 %v4351, 0.044715
        %v4466 = vmul.f32 %v4356, 0.044715
        %v4467 = vmul.f32 %v4359, 0.044715
        %v4468 = vmul.f32 %v4364, 0.044715
        %v4469 = vmul.f32 %v4367, 0.044715
        %v4470 = vmul.f32 %v4372, 0.044715
        %v4471 = vmul.f32 %v4375, 0.044715
        %v4472 = vmul.f32 %v4380, 0.044715
        %v4473 = vmul.f32 %v4383, 0.044715
        %v4474 = vmul.f32 %v4388, 0.044715
        %v4475 = vmul.f32 %v4391, 0.044715
        %v4476 = vmul.f32 %v4396, 0.044715
        %v4477 = vmul.f32 %v4399, 0.044715
        %v4478 = vmul.f32 %v4404, 0.044715
        %v4479 = vmul.f32 %v4407, 0.044715
        %v4480 = vmul.f32 %v4412, 0.044715
        %v4481 = vmul.f32 %v4415, 0.044715
        %v4482 = vmul.f32 %v4450, %v4292
        %v4483 = vmul.f32 %v4451, %v4295
        %v4484 = vmul.f32 %v4452, %v4300
        %v4485 = vmul.f32 %v4453, %v4303
        %v4486 = vmul.f32 %v4454, %v4308
        %v4487 = vmul.f32 %v4455, %v4311
        %v4488 = vmul.f32 %v4456, %v4316
        %v4489 = vmul.f32 %v4457, %v4319
        %v4490 = vmul.f32 %v4458, %v4324
        %v4491 = vmul.f32 %v4459, %v4327
        %v4492 = vmul.f32 %v4460, %v4332
        %v4493 = vmul.f32 %v4461, %v4335
        %v4494 = vmul.f32 %v4462, %v4340
        %v4495 = vmul.f32 %v4463, %v4343
        %v4496 = vmul.f32 %v4464, %v4348
        %v4497 = vmul.f32 %v4465, %v4351
        %v4498 = vmul.f32 %v4466, %v4356
        %v4499 = vmul.f32 %v4467, %v4359
        %v4500 = vmul.f32 %v4468, %v4364
        %v4501 = vmul.f32 %v4469, %v4367
        %v4502 = vmul.f32 %v4470, %v4372
        %v4503 = vmul.f32 %v4471, %v4375
        %v4504 = vmul.f32 %v4472, %v4380
        %v4505 = vmul.f32 %v4473, %v4383
        %v4506 = vmul.f32 %v4474, %v4388
        %v4507 = vmul.f32 %v4475, %v4391
        %v4508 = vmul.f32 %v4476, %v4396
        %v4509 = vmul.f32 %v4477, %v4399
        %v4510 = vmul.f32 %v4478, %v4404
        %v4511 = vmul.f32 %v4479, %v4407
        %v4512 = vmul.f32 %v4480, %v4412
        %v4513 = vmul.f32 %v4481, %v4415
        %v4514 = vmul.f32 %v4482, %v4292
        %v4515 = vmul.f32 %v4483, %v4295
        %v4516 = vmul.f32 %v4484, %v4300
        %v4517 = vmul.f32 %v4485, %v4303
        %v4518 = vmul.f32 %v4486, %v4308
        %v4519 = vmul.f32 %v4487, %v4311
        %v4520 = vmul.f32 %v4488, %v4316
        %v4521 = vmul.f32 %v4489, %v4319
        %v4522 = vmul.f32 %v4490, %v4324
        %v4523 = vmul.f32 %v4491, %v4327
        %v4524 = vmul.f32 %v4492, %v4332
        %v4525 = vmul.f32 %v4493, %v4335
        %v4526 = vmul.f32 %v4494, %v4340
        %v4527 = vmul.f32 %v4495, %v4343
        %v4528 = vmul.f32 %v4496, %v4348
        %v4529 = vmul.f32 %v4497, %v4351
        %v4530 = vmul.f32 %v4498, %v4356
        %v4531 = vmul.f32 %v4499, %v4359
        %v4532 = vmul.f32 %v4500, %v4364
        %v4533 = vmul.f32 %v4501, %v4367
        %v4534 = vmul.f32 %v4502, %v4372
        %v4535 = vmul.f32 %v4503, %v4375
        %v4536 = vmul.f32 %v4504, %v4380
        %v4537 = vmul.f32 %v4505, %v4383
        %v4538 = vmul.f32 %v4506, %v4388
        %v4539 = vmul.f32 %v4507, %v4391
        %v4540 = vmul.f32 %v4508, %v4396
        %v4541 = vmul.f32 %v4509, %v4399
        %v4542 = vmul.f32 %v4510, %v4404
        %v4543 = vmul.f32 %v4511, %v4407
        %v4544 = vmul.f32 %v4512, %v4412
        %v4545 = vmul.f32 %v4513, %v4415
        %v4546 = vadd.f32 %v4292, %v4514
        %v4547 = vadd.f32 %v4295, %v4515
        %v4548 = vadd.f32 %v4300, %v4516
        %v4549 = vadd.f32 %v4303, %v4517
        %v4550 = vadd.f32 %v4308, %v4518
        %v4551 = vadd.f32 %v4311, %v4519
        %v4552 = vadd.f32 %v4316, %v4520
        %v4553 = vadd.f32 %v4319, %v4521
        %v4554 = vadd.f32 %v4324, %v4522
        %v4555 = vadd.f32 %v4327, %v4523
        %v4556 = vadd.f32 %v4332, %v4524
        %v4557 = vadd.f32 %v4335, %v4525
        %v4558 = vadd.f32 %v4340, %v4526
        %v4559 = vadd.f32 %v4343, %v4527
        %v4560 = vadd.f32 %v4348, %v4528
        %v4561 = vadd.f32 %v4351, %v4529
        %v4562 = vadd.f32 %v4356, %v4530
        %v4563 = vadd.f32 %v4359, %v4531
        %v4564 = vadd.f32 %v4364, %v4532
        %v4565 = vadd.f32 %v4367, %v4533
        %v4566 = vadd.f32 %v4372, %v4534
        %v4567 = vadd.f32 %v4375, %v4535
        %v4568 = vadd.f32 %v4380, %v4536
        %v4569 = vadd.f32 %v4383, %v4537
        %v4570 = vadd.f32 %v4388, %v4538
        %v4571 = vadd.f32 %v4391, %v4539
        %v4572 = vadd.f32 %v4396, %v4540
        %v4573 = vadd.f32 %v4399, %v4541
        %v4574 = vadd.f32 %v4404, %v4542
        %v4575 = vadd.f32 %v4407, %v4543
        %v4576 = vadd.f32 %v4412, %v4544
        %v4577 = vadd.f32 %v4415, %v4545
        %v4578 = vmul.f32 %v4546, 0.7978846
        %v4579 = vmul.f32 %v4547, 0.7978846
        %v4580 = vmul.f32 %v4548, 0.7978846
        %v4581 = vmul.f32 %v4549, 0.7978846
        %v4582 = vmul.f32 %v4550, 0.7978846
        %v4583 = vmul.f32 %v4551, 0.7978846
        %v4584 = vmul.f32 %v4552, 0.7978846
        %v4585 = vmul.f32 %v4553, 0.7978846
        %v4586 = vmul.f32 %v4554, 0.7978846
        %v4587 = vmul.f32 %v4555, 0.7978846
        %v4588 = vmul.f32 %v4556, 0.7978846
        %v4589 = vmul.f32 %v4557, 0.7978846
        %v4590 = vmul.f32 %v4558, 0.7978846
        %v4591 = vmul.f32 %v4559, 0.7978846
        %v4592 = vmul.f32 %v4560, 0.7978846
        %v4593 = vmul.f32 %v4561, 0.7978846
        %v4594 = vmul.f32 %v4562, 0.7978846
        %v4595 = vmul.f32 %v4563, 0.7978846
        %v4596 = vmul.f32 %v4564, 0.7978846
        %v4597 = vmul.f32 %v4565, 0.7978846
        %v4598 = vmul.f32 %v4566, 0.7978846
        %v4599 = vmul.f32 %v4567, 0.7978846
        %v4600 = vmul.f32 %v4568, 0.7978846
        %v4601 = vmul.f32 %v4569, 0.7978846
        %v4602 = vmul.f32 %v4570, 0.7978846
        %v4603 = vmul.f32 %v4571, 0.7978846
        %v4604 = vmul.f32 %v4572, 0.7978846
        %v4605 = vmul.f32 %v4573, 0.7978846
        %v4606 = vmul.f32 %v4574, 0.7978846
        %v4607 = vmul.f32 %v4575, 0.7978846
        %v4608 = vmul.f32 %v4576, 0.7978846
        %v4609 = vmul.f32 %v4577, 0.7978846
        %v4610 = vtanh.pop %v4578
        %v4611 = vtanh.pop %v4579
        %v4612 = vtanh.pop %v4580
        %v4613 = vtanh.pop %v4581
        %v4614 = vtanh.pop %v4582
        %v4615 = vtanh.pop %v4583
        %v4616 = vtanh.pop %v4584
        %v4617 = vtanh.pop %v4585
        %v4618 = vtanh.pop %v4586
        %v4619 = vtanh.pop %v4587
        %v4620 = vtanh.pop %v4588
        %v4621 = vtanh.pop %v4589
        %v4622 = vtanh.pop %v4590
        %v4623 = vtanh.pop %v4591
        %v4624 = vtanh.pop %v4592
        %v4625 = vtanh.pop %v4593
        %v4626 = vtanh.pop %v4594
        %v4627 = vtanh.pop %v4595
        %v4628 = vtanh.pop %v4596
        %v4629 = vtanh.pop %v4597
        %v4630 = vtanh.pop %v4598
        %v4631 = vtanh.pop %v4599
        %v4632 = vtanh.pop %v4600
        %v4633 = vtanh.pop %v4601
        %v4634 = vtanh.pop %v4602
        %v4635 = vtanh.pop %v4603
        %v4636 = vtanh.pop %v4604
        %v4637 = vtanh.pop %v4605
        %v4638 = vtanh.pop %v4606
        %v4639 = vtanh.pop %v4607
        %v4640 = vtanh.pop %v4608
        %v4641 = vtanh.pop %v4609
        %v4642 = vadd.f32 %v4610, 1.0
        %v4643 = vadd.f32 %v4611, 1.0
        %v4644 = vadd.f32 %v4612, 1.0
        %v4645 = vadd.f32 %v4613, 1.0
        %v4646 = vadd.f32 %v4614, 1.0
        %v4647 = vadd.f32 %v4615, 1.0
        %v4648 = vadd.f32 %v4616, 1.0
        %v4649 = vadd.f32 %v4617, 1.0
        %v4650 = vadd.f32 %v4618, 1.0
        %v4651 = vadd.f32 %v4619, 1.0
        %v4652 = vadd.f32 %v4620, 1.0
        %v4653 = vadd.f32 %v4621, 1.0
        %v4654 = vadd.f32 %v4622, 1.0
        %v4655 = vadd.f32 %v4623, 1.0
        %v4656 = vadd.f32 %v4624, 1.0
        %v4657 = vadd.f32 %v4625, 1.0
        %v4658 = vadd.f32 %v4626, 1.0
        %v4659 = vadd.f32 %v4627, 1.0
        %v4660 = vadd.f32 %v4628, 1.0
        %v4661 = vadd.f32 %v4629, 1.0
        %v4662 = vadd.f32 %v4630, 1.0
        %v4663 = vadd.f32 %v4631, 1.0
        %v4664 = vadd.f32 %v4632, 1.0
        %v4665 = vadd.f32 %v4633, 1.0
        %v4666 = vadd.f32 %v4634, 1.0
        %v4667 = vadd.f32 %v4635, 1.0
        %v4668 = vadd.f32 %v4636, 1.0
        %v4669 = vadd.f32 %v4637, 1.0
        %v4670 = vadd.f32 %v4638, 1.0
        %v4671 = vadd.f32 %v4639, 1.0
        %v4672 = vadd.f32 %v4640, 1.0
        %v4673 = vadd.f32 %v4641, 1.0
        %v4674 = vmul.f32 %v4418, %v4642
        %v4675 = vmul.f32 %v4419, %v4643
        %v4676 = vmul.f32 %v4420, %v4644
        %v4677 = vmul.f32 %v4421, %v4645
        %v4678 = vmul.f32 %v4422, %v4646
        %v4679 = vmul.f32 %v4423, %v4647
        %v4680 = vmul.f32 %v4424, %v4648
        %v4681 = vmul.f32 %v4425, %v4649
        %v4682 = vmul.f32 %v4426, %v4650
        %v4683 = vmul.f32 %v4427, %v4651
        %v4684 = vmul.f32 %v4428, %v4652
        %v4685 = vmul.f32 %v4429, %v4653
        %v4686 = vmul.f32 %v4430, %v4654
        %v4687 = vmul.f32 %v4431, %v4655
        %v4688 = vmul.f32 %v4432, %v4656
        %v4689 = vmul.f32 %v4433, %v4657
        %v4690 = vmul.f32 %v4434, %v4658
        %v4691 = vmul.f32 %v4435, %v4659
        %v4692 = vmul.f32 %v4436, %v4660
        %v4693 = vmul.f32 %v4437, %v4661
        %v4694 = vmul.f32 %v4438, %v4662
        %v4695 = vmul.f32 %v4439, %v4663
        %v4696 = vmul.f32 %v4440, %v4664
        %v4697 = vmul.f32 %v4441, %v4665
        %v4698 = vmul.f32 %v4442, %v4666
        %v4699 = vmul.f32 %v4443, %v4667
        %v4700 = vmul.f32 %v4444, %v4668
        %v4701 = vmul.f32 %v4445, %v4669
        %v4702 = vmul.f32 %v4446, %v4670
        %v4703 = vmul.f32 %v4447, %v4671
        %v4704 = vmul.f32 %v4448, %v4672
        %v4705 = vmul.f32 %v4449, %v4673
        %v4706 = vld [vmem:[%s7] sm:$0xf]
        %v4707 = vld [vmem:[%s7 + $0x4] sm:$0xf]
        %v4708 = vld [vmem:[%s7 + $0x8] sm:$0xf]
        %v4709 = vld [vmem:[%s7 + $0xc] sm:$0xf]
        %v4710 = vld [vmem:[%s7 + $0x10] sm:$0xf]
        %v4711 = vld [vmem:[%s7 + $0x14] sm:$0xf]
        %v4712 = vld [vmem:[%s7 + $0x18] sm:$0xf]
        %v4713 = vld [vmem:[%s7 + $0x1c] sm:$0xf]
        %v4714 = vld [vmem:[%s7 + $0x20] sm:$0xf]
        %v4715 = vld [vmem:[%s7 + $0x24] sm:$0xf]
        %v4716 = vld [vmem:[%s7 + $0x28] sm:$0xf]
        %v4717 = vld [vmem:[%s7 + $0x2c] sm:$0xf]
        %v4718 = vld [vmem:[%s7 + $0x30] sm:$0xf]
        %v4719 = vld [vmem:[%s7 + $0x34] sm:$0xf]
        %v4720 = vld [vmem:[%s7 + $0x38] sm:$0xf]
        %v4721 = vld [vmem:[%s7 + $0x3c] sm:$0xf]
        %v4722 = vld [vmem:[%s7 + $0x40] sm:$0xf]
        %v4723 = vld [vmem:[%s7 + $0x44] sm:$0xf]
        %v4724 = vld [vmem:[%s7 + $0x48] sm:$0xf]
        %v4725 = vld [vmem:[%s7 + $0x4c] sm:$0xf]
        %v4726 = vld [vmem:[%s7 + $0x50] sm:$0xf]
        %v4727 = vld [vmem:[%s7 + $0x54] sm:$0xf]
        %v4728 = vld [vmem:[%s7 + $0x58] sm:$0xf]
        %v4729 = vld [vmem:[%s7 + $0x5c] sm:$0xf]
        %v4730 = vld [vmem:[%s7 + $0x60] sm:$0xf]
        %v4731 = vld [vmem:[%s7 + $0x64] sm:$0xf]
        %v4732 = vld [vmem:[%s7 + $0x68] sm:$0xf]
        %v4733 = vld [vmem:[%s7 + $0x6c] sm:$0xf]
        %v4734 = vld [vmem:[%s7 + $0x70] sm:$0xf]
        %v4735 = vld [vmem:[%s7 + $0x74] sm:$0xf]
        %v4736 = vld [vmem:[%s7 + $0x78] sm:$0xf]
        %v4737 = vld [vmem:[%s7 + $0x7c] sm:$0xf]
        %v4738 = vld [vmem:[%s7 + $0x80] sm:$0xf]
        %v4739 = vld [vmem:[%s7 + $0x84] sm:$0xf]
        %v4740 = vld [vmem:[%s7 + $0x88] sm:$0xf]
        %v4741 = vld [vmem:[%s7 + $0x8c] sm:$0xf]
        %v4742 = vld [vmem:[%s8] sm:$0x1]
        %v4759 = vrot.slane %v4705, 7
        %v4760 = vrot.slane %v4675, 7
        %v4761 = vrot.slane %v4677, 7
        %v4762 = vrot.slane %v4679, 7
        %v4763 = vrot.slane %v4681, 7
        %v4764 = vrot.slane %v4683, 7
        %v4765 = vrot.slane %v4685, 7
        %v4766 = vrot.slane %v4687, 7
        %v4767 = vrot.slane %v4689, 7
        %v4768 = vrot.slane %v4691, 7
        %v4769 = vrot.slane %v4693, 7
        %v4770 = vrot.slane %v4695, 7
        %v4771 = vrot.slane %v4697, 7
        %v4772 = vrot.slane %v4699, 7
        %v4773 = vrot.slane %v4701, 7
        %v4774 = vrot.slane %v4703, 7
        %v4807 = vrot.slane %v4704, 7
        %v4808 = vsel %vm846, %v4807, %v4759
        %v4809 = vrot.slane %v4674, 7
        %v4810 = vsel %vm846, %v4809, %v4760
        %v4811 = vrot.slane %v4676, 7
        %v4812 = vsel %vm846, %v4811, %v4761
        %v4813 = vrot.slane %v4678, 7
        %v4814 = vsel %vm846, %v4813, %v4762
        %v4815 = vrot.slane %v4680, 7
        %v4816 = vsel %vm846, %v4815, %v4763
        %v4817 = vrot.slane %v4682, 7
        %v4818 = vsel %vm846, %v4817, %v4764
        %v4819 = vrot.slane %v4684, 7
        %v4820 = vsel %vm846, %v4819, %v4765
        %v4821 = vrot.slane %v4686, 7
        %v4822 = vsel %vm846, %v4821, %v4766
        %v4823 = vrot.slane %v4688, 7
        %v4824 = vsel %vm846, %v4823, %v4767
        %v4825 = vrot.slane %v4690, 7
        %v4826 = vsel %vm846, %v4825, %v4768
        %v4827 = vrot.slane %v4692, 7
        %v4828 = vsel %vm846, %v4827, %v4769
        %v4829 = vrot.slane %v4694, 7
        %v4830 = vsel %vm846, %v4829, %v4770
        %v4831 = vrot.slane %v4696, 7
        %v4832 = vsel %vm846, %v4831, %v4771
        %v4833 = vrot.slane %v4698, 7
        %v4834 = vsel %vm846, %v4833, %v4772
        %v4835 = vrot.slane %v4700, 7
        %v4836 = vsel %vm846, %v4835, %v4773
        %v4837 = vrot.slane %v4702, 7
        %v4838 = vsel %vm846, %v4837, %v4774
        %v4871 = vsel %vm846, %v4759, %v4807
        %v4872 = vsel %vm846, %v4760, %v4809
        %v4873 = vsel %vm846, %v4761, %v4811
        %v4874 = vsel %vm846, %v4762, %v4813
        %v4875 = vsel %vm846, %v4763, %v4815
        %v4876 = vsel %vm846, %v4764, %v4817
        %v4877 = vsel %vm846, %v4765, %v4819
        %v4878 = vsel %vm846, %v4766, %v4821
        %v4879 = vsel %vm846, %v4767, %v4823
        %v4880 = vsel %vm846, %v4768, %v4825
        %v4881 = vsel %vm846, %v4769, %v4827
        %v4882 = vsel %vm846, %v4770, %v4829
        %v4883 = vsel %vm846, %v4771, %v4831
        %v4884 = vsel %vm846, %v4772, %v4833
        %v4885 = vsel %vm846, %v4773, %v4835
        %v4886 = vsel %vm846, %v4774, %v4837
        %v4903 = vrot.slane %v4871, 1
        %v4904 = vrot.slane %v4808, 1
        %v4905 = vsel %vm943, %v4903, %v4904
        %v4906 = vsel %vm943, %v4904, %v4903
        %v4907 = vrot.slane %v4872, 1
        %v4908 = vrot.slane %v4810, 1
        %v4909 = vsel %vm943, %v4907, %v4908
        %v4910 = vsel %vm943, %v4908, %v4907
        %v4911 = vrot.slane %v4873, 1
        %v4912 = vrot.slane %v4812, 1
        %v4913 = vsel %vm943, %v4911, %v4912
        %v4914 = vsel %vm943, %v4912, %v4911
        %v4915 = vrot.slane %v4874, 1
        %v4916 = vrot.slane %v4814, 1
        %v4917 = vsel %vm943, %v4915, %v4916
        %v4918 = vsel %vm943, %v4916, %v4915
        %v4919 = vrot.slane %v4875, 1
        %v4920 = vrot.slane %v4816, 1
        %v4921 = vsel %vm943, %v4919, %v4920
        %v4922 = vsel %vm943, %v4920, %v4919
        %v4923 = vrot.slane %v4876, 1
        %v4924 = vrot.slane %v4818, 1
        %v4925 = vsel %vm943, %v4923, %v4924
        %v4926 = vsel %vm943, %v4924, %v4923
        %v4927 = vrot.slane %v4877, 1
        %v4928 = vrot.slane %v4820, 1
        %v4929 = vsel %vm943, %v4927, %v4928
        %v4930 = vsel %vm943, %v4928, %v4927
        %v4931 = vrot.slane %v4878, 1
        %v4932 = vrot.slane %v4822, 1
        %v4933 = vsel %vm943, %v4931, %v4932
        %v4934 = vsel %vm943, %v4932, %v4931
        %v4935 = vrot.slane %v4879, 1
        %v4936 = vrot.slane %v4824, 1
        %v4937 = vsel %vm943, %v4935, %v4936
        %v4938 = vsel %vm943, %v4936, %v4935
        %v4939 = vrot.slane %v4880, 1
        %v4940 = vrot.slane %v4826, 1
        %v4941 = vsel %vm943, %v4939, %v4940
        %v4942 = vsel %vm943, %v4940, %v4939
        %v4943 = vrot.slane %v4881, 1
        %v4944 = vrot.slane %v4828, 1
        %v4945 = vsel %vm943, %v4943, %v4944
        %v4946 = vsel %vm943, %v4944, %v4943
        %v4947 = vrot.slane %v4882, 1
        %v4948 = vrot.slane %v4830, 1
        %v4949 = vsel %vm943, %v4947, %v4948
        %v4950 = vsel %vm943, %v4948, %v4947
        %v4951 = vrot.slane %v4883, 1
        %v4952 = vrot.slane %v4832, 1
        %v4953 = vsel %vm943, %v4951, %v4952
        %v4954 = vsel %vm943, %v4952, %v4951
        %v4955 = vrot.slane %v4884, 1
        %v4956 = vrot.slane %v4834, 1
        %v4957 = vsel %vm943, %v4955, %v4956
        %v4958 = vsel %vm943, %v4956, %v4955
        %v4959 = vrot.slane %v4885, 1
        %v4960 = vrot.slane %v4836, 1
        %v4961 = vsel %vm943, %v4959, %v4960
        %v4962 = vsel %vm943, %v4960, %v4959
        %v4963 = vrot.slane %v4886, 1
        %v4964 = vrot.slane %v4838, 1
        %v4965 = vsel %vm943, %v4963, %v4964
        %v4966 = vsel %vm943, %v4964, %v4963
        %4967 = vrot.lane.b32.xlu0 %v4905, 32
        %v4968 = vpop.permute.xlu0 %4967
        %4969 = vrot.lane.b32.xlu0 %v4906, 32
        %v4970 = vpop.permute.xlu0 %4969
        %4971 = vrot.lane.b32.xlu0 %v4909, 32
        %v4972 = vpop.permute.xlu0 %4971
        %4973 = vrot.lane.b32.xlu0 %v4910, 32
        %v4974 = vpop.permute.xlu0 %4973
        %4975 = vrot.lane.b32.xlu0 %v4913, 32
        %v4976 = vpop.permute.xlu0 %4975
        %4977 = vrot.lane.b32.xlu0 %v4914, 32
        %v4978 = vpop.permute.xlu0 %4977
        %4979 = vrot.lane.b32.xlu0 %v4917, 32
        %v4980 = vpop.permute.xlu0 %4979
        %4981 = vrot.lane.b32.xlu0 %v4918, 32
        %v4982 = vpop.permute.xlu0 %4981
        %4983 = vrot.lane.b32.xlu0 %v4921, 32
        %v4984 = vpop.permute.xlu0 %4983
        %4985 = vrot.lane.b32.xlu0 %v4922, 32
        %v4986 = vpop.permute.xlu0 %4985
        %4987 = vrot.lane.b32.xlu0 %v4925, 32
        %v4988 = vpop.permute.xlu0 %4987
        %4989 = vrot.lane.b32.xlu0 %v4926, 32
        %v4990 = vpop.permute.xlu0 %4989
        %4991 = vrot.lane.b32.xlu0 %v4929, 32
        %v4992 = vpop.permute.xlu0 %4991
        %4993 = vrot.lane.b32.xlu0 %v4930, 32
        %v4994 = vpop.permute.xlu0 %4993
        %4995 = vrot.lane.b32.xlu0 %v4933, 32
        %v4996 = vpop.permute.xlu0 %4995
        %4997 = vrot.lane.b32.xlu0 %v4934, 32
        %v4998 = vpop.permute.xlu0 %4997
        %4999 = vrot.lane.b32.xlu0 %v4937, 32
        %v5000 = vpop.permute.xlu0 %4999
        %5001 = vrot.lane.b32.xlu0 %v4938, 32
        %v5002 = vpop.permute.xlu0 %5001
        %5003 = vrot.lane.b32.xlu0 %v4941, 32
        %v5004 = vpop.permute.xlu0 %5003
        %5005 = vrot.lane.b32.xlu0 %v4942, 32
        %v5006 = vpop.permute.xlu0 %5005
        %5007 = vrot.lane.b32.xlu0 %v4945, 32
        %v5008 = vpop.permute.xlu0 %5007
        %5009 = vrot.lane.b32.xlu0 %v4946, 32
        %v5010 = vpop.permute.xlu0 %5009
        %5011 = vrot.lane.b32.xlu0 %v4949, 32
        %v5012 = vpop.permute.xlu0 %5011
        %5013 = vrot.lane.b32.xlu0 %v4950, 32
        %v5014 = vpop.permute.xlu0 %5013
        %5015 = vrot.lane.b32.xlu0 %v4953, 32
        %v5016 = vpop.permute.xlu0 %5015
        %5017 = vrot.lane.b32.xlu0 %v4954, 32
        %v5018 = vpop.permute.xlu0 %5017
        %5019 = vrot.lane.b32.xlu0 %v4957, 32
        %v5020 = vpop.permute.xlu0 %5019
        %5021 = vrot.lane.b32.xlu0 %v4958, 32
        %v5022 = vpop.permute.xlu0 %5021
        %5023 = vrot.lane.b32.xlu0 %v4961, 32
        %v5024 = vpop.permute.xlu0 %5023
        %5025 = vrot.lane.b32.xlu0 %v4962, 32
        %v5026 = vpop.permute.xlu0 %5025
        %5027 = vrot.lane.b32.xlu0 %v4965, 32
        %v5028 = vpop.permute.xlu0 %5027
        %5029 = vrot.lane.b32.xlu0 %v4966, 32
        %v5030 = vpop.permute.xlu0 %5029
        %v5063 = vrot.slane %v4871, 2
        %v5064 = vrot.slane %v4808, 2
        %v5065 = vsel %vm1104, %v5063, %v5064
        %v5066 = vsel %vm1104, %v5064, %v5063
        %v5067 = vrot.slane %v4872, 2
        %v5068 = vrot.slane %v4810, 2
        %v5069 = vsel %vm1104, %v5067, %v5068
        %v5070 = vsel %vm1104, %v5068, %v5067
        %v5071 = vrot.slane %v4873, 2
        %v5072 = vrot.slane %v4812, 2
        %v5073 = vsel %vm1104, %v5071, %v5072
        %v5074 = vsel %vm1104, %v5072, %v5071
        %v5075 = vrot.slane %v4874, 2
        %v5076 = vrot.slane %v4814, 2
        %v5077 = vsel %vm1104, %v5075, %v5076
        %v5078 = vsel %vm1104, %v5076, %v5075
        %v5079 = vrot.slane %v4875, 2
        %v5080 = vrot.slane %v4816, 2
        %v5081 = vsel %vm1104, %v5079, %v5080
        %v5082 = vsel %vm1104, %v5080, %v5079
        %v5083 = vrot.slane %v4876, 2
        %v5084 = vrot.slane %v4818, 2
        %v5085 = vsel %vm1104, %v5083, %v5084
        %v5086 = vsel %vm1104, %v5084, %v5083
        %v5087 = vrot.slane %v4877, 2
        %v5088 = vrot.slane %v4820, 2
        %v5089 = vsel %vm1104, %v5087, %v5088
        %v5090 = vsel %vm1104, %v5088, %v5087
        %v5091 = vrot.slane %v4878, 2
        %v5092 = vrot.slane %v4822, 2
        %v5093 = vsel %vm1104, %v5091, %v5092
        %v5094 = vsel %vm1104, %v5092, %v5091
        %v5095 = vrot.slane %v4879, 2
        %v5096 = vrot.slane %v4824, 2
        %v5097 = vsel %vm1104, %v5095, %v5096
        %v5098 = vsel %vm1104, %v5096, %v5095
        %v5099 = vrot.slane %v4880, 2
        %v5100 = vrot.slane %v4826, 2
        %v5101 = vsel %vm1104, %v5099, %v5100
        %v5102 = vsel %vm1104, %v5100, %v5099
        %v5103 = vrot.slane %v4881, 2
        %v5104 = vrot.slane %v4828, 2
        %v5105 = vsel %vm1104, %v5103, %v5104
        %v5106 = vsel %vm1104, %v5104, %v5103
        %v5107 = vrot.slane %v4882, 2
        %v5108 = vrot.slane %v4830, 2
        %v5109 = vsel %vm1104, %v5107, %v5108
        %v5110 = vsel %vm1104, %v5108, %v5107
        %v5111 = vrot.slane %v4883, 2
        %v5112 = vrot.slane %v4832, 2
        %v5113 = vsel %vm1104, %v5111, %v5112
        %v5114 = vsel %vm1104, %v5112, %v5111
        %v5115 = vrot.slane %v4884, 2
        %v5116 = vrot.slane %v4834, 2
        %v5117 = vsel %vm1104, %v5115, %v5116
        %v5118 = vsel %vm1104, %v5116, %v5115
        %v5119 = vrot.slane %v4885, 2
        %v5120 = vrot.slane %v4836, 2
        %v5121 = vsel %vm1104, %v5119, %v5120
        %v5122 = vsel %vm1104, %v5120, %v5119
        %v5123 = vrot.slane %v4886, 2
        %v5124 = vrot.slane %v4838, 2
        %v5125 = vsel %vm1104, %v5123, %v5124
        %v5126 = vsel %vm1104, %v5124, %v5123
        %5127 = vrot.lane.b32.xlu0 %v5065, 64
        %v5128 = vpop.permute.xlu0 %5127
        %5129 = vrot.lane.b32.xlu0 %v5066, 64
        %v5130 = vpop.permute.xlu0 %5129
        %5131 = vrot.lane.b32.xlu0 %v5069, 64
        %v5132 = vpop.permute.xlu0 %5131
        %5133 = vrot.lane.b32.xlu0 %v5070, 64
        %v5134 = vpop.permute.xlu0 %5133
        %5135 = vrot.lane.b32.xlu0 %v5073, 64
        %v5136 = vpop.permute.xlu0 %5135
        %5137 = vrot.lane.b32.xlu0 %v5074, 64
        %v5138 = vpop.permute.xlu0 %5137
        %5139 = vrot.lane.b32.xlu0 %v5077, 64
        %v5140 = vpop.permute.xlu0 %5139
        %5141 = vrot.lane.b32.xlu0 %v5078, 64
        %v5142 = vpop.permute.xlu0 %5141
        %5143 = vrot.lane.b32.xlu0 %v5081, 64
        %v5144 = vpop.permute.xlu0 %5143
        %5145 = vrot.lane.b32.xlu0 %v5082, 64
        %v5146 = vpop.permute.xlu0 %5145
        %5147 = vrot.lane.b32.xlu0 %v5085, 64
        %v5148 = vpop.permute.xlu0 %5147
        %5149 = vrot.lane.b32.xlu0 %v5086, 64
        %v5150 = vpop.permute.xlu0 %5149
        %5151 = vrot.lane.b32.xlu0 %v5089, 64
        %v5152 = vpop.permute.xlu0 %5151
        %5153 = vrot.lane.b32.xlu0 %v5090, 64
        %v5154 = vpop.permute.xlu0 %5153
        %5155 = vrot.lane.b32.xlu0 %v5093, 64
        %v5156 = vpop.permute.xlu0 %5155
        %5157 = vrot.lane.b32.xlu0 %v5094, 64
        %v5158 = vpop.permute.xlu0 %5157
        %5159 = vrot.lane.b32.xlu0 %v5097, 64
        %v5160 = vpop.permute.xlu0 %5159
        %5161 = vrot.lane.b32.xlu0 %v5098, 64
        %v5162 = vpop.permute.xlu0 %5161
        %5163 = vrot.lane.b32.xlu0 %v5101, 64
        %v5164 = vpop.permute.xlu0 %5163
        %5165 = vrot.lane.b32.xlu0 %v5102, 64
        %v5166 = vpop.permute.xlu0 %5165
        %5167 = vrot.lane.b32.xlu0 %v5105, 64
        %v5168 = vpop.permute.xlu0 %5167
        %5169 = vrot.lane.b32.xlu0 %v5106, 64
        %v5170 = vpop.permute.xlu0 %5169
        %5171 = vrot.lane.b32.xlu0 %v5109, 64
        %v5172 = vpop.permute.xlu0 %5171
        %5173 = vrot.lane.b32.xlu0 %v5110, 64
        %v5174 = vpop.permute.xlu0 %5173
        %5175 = vrot.lane.b32.xlu0 %v5113, 64
        %v5176 = vpop.permute.xlu0 %5175
        %5177 = vrot.lane.b32.xlu0 %v5114, 64
        %v5178 = vpop.permute.xlu0 %5177
        %5179 = vrot.lane.b32.xlu0 %v5117, 64
        %v5180 = vpop.permute.xlu0 %5179
        %5181 = vrot.lane.b32.xlu0 %v5118, 64
        %v5182 = vpop.permute.xlu0 %5181
        %5183 = vrot.lane.b32.xlu0 %v5121, 64
        %v5184 = vpop.permute.xlu0 %5183
        %5185 = vrot.lane.b32.xlu0 %v5122, 64
        %v5186 = vpop.permute.xlu0 %5185
        %5187 = vrot.lane.b32.xlu0 %v5125, 64
        %v5188 = vpop.permute.xlu0 %5187
        %5189 = vrot.lane.b32.xlu0 %v5126, 64
        %v5190 = vpop.permute.xlu0 %5189
        %5223 = vrot.lane.b32.xlu0 %v4872, 96
        %v5224 = vpop.permute.xlu0 %5223
        %5225 = vrot.lane.b32.xlu0 %v4810, 96
        %v5226 = vpop.permute.xlu0 %5225
        %5227 = vrot.lane.b32.xlu0 %v4873, 96
        %v5228 = vpop.permute.xlu0 %5227
        %5229 = vrot.lane.b32.xlu0 %v4812, 96
        %v5230 = vpop.permute.xlu0 %5229
        %5231 = vrot.lane.b32.xlu0 %v4874, 96
        %v5232 = vpop.permute.xlu0 %5231
        %5233 = vrot.lane.b32.xlu0 %v4814, 96
        %v5234 = vpop.permute.xlu0 %5233
        %5235 = vrot.lane.b32.xlu0 %v4875, 96
        %v5236 = vpop.permute.xlu0 %5235
        %5237 = vrot.lane.b32.xlu0 %v4816, 96
        %v5238 = vpop.permute.xlu0 %5237
        %5239 = vrot.lane.b32.xlu0 %v4876, 96
        %v5240 = vpop.permute.xlu0 %5239
        %5241 = vrot.lane.b32.xlu0 %v4818, 96
        %v5242 = vpop.permute.xlu0 %5241
        %5243 = vrot.lane.b32.xlu0 %v4877, 96
        %v5244 = vpop.permute.xlu0 %5243
        %5245 = vrot.lane.b32.xlu0 %v4820, 96
        %v5246 = vpop.permute.xlu0 %5245
        %5247 = vrot.lane.b32.xlu0 %v4878, 96
        %v5248 = vpop.permute.xlu0 %5247
        %5249 = vrot.lane.b32.xlu0 %v4822, 96
        %v5250 = vpop.permute.xlu0 %5249
        %5251 = vrot.lane.b32.xlu0 %v4879, 96
        %v5252 = vpop.permute.xlu0 %5251
        %5253 = vrot.lane.b32.xlu0 %v4824, 96
        %v5254 = vpop.permute.xlu0 %5253
        %5255 = vrot.lane.b32.xlu0 %v4880, 96
        %v5256 = vpop.permute.xlu0 %5255
        %5257 = vrot.lane.b32.xlu0 %v4826, 96
        %v5258 = vpop.permute.xlu0 %5257
        %5259 = vrot.lane.b32.xlu0 %v4881, 96
        %v5260 = vpop.permute.xlu0 %5259
        %5261 = vrot.lane.b32.xlu0 %v4828, 96
        %v5262 = vpop.permute.xlu0 %5261
        %5263 = vrot.lane.b32.xlu0 %v4882, 96
        %v5264 = vpop.permute.xlu0 %5263
        %5265 = vrot.lane.b32.xlu0 %v4830, 96
        %v5266 = vpop.permute.xlu0 %5265
        %5267 = vrot.lane.b32.xlu0 %v4883, 96
        %v5268 = vpop.permute.xlu0 %5267
        %5269 = vrot.lane.b32.xlu0 %v4832, 96
        %v5270 = vpop.permute.xlu0 %5269
        %5271 = vrot.lane.b32.xlu0 %v4884, 96
        %v5272 = vpop.permute.xlu0 %5271
        %5273 = vrot.lane.b32.xlu0 %v4834, 96
        %v5274 = vpop.permute.xlu0 %5273
        %5275 = vrot.lane.b32.xlu0 %v4885, 96
        %v5276 = vpop.permute.xlu0 %5275
        %5277 = vrot.lane.b32.xlu0 %v4836, 96
        %v5278 = vpop.permute.xlu0 %5277
        %5279 = vrot.lane.b32.xlu0 %v4886, 96
        %v5280 = vpop.permute.xlu0 %5279
        %5281 = vrot.lane.b32.xlu0 %v4838, 96
        %v5282 = vpop.permute.xlu0 %5281
        %5283 = vrot.lane.b32.xlu0 %v4871, 96
        %v5284 = vpop.permute.xlu0 %5283
        %5285 = vrot.lane.b32.xlu0 %v4808, 96
        %v5286 = vpop.permute.xlu0 %5285
        %5351 = vrot.lane.b32.xlu0 %v5069, 32
        %v5352 = vpop.permute.xlu0 %5351
        %5353 = vrot.lane.b32.xlu0 %v5070, 32
        %v5354 = vpop.permute.xlu0 %5353
        %5355 = vrot.lane.b32.xlu0 %v5073, 32
        %v5356 = vpop.permute.xlu0 %5355
        %5357 = vrot.lane.b32.xlu0 %v5074, 32
        %v5358 = vpop.permute.xlu0 %5357
        %5359 = vrot.lane.b32.xlu0 %v5077, 32
        %v5360 = vpop.permute.xlu0 %5359
        %5361 = vrot.lane.b32.xlu0 %v5078, 32
        %v5362 = vpop.permute.xlu0 %5361
        %5363 = vrot.lane.b32.xlu0 %v5081, 32
        %v5364 = vpop.permute.xlu0 %5363
        %5365 = vrot.lane.b32.xlu0 %v5082, 32
        %v5366 = vpop.permute.xlu0 %5365
        %5367 = vrot.lane.b32.xlu0 %v5085, 32
        %v5368 = vpop.permute.xlu0 %5367
        %5369 = vrot.lane.b32.xlu0 %v5086, 32
        %v5370 = vpop.permute.xlu0 %5369
        %5371 = vrot.lane.b32.xlu0 %v5089, 32
        %v5372 = vpop.permute.xlu0 %5371
        %5373 = vrot.lane.b32.xlu0 %v5090, 32
        %v5374 = vpop.permute.xlu0 %5373
        %5375 = vrot.lane.b32.xlu0 %v5093, 32
        %v5376 = vpop.permute.xlu0 %5375
        %5377 = vrot.lane.b32.xlu0 %v5094, 32
        %v5378 = vpop.permute.xlu0 %5377
        %5379 = vrot.lane.b32.xlu0 %v5097, 32
        %v5380 = vpop.permute.xlu0 %5379
        %5381 = vrot.lane.b32.xlu0 %v5098, 32
        %v5382 = vpop.permute.xlu0 %5381
        %5383 = vrot.lane.b32.xlu0 %v5101, 32
        %v5384 = vpop.permute.xlu0 %5383
        %5385 = vrot.lane.b32.xlu0 %v5102, 32
        %v5386 = vpop.permute.xlu0 %5385
        %5387 = vrot.lane.b32.xlu0 %v5105, 32
        %v5388 = vpop.permute.xlu0 %5387
        %5389 = vrot.lane.b32.xlu0 %v5106, 32
        %v5390 = vpop.permute.xlu0 %5389
        %5391 = vrot.lane.b32.xlu0 %v5109, 32
        %v5392 = vpop.permute.xlu0 %5391
        %5393 = vrot.lane.b32.xlu0 %v5110, 32
        %v5394 = vpop.permute.xlu0 %5393
        %5395 = vrot.lane.b32.xlu0 %v5113, 32
        %v5396 = vpop.permute.xlu0 %5395
        %5397 = vrot.lane.b32.xlu0 %v5114, 32
        %v5398 = vpop.permute.xlu0 %5397
        %5399 = vrot.lane.b32.xlu0 %v5117, 32
        %v5400 = vpop.permute.xlu0 %5399
        %5401 = vrot.lane.b32.xlu0 %v5118, 32
        %v5402 = vpop.permute.xlu0 %5401
        %5403 = vrot.lane.b32.xlu0 %v5121, 32
        %v5404 = vpop.permute.xlu0 %5403
        %5405 = vrot.lane.b32.xlu0 %v5122, 32
        %v5406 = vpop.permute.xlu0 %5405
        %5407 = vrot.lane.b32.xlu0 %v5125, 32
        %v5408 = vpop.permute.xlu0 %5407
        %5409 = vrot.lane.b32.xlu0 %v5126, 32
        %v5410 = vpop.permute.xlu0 %5409
        %5411 = vrot.lane.b32.xlu0 %v5065, 32
        %v5412 = vpop.permute.xlu0 %5411
        %5413 = vrot.lane.b32.xlu0 %v5066, 32
        %v5414 = vpop.permute.xlu0 %5413
        %5447 = vrot.lane.b32.xlu0 %v4873, 64
        %v5448 = vpop.permute.xlu0 %5447
        %5449 = vrot.lane.b32.xlu0 %v4812, 64
        %v5450 = vpop.permute.xlu0 %5449
        %5451 = vrot.lane.b32.xlu0 %v4874, 64
        %v5452 = vpop.permute.xlu0 %5451
        %5453 = vrot.lane.b32.xlu0 %v4814, 64
        %v5454 = vpop.permute.xlu0 %5453
        %5455 = vrot.lane.b32.xlu0 %v4875, 64
        %v5456 = vpop.permute.xlu0 %5455
        %5457 = vrot.lane.b32.xlu0 %v4816, 64
        %v5458 = vpop.permute.xlu0 %5457
        %5459 = vrot.lane.b32.xlu0 %v4876, 64
        %v5460 = vpop.permute.xlu0 %5459
        %5461 = vrot.lane.b32.xlu0 %v4818, 64
        %v5462 = vpop.permute.xlu0 %5461
        %5463 = vrot.lane.b32.xlu0 %v4877, 64
        %v5464 = vpop.permute.xlu0 %5463
        %5465 = vrot.lane.b32.xlu0 %v4820, 64
        %v5466 = vpop.permute.xlu0 %5465
        %5467 = vrot.lane.b32.xlu0 %v4878, 64
        %v5468 = vpop.permute.xlu0 %5467
        %5469 = vrot.lane.b32.xlu0 %v4822, 64
        %v5470 = vpop.permute.xlu0 %5469
        %5471 = vrot.lane.b32.xlu0 %v4879, 64
        %v5472 = vpop.permute.xlu0 %5471
        %5473 = vrot.lane.b32.xlu0 %v4824, 64
        %v5474 = vpop.permute.xlu0 %5473
        %5475 = vrot.lane.b32.xlu0 %v4880, 64
        %v5476 = vpop.permute.xlu0 %5475
        %5477 = vrot.lane.b32.xlu0 %v4826, 64
        %v5478 = vpop.permute.xlu0 %5477
        %5479 = vrot.lane.b32.xlu0 %v4881, 64
        %v5480 = vpop.permute.xlu0 %5479
        %5481 = vrot.lane.b32.xlu0 %v4828, 64
        %v5482 = vpop.permute.xlu0 %5481
        %5483 = vrot.lane.b32.xlu0 %v4882, 64
        %v5484 = vpop.permute.xlu0 %5483
        %5485 = vrot.lane.b32.xlu0 %v4830, 64
        %v5486 = vpop.permute.xlu0 %5485
        %5487 = vrot.lane.b32.xlu0 %v4883, 64
        %v5488 = vpop.permute.xlu0 %5487
        %5489 = vrot.lane.b32.xlu0 %v4832, 64
        %v5490 = vpop.permute.xlu0 %5489
        %5491 = vrot.lane.b32.xlu0 %v4884, 64
        %v5492 = vpop.permute.xlu0 %5491
        %5493 = vrot.lane.b32.xlu0 %v4834, 64
        %v5494 = vpop.permute.xlu0 %5493
        %5495 = vrot.lane.b32.xlu0 %v4885, 64
        %v5496 = vpop.permute.xlu0 %5495
        %5497 = vrot.lane.b32.xlu0 %v4836, 64
        %v5498 = vpop.permute.xlu0 %5497
        %5499 = vrot.lane.b32.xlu0 %v4886, 64
        %v5500 = vpop.permute.xlu0 %5499
        %5501 = vrot.lane.b32.xlu0 %v4838, 64
        %v5502 = vpop.permute.xlu0 %5501
        %5503 = vrot.lane.b32.xlu0 %v4871, 64
        %v5504 = vpop.permute.xlu0 %5503
        %5505 = vrot.lane.b32.xlu0 %v4808, 64
        %v5506 = vpop.permute.xlu0 %5505
        %5507 = vrot.lane.b32.xlu0 %v4872, 64
        %v5508 = vpop.permute.xlu0 %5507
        %5509 = vrot.lane.b32.xlu0 %v4810, 64
        %v5510 = vpop.permute.xlu0 %5509
        %5543 = vrot.lane.b32.xlu0 %v4913, 96
        %v5544 = vpop.permute.xlu0 %5543
        %5545 = vrot.lane.b32.xlu0 %v4914, 96
        %v5546 = vpop.permute.xlu0 %5545
        %5547 = vrot.lane.b32.xlu0 %v4917, 96
        %v5548 = vpop.permute.xlu0 %5547
        %5549 = vrot.lane.b32.xlu0 %v4918, 96
        %v5550 = vpop.permute.xlu0 %5549
        %5551 = vrot.lane.b32.xlu0 %v4921, 96
        %v5552 = vpop.permute.xlu0 %5551
        %5553 = vrot.lane.b32.xlu0 %v4922, 96
        %v5554 = vpop.permute.xlu0 %5553
        %5555 = vrot.lane.b32.xlu0 %v4925, 96
        %v5556 = vpop.permute.xlu0 %5555
        %5557 = vrot.lane.b32.xlu0 %v4926, 96
        %v5558 = vpop.permute.xlu0 %5557
        %5559 = vrot.lane.b32.xlu0 %v4929, 96
        %v5560 = vpop.permute.xlu0 %5559
        %5561 = vrot.lane.b32.xlu0 %v4930, 96
        %v5562 = vpop.permute.xlu0 %5561
        %5563 = vrot.lane.b32.xlu0 %v4933, 96
        %v5564 = vpop.permute.xlu0 %5563
        %5565 = vrot.lane.b32.xlu0 %v4934, 96
        %v5566 = vpop.permute.xlu0 %5565
        %5567 = vrot.lane.b32.xlu0 %v4937, 96
        %v5568 = vpop.permute.xlu0 %5567
        %5569 = vrot.lane.b32.xlu0 %v4938, 96
        %v5570 = vpop.permute.xlu0 %5569
        %5571 = vrot.lane.b32.xlu0 %v4941, 96
        %v5572 = vpop.permute.xlu0 %5571
        %5573 = vrot.lane.b32.xlu0 %v4942, 96
        %v5574 = vpop.permute.xlu0 %5573
        %5575 = vrot.lane.b32.xlu0 %v4945, 96
        %v5576 = vpop.permute.xlu0 %5575
        %5577 = vrot.lane.b32.xlu0 %v4946, 96
        %v5578 = vpop.permute.xlu0 %5577
        %5579 = vrot.lane.b32.xlu0 %v4949, 96
        %v5580 = vpop.permute.xlu0 %5579
        %5581 = vrot.lane.b32.xlu0 %v4950, 96
        %v5582 = vpop.permute.xlu0 %5581
        %5583 = vrot.lane.b32.xlu0 %v4953, 96
        %v5584 = vpop.permute.xlu0 %5583
        %5585 = vrot.lane.b32.xlu0 %v4954, 96
        %v5586 = vpop.permute.xlu0 %5585
        %5587 = vrot.lane.b32.xlu0 %v4957, 96
        %v5588 = vpop.permute.xlu0 %5587
        %5589 = vrot.lane.b32.xlu0 %v4958, 96
        %v5590 = vpop.permute.xlu0 %5589
        %5591 = vrot.lane.b32.xlu0 %v4961, 96
        %v5592 = vpop.permute.xlu0 %5591
        %5593 = vrot.lane.b32.xlu0 %v4962, 96
        %v5594 = vpop.permute.xlu0 %5593
        %5595 = vrot.lane.b32.xlu0 %v4965, 96
        %v5596 = vpop.permute.xlu0 %5595
        %5597 = vrot.lane.b32.xlu0 %v4966, 96
        %v5598 = vpop.permute.xlu0 %5597
        %5599 = vrot.lane.b32.xlu0 %v4905, 96
        %v5600 = vpop.permute.xlu0 %5599
        %5601 = vrot.lane.b32.xlu0 %v4906, 96
        %v5602 = vpop.permute.xlu0 %5601
        %5603 = vrot.lane.b32.xlu0 %v4909, 96
        %v5604 = vpop.permute.xlu0 %5603
        %5605 = vrot.lane.b32.xlu0 %v4910, 96
        %v5606 = vpop.permute.xlu0 %5605
        %v5671 = vsel %vm474, %v4871, %v4968
        %v5672 = vsel %vm474, %v4808, %v4970
        %v5673 = vsel %vm474, %v4872, %v4972
        %v5674 = vsel %vm474, %v4810, %v4974
        %v5675 = vsel %vm474, %v4873, %v4976
        %v5676 = vsel %vm474, %v4812, %v4978
        %v5677 = vsel %vm474, %v4874, %v4980
        %v5678 = vsel %vm474, %v4814, %v4982
        %v5679 = vsel %vm474, %v4875, %v4984
        %v5680 = vsel %vm474, %v4816, %v4986
        %v5681 = vsel %vm474, %v4876, %v4988
        %v5682 = vsel %vm474, %v4818, %v4990
        %v5683 = vsel %vm474, %v4877, %v4992
        %v5684 = vsel %vm474, %v4820, %v4994
        %v5685 = vsel %vm474, %v4878, %v4996
        %v5686 = vsel %vm474, %v4822, %v4998
        %v5687 = vsel %vm474, %v4879, %v5000
        %v5688 = vsel %vm474, %v4824, %v5002
        %v5689 = vsel %vm474, %v4880, %v5004
        %v5690 = vsel %vm474, %v4826, %v5006
        %v5691 = vsel %vm474, %v4881, %v5008
        %v5692 = vsel %vm474, %v4828, %v5010
        %v5693 = vsel %vm474, %v4882, %v5012
        %v5694 = vsel %vm474, %v4830, %v5014
        %v5695 = vsel %vm474, %v4883, %v5016
        %v5696 = vsel %vm474, %v4832, %v5018
        %v5697 = vsel %vm474, %v4884, %v5020
        %v5698 = vsel %vm474, %v4834, %v5022
        %v5699 = vsel %vm474, %v4885, %v5024
        %v5700 = vsel %vm474, %v4836, %v5026
        %v5701 = vsel %vm474, %v4886, %v5028
        %v5702 = vsel %vm474, %v4838, %v5030
        %v5703 = vsel %vm1745, %v5671, %v5128
        %v5704 = vsel %vm1745, %v5672, %v5130
        %v5705 = vsel %vm1745, %v5673, %v5132
        %v5706 = vsel %vm1745, %v5674, %v5134
        %v5707 = vsel %vm1745, %v5675, %v5136
        %v5708 = vsel %vm1745, %v5676, %v5138
        %v5709 = vsel %vm1745, %v5677, %v5140
        %v5710 = vsel %vm1745, %v5678, %v5142
        %v5711 = vsel %vm1745, %v5679, %v5144
        %v5712 = vsel %vm1745, %v5680, %v5146
        %v5713 = vsel %vm1745, %v5681, %v5148
        %v5714 = vsel %vm1745, %v5682, %v5150
        %v5715 = vsel %vm1745, %v5683, %v5152
        %v5716 = vsel %vm1745, %v5684, %v5154
        %v5717 = vsel %vm1745, %v5685, %v5156
        %v5718 = vsel %vm1745, %v5686, %v5158
        %v5719 = vsel %vm1745, %v5687, %v5160
        %v5720 = vsel %vm1745, %v5688, %v5162
        %v5721 = vsel %vm1745, %v5689, %v5164
        %v5722 = vsel %vm1745, %v5690, %v5166
        %v5723 = vsel %vm1745, %v5691, %v5168
        %v5724 = vsel %vm1745, %v5692, %v5170
        %v5725 = vsel %vm1745, %v5693, %v5172
        %v5726 = vsel %vm1745, %v5694, %v5174
        %v5727 = vsel %vm1745, %v5695, %v5176
        %v5728 = vsel %vm1745, %v5696, %v5178
        %v5729 = vsel %vm1745, %v5697, %v5180
        %v5730 = vsel %vm1745, %v5698, %v5182
        %v5731 = vsel %vm1745, %v5699, %v5184
        %v5732 = vsel %vm1745, %v5700, %v5186
        %v5733 = vsel %vm1745, %v5701, %v5188
        %v5734 = vsel %vm1745, %v5702, %v5190
        %v5735 = vsel %vm1778, %v5703, %v5224
        %v5736 = vsel %vm1778, %v5704, %v5226
        %v5737 = vsel %vm1778, %v5705, %v5228
        %v5738 = vsel %vm1778, %v5706, %v5230
        %v5739 = vsel %vm1778, %v5707, %v5232
        %v5740 = vsel %vm1778, %v5708, %v5234
        %v5741 = vsel %vm1778, %v5709, %v5236
        %v5742 = vsel %vm1778, %v5710, %v5238
        %v5743 = vsel %vm1778, %v5711, %v5240
        %v5744 = vsel %vm1778, %v5712, %v5242
        %v5745 = vsel %vm1778, %v5713, %v5244
        %v5746 = vsel %vm1778, %v5714, %v5246
        %v5747 = vsel %vm1778, %v5715, %v5248
        %v5748 = vsel %vm1778, %v5716, %v5250
        %v5749 = vsel %vm1778, %v5717, %v5252
        %v5750 = vsel %vm1778, %v5718, %v5254
        %v5751 = vsel %vm1778, %v5719, %v5256
        %v5752 = vsel %vm1778, %v5720, %v5258
        %v5753 = vsel %vm1778, %v5721, %v5260
        %v5754 = vsel %vm1778, %v5722, %v5262
        %v5755 = vsel %vm1778, %v5723, %v5264
        %v5756 = vsel %vm1778, %v5724, %v5266
        %v5757 = vsel %vm1778, %v5725, %v5268
        %v5758 = vsel %vm1778, %v5726, %v5270
        %v5759 = vsel %vm1778, %v5727, %v5272
        %v5760 = vsel %vm1778, %v5728, %v5274
        %v5761 = vsel %vm1778, %v5729, %v5276
        %v5762 = vsel %vm1778, %v5730, %v5278
        %v5763 = vsel %vm1778, %v5731, %v5280
        %v5764 = vsel %vm1778, %v5732, %v5282
        %v5765 = vsel %vm1778, %v5733, %v5284
        %v5766 = vsel %vm1778, %v5734, %v5286
        %v5767 = vsel %vm474, %v4909, %v5352
        %v5768 = vsel %vm474, %v4910, %v5354
        %v5769 = vsel %vm474, %v4913, %v5356
        %v5770 = vsel %vm474, %v4914, %v5358
        %v5771 = vsel %vm474, %v4917, %v5360
        %v5772 = vsel %vm474, %v4918, %v5362
        %v5773 = vsel %vm474, %v4921, %v5364
        %v5774 = vsel %vm474, %v4922, %v5366
        %v5775 = vsel %vm474, %v4925, %v5368
        %v5776 = vsel %vm474, %v4926, %v5370
        %v5777 = vsel %vm474, %v4929, %v5372
        %v5778 = vsel %vm474, %v4930, %v5374
        %v5779 = vsel %vm474, %v4933, %v5376
        %v5780 = vsel %vm474, %v4934, %v5378
        %v5781 = vsel %vm474, %v4937, %v5380
        %v5782 = vsel %vm474, %v4938, %v5382
        %v5783 = vsel %vm474, %v4941, %v5384
        %v5784 = vsel %vm474, %v4942, %v5386
        %v5785 = vsel %vm474, %v4945, %v5388
        %v5786 = vsel %vm474, %v4946, %v5390
        %v5787 = vsel %vm474, %v4949, %v5392
        %v5788 = vsel %vm474, %v4950, %v5394
        %v5789 = vsel %vm474, %v4953, %v5396
        %v5790 = vsel %vm474, %v4954, %v5398
        %v5791 = vsel %vm474, %v4957, %v5400
        %v5792 = vsel %vm474, %v4958, %v5402
        %v5793 = vsel %vm474, %v4961, %v5404
        %v5794 = vsel %vm474, %v4962, %v5406
        %v5795 = vsel %vm474, %v4965, %v5408
        %v5796 = vsel %vm474, %v4966, %v5410
        %v5797 = vsel %vm474, %v4905, %v5412
        %v5798 = vsel %vm474, %v4906, %v5414
        %v5799 = vsel %vm1745, %v5767, %v5448
        %v5800 = vsel %vm1745, %v5768, %v5450
        %v5801 = vsel %vm1745, %v5769, %v5452
        %v5802 = vsel %vm1745, %v5770, %v5454
        %v5803 = vsel %vm1745, %v5771, %v5456
        %v5804 = vsel %vm1745, %v5772, %v5458
        %v5805 = vsel %vm1745, %v5773, %v5460
        %v5806 = vsel %vm1745, %v5774, %v5462
        %v5807 = vsel %vm1745, %v5775, %v5464
        %v5808 = vsel %vm1745, %v5776, %v5466
        %v5809 = vsel %vm1745, %v5777, %v5468
        %v5810 = vsel %vm1745, %v5778, %v5470
        %v5811 = vsel %vm1745, %v5779, %v5472
        %v5812 = vsel %vm1745, %v5780, %v5474
        %v5813 = vsel %vm1745, %v5781, %v5476
        %v5814 = vsel %vm1745, %v5782, %v5478
        %v5815 = vsel %vm1745, %v5783, %v5480
        %v5816 = vsel %vm1745, %v5784, %v5482
        %v5817 = vsel %vm1745, %v5785, %v5484
        %v5818 = vsel %vm1745, %v5786, %v5486
        %v5819 = vsel %vm1745, %v5787, %v5488
        %v5820 = vsel %vm1745, %v5788, %v5490
        %v5821 = vsel %vm1745, %v5789, %v5492
        %v5822 = vsel %vm1745, %v5790, %v5494
        %v5823 = vsel %vm1745, %v5791, %v5496
        %v5824 = vsel %vm1745, %v5792, %v5498
        %v5825 = vsel %vm1745, %v5793, %v5500
        %v5826 = vsel %vm1745, %v5794, %v5502
        %v5827 = vsel %vm1745, %v5795, %v5504
        %v5828 = vsel %vm1745, %v5796, %v5506
        %v5829 = vsel %vm1745, %v5797, %v5508
        %v5830 = vsel %vm1745, %v5798, %v5510
        %v5831 = vsel %vm1778, %v5799, %v5544
        %v5832 = vsel %vm1778, %v5800, %v5546
        %v5833 = vsel %vm1778, %v5801, %v5548
        %v5834 = vsel %vm1778, %v5802, %v5550
        %v5835 = vsel %vm1778, %v5803, %v5552
        %v5836 = vsel %vm1778, %v5804, %v5554
        %v5837 = vsel %vm1778, %v5805, %v5556
        %v5838 = vsel %vm1778, %v5806, %v5558
        %v5839 = vsel %vm1778, %v5807, %v5560
        %v5840 = vsel %vm1778, %v5808, %v5562
        %v5841 = vsel %vm1778, %v5809, %v5564
        %v5842 = vsel %vm1778, %v5810, %v5566
        %v5843 = vsel %vm1778, %v5811, %v5568
        %v5844 = vsel %vm1778, %v5812, %v5570
        %v5845 = vsel %vm1778, %v5813, %v5572
        %v5846 = vsel %vm1778, %v5814, %v5574
        %v5847 = vsel %vm1778, %v5815, %v5576
        %v5848 = vsel %vm1778, %v5816, %v5578
        %v5849 = vsel %vm1778, %v5817, %v5580
        %v5850 = vsel %vm1778, %v5818, %v5582
        %v5851 = vsel %vm1778, %v5819, %v5584
        %v5852 = vsel %vm1778, %v5820, %v5586
        %v5853 = vsel %vm1778, %v5821, %v5588
        %v5854 = vsel %vm1778, %v5822, %v5590
        %v5855 = vsel %vm1778, %v5823, %v5592
        %v5856 = vsel %vm1778, %v5824, %v5594
        %v5857 = vsel %vm1778, %v5825, %v5596
        %v5858 = vsel %vm1778, %v5826, %v5598
        %v5859 = vsel %vm1778, %v5827, %v5600
        %v5860 = vsel %vm1778, %v5828, %v5602
        %v5861 = vsel %vm1778, %v5829, %v5604
        %v5862 = vsel %vm1778, %v5830, %v5606
        %v5863 = vpack.c.bf16 %v5736, %v5735
        %v5864 = vpack.c.bf16 %v5832, %v5831
        %v5865 = vpack.c.bf16 %v5074, %v5073
        %v5866 = vpack.c.bf16 %v5738, %v5737
        %v5867 = vpack.c.bf16 %v5834, %v5833
        %v5868 = vpack.c.bf16 %v5078, %v5077
        %v5869 = vpack.c.bf16 %v5740, %v5739
        %v5870 = vpack.c.bf16 %v5836, %v5835
        %v5871 = vpack.c.bf16 %v5082, %v5081
        %v5872 = vpack.c.bf16 %v5742, %v5741
        %v5873 = vpack.c.bf16 %v5838, %v5837
        %v5874 = vpack.c.bf16 %v5086, %v5085
        %v5875 = vpack.c.bf16 %v5744, %v5743
        %v5876 = vpack.c.bf16 %v5840, %v5839
        %v5877 = vpack.c.bf16 %v5090, %v5089
        %v5878 = vpack.c.bf16 %v5746, %v5745
        %v5879 = vpack.c.bf16 %v5842, %v5841
        %v5880 = vpack.c.bf16 %v5094, %v5093
        %v5881 = vpack.c.bf16 %v5748, %v5747
        %v5882 = vpack.c.bf16 %v5844, %v5843
        %v5883 = vpack.c.bf16 %v5098, %v5097
        %v5884 = vpack.c.bf16 %v5750, %v5749
        %v5885 = vpack.c.bf16 %v5846, %v5845
        %v5886 = vpack.c.bf16 %v5102, %v5101
        %v5887 = vpack.c.bf16 %v5752, %v5751
        %v5888 = vpack.c.bf16 %v5848, %v5847
        %v5889 = vpack.c.bf16 %v5106, %v5105
        %v5890 = vpack.c.bf16 %v5754, %v5753
        %v5891 = vpack.c.bf16 %v5850, %v5849
        %v5892 = vpack.c.bf16 %v5110, %v5109
        %v5893 = vpack.c.bf16 %v5756, %v5755
        %v5894 = vpack.c.bf16 %v5852, %v5851
        %v5895 = vpack.c.bf16 %v5114, %v5113
        %v5896 = vpack.c.bf16 %v5758, %v5757
        %v5897 = vpack.c.bf16 %v5854, %v5853
        %v5898 = vpack.c.bf16 %v5118, %v5117
        %v5899 = vpack.c.bf16 %v5760, %v5759
        %v5900 = vpack.c.bf16 %v5856, %v5855
        %v5901 = vpack.c.bf16 %v5122, %v5121
        %v5902 = vpack.c.bf16 %v5762, %v5761
        %v5903 = vpack.c.bf16 %v5858, %v5857
        %v5904 = vpack.c.bf16 %v5126, %v5125
        %v5905 = vpack.c.bf16 %v5764, %v5763
        %v5906 = vpack.c.bf16 %v5860, %v5859
        %v5907 = vpack.c.bf16 %v5066, %v5065
        %v5908 = vpack.c.bf16 %v5766, %v5765
        %v5909 = vpack.c.bf16 %v5862, %v5861
        %v5910 = vpack.c.bf16 %v5070, %v5069
        %v5912 = vlaneseq
        %v5913 = vshrl.u32 %v5912, 7
        %v5914 = vsub.s32 0, %v5913
        %v5915 = vrot.slane %v4742, %v5914
        %v5953 = vunpack.c.l.b16 %v4706
        %v5954 = vunpack.c.l.b16 %v4707
        %v5955 = vunpack.c.l.b16 %v4708
        %v5956 = vunpack.c.l.b16 %v4709
        %v5957 = vunpack.c.l.b16 %v4710
        %v5958 = vunpack.c.l.b16 %v4711
        %v5959 = vunpack.c.l.b16 %v4712
        %v5960 = vunpack.c.l.b16 %v4713
        %v5961 = vunpack.c.l.b16 %v4714
        %v5962 = vunpack.c.l.b16 %v4715
        %v5963 = vunpack.c.l.b16 %v4716
        %v5964 = vunpack.c.l.b16 %v4717
        %v5965 = vunpack.c.l.b16 %v4718
        %v5966 = vunpack.c.l.b16 %v4719
        %v5967 = vunpack.c.l.b16 %v4720
        %v5968 = vunpack.c.l.b16 %v4721
        %v5969 = vunpack.c.l.b16 %v4722
        %v5970 = vunpack.c.l.b16 %v4723
        %v5971 = vunpack.c.l.b16 %v4724
        %v5972 = vunpack.c.l.b16 %v4725
        %v5973 = vunpack.c.l.b16 %v4726
        %v5974 = vunpack.c.l.b16 %v4727
        %v5975 = vunpack.c.l.b16 %v4728
        %v5976 = vunpack.c.l.b16 %v4729
        %v5977 = vunpack.c.l.b16 %v4730
        %v5978 = vunpack.c.l.b16 %v4731
        %v5979 = vunpack.c.l.b16 %v4732
        %v5980 = vunpack.c.l.b16 %v4733
        %v5981 = vunpack.c.l.b16 %v4734
        %v5982 = vunpack.c.l.b16 %v4735
        %v5983 = vunpack.c.l.b16 %v4736
        %v5984 = vunpack.c.l.b16 %v4737
        %v5985 = vunpack.c.l.b16 %v4738
        %v5986 = vunpack.c.l.b16 %v4739
        %v5987 = vunpack.c.l.b16 %v4740
        %v5988 = vunpack.c.l.b16 %v4741
        %v5989 = vpack.c.b16 %v5954, %v5953
        %v5990 = vpack.c.b16 %v5956, %v5955
        %v5991 = vpack.c.b16 %v5958, %v5957
        %v5992 = vpack.c.b16 %v5960, %v5959
        %v5993 = vpack.c.b16 %v5962, %v5961
        %v5994 = vpack.c.b16 %v5964, %v5963
        %v5995 = vpack.c.b16 %v5966, %v5965
        %v5996 = vpack.c.b16 %v5968, %v5967
        %v5997 = vpack.c.b16 %v5970, %v5969
        %v5998 = vpack.c.b16 %v5972, %v5971
        %v5999 = vpack.c.b16 %v5974, %v5973
        %v6000 = vpack.c.b16 %v5976, %v5975
        %v6001 = vpack.c.b16 %v5978, %v5977
        %v6002 = vpack.c.b16 %v5980, %v5979
        %v6003 = vpack.c.b16 %v5982, %v5981
        %v6004 = vpack.c.b16 %v5984, %v5983
        %v6005 = vpack.c.b16 %v5986, %v5985
        %v6006 = vpack.c.b16 %v5988, %v5987
        %v6026 = vsel %vm474, %v5865, 0
        %v6029 = vsel %vm474, %v5868, 0
        %v6032 = vsel %vm474, %v5871, 0
        %v6035 = vsel %vm474, %v5874, 0
        %v6038 = vsel %vm474, %v5877, 0
        %v6041 = vsel %vm474, %v5880, 0
        %v6044 = vsel %vm474, %v5883, 0
        %v6047 = vsel %vm474, %v5886, 0
        %v6050 = vsel %vm474, %v5889, 0
        %v6053 = vsel %vm474, %v5892, 0
        %v6056 = vsel %vm474, %v5895, 0
        %v6059 = vsel %vm474, %v5898, 0
        %v6062 = vsel %vm474, %v5901, 0
        %v6065 = vsel %vm474, %v5904, 0
        %v6068 = vsel %vm474, %v5907, 0
        %v6071 = vsel %vm474, %v5910, 0
        %6073 = vmatprep.subr.bf16.mxu0 0
        %6074 = vmatpush1.bf16.msra.mxu0 %v5996
        %6075 = vmatprep.subr.bf16.mxu0 0
        %6076 = vmatpush1.bf16.msra.mxu0 %v5995
        %6077 = vmatprep.subr.bf16.mxu0 0
        %6078 = vmatpush1.bf16.msra.mxu0 %v5994
        %6079 = vmatprep.subr.bf16.mxu0 0
        %6080 = vmatpush1.bf16.msra.mxu0 %v5993
        %6081 = vmatprep.subr.bf16.mxu0 0
        %6082 = vmatpush1.bf16.msra.mxu0 %v5992
        %6083 = vmatprep.subr.bf16.mxu0 0
        %6084 = vmatpush1.bf16.msra.mxu0 %v5991
        %6085 = vmatprep.subr.bf16.mxu0 0
        %6086 = vmatpush1.bf16.msra.mxu0 %v5990
        %6087 = vmatprep.subr.bf16.mxu0 0
        %6088 = vmatpush1.bf16.msra.mxu0 %v5989
        %6089 = vmatprep.subr.bf16.mxu0 0
        %6090 = vmatpush2.bf16.msra.mxu0 %v6004
        %6091 = vmatprep.subr.bf16.mxu0 0
        %6092 = vmatpush2.bf16.msra.mxu0 %v6003
        %6093 = vmatprep.subr.bf16.mxu0 0
        %6094 = vmatpush2.bf16.msra.mxu0 %v6002
        %6095 = vmatprep.subr.bf16.mxu0 0
        %6096 = vmatpush2.bf16.msra.mxu0 %v6001
        %6097 = vmatprep.subr.bf16.mxu0 0
        %6098 = vmatpush2.bf16.msra.mxu0 %v6000
        %6099 = vmatprep.subr.bf16.mxu0 0
        %6100 = vmatpush2.bf16.msra.mxu0 %v5999
        %6101 = vmatprep.subr.bf16.mxu0 0
        %6102 = vmatpush2.bf16.msra.mxu0 %v5998
        %6103 = vmatprep.subr.bf16.mxu0 0
        %6104 = vmatpush2.bf16.msra.mxu0 %v5997
        %6105 = vmatprep.mubr.bf16.mxu0 %v5864
        %6106 = vmatmul.mubr.bf16.gmra.mxu0 %v5863
        %v6107 = vpop.f32.mrf.mxu0
        %v6108 = vadd.f32 %v5915, %v6107
        %v6109 = vpop.f32.mrf.mxu0
        %v6110 = vpop.f32.mrf.mxu0
        %v6111 = vadd.f32 %v5915, %v6110
        %v6112 = vpop.f32.mrf.mxu0
        %6113 = vmatprep.mubr.bf16.mxu0 %v5867
        %6114 = vmatmul.mubr.bf16.gmra.mxu0 %v5866
        %v6115 = vpop.f32.mrf.mxu0
        %v6116 = vadd.f32 %v5915, %v6115
        %v6117 = vpop.f32.mrf.mxu0
        %v6118 = vpop.f32.mrf.mxu0
        %v6119 = vadd.f32 %v5915, %v6118
        %v6120 = vpop.f32.mrf.mxu0
        %6121 = vmatprep.mubr.bf16.mxu0 %v5870
        %6122 = vmatmul.mubr.bf16.gmra.mxu0 %v5869
        %v6123 = vpop.f32.mrf.mxu0
        %v6124 = vadd.f32 %v5915, %v6123
        %v6125 = vpop.f32.mrf.mxu0
        %v6126 = vpop.f32.mrf.mxu0
        %v6127 = vadd.f32 %v5915, %v6126
        %v6128 = vpop.f32.mrf.mxu0
        %6129 = vmatprep.mubr.bf16.mxu0 %v5873
        %6130 = vmatmul.mubr.bf16.gmra.mxu0 %v5872
        %v6131 = vpop.f32.mrf.mxu0
        %v6132 = vadd.f32 %v5915, %v6131
        %v6133 = vpop.f32.mrf.mxu0
        %v6134 = vpop.f32.mrf.mxu0
        %v6135 = vadd.f32 %v5915, %v6134
        %v6136 = vpop.f32.mrf.mxu0
        %6137 = vmatprep.mubr.bf16.mxu0 %v5876
        %6138 = vmatmul.mubr.bf16.gmra.mxu0 %v5875
        %v6139 = vpop.f32.mrf.mxu0
        %v6140 = vadd.f32 %v5915, %v6139
        %v6141 = vpop.f32.mrf.mxu0
        %v6142 = vpop.f32.mrf.mxu0
        %v6143 = vadd.f32 %v5915, %v6142
        %v6144 = vpop.f32.mrf.mxu0
        %6145 = vmatprep.mubr.bf16.mxu0 %v5879
        %6146 = vmatmul.mubr.bf16.gmra.mxu0 %v5878
        %v6147 = vpop.f32.mrf.mxu0
        %v6148 = vadd.f32 %v5915, %v6147
        %v6149 = vpop.f32.mrf.mxu0
        %v6150 = vpop.f32.mrf.mxu0
        %v6151 = vadd.f32 %v5915, %v6150
        %v6152 = vpop.f32.mrf.mxu0
        %6153 = vmatprep.mubr.bf16.mxu0 %v5882
        %6154 = vmatmul.mubr.bf16.gmra.mxu0 %v5881
        %v6155 = vpop.f32.mrf.mxu0
        %v6156 = vadd.f32 %v5915, %v6155
        %v6157 = vpop.f32.mrf.mxu0
        %v6158 = vpop.f32.mrf.mxu0
        %v6159 = vadd.f32 %v5915, %v6158
        %v6160 = vpop.f32.mrf.mxu0
        %6161 = vmatprep.mubr.bf16.mxu0 %v5885
        %6162 = vmatmul.mubr.bf16.gmra.mxu0 %v5884
        %v6163 = vpop.f32.mrf.mxu0
        %v6164 = vadd.f32 %v5915, %v6163
        %v6165 = vpop.f32.mrf.mxu0
        %v6166 = vpop.f32.mrf.mxu0
        %v6167 = vadd.f32 %v5915, %v6166
        %v6168 = vpop.f32.mrf.mxu0
        %6169 = vmatprep.mubr.bf16.mxu0 %v5888
        %6170 = vmatmul.mubr.bf16.gmra.mxu0 %v5887
        %v6171 = vpop.f32.mrf.mxu0
        %v6172 = vadd.f32 %v5915, %v6171
        %v6173 = vpop.f32.mrf.mxu0
        %v6174 = vpop.f32.mrf.mxu0
        %v6175 = vadd.f32 %v5915, %v6174
        %v6176 = vpop.f32.mrf.mxu0
        %6177 = vmatprep.mubr.bf16.mxu0 %v5891
        %6178 = vmatmul.mubr.bf16.gmra.mxu0 %v5890
        %v6179 = vpop.f32.mrf.mxu0
        %v6180 = vadd.f32 %v5915, %v6179
        %v6181 = vpop.f32.mrf.mxu0
        %v6182 = vpop.f32.mrf.mxu0
        %v6183 = vadd.f32 %v5915, %v6182
        %v6184 = vpop.f32.mrf.mxu0
        %6185 = vmatprep.mubr.bf16.mxu0 %v5894
        %6186 = vmatmul.mubr.bf16.gmra.mxu0 %v5893
        %v6187 = vpop.f32.mrf.mxu0
        %v6188 = vadd.f32 %v5915, %v6187
        %v6189 = vpop.f32.mrf.mxu0
        %v6190 = vpop.f32.mrf.mxu0
        %v6191 = vadd.f32 %v5915, %v6190
        %v6192 = vpop.f32.mrf.mxu0
        %6193 = vmatprep.mubr.bf16.mxu0 %v5897
        %6194 = vmatmul.mubr.bf16.gmra.mxu0 %v5896
        %v6195 = vpop.f32.mrf.mxu0
        %v6196 = vadd.f32 %v5915, %v6195
        %v6197 = vpop.f32.mrf.mxu0
        %v6198 = vpop.f32.mrf.mxu0
        %v6199 = vadd.f32 %v5915, %v6198
        %v6200 = vpop.f32.mrf.mxu0
        %6201 = vmatprep.mubr.bf16.mxu0 %v5900
        %6202 = vmatmul.mubr.bf16.gmra.mxu0 %v5899
        %v6203 = vpop.f32.mrf.mxu0
        %v6204 = vadd.f32 %v5915, %v6203
        %v6205 = vpop.f32.mrf.mxu0
        %v6206 = vpop.f32.mrf.mxu0
        %v6207 = vadd.f32 %v5915, %v6206
        %v6208 = vpop.f32.mrf.mxu0
        %6209 = vmatprep.mubr.bf16.mxu0 %v5903
        %6210 = vmatmul.mubr.bf16.gmra.mxu0 %v5902
        %v6211 = vpop.f32.mrf.mxu0
        %v6212 = vadd.f32 %v5915, %v6211
        %v6213 = vpop.f32.mrf.mxu0
        %v6214 = vpop.f32.mrf.mxu0
        %v6215 = vadd.f32 %v5915, %v6214
        %v6216 = vpop.f32.mrf.mxu0
        %6217 = vmatprep.mubr.bf16.mxu0 %v5906
        %6218 = vmatmul.mubr.bf16.gmra.mxu0 %v5905
        %v6219 = vpop.f32.mrf.mxu0
        %v6220 = vadd.f32 %v5915, %v6219
        %v6221 = vpop.f32.mrf.mxu0
        %v6222 = vpop.f32.mrf.mxu0
        %v6223 = vadd.f32 %v5915, %v6222
        %v6224 = vpop.f32.mrf.mxu0
        %6225 = vmatprep.mubr.bf16.mxu0 %v5909
        %6226 = vmatmul.mubr.bf16.gmra.mxu0 %v5908
        %v6227 = vpop.f32.mrf.mxu0
        %v6228 = vadd.f32 %v5915, %v6227
        %v6229 = vpop.f32.mrf.mxu0
        %v6230 = vpop.f32.mrf.mxu0
        %v6231 = vadd.f32 %v5915, %v6230
        %v6232 = vpop.f32.mrf.mxu0
        %6233 = vdwg.mxu0
        %6234 = vmatprep.subr.bf16.mxu0 0
        %6235 = vmatpush1.bf16.msra.mxu0 0
        %6236 = vmatprep.subr.bf16.mxu0 0
        %6237 = vmatpush1.bf16.msra.mxu0 0
        %6238 = vmatprep.subr.bf16.mxu0 0
        %6239 = vmatpush1.bf16.msra.mxu0 0
        %6240 = vmatprep.subr.bf16.mxu0 0
        %6241 = vmatpush1.bf16.msra.mxu0 0
        %6242 = vmatprep.subr.bf16.mxu0 0
        %6243 = vmatpush1.bf16.msra.mxu0 0
        %6244 = vmatprep.subr.bf16.mxu0 0
        %6245 = vmatpush1.bf16.msra.mxu0 0
        %6246 = vmatprep.subr.bf16.mxu0 0
        %6247 = vmatpush1.bf16.msra.mxu0 %v6006
        %6248 = vmatprep.subr.bf16.mxu0 0
        %6249 = vmatpush1.bf16.msra.mxu0 %v6005
        %6250 = vmatprep.subr.bf16.mxu0 0
        %6251 = vmatpush2.bf16.msra.mxu0 0
        %6252 = vmatprep.subr.bf16.mxu0 0
        %6253 = vmatpush2.bf16.msra.mxu0 0
        %6254 = vmatprep.subr.bf16.mxu0 0
        %6255 = vmatpush2.bf16.msra.mxu0 0
        %6256 = vmatprep.subr.bf16.mxu0 0
        %6257 = vmatpush2.bf16.msra.mxu0 0
        %6258 = vmatprep.subr.bf16.mxu0 0
        %6259 = vmatpush2.bf16.msra.mxu0 0
        %6260 = vmatprep.subr.bf16.mxu0 0
        %6261 = vmatpush2.bf16.msra.mxu0 0
        %6262 = vmatprep.subr.bf16.mxu0 0
        %6263 = vmatpush2.bf16.msra.mxu0 0
        %6264 = vmatprep.subr.bf16.mxu0 0
        %6265 = vmatpush2.bf16.msra.mxu0 0
        %6266 = vmatprep.mubr.bf16.mxu0 0
        %6267 = vmatmul.mubr.bf16.gmra.mxu0 %v6026
        %v6268 = vpop.f32.mrf.mxu0
        %v6269 = vadd.f32 %v6108, %v6268
        %v6270 = vpop.f32.mrf.mxu0
        %v6271 = vpop.f32.mrf.mxu0
        %v6272 = vadd.f32 %v6111, %v6271
        %v6273 = vpop.f32.mrf.mxu0
        %6274 = vmatprep.mubr.bf16.mxu0 0
        %6275 = vmatmul.mubr.bf16.gmra.mxu0 %v6029
        %v6276 = vpop.f32.mrf.mxu0
        %v6277 = vadd.f32 %v6116, %v6276
        %v6278 = vpop.f32.mrf.mxu0
        %v6279 = vpop.f32.mrf.mxu0
        %v6280 = vadd.f32 %v6119, %v6279
        %v6281 = vpop.f32.mrf.mxu0
        %6282 = vmatprep.mubr.bf16.mxu0 0
        %6283 = vmatmul.mubr.bf16.gmra.mxu0 %v6032
        %v6284 = vpop.f32.mrf.mxu0
        %v6285 = vadd.f32 %v6124, %v6284
        %v6286 = vpop.f32.mrf.mxu0
        %v6287 = vpop.f32.mrf.mxu0
        %v6288 = vadd.f32 %v6127, %v6287
        %v6289 = vpop.f32.mrf.mxu0
        %6290 = vmatprep.mubr.bf16.mxu0 0
        %6291 = vmatmul.mubr.bf16.gmra.mxu0 %v6035
        %v6292 = vpop.f32.mrf.mxu0
        %v6293 = vadd.f32 %v6132, %v6292
        %v6294 = vpop.f32.mrf.mxu0
        %v6295 = vpop.f32.mrf.mxu0
        %v6296 = vadd.f32 %v6135, %v6295
        %v6297 = vpop.f32.mrf.mxu0
        %6298 = vmatprep.mubr.bf16.mxu0 0
        %6299 = vmatmul.mubr.bf16.gmra.mxu0 %v6038
        %v6300 = vpop.f32.mrf.mxu0
        %v6301 = vadd.f32 %v6140, %v6300
        %v6302 = vpop.f32.mrf.mxu0
        %v6303 = vpop.f32.mrf.mxu0
        %v6304 = vadd.f32 %v6143, %v6303
        %v6305 = vpop.f32.mrf.mxu0
        %6306 = vmatprep.mubr.bf16.mxu0 0
        %6307 = vmatmul.mubr.bf16.gmra.mxu0 %v6041
        %v6308 = vpop.f32.mrf.mxu0
        %v6309 = vadd.f32 %v6148, %v6308
        %v6310 = vpop.f32.mrf.mxu0
        %v6311 = vpop.f32.mrf.mxu0
        %v6312 = vadd.f32 %v6151, %v6311
        %v6313 = vpop.f32.mrf.mxu0
        %6314 = vmatprep.mubr.bf16.mxu0 0
        %6315 = vmatmul.mubr.bf16.gmra.mxu0 %v6044
        %v6316 = vpop.f32.mrf.mxu0
        %v6317 = vadd.f32 %v6156, %v6316
        %v6318 = vpop.f32.mrf.mxu0
        %v6319 = vpop.f32.mrf.mxu0
        %v6320 = vadd.f32 %v6159, %v6319
        %v6321 = vpop.f32.mrf.mxu0
        %6322 = vmatprep.mubr.bf16.mxu0 0
        %6323 = vmatmul.mubr.bf16.gmra.mxu0 %v6047
        %v6324 = vpop.f32.mrf.mxu0
        %v6325 = vadd.f32 %v6164, %v6324
        %v6326 = vpop.f32.mrf.mxu0
        %v6327 = vpop.f32.mrf.mxu0
        %v6328 = vadd.f32 %v6167, %v6327
        %v6329 = vpop.f32.mrf.mxu0
        %6330 = vmatprep.mubr.bf16.mxu0 0
        %6331 = vmatmul.mubr.bf16.gmra.mxu0 %v6050
        %v6332 = vpop.f32.mrf.mxu0
        %v6333 = vadd.f32 %v6172, %v6332
        %v6334 = vpop.f32.mrf.mxu0
        %v6335 = vpop.f32.mrf.mxu0
        %v6336 = vadd.f32 %v6175, %v6335
        %v6337 = vpop.f32.mrf.mxu0
        %6338 = vmatprep.mubr.bf16.mxu0 0
        %6339 = vmatmul.mubr.bf16.gmra.mxu0 %v6053
        %v6340 = vpop.f32.mrf.mxu0
        %v6341 = vadd.f32 %v6180, %v6340
        %v6342 = vpop.f32.mrf.mxu0
        %v6343 = vpop.f32.mrf.mxu0
        %v6344 = vadd.f32 %v6183, %v6343
        %v6345 = vpop.f32.mrf.mxu0
        %6346 = vmatprep.mubr.bf16.mxu0 0
        %6347 = vmatmul.mubr.bf16.gmra.mxu0 %v6056
        %v6348 = vpop.f32.mrf.mxu0
        %v6349 = vadd.f32 %v6188, %v6348
        %v6350 = vpop.f32.mrf.mxu0
        %v6351 = vpop.f32.mrf.mxu0
        %v6352 = vadd.f32 %v6191, %v6351
        %v6353 = vpop.f32.mrf.mxu0
        %6354 = vmatprep.mubr.bf16.mxu0 0
        %6355 = vmatmul.mubr.bf16.gmra.mxu0 %v6059
        %v6356 = vpop.f32.mrf.mxu0
        %v6357 = vadd.f32 %v6196, %v6356
        %v6358 = vpop.f32.mrf.mxu0
        %v6359 = vpop.f32.mrf.mxu0
        %v6360 = vadd.f32 %v6199, %v6359
        %v6361 = vpop.f32.mrf.mxu0
        %6362 = vmatprep.mubr.bf16.mxu0 0
        %6363 = vmatmul.mubr.bf16.gmra.mxu0 %v6062
        %v6364 = vpop.f32.mrf.mxu0
        %v6365 = vadd.f32 %v6204, %v6364
        %v6366 = vpop.f32.mrf.mxu0
        %v6367 = vpop.f32.mrf.mxu0
        %v6368 = vadd.f32 %v6207, %v6367
        %v6369 = vpop.f32.mrf.mxu0
        %6370 = vmatprep.mubr.bf16.mxu0 0
        %6371 = vmatmul.mubr.bf16.gmra.mxu0 %v6065
        %v6372 = vpop.f32.mrf.mxu0
        %v6373 = vadd.f32 %v6212, %v6372
        %v6374 = vpop.f32.mrf.mxu0
        %v6375 = vpop.f32.mrf.mxu0
        %v6376 = vadd.f32 %v6215, %v6375
        %v6377 = vpop.f32.mrf.mxu0
        %6378 = vmatprep.mubr.bf16.mxu0 0
        %6379 = vmatmul.mubr.bf16.gmra.mxu0 %v6068
        %v6380 = vpop.f32.mrf.mxu0
        %v6381 = vadd.f32 %v6220, %v6380
        %v6382 = vpop.f32.mrf.mxu0
        %v6383 = vpop.f32.mrf.mxu0
        %v6384 = vadd.f32 %v6223, %v6383
        %v6385 = vpop.f32.mrf.mxu0
        %6386 = vmatprep.mubr.bf16.mxu0 0
        %6387 = vmatmul.mubr.bf16.gmra.mxu0 %v6071
        %v6388 = vpop.f32.mrf.mxu0
        %v6389 = vadd.f32 %v6228, %v6388
        %v6390 = vpop.f32.mrf.mxu0
        %v6391 = vpop.f32.mrf.mxu0
        %v6392 = vadd.f32 %v6231, %v6391
        %v6393 = vpop.f32.mrf.mxu0
        %6394 = vdwg.mxu0
        %v6395 = vadd.f32 %v440, %v6269
        %v6396 = vadd.f32 %v441, %v6272
        %v6397 = vadd.f32 %v442, %v6277
        %v6398 = vadd.f32 %v443, %v6280
        %v6399 = vadd.f32 %v444, %v6285
        %v6400 = vadd.f32 %v445, %v6288
        %v6401 = vadd.f32 %v446, %v6293
        %v6402 = vadd.f32 %v447, %v6296
        %v6403 = vadd.f32 %v448, %v6301
        %v6404 = vadd.f32 %v449, %v6304
        %v6405 = vadd.f32 %v450, %v6309
        %v6406 = vadd.f32 %v451, %v6312
        %v6407 = vadd.f32 %v452, %v6317
        %v6408 = vadd.f32 %v453, %v6320
        %v6409 = vadd.f32 %v454, %v6325
        %v6410 = vadd.f32 %v455, %v6328
        %v6411 = vadd.f32 %v456, %v6333
        %v6412 = vadd.f32 %v457, %v6336
        %v6413 = vadd.f32 %v458, %v6341
        %v6414 = vadd.f32 %v459, %v6344
        %v6415 = vadd.f32 %v460, %v6349
        %v6416 = vadd.f32 %v461, %v6352
        %v6417 = vadd.f32 %v462, %v6357
        %v6418 = vadd.f32 %v463, %v6360
        %v6419 = vadd.f32 %v464, %v6365
        %v6420 = vadd.f32 %v465, %v6368
        %v6421 = vadd.f32 %v466, %v6373
        %v6422 = vadd.f32 %v467, %v6376
        %v6423 = vadd.f32 %v468, %v6381
        %v6424 = vadd.f32 %v469, %v6384
        %v6425 = vadd.f32 %v470, %v6389
        %v6426 = vadd.f32 %v471, %v6392
        %v6427 = vld [vmem:[%s9] sm:$0x1]
        %v6428 = vld [vmem:[%s10] sm:$0x1]
        %v6429 = vsel %vm474, %v6395, 0.0
        %v6430 = vsel %vm474, %v6396, 0.0
        %v6431 = vadd.f32 %v6429, %v6430
        %v6432 = vsel %vm474, %v6397, 0.0
        %v6433 = vadd.f32 %v6431, %v6432
        %v6434 = vsel %vm474, %v6398, 0.0
        %v6435 = vadd.f32 %v6433, %v6434
        %v6436 = vsel %vm474, %v6399, 0.0
        %v6437 = vadd.f32 %v6435, %v6436
        %v6438 = vsel %vm474, %v6400, 0.0
        %v6439 = vadd.f32 %v6437, %v6438
        %v6440 = vsel %vm474, %v6401, 0.0
        %v6441 = vadd.f32 %v6439, %v6440
        %v6442 = vsel %vm474, %v6402, 0.0
        %v6443 = vadd.f32 %v6441, %v6442
        %v6444 = vsel %vm474, %v6403, 0.0
        %v6445 = vadd.f32 %v6443, %v6444
        %v6446 = vsel %vm474, %v6404, 0.0
        %v6447 = vadd.f32 %v6445, %v6446
        %v6448 = vsel %vm474, %v6405, 0.0
        %v6449 = vadd.f32 %v6447, %v6448
        %v6450 = vsel %vm474, %v6406, 0.0
        %v6451 = vadd.f32 %v6449, %v6450
        %v6452 = vsel %vm474, %v6407, 0.0
        %v6453 = vadd.f32 %v6451, %v6452
        %v6454 = vsel %vm474, %v6408, 0.0
        %v6455 = vadd.f32 %v6453, %v6454
        %v6456 = vsel %vm474, %v6409, 0.0
        %v6457 = vadd.f32 %v6455, %v6456
        %v6458 = vsel %vm474, %v6410, 0.0
        %v6459 = vadd.f32 %v6457, %v6458
        %v6460 = vsel %vm474, %v6411, 0.0
        %v6461 = vadd.f32 %v6459, %v6460
        %v6462 = vsel %vm474, %v6412, 0.0
        %v6463 = vadd.f32 %v6461, %v6462
        %v6464 = vsel %vm474, %v6413, 0.0
        %v6465 = vadd.f32 %v6463, %v6464
        %v6466 = vsel %vm474, %v6414, 0.0
        %v6467 = vadd.f32 %v6465, %v6466
        %v6468 = vsel %vm474, %v6415, 0.0
        %v6469 = vadd.f32 %v6467, %v6468
        %v6470 = vsel %vm474, %v6416, 0.0
        %v6471 = vadd.f32 %v6469, %v6470
        %v6472 = vsel %vm474, %v6417, 0.0
        %v6473 = vadd.f32 %v6471, %v6472
        %v6474 = vsel %vm474, %v6418, 0.0
        %v6475 = vadd.f32 %v6473, %v6474
        %v6476 = vsel %vm474, %v6419, 0.0
        %v6477 = vadd.f32 %v6475, %v6476
        %v6478 = vsel %vm474, %v6420, 0.0
        %v6479 = vadd.f32 %v6477, %v6478
        %v6480 = vsel %vm474, %v6421, 0.0
        %v6481 = vadd.f32 %v6479, %v6480
        %v6482 = vsel %vm474, %v6422, 0.0
        %v6483 = vadd.f32 %v6481, %v6482
        %v6484 = vsel %vm474, %v6423, 0.0
        %v6485 = vadd.f32 %v6483, %v6484
        %v6486 = vsel %vm474, %v6424, 0.0
        %v6487 = vadd.f32 %v6485, %v6486
        %v6488 = vsel %vm474, %v6425, 0.0
        %v6489 = vadd.f32 %v6487, %v6488
        %v6490 = vsel %vm474, %v6426, 0.0
        %v6491 = vadd.f32 %v6489, %v6490
        %6492 = vadd.xlane.f32.xlu0 %v6491
        %v6493 = vpop.xlane.xlu0 %6492
        %v6494 = vrot.slane %v6493, 4
        %v6495 = vadd.f32 %v6493, %v6494
        %v6496 = vrot.slane %v6495, 2
        %v6497 = vadd.f32 %v6495, %v6496
        %v6498 = vrot.slane %v6497, 1
        %v6499 = vadd.f32 %v6497, %v6498
        %s6500 = vtos %v6499
        %v6501 = vmul.f32 %v6395, %v6395
        %v6502 = vmul.f32 %v6396, %v6396
        %v6503 = vmul.f32 %v6397, %v6397
        %v6504 = vmul.f32 %v6398, %v6398
        %v6505 = vmul.f32 %v6399, %v6399
        %v6506 = vmul.f32 %v6400, %v6400
        %v6507 = vmul.f32 %v6401, %v6401
        %v6508 = vmul.f32 %v6402, %v6402
        %v6509 = vmul.f32 %v6403, %v6403
        %v6510 = vmul.f32 %v6404, %v6404
        %v6511 = vmul.f32 %v6405, %v6405
        %v6512 = vmul.f32 %v6406, %v6406
        %v6513 = vmul.f32 %v6407, %v6407
        %v6514 = vmul.f32 %v6408, %v6408
        %v6515 = vmul.f32 %v6409, %v6409
        %v6516 = vmul.f32 %v6410, %v6410
        %v6517 = vmul.f32 %v6411, %v6411
        %v6518 = vmul.f32 %v6412, %v6412
        %v6519 = vmul.f32 %v6413, %v6413
        %v6520 = vmul.f32 %v6414, %v6414
        %v6521 = vmul.f32 %v6415, %v6415
        %v6522 = vmul.f32 %v6416, %v6416
        %v6523 = vmul.f32 %v6417, %v6417
        %v6524 = vmul.f32 %v6418, %v6418
        %v6525 = vmul.f32 %v6419, %v6419
        %v6526 = vmul.f32 %v6420, %v6420
        %v6527 = vmul.f32 %v6421, %v6421
        %v6528 = vmul.f32 %v6422, %v6422
        %v6529 = vmul.f32 %v6423, %v6423
        %v6530 = vmul.f32 %v6424, %v6424
        %v6531 = vmul.f32 %v6425, %v6425
        %v6532 = vmul.f32 %v6426, %v6426
        %v6533 = vsel %vm474, %v6501, 0.0
        %v6534 = vsel %vm474, %v6502, 0.0
        %v6535 = vadd.f32 %v6533, %v6534
        %v6536 = vsel %vm474, %v6503, 0.0
        %v6537 = vadd.f32 %v6535, %v6536
        %v6538 = vsel %vm474, %v6504, 0.0
        %v6539 = vadd.f32 %v6537, %v6538
        %v6540 = vsel %vm474, %v6505, 0.0
        %v6541 = vadd.f32 %v6539, %v6540
        %v6542 = vsel %vm474, %v6506, 0.0
        %v6543 = vadd.f32 %v6541, %v6542
        %v6544 = vsel %vm474, %v6507, 0.0
        %v6545 = vadd.f32 %v6543, %v6544
        %v6546 = vsel %vm474, %v6508, 0.0
        %v6547 = vadd.f32 %v6545, %v6546
        %v6548 = vsel %vm474, %v6509, 0.0
        %v6549 = vadd.f32 %v6547, %v6548
        %v6550 = vsel %vm474, %v6510, 0.0
        %v6551 = vadd.f32 %v6549, %v6550
        %v6552 = vsel %vm474, %v6511, 0.0
        %v6553 = vadd.f32 %v6551, %v6552
        %v6554 = vsel %vm474, %v6512, 0.0
        %v6555 = vadd.f32 %v6553, %v6554
        %v6556 = vsel %vm474, %v6513, 0.0
        %v6557 = vadd.f32 %v6555, %v6556
        %v6558 = vsel %vm474, %v6514, 0.0
        %v6559 = vadd.f32 %v6557, %v6558
        %v6560 = vsel %vm474, %v6515, 0.0
        %v6561 = vadd.f32 %v6559, %v6560
        %v6562 = vsel %vm474, %v6516, 0.0
        %v6563 = vadd.f32 %v6561, %v6562
        %v6564 = vsel %vm474, %v6517, 0.0
        %v6565 = vadd.f32 %v6563, %v6564
        %v6566 = vsel %vm474, %v6518, 0.0
        %v6567 = vadd.f32 %v6565, %v6566
        %v6568 = vsel %vm474, %v6519, 0.0
        %v6569 = vadd.f32 %v6567, %v6568
        %v6570 = vsel %vm474, %v6520, 0.0
        %v6571 = vadd.f32 %v6569, %v6570
        %v6572 = vsel %vm474, %v6521, 0.0
        %v6573 = vadd.f32 %v6571, %v6572
        %v6574 = vsel %vm474, %v6522, 0.0
        %v6575 = vadd.f32 %v6573, %v6574
        %v6576 = vsel %vm474, %v6523, 0.0
        %v6577 = vadd.f32 %v6575, %v6576
        %v6578 = vsel %vm474, %v6524, 0.0
        %v6579 = vadd.f32 %v6577, %v6578
        %v6580 = vsel %vm474, %v6525, 0.0
        %v6581 = vadd.f32 %v6579, %v6580
        %v6582 = vsel %vm474, %v6526, 0.0
        %v6583 = vadd.f32 %v6581, %v6582
        %v6584 = vsel %vm474, %v6527, 0.0
        %v6585 = vadd.f32 %v6583, %v6584
        %v6586 = vsel %vm474, %v6528, 0.0
        %v6587 = vadd.f32 %v6585, %v6586
        %v6588 = vsel %vm474, %v6529, 0.0
        %v6589 = vadd.f32 %v6587, %v6588
        %v6590 = vsel %vm474, %v6530, 0.0
        %v6591 = vadd.f32 %v6589, %v6590
        %v6592 = vsel %vm474, %v6531, 0.0
        %v6593 = vadd.f32 %v6591, %v6592
        %v6594 = vsel %vm474, %v6532, 0.0
        %v6595 = vadd.f32 %v6593, %v6594
        %6596 = vadd.xlane.f32.xlu0 %v6595
        %v6597 = vpop.xlane.xlu0 %6596
        %v6598 = vrot.slane %v6597, 4
        %v6599 = vadd.f32 %v6597, %v6598
        %v6600 = vrot.slane %v6599, 2
        %v6601 = vadd.f32 %v6599, %v6600
        %v6602 = vrot.slane %v6601, 1
        %v6603 = vadd.f32 %v6601, %v6602
        %s6604 = vtos %v6603
        %v6605 = vrcp.pop 8192.0
        %s6606 = vtos %v6605
        %s6607 = smul.f32 %s6500, %s6606
        %v6608 = vrcp.pop 8192.0
        %s6609 = vtos %v6608
        %s6610 = smul.f32 %s6604, %s6609
        %s6611 = smul.f32 %s6607, %s6607
        %s6612 = ssub.f32 %s6610, %s6611
        %s6613 = smax.f32 %s6612, 0.0
        %s6614 = sadd.f32 %s6613, 1e-05
        %v6615 = vstv %s6614
        %v6616 = vrsqrt.pop %v6615
        %s6617 = vtos %v6616
        %v6618 = vstv %s6617
        %v6619 = vmul.f32 %v6427, %v6618
        %v6620 = vstv %s6607
        %v6621 = vmul.f32 %v6620, %v6619
        %v6622 = vsub.f32 %v6428, %v6621
        %v6624 = vlaneseq
        %v6625 = vshrl.u32 %v6624, 7
        %v6626 = vsub.s32 0, %v6625
        %v6627 = vrot.slane %v6619, %v6626
        %v6629 = vmul.f32 %v6395, %v6627
        %v6630 = vmul.f32 %v6396, %v6627
        %v6631 = vmul.f32 %v6397, %v6627
        %v6632 = vmul.f32 %v6398, %v6627
        %v6633 = vmul.f32 %v6399, %v6627
        %v6634 = vmul.f32 %v6400, %v6627
        %v6635 = vmul.f32 %v6401, %v6627
        %v6636 = vmul.f32 %v6402, %v6627
        %v6637 = vmul.f32 %v6403, %v6627
        %v6638 = vmul.f32 %v6404, %v6627
        %v6639 = vmul.f32 %v6405, %v6627
        %v6640 = vmul.f32 %v6406, %v6627
        %v6641 = vmul.f32 %v6407, %v6627
        %v6642 = vmul.f32 %v6408, %v6627
        %v6643 = vmul.f32 %v6409, %v6627
        %v6644 = vmul.f32 %v6410, %v6627
        %v6645 = vmul.f32 %v6411, %v6627
        %v6646 = vmul.f32 %v6412, %v6627
        %v6647 = vmul.f32 %v6413, %v6627
        %v6648 = vmul.f32 %v6414, %v6627
        %v6649 = vmul.f32 %v6415, %v6627
        %v6650 = vmul.f32 %v6416, %v6627
        %v6651 = vmul.f32 %v6417, %v6627
        %v6652 = vmul.f32 %v6418, %v6627
        %v6653 = vmul.f32 %v6419, %v6627
        %v6654 = vmul.f32 %v6420, %v6627
        %v6655 = vmul.f32 %v6421, %v6627
        %v6656 = vmul.f32 %v6422, %v6627
        %v6657 = vmul.f32 %v6423, %v6627
        %v6658 = vmul.f32 %v6424, %v6627
        %v6659 = vmul.f32 %v6425, %v6627
        %v6660 = vmul.f32 %v6426, %v6627
        %v6662 = vlaneseq
        %v6663 = vshrl.u32 %v6662, 7
        %v6664 = vsub.s32 0, %v6663
        %v6665 = vrot.slane %v6622, %v6664
        %v6667 = vadd.f32 %v6629, %v6665
        %v6668 = vadd.f32 %v6630, %v6665
        %v6669 = vadd.f32 %v6631, %v6665
        %v6670 = vadd.f32 %v6632, %v6665
        %v6671 = vadd.f32 %v6633, %v6665
        %v6672 = vadd.f32 %v6634, %v6665
        %v6673 = vadd.f32 %v6635, %v6665
        %v6674 = vadd.f32 %v6636, %v6665
        %v6675 = vadd.f32 %v6637, %v6665
        %v6676 = vadd.f32 %v6638, %v6665
        %v6677 = vadd.f32 %v6639, %v6665
        %v6678 = vadd.f32 %v6640, %v6665
        %v6679 = vadd.f32 %v6641, %v6665
        %v6680 = vadd.f32 %v6642, %v6665
        %v6681 = vadd.f32 %v6643, %v6665
        %v6682 = vadd.f32 %v6644, %v6665
        %v6683 = vadd.f32 %v6645, %v6665
        %v6684 = vadd.f32 %v6646, %v6665
        %v6685 = vadd.f32 %v6647, %v6665
        %v6686 = vadd.f32 %v6648, %v6665
        %v6687 = vadd.f32 %v6649, %v6665
        %v6688 = vadd.f32 %v6650, %v6665
        %v6689 = vadd.f32 %v6651, %v6665
        %v6690 = vadd.f32 %v6652, %v6665
        %v6691 = vadd.f32 %v6653, %v6665
        %v6692 = vadd.f32 %v6654, %v6665
        %v6693 = vadd.f32 %v6655, %v6665
        %v6694 = vadd.f32 %v6656, %v6665
        %v6695 = vadd.f32 %v6657, %v6665
        %v6696 = vadd.f32 %v6658, %v6665
        %v6697 = vadd.f32 %v6659, %v6665
        %v6698 = vadd.f32 %v6660, %v6665
        %v6699 = vpack.c.bf16 %v6668, %v6667
        %v6700 = vpack.c.bf16 %v6670, %v6669
        %v6701 = vpack.c.bf16 %v6672, %v6671
        %v6702 = vpack.c.bf16 %v6674, %v6673
        %v6703 = vpack.c.bf16 %v6676, %v6675
        %v6704 = vpack.c.bf16 %v6678, %v6677
        %v6705 = vpack.c.bf16 %v6680, %v6679
        %v6706 = vpack.c.bf16 %v6682, %v6681
        %v6707 = vpack.c.bf16 %v6684, %v6683
        %v6708 = vpack.c.bf16 %v6686, %v6685
        %v6709 = vpack.c.bf16 %v6688, %v6687
        %v6710 = vpack.c.bf16 %v6690, %v6689
        %v6711 = vpack.c.bf16 %v6692, %v6691
        %v6712 = vpack.c.bf16 %v6694, %v6693
        %v6713 = vpack.c.bf16 %v6696, %v6695
        %v6714 = vpack.c.bf16 %v6698, %v6697
        %v6715 = vld [vmem:[%s11] sm:$0xf]
        %v6716 = vld [vmem:[%s11 + $0x4] sm:$0xf]
        %v6717 = vld [vmem:[%s11 + $0x8] sm:$0xf]
        %v6718 = vld [vmem:[%s11 + $0xc] sm:$0xf]
        %v6723 = vunpack.c.l.b16 %v6715
        %v6724 = vunpack.c.l.b16 %v6716
        %v6725 = vunpack.c.l.b16 %v6717
        %v6726 = vunpack.c.l.b16 %v6718
        %v6727 = vpack.c.b16 %v6724, %v6723
        %v6728 = vpack.c.b16 %v6726, %v6725
        %v6732 = vsel %vm474, %v6699, 0
        %v6735 = vsel %vm474, %v6700, 0
        %v6738 = vsel %vm474, %v6701, 0
        %v6741 = vsel %vm474, %v6702, 0
        %v6744 = vsel %vm474, %v6703, 0
        %v6747 = vsel %vm474, %v6704, 0
        %v6750 = vsel %vm474, %v6705, 0
        %v6753 = vsel %vm474, %v6706, 0
        %v6756 = vsel %vm474, %v6707, 0
        %v6759 = vsel %vm474, %v6708, 0
        %v6762 = vsel %vm474, %v6709, 0
        %v6765 = vsel %vm474, %v6710, 0
        %v6768 = vsel %vm474, %v6711, 0
        %v6771 = vsel %vm474, %v6712, 0
        %v6774 = vsel %vm474, %v6713, 0
        %v6777 = vsel %vm474, %v6714, 0
        %6779 = vmatprep.subr.bf16.mxu0 0
        %6780 = vmatpush1.bf16.msra.mxu0 0
        %6781 = vmatprep.subr.bf16.mxu0 0
        %6782 = vmatpush1.bf16.msra.mxu0 0
        %6783 = vmatprep.subr.bf16.mxu0 0
        %6784 = vmatpush1.bf16.msra.mxu0 0
        %6785 = vmatprep.subr.bf16.mxu0 0
        %6786 = vmatpush1.bf16.msra.mxu0 0
        %6787 = vmatprep.subr.bf16.mxu0 0
        %6788 = vmatpush1.bf16.msra.mxu0 0
        %6789 = vmatprep.subr.bf16.mxu0 0
        %6790 = vmatpush1.bf16.msra.mxu0 0
        %6791 = vmatprep.subr.bf16.mxu0 0
        %6792 = vmatpush1.bf16.msra.mxu0 %v6728
        %6793 = vmatprep.subr.bf16.mxu0 0
        %6794 = vmatpush1.bf16.msra.mxu0 %v6727
        %6795 = vmatprep.subr.bf16.mxu0 0
        %6796 = vmatpush2.bf16.msra.mxu0 0
        %6797 = vmatprep.subr.bf16.mxu0 0
        %6798 = vmatpush2.bf16.msra.mxu0 0
        %6799 = vmatprep.subr.bf16.mxu0 0
        %6800 = vmatpush2.bf16.msra.mxu0 0
        %6801 = vmatprep.subr.bf16.mxu0 0
        %6802 = vmatpush2.bf16.msra.mxu0 0
        %6803 = vmatprep.subr.bf16.mxu0 0
        %6804 = vmatpush2.bf16.msra.mxu0 0
        %6805 = vmatprep.subr.bf16.mxu0 0
        %6806 = vmatpush2.bf16.msra.mxu0 0
        %6807 = vmatprep.subr.bf16.mxu0 0
        %6808 = vmatpush2.bf16.msra.mxu0 0
        %6809 = vmatprep.subr.bf16.mxu0 0
        %6810 = vmatpush2.bf16.msra.mxu0 0
        %6811 = vmatprep.mubr.bf16.mxu0 0
        %6812 = vmatmul.mubr.bf16.gmra.mxu0 %v6732
        %v6813 = vpop.f32.mrf.mxu0
        %v6814 = vadd.f32 0.0, %v6813
        %v6815 = vpop.f32.mrf.mxu0
        %v6816 = vpop.f32.mrf.mxu0
        %v6817 = vadd.f32 0.0, %v6816
        %v6818 = vpop.f32.mrf.mxu0
        %6819 = vmatprep.mubr.bf16.mxu0 0
        %6820 = vmatmul.mubr.bf16.gmra.mxu0 %v6735
        %v6821 = vpop.f32.mrf.mxu0
        %v6822 = vadd.f32 0.0, %v6821
        %v6823 = vpop.f32.mrf.mxu0
        %v6824 = vpop.f32.mrf.mxu0
        %v6825 = vadd.f32 0.0, %v6824
        %v6826 = vpop.f32.mrf.mxu0
        %6827 = vmatprep.mubr.bf16.mxu0 0
        %6828 = vmatmul.mubr.bf16.gmra.mxu0 %v6738
        %v6829 = vpop.f32.mrf.mxu0
        %v6830 = vadd.f32 0.0, %v6829
        %v6831 = vpop.f32.mrf.mxu0
        %v6832 = vpop.f32.mrf.mxu0
        %v6833 = vadd.f32 0.0, %v6832
        %v6834 = vpop.f32.mrf.mxu0
        %6835 = vmatprep.mubr.bf16.mxu0 0
        %6836 = vmatmul.mubr.bf16.gmra.mxu0 %v6741
        %v6837 = vpop.f32.mrf.mxu0
        %v6838 = vadd.f32 0.0, %v6837
        %v6839 = vpop.f32.mrf.mxu0
        %v6840 = vpop.f32.mrf.mxu0
        %v6841 = vadd.f32 0.0, %v6840
        %v6842 = vpop.f32.mrf.mxu0
        %6843 = vmatprep.mubr.bf16.mxu0 0
        %6844 = vmatmul.mubr.bf16.gmra.mxu0 %v6744
        %v6845 = vpop.f32.mrf.mxu0
        %v6846 = vadd.f32 0.0, %v6845
        %v6847 = vpop.f32.mrf.mxu0
        %v6848 = vpop.f32.mrf.mxu0
        %v6849 = vadd.f32 0.0, %v6848
        %v6850 = vpop.f32.mrf.mxu0
        %6851 = vmatprep.mubr.bf16.mxu0 0
        %6852 = vmatmul.mubr.bf16.gmra.mxu0 %v6747
        %v6853 = vpop.f32.mrf.mxu0
        %v6854 = vadd.f32 0.0, %v6853
        %v6855 = vpop.f32.mrf.mxu0
        %v6856 = vpop.f32.mrf.mxu0
        %v6857 = vadd.f32 0.0, %v6856
        %v6858 = vpop.f32.mrf.mxu0
        %6859 = vmatprep.mubr.bf16.mxu0 0
        %6860 = vmatmul.mubr.bf16.gmra.mxu0 %v6750
        %v6861 = vpop.f32.mrf.mxu0
        %v6862 = vadd.f32 0.0, %v6861
        %v6863 = vpop.f32.mrf.mxu0
        %v6864 = vpop.f32.mrf.mxu0
        %v6865 = vadd.f32 0.0, %v6864
        %v6866 = vpop.f32.mrf.mxu0
        %6867 = vmatprep.mubr.bf16.mxu0 0
        %6868 = vmatmul.mubr.bf16.gmra.mxu0 %v6753
        %v6869 = vpop.f32.mrf.mxu0
        %v6870 = vadd.f32 0.0, %v6869
        %v6871 = vpop.f32.mrf.mxu0
        %v6872 = vpop.f32.mrf.mxu0
        %v6873 = vadd.f32 0.0, %v6872
        %v6874 = vpop.f32.mrf.mxu0
        %6875 = vmatprep.mubr.bf16.mxu0 0
        %6876 = vmatmul.mubr.bf16.gmra.mxu0 %v6756
        %v6877 = vpop.f32.mrf.mxu0
        %v6878 = vadd.f32 0.0, %v6877
        %v6879 = vpop.f32.mrf.mxu0
        %v6880 = vpop.f32.mrf.mxu0
        %v6881 = vadd.f32 0.0, %v6880
        %v6882 = vpop.f32.mrf.mxu0
        %6883 = vmatprep.mubr.bf16.mxu0 0
        %6884 = vmatmul.mubr.bf16.gmra.mxu0 %v6759
        %v6885 = vpop.f32.mrf.mxu0
        %v6886 = vadd.f32 0.0, %v6885
        %v6887 = vpop.f32.mrf.mxu0
        %v6888 = vpop.f32.mrf.mxu0
        %v6889 = vadd.f32 0.0, %v6888
        %v6890 = vpop.f32.mrf.mxu0
        %6891 = vmatprep.mubr.bf16.mxu0 0
        %6892 = vmatmul.mubr.bf16.gmra.mxu0 %v6762
        %v6893 = vpop.f32.mrf.mxu0
        %v6894 = vadd.f32 0.0, %v6893
        %v6895 = vpop.f32.mrf.mxu0
        %v6896 = vpop.f32.mrf.mxu0
        %v6897 = vadd.f32 0.0, %v6896
        %v6898 = vpop.f32.mrf.mxu0
        %6899 = vmatprep.mubr.bf16.mxu0 0
        %6900 = vmatmul.mubr.bf16.gmra.mxu0 %v6765
        %v6901 = vpop.f32.mrf.mxu0
        %v6902 = vadd.f32 0.0, %v6901
        %v6903 = vpop.f32.mrf.mxu0
        %v6904 = vpop.f32.mrf.mxu0
        %v6905 = vadd.f32 0.0, %v6904
        %v6906 = vpop.f32.mrf.mxu0
        %6907 = vmatprep.mubr.bf16.mxu0 0
        %6908 = vmatmul.mubr.bf16.gmra.mxu0 %v6768
        %v6909 = vpop.f32.mrf.mxu0
        %v6910 = vadd.f32 0.0, %v6909
        %v6911 = vpop.f32.mrf.mxu0
        %v6912 = vpop.f32.mrf.mxu0
        %v6913 = vadd.f32 0.0, %v6912
        %v6914 = vpop.f32.mrf.mxu0
        %6915 = vmatprep.mubr.bf16.mxu0 0
        %6916 = vmatmul.mubr.bf16.gmra.mxu0 %v6771
        %v6917 = vpop.f32.mrf.mxu0
        %v6918 = vadd.f32 0.0, %v6917
        %v6919 = vpop.f32.mrf.mxu0
        %v6920 = vpop.f32.mrf.mxu0
        %v6921 = vadd.f32 0.0, %v6920
        %v6922 = vpop.f32.mrf.mxu0
        %6923 = vmatprep.mubr.bf16.mxu0 0
        %6924 = vmatmul.mubr.bf16.gmra.mxu0 %v6774
        %v6925 = vpop.f32.mrf.mxu0
        %v6926 = vadd.f32 0.0, %v6925
        %v6927 = vpop.f32.mrf.mxu0
        %v6928 = vpop.f32.mrf.mxu0
        %v6929 = vadd.f32 0.0, %v6928
        %v6930 = vpop.f32.mrf.mxu0
        %6931 = vmatprep.mubr.bf16.mxu0 0
        %6932 = vmatmul.mubr.bf16.gmra.mxu0 %v6777
        %v6933 = vpop.f32.mrf.mxu0
        %v6934 = vadd.f32 0.0, %v6933
        %v6935 = vpop.f32.mrf.mxu0
        %v6936 = vpop.f32.mrf.mxu0
        %v6937 = vadd.f32 0.0, %v6936
        %v6938 = vpop.f32.mrf.mxu0
        %6939 = vdwg.mxu0
        %v6940 = vmul.f32 %v6814, 0.5
        %v6941 = vmul.f32 %v6817, 0.5
        %v6942 = vmul.f32 %v6822, 0.5
        %v6943 = vmul.f32 %v6825, 0.5
        %v6944 = vmul.f32 %v6830, 0.5
        %v6945 = vmul.f32 %v6833, 0.5
        %v6946 = vmul.f32 %v6838, 0.5
        %v6947 = vmul.f32 %v6841, 0.5
        %v6948 = vmul.f32 %v6846, 0.5
        %v6949 = vmul.f32 %v6849, 0.5
        %v6950 = vmul.f32 %v6854, 0.5
        %v6951 = vmul.f32 %v6857, 0.5
        %v6952 = vmul.f32 %v6862, 0.5
        %v6953 = vmul.f32 %v6865, 0.5
        %v6954 = vmul.f32 %v6870, 0.5
        %v6955 = vmul.f32 %v6873, 0.5
        %v6956 = vmul.f32 %v6878, 0.5
        %v6957 = vmul.f32 %v6881, 0.5
        %v6958 = vmul.f32 %v6886, 0.5
        %v6959 = vmul.f32 %v6889, 0.5
        %v6960 = vmul.f32 %v6894, 0.5
        %v6961 = vmul.f32 %v6897, 0.5
        %v6962 = vmul.f32 %v6902, 0.5
        %v6963 = vmul.f32 %v6905, 0.5
        %v6964 = vmul.f32 %v6910, 0.5
        %v6965 = vmul.f32 %v6913, 0.5
        %v6966 = vmul.f32 %v6918, 0.5
        %v6967 = vmul.f32 %v6921, 0.5
        %v6968 = vmul.f32 %v6926, 0.5
        %v6969 = vmul.f32 %v6929, 0.5
        %v6970 = vmul.f32 %v6934, 0.5
        %v6971 = vmul.f32 %v6937, 0.5
        %v6972 = vmul.f32 %v6814, 0.044715
        %v6973 = vmul.f32 %v6817, 0.044715
        %v6974 = vmul.f32 %v6822, 0.044715
        %v6975 = vmul.f32 %v6825, 0.044715
        %v6976 = vmul.f32 %v6830, 0.044715
        %v6977 = vmul.f32 %v6833, 0.044715
        %v6978 = vmul.f32 %v6838, 0.044715
        %v6979 = vmul.f32 %v6841, 0.044715
        %v6980 = vmul.f32 %v6846, 0.044715
        %v6981 = vmul.f32 %v6849, 0.044715
        %v6982 = vmul.f32 %v6854, 0.044715
        %v6983 = vmul.f32 %v6857, 0.044715
        %v6984 = vmul.f32 %v6862, 0.044715
        %v6985 = vmul.f32 %v6865, 0.044715
        %v6986 = vmul.f32 %v6870, 0.044715
        %v6987 = vmul.f32 %v6873, 0.044715
        %v6988 = vmul.f32 %v6878, 0.044715
        %v6989 = vmul.f32 %v6881, 0.044715
        %v6990 = vmul.f32 %v6886, 0.044715
        %v6991 = vmul.f32 %v6889, 0.044715
        %v6992 = vmul.f32 %v6894, 0.044715
        %v6993 = vmul.f32 %v6897, 0.044715
        %v6994 = vmul.f32 %v6902, 0.044715
        %v6995 = vmul.f32 %v6905, 0.044715
        %v6996 = vmul.f32 %v6910, 0.044715
        %v6997 = vmul.f32 %v6913, 0.044715
        %v6998 = vmul.f32 %v6918, 0.044715
        %v6999 = vmul.f32 %v6921, 0.044715
        %v7000 = vmul.f32 %v6926, 0.044715
        %v7001 = vmul.f32 %v6929, 0.044715
        %v7002 = vmul.f32 %v6934, 0.044715
        %v7003 = vmul.f32 %v6937, 0.044715
        %v7004 = vmul.f32 %v6972, %v6814
        %v7005 = vmul.f32 %v6973, %v6817
        %v7006 = vmul.f32 %v6974, %v6822
        %v7007 = vmul.f32 %v6975, %v6825
        %v7008 = vmul.f32 %v6976, %v6830
        %v7009 = vmul.f32 %v6977, %v6833
        %v7010 = vmul.f32 %v6978, %v6838
        %v7011 = vmul.f32 %v6979, %v6841
        %v7012 = vmul.f32 %v6980, %v6846
        %v7013 = vmul.f32 %v6981, %v6849
        %v7014 = vmul.f32 %v6982, %v6854
        %v7015 = vmul.f32 %v6983, %v6857
        %v7016 = vmul.f32 %v6984, %v6862
        %v7017 = vmul.f32 %v6985, %v6865
        %v7018 = vmul.f32 %v6986, %v6870
        %v7019 = vmul.f32 %v6987, %v6873
        %v7020 = vmul.f32 %v6988, %v6878
        %v7021 = vmul.f32 %v6989, %v6881
        %v7022 = vmul.f32 %v6990, %v6886
        %v7023 = vmul.f32 %v6991, %v6889
        %v7024 = vmul.f32 %v6992, %v6894
        %v7025 = vmul.f32 %v6993, %v6897
        %v7026 = vmul.f32 %v6994, %v6902
        %v7027 = vmul.f32 %v6995, %v6905
        %v7028 = vmul.f32 %v6996, %v6910
        %v7029 = vmul.f32 %v6997, %v6913
        %v7030 = vmul.f32 %v6998, %v6918
        %v7031 = vmul.f32 %v6999, %v6921
        %v7032 = vmul.f32 %v7000, %v6926
        %v7033 = vmul.f32 %v7001, %v6929
        %v7034 = vmul.f32 %v7002, %v6934
        %v7035 = vmul.f32 %v7003, %v6937
        %v7036 = vmul.f32 %v7004, %v6814
        %v7037 = vmul.f32 %v7005, %v6817
        %v7038 = vmul.f32 %v7006, %v6822
        %v7039 = vmul.f32 %v7007, %v6825
        %v7040 = vmul.f32 %v7008, %v6830
        %v7041 = vmul.f32 %v7009, %v6833
        %v7042 = vmul.f32 %v7010, %v6838
        %v7043 = vmul.f32 %v7011, %v6841
        %v7044 = vmul.f32 %v7012, %v6846
        %v7045 = vmul.f32 %v7013, %v6849
        %v7046 = vmul.f32 %v7014, %v6854
        %v7047 = vmul.f32 %v7015, %v6857
        %v7048 = vmul.f32 %v7016, %v6862
        %v7049 = vmul.f32 %v7017, %v6865
        %v7050 = vmul.f32 %v7018, %v6870
        %v7051 = vmul.f32 %v7019, %v6873
        %v7052 = vmul.f32 %v7020, %v6878
        %v7053 = vmul.f32 %v7021, %v6881
        %v7054 = vmul.f32 %v7022, %v6886
        %v7055 = vmul.f32 %v7023, %v6889
        %v7056 = vmul.f32 %v7024, %v6894
        %v7057 = vmul.f32 %v7025, %v6897
        %v7058 = vmul.f32 %v7026, %v6902
        %v7059 = vmul.f32 %v7027, %v6905
        %v7060 = vmul.f32 %v7028, %v6910
        %v7061 = vmul.f32 %v7029, %v6913
        %v7062 = vmul.f32 %v7030, %v6918
        %v7063 = vmul.f32 %v7031, %v6921
        %v7064 = vmul.f32 %v7032, %v6926
        %v7065 = vmul.f32 %v7033, %v6929
        %v7066 = vmul.f32 %v7034, %v6934
        %v7067 = vmul.f32 %v7035, %v6937
        %v7068 = vadd.f32 %v6814, %v7036
        %v7069 = vadd.f32 %v6817, %v7037
        %v7070 = vadd.f32 %v6822, %v7038
        %v7071 = vadd.f32 %v6825, %v7039
        %v7072 = vadd.f32 %v6830, %v7040
        %v7073 = vadd.f32 %v6833, %v7041
        %v7074 = vadd.f32 %v6838, %v7042
        %v7075 = vadd.f32 %v6841, %v7043
        %v7076 = vadd.f32 %v6846, %v7044
        %v7077 = vadd.f32 %v6849, %v7045
        %v7078 = vadd.f32 %v6854, %v7046
        %v7079 = vadd.f32 %v6857, %v7047
        %v7080 = vadd.f32 %v6862, %v7048
        %v7081 = vadd.f32 %v6865, %v7049
        %v7082 = vadd.f32 %v6870, %v7050
        %v7083 = vadd.f32 %v6873, %v7051
        %v7084 = vadd.f32 %v6878, %v7052
        %v7085 = vadd.f32 %v6881, %v7053
        %v7086 = vadd.f32 %v6886, %v7054
        %v7087 = vadd.f32 %v6889, %v7055
        %v7088 = vadd.f32 %v6894, %v7056
        %v7089 = vadd.f32 %v6897, %v7057
        %v7090 = vadd.f32 %v6902, %v7058
        %v7091 = vadd.f32 %v6905, %v7059
        %v7092 = vadd.f32 %v6910, %v7060
        %v7093 = vadd.f32 %v6913, %v7061
        %v7094 = vadd.f32 %v6918, %v7062
        %v7095 = vadd.f32 %v6921, %v7063
        %v7096 = vadd.f32 %v6926, %v7064
        %v7097 = vadd.f32 %v6929, %v7065
        %v7098 = vadd.f32 %v6934, %v7066
        %v7099 = vadd.f32 %v6937, %v7067
        %v7100 = vmul.f32 %v7068, 0.7978846
        %v7101 = vmul.f32 %v7069, 0.7978846
        %v7102 = vmul.f32 %v7070, 0.7978846
        %v7103 = vmul.f32 %v7071, 0.7978846
        %v7104 = vmul.f32 %v7072, 0.7978846
        %v7105 = vmul.f32 %v7073, 0.7978846
        %v7106 = vmul.f32 %v7074, 0.7978846
        %v7107 = vmul.f32 %v7075, 0.7978846
        %v7108 = vmul.f32 %v7076, 0.7978846
        %v7109 = vmul.f32 %v7077, 0.7978846
        %v7110 = vmul.f32 %v7078, 0.7978846
        %v7111 = vmul.f32 %v7079, 0.7978846
        %v7112 = vmul.f32 %v7080, 0.7978846
        %v7113 = vmul.f32 %v7081, 0.7978846
        %v7114 = vmul.f32 %v7082, 0.7978846
        %v7115 = vmul.f32 %v7083, 0.7978846
        %v7116 = vmul.f32 %v7084, 0.7978846
        %v7117 = vmul.f32 %v7085, 0.7978846
        %v7118 = vmul.f32 %v7086, 0.7978846
        %v7119 = vmul.f32 %v7087, 0.7978846
        %v7120 = vmul.f32 %v7088, 0.7978846
        %v7121 = vmul.f32 %v7089, 0.7978846
        %v7122 = vmul.f32 %v7090, 0.7978846
        %v7123 = vmul.f32 %v7091, 0.7978846
        %v7124 = vmul.f32 %v7092, 0.7978846
        %v7125 = vmul.f32 %v7093, 0.7978846
        %v7126 = vmul.f32 %v7094, 0.7978846
        %v7127 = vmul.f32 %v7095, 0.7978846
        %v7128 = vmul.f32 %v7096, 0.7978846
        %v7129 = vmul.f32 %v7097, 0.7978846
        %v7130 = vmul.f32 %v7098, 0.7978846
        %v7131 = vmul.f32 %v7099, 0.7978846
        %v7132 = vtanh.pop %v7100
        %v7133 = vtanh.pop %v7101
        %v7134 = vtanh.pop %v7102
        %v7135 = vtanh.pop %v7103
        %v7136 = vtanh.pop %v7104
        %v7137 = vtanh.pop %v7105
        %v7138 = vtanh.pop %v7106
        %v7139 = vtanh.pop %v7107
        %v7140 = vtanh.pop %v7108
        %v7141 = vtanh.pop %v7109
        %v7142 = vtanh.pop %v7110
        %v7143 = vtanh.pop %v7111
        %v7144 = vtanh.pop %v7112
        %v7145 = vtanh.pop %v7113
        %v7146 = vtanh.pop %v7114
        %v7147 = vtanh.pop %v7115
        %v7148 = vtanh.pop %v7116
        %v7149 = vtanh.pop %v7117
        %v7150 = vtanh.pop %v7118
        %v7151 = vtanh.pop %v7119
        %v7152 = vtanh.pop %v7120
        %v7153 = vtanh.pop %v7121
        %v7154 = vtanh.pop %v7122
        %v7155 = vtanh.pop %v7123
        %v7156 = vtanh.pop %v7124
        %v7157 = vtanh.pop %v7125
        %v7158 = vtanh.pop %v7126
        %v7159 = vtanh.pop %v7127
        %v7160 = vtanh.pop %v7128
        %v7161 = vtanh.pop %v7129
        %v7162 = vtanh.pop %v7130
        %v7163 = vtanh.pop %v7131
        %v7164 = vadd.f32 %v7132, 1.0
        %v7165 = vadd.f32 %v7133, 1.0
        %v7166 = vadd.f32 %v7134, 1.0
        %v7167 = vadd.f32 %v7135, 1.0
        %v7168 = vadd.f32 %v7136, 1.0
        %v7169 = vadd.f32 %v7137, 1.0
        %v7170 = vadd.f32 %v7138, 1.0
        %v7171 = vadd.f32 %v7139, 1.0
        %v7172 = vadd.f32 %v7140, 1.0
        %v7173 = vadd.f32 %v7141, 1.0
        %v7174 = vadd.f32 %v7142, 1.0
        %v7175 = vadd.f32 %v7143, 1.0
        %v7176 = vadd.f32 %v7144, 1.0
        %v7177 = vadd.f32 %v7145, 1.0
        %v7178 = vadd.f32 %v7146, 1.0
        %v7179 = vadd.f32 %v7147, 1.0
        %v7180 = vadd.f32 %v7148, 1.0
        %v7181 = vadd.f32 %v7149, 1.0
        %v7182 = vadd.f32 %v7150, 1.0
        %v7183 = vadd.f32 %v7151, 1.0
        %v7184 = vadd.f32 %v7152, 1.0
        %v7185 = vadd.f32 %v7153, 1.0
        %v7186 = vadd.f32 %v7154, 1.0
        %v7187 = vadd.f32 %v7155, 1.0
        %v7188 = vadd.f32 %v7156, 1.0
        %v7189 = vadd.f32 %v7157, 1.0
        %v7190 = vadd.f32 %v7158, 1.0
        %v7191 = vadd.f32 %v7159, 1.0
        %v7192 = vadd.f32 %v7160, 1.0
        %v7193 = vadd.f32 %v7161, 1.0
        %v7194 = vadd.f32 %v7162, 1.0
        %v7195 = vadd.f32 %v7163, 1.0
        %v7196 = vmul.f32 %v6940, %v7164
        %v7197 = vmul.f32 %v6941, %v7165
        %v7198 = vmul.f32 %v6942, %v7166
        %v7199 = vmul.f32 %v6943, %v7167
        %v7200 = vmul.f32 %v6944, %v7168
        %v7201 = vmul.f32 %v6945, %v7169
        %v7202 = vmul.f32 %v6946, %v7170
        %v7203 = vmul.f32 %v6947, %v7171
        %v7204 = vmul.f32 %v6948, %v7172
        %v7205 = vmul.f32 %v6949, %v7173
        %v7206 = vmul.f32 %v6950, %v7174
        %v7207 = vmul.f32 %v6951, %v7175
        %v7208 = vmul.f32 %v6952, %v7176
        %v7209 = vmul.f32 %v6953, %v7177
        %v7210 = vmul.f32 %v6954, %v7178
        %v7211 = vmul.f32 %v6955, %v7179
        %v7212 = vmul.f32 %v6956, %v7180
        %v7213 = vmul.f32 %v6957, %v7181
        %v7214 = vmul.f32 %v6958, %v7182
        %v7215 = vmul.f32 %v6959, %v7183
        %v7216 = vmul.f32 %v6960, %v7184
        %v7217 = vmul.f32 %v6961, %v7185
        %v7218 = vmul.f32 %v6962, %v7186
        %v7219 = vmul.f32 %v6963, %v7187
        %v7220 = vmul.f32 %v6964, %v7188
        %v7221 = vmul.f32 %v6965, %v7189
        %v7222 = vmul.f32 %v6966, %v7190
        %v7223 = vmul.f32 %v6967, %v7191
        %v7224 = vmul.f32 %v6968, %v7192
        %v7225 = vmul.f32 %v6969, %v7193
        %v7226 = vmul.f32 %v6970, %v7194
        %v7227 = vmul.f32 %v6971, %v7195
        %v7228 = vpack.c.bf16 %v7197, %v7196
        %v7229 = vpack.c.bf16 %v7199, %v7198
        %v7230 = vpack.c.bf16 %v7201, %v7200
        %v7231 = vpack.c.bf16 %v7203, %v7202
        %v7232 = vpack.c.bf16 %v7205, %v7204
        %v7233 = vpack.c.bf16 %v7207, %v7206
        %v7234 = vpack.c.bf16 %v7209, %v7208
        %v7235 = vpack.c.bf16 %v7211, %v7210
        %v7236 = vpack.c.bf16 %v7213, %v7212
        %v7237 = vpack.c.bf16 %v7215, %v7214
        %v7238 = vpack.c.bf16 %v7217, %v7216
        %v7239 = vpack.c.bf16 %v7219, %v7218
        %v7240 = vpack.c.bf16 %v7221, %v7220
        %v7241 = vpack.c.bf16 %v7223, %v7222
        %v7242 = vpack.c.bf16 %v7225, %v7224
        %v7243 = vpack.c.bf16 %v7227, %v7226
        %v7244 = vld [vmem:[%s12] sm:$0xf]
        %v7245 = vld [vmem:[%s12 + $0x4] sm:$0xf]
        %v7246 = vld [vmem:[%s12 + $0x8] sm:$0xf]
        %v7247 = vld [vmem:[%s12 + $0xc] sm:$0xf]
        %v7252 = vunpack.c.l.b16 %v7244
        %v7253 = vunpack.c.l.b16 %v7245
        %v7254 = vunpack.c.l.b16 %v7246
        %v7255 = vunpack.c.l.b16 %v7247
        %v7256 = vpack.c.b16 %v7253, %v7252
        %v7257 = vpack.c.b16 %v7255, %v7254
        %v7261 = vsel %vm474, %v7228, 0
        %v7264 = vsel %vm474, %v7229, 0
        %v7267 = vsel %vm474, %v7230, 0
        %v7270 = vsel %vm474, %v7231, 0
        %v7273 = vsel %vm474, %v7232, 0
        %v7276 = vsel %vm474, %v7233, 0
        %v7279 = vsel %vm474, %v7234, 0
        %v7282 = vsel %vm474, %v7235, 0
        %v7285 = vsel %vm474, %v7236, 0
        %v7288 = vsel %vm474, %v7237, 0
        %v7291 = vsel %vm474, %v7238, 0
        %v7294 = vsel %vm474, %v7239, 0
        %v7297 = vsel %vm474, %v7240, 0
        %v7300 = vsel %vm474, %v7241, 0
        %v7303 = vsel %vm474, %v7242, 0
        %v7306 = vsel %vm474, %v7243, 0
        %7308 = vmatprep.subr.bf16.mxu0 0
        %7309 = vmatpush1.bf16.msra.mxu0 0
        %7310 = vmatprep.subr.bf16.mxu0 0
        %7311 = vmatpush1.bf16.msra.mxu0 0
        %7312 = vmatprep.subr.bf16.mxu0 0
        %7313 = vmatpush1.bf16.msra.mxu0 0
        %7314 = vmatprep.subr.bf16.mxu0 0
        %7315 = vmatpush1.bf16.msra.mxu0 0
        %7316 = vmatprep.subr.bf16.mxu0 0
        %7317 = vmatpush1.bf16.msra.mxu0 0
        %7318 = vmatprep.subr.bf16.mxu0 0
        %7319 = vmatpush1.bf16.msra.mxu0 0
        %7320 = vmatprep.subr.bf16.mxu0 0
        %7321 = vmatpush1.bf16.msra.mxu0 %v7257
        %7322 = vmatprep.subr.bf16.mxu0 0
        %7323 = vmatpush1.bf16.msra.mxu0 %v7256
        %7324 = vmatprep.subr.bf16.mxu0 0
        %7325 = vmatpush2.bf16.msra.mxu0 0
        %7326 = vmatprep.subr.bf16.mxu0 0
        %7327 = vmatpush2.bf16.msra.mxu0 0
        %7328 = vmatprep.subr.bf16.mxu0 0
        %7329 = vmatpush2.bf16.msra.mxu0 0
        %7330 = vmatprep.subr.bf16.mxu0 0
        %7331 = vmatpush2.bf16.msra.mxu0 0
        %7332 = vmatprep.subr.bf16.mxu0 0
        %7333 = vmatpush2.bf16.msra.mxu0 0
        %7334 = vmatprep.subr.bf16.mxu0 0
        %7335 = vmatpush2.bf16.msra.mxu0 0
        %7336 = vmatprep.subr.bf16.mxu0 0
        %7337 = vmatpush2.bf16.msra.mxu0 0
        %7338 = vmatprep.subr.bf16.mxu0 0
        %7339 = vmatpush2.bf16.msra.mxu0 0
        %7340 = vmatprep.mubr.bf16.mxu0 0
        %7341 = vmatmul.mubr.bf16.gmra.mxu0 %v7261
        %v7342 = vpop.f32.mrf.mxu0
        %v7343 = vadd.f32 0.0, %v7342
        %v7344 = vpop.f32.mrf.mxu0
        %v7345 = vpop.f32.mrf.mxu0
        %v7346 = vadd.f32 0.0, %v7345
        %v7347 = vpop.f32.mrf.mxu0
        %7348 = vmatprep.mubr.bf16.mxu0 0
        %7349 = vmatmul.mubr.bf16.gmra.mxu0 %v7264
        %v7350 = vpop.f32.mrf.mxu0
        %v7351 = vadd.f32 0.0, %v7350
        %v7352 = vpop.f32.mrf.mxu0
        %v7353 = vpop.f32.mrf.mxu0
        %v7354 = vadd.f32 0.0, %v7353
        %v7355 = vpop.f32.mrf.mxu0
        %7356 = vmatprep.mubr.bf16.mxu0 0
        %7357 = vmatmul.mubr.bf16.gmra.mxu0 %v7267
        %v7358 = vpop.f32.mrf.mxu0
        %v7359 = vadd.f32 0.0, %v7358
        %v7360 = vpop.f32.mrf.mxu0
        %v7361 = vpop.f32.mrf.mxu0
        %v7362 = vadd.f32 0.0, %v7361
        %v7363 = vpop.f32.mrf.mxu0
        %7364 = vmatprep.mubr.bf16.mxu0 0
        %7365 = vmatmul.mubr.bf16.gmra.mxu0 %v7270
        %v7366 = vpop.f32.mrf.mxu0
        %v7367 = vadd.f32 0.0, %v7366
        %v7368 = vpop.f32.mrf.mxu0
        %v7369 = vpop.f32.mrf.mxu0
        %v7370 = vadd.f32 0.0, %v7369
        %v7371 = vpop.f32.mrf.mxu0
        %7372 = vmatprep.mubr.bf16.mxu0 0
        %7373 = vmatmul.mubr.bf16.gmra.mxu0 %v7273
        %v7374 = vpop.f32.mrf.mxu0
        %v7375 = vadd.f32 0.0, %v7374
        %v7376 = vpop.f32.mrf.mxu0
        %v7377 = vpop.f32.mrf.mxu0
        %v7378 = vadd.f32 0.0, %v7377
        %v7379 = vpop.f32.mrf.mxu0
        %7380 = vmatprep.mubr.bf16.mxu0 0
        %7381 = vmatmul.mubr.bf16.gmra.mxu0 %v7276
        %v7382 = vpop.f32.mrf.mxu0
        %v7383 = vadd.f32 0.0, %v7382
        %v7384 = vpop.f32.mrf.mxu0
        %v7385 = vpop.f32.mrf.mxu0
        %v7386 = vadd.f32 0.0, %v7385
        %v7387 = vpop.f32.mrf.mxu0
        %7388 = vmatprep.mubr.bf16.mxu0 0
        %7389 = vmatmul.mubr.bf16.gmra.mxu0 %v7279
        %v7390 = vpop.f32.mrf.mxu0
        %v7391 = vadd.f32 0.0, %v7390
        %v7392 = vpop.f32.mrf.mxu0
        %v7393 = vpop.f32.mrf.mxu0
        %v7394 = vadd.f32 0.0, %v7393
        %v7395 = vpop.f32.mrf.mxu0
        %7396 = vmatprep.mubr.bf16.mxu0 0
        %7397 = vmatmul.mubr.bf16.gmra.mxu0 %v7282
        %v7398 = vpop.f32.mrf.mxu0
        %v7399 = vadd.f32 0.0, %v7398
        %v7400 = vpop.f32.mrf.mxu0
        %v7401 = vpop.f32.mrf.mxu0
        %v7402 = vadd.f32 0.0, %v7401
        %v7403 = vpop.f32.mrf.mxu0
        %7404 = vmatprep.mubr.bf16.mxu0 0
        %7405 = vmatmul.mubr.bf16.gmra.mxu0 %v7285
        %v7406 = vpop.f32.mrf.mxu0
        %v7407 = vadd.f32 0.0, %v7406
        %v7408 = vpop.f32.mrf.mxu0
        %v7409 = vpop.f32.mrf.mxu0
        %v7410 = vadd.f32 0.0, %v7409
        %v7411 = vpop.f32.mrf.mxu0
        %7412 = vmatprep.mubr.bf16.mxu0 0
        %7413 = vmatmul.mubr.bf16.gmra.mxu0 %v7288
        %v7414 = vpop.f32.mrf.mxu0
        %v7415 = vadd.f32 0.0, %v7414
        %v7416 = vpop.f32.mrf.mxu0
        %v7417 = vpop.f32.mrf.mxu0
        %v7418 = vadd.f32 0.0, %v7417
        %v7419 = vpop.f32.mrf.mxu0
        %7420 = vmatprep.mubr.bf16.mxu0 0
        %7421 = vmatmul.mubr.bf16.gmra.mxu0 %v7291
        %v7422 = vpop.f32.mrf.mxu0
        %v7423 = vadd.f32 0.0, %v7422
        %v7424 = vpop.f32.mrf.mxu0
        %v7425 = vpop.f32.mrf.mxu0
        %v7426 = vadd.f32 0.0, %v7425
        %v7427 = vpop.f32.mrf.mxu0
        %7428 = vmatprep.mubr.bf16.mxu0 0
        %7429 = vmatmul.mubr.bf16.gmra.mxu0 %v7294
        %v7430 = vpop.f32.mrf.mxu0
        %v7431 = vadd.f32 0.0, %v7430
        %v7432 = vpop.f32.mrf.mxu0
        %v7433 = vpop.f32.mrf.mxu0
        %v7434 = vadd.f32 0.0, %v7433
        %v7435 = vpop.f32.mrf.mxu0
        %7436 = vmatprep.mubr.bf16.mxu0 0
        %7437 = vmatmul.mubr.bf16.gmra.mxu0 %v7297
        %v7438 = vpop.f32.mrf.mxu0
        %v7439 = vadd.f32 0.0, %v7438
        %v7440 = vpop.f32.mrf.mxu0
        %v7441 = vpop.f32.mrf.mxu0
        %v7442 = vadd.f32 0.0, %v7441
        %v7443 = vpop.f32.mrf.mxu0
        %7444 = vmatprep.mubr.bf16.mxu0 0
        %7445 = vmatmul.mubr.bf16.gmra.mxu0 %v7300
        %v7446 = vpop.f32.mrf.mxu0
        %v7447 = vadd.f32 0.0, %v7446
        %v7448 = vpop.f32.mrf.mxu0
        %v7449 = vpop.f32.mrf.mxu0
        %v7450 = vadd.f32 0.0, %v7449
        %v7451 = vpop.f32.mrf.mxu0
        %7452 = vmatprep.mubr.bf16.mxu0 0
        %7453 = vmatmul.mubr.bf16.gmra.mxu0 %v7303
        %v7454 = vpop.f32.mrf.mxu0
        %v7455 = vadd.f32 0.0, %v7454
        %v7456 = vpop.f32.mrf.mxu0
        %v7457 = vpop.f32.mrf.mxu0
        %v7458 = vadd.f32 0.0, %v7457
        %v7459 = vpop.f32.mrf.mxu0
        %7460 = vmatprep.mubr.bf16.mxu0 0
        %7461 = vmatmul.mubr.bf16.gmra.mxu0 %v7306
        %v7462 = vpop.f32.mrf.mxu0
        %v7463 = vadd.f32 0.0, %v7462
        %v7464 = vpop.f32.mrf.mxu0
        %v7465 = vpop.f32.mrf.mxu0
        %v7466 = vadd.f32 0.0, %v7465
        %v7467 = vpop.f32.mrf.mxu0
        %7468 = vdwg.mxu0
        %v7469 = vadd.f32 %v6395, %v7343
        %v7470 = vadd.f32 %v6396, %v7346
        %v7471 = vadd.f32 %v6397, %v7351
        %v7472 = vadd.f32 %v6398, %v7354
        %v7473 = vadd.f32 %v6399, %v7359
        %v7474 = vadd.f32 %v6400, %v7362
        %v7475 = vadd.f32 %v6401, %v7367
        %v7476 = vadd.f32 %v6402, %v7370
        %v7477 = vadd.f32 %v6403, %v7375
        %v7478 = vadd.f32 %v6404, %v7378
        %v7479 = vadd.f32 %v6405, %v7383
        %v7480 = vadd.f32 %v6406, %v7386
        %v7481 = vadd.f32 %v6407, %v7391
        %v7482 = vadd.f32 %v6408, %v7394
        %v7483 = vadd.f32 %v6409, %v7399
        %v7484 = vadd.f32 %v6410, %v7402
        %v7485 = vadd.f32 %v6411, %v7407
        %v7486 = vadd.f32 %v6412, %v7410
        %v7487 = vadd.f32 %v6413, %v7415
        %v7488 = vadd.f32 %v6414, %v7418
        %v7489 = vadd.f32 %v6415, %v7423
        %v7490 = vadd.f32 %v6416, %v7426
        %v7491 = vadd.f32 %v6417, %v7431
        %v7492 = vadd.f32 %v6418, %v7434
        %v7493 = vadd.f32 %v6419, %v7439
        %v7494 = vadd.f32 %v6420, %v7442
        %v7495 = vadd.f32 %v6421, %v7447
        %v7496 = vadd.f32 %v6422, %v7450
        %v7497 = vadd.f32 %v6423, %v7455
        %v7498 = vadd.f32 %v6424, %v7458
        %v7499 = vadd.f32 %v6425, %v7463
        %v7500 = vadd.f32 %v6426, %v7466
        %7501 = vst.msk [vmem:[%s433] sm:$0xff] %vm474, %v7469
        %7502 = vst.msk [vmem:[%s433 + $0x8] sm:$0xff] %vm474, %v7470
        %7503 = vst.msk [vmem:[%s433 + $0x10] sm:$0xff] %vm474, %v7471
        %7504 = vst.msk [vmem:[%s433 + $0x18] sm:$0xff] %vm474, %v7472
        %7505 = vst.msk [vmem:[%s433 + $0x20] sm:$0xff] %vm474, %v7473
        %7506 = vst.msk [vmem:[%s433 + $0x28] sm:$0xff] %vm474, %v7474
        %7507 = vst.msk [vmem:[%s433 + $0x30] sm:$0xff] %vm474, %v7475
        %7508 = vst.msk [vmem:[%s433 + $0x38] sm:$0xff] %vm474, %v7476
        %7509 = vst.msk [vmem:[%s433 + $0x40] sm:$0xff] %vm474, %v7477
        %7510 = vst.msk [vmem:[%s433 + $0x48] sm:$0xff] %vm474, %v7478
        %7511 = vst.msk [vmem:[%s433 + $0x50] sm:$0xff] %vm474, %v7479
        %7512 = vst.msk [vmem:[%s433 + $0x58] sm:$0xff] %vm474, %v7480
        %7513 = vst.msk [vmem:[%s433 + $0x60] sm:$0xff] %vm474, %v7481
        %7514 = vst.msk [vmem:[%s433 + $0x68] sm:$0xff] %vm474, %v7482
        %7515 = vst.msk [vmem:[%s433 + $0x70] sm:$0xff] %vm474, %v7483
        %7516 = vst.msk [vmem:[%s433 + $0x78] sm:$0xff] %vm474, %v7484
        %7517 = vst.msk [vmem:[%s433 + $0x80] sm:$0xff] %vm474, %v7485
        %7518 = vst.msk [vmem:[%s433 + $0x88] sm:$0xff] %vm474, %v7486
        %7519 = vst.msk [vmem:[%s433 + $0x90] sm:$0xff] %vm474, %v7487
        %7520 = vst.msk [vmem:[%s433 + $0x98] sm:$0xff] %vm474, %v7488
        %7521 = vst.msk [vmem:[%s433 + $0xa0] sm:$0xff] %vm474, %v7489
        %7522 = vst.msk [vmem:[%s433 + $0xa8] sm:$0xff] %vm474, %v7490
        %7523 = vst.msk [vmem:[%s433 + $0xb0] sm:$0xff] %vm474, %v7491
        %7524 = vst.msk [vmem:[%s433 + $0xb8] sm:$0xff] %vm474, %v7492
        %7525 = vst.msk [vmem:[%s433 + $0xc0] sm:$0xff] %vm474, %v7493
        %7526 = vst.msk [vmem:[%s433 + $0xc8] sm:$0xff] %vm474, %v7494
        %7527 = vst.msk [vmem:[%s433 + $0xd0] sm:$0xff] %vm474, %v7495
        %7528 = vst.msk [vmem:[%s433 + $0xd8] sm:$0xff] %vm474, %v7496
        %7529 = vst.msk [vmem:[%s433 + $0xe0] sm:$0xff] %vm474, %v7497
        %7530 = vst.msk [vmem:[%s433 + $0xe8] sm:$0xff] %vm474, %v7498
        %7531 = vst.msk [vmem:[%s433 + $0xf0] sm:$0xff] %vm474, %v7499
        %7532 = vst.msk [vmem:[%s433 + $0xf8] sm:$0xff] %vm474, %v7500
        %s7533 = sand.u32 %s313, 1
        %s7534 = scalar_lea.sflag [#allocation3], %s7533
        %s7535 = sand.u32 %s313, 1
        %s7536 = smul.addr %s7535, 256
        %s7537 = scalar_lea.vmem [#allocation2], %s7536
        // Predicated region
        $region73: #{dilated_residual_block_nhwc.1} parent=71 // pred_check
          %p7538 = pneg %p323
        $region74: #{dilated_residual_block_nhwc.1} parent=71 // pred_check_branch
          %7540 = sbr.rel (%p7538) target = $region76
        $region75: #{dilated_residual_block_nhwc.1} parent=71 // pred_region
          %s7542 = ssub.s32 4096, 4096
          %7543 = vsyncadd %s7534, %s7542
          %s7544 = smul.addr %s27, 32
          %s7545 = smul.addr %s7544, 128
          %s7546 = scalar_lea.hbm %s13, %s7545
          %s7547 = sshll.u32 %s7537, 4
          %s7548 = int_to_ptr.vmem [resolvable:$true] %s7547
          %7553 = dma.vmem_to_hbm [thread:$0]  %s7548, 4096, %s7546, %s7534, 128, 128, 8
        $region76: #{dilated_residual_block_nhwc.1} parent=71 // pred_fallthru
          _
      $region72: #{dilated_residual_block_nhwc.1} parent=5 // pred_fallthru
        _
      %p7554 = scmp.le.s32.totalorder 2, %s22
      // Predicated region
      $region77: #{dilated_residual_block_nhwc.1} parent=5 // pred_check
        %p7555 = pneg %p7554
      $region78: #{dilated_residual_block_nhwc.1} parent=5 // pred_check_branch
        %7557 = sbr.rel (%p7555) target = $region80
      $region79: #{dilated_residual_block_nhwc.1} parent=5 // pred_region
        %s7558 = ssub.s32 %s22, 2
        // Predicated region
        $region81: #{dilated_residual_block_nhwc.1} parent=79 // pred_check
          %p7559 = pneg %p329
        $region82: #{dilated_residual_block_nhwc.1} parent=79 // pred_check_branch
          %7561 = sbr.rel (%p7559) target = $region84
        $region83: #{dilated_residual_block_nhwc.1} parent=79 // pred_region
          %s7562 = sand.u32 %s314, 1
          %s7563 = scalar_lea.sflag [#allocation3], %s7562
          %s7564 = sand.u32 %s314, 1
          %s7565 = smul.addr %s7564, 256
          %s7566 = scalar_lea.vmem [#allocation2], %s7565
          %7567 = dma.done %s7563, 4096
        $region84: #{dilated_residual_block_nhwc.1} parent=79 // pred_fallthru
          _
      $region80: #{dilated_residual_block_nhwc.1} parent=5 // pred_fallthru
        _
    $region6: #{dilated_residual_block_nhwc.1} parent=1 // loop_footer
      %s26 = sadd.s32 1, %s22
    $region7: #{dilated_residual_block_nhwc.1} parent=1 // loop_footer_branch
      %21 = sbr.rel target = $region3
    $region8: #{dilated_residual_block_nhwc.1} parent=1 // loop_exit
      _
    %7568 = vsyncpa [#allocation3], 1
    %s7569 = scalar_lea.sflag [#allocation3], 1
    %7570 = vsyncpa %s7569, 1

</llo_original>
